<compile_context>
chip_gen: v7x
topology: tpu7x:2x2x1
jax: 0.10.0
libtpu: 0.0.40
codegen_flags: <defaults>
</compile_context>

<pallas_src>
import jax
import jax.numpy as jnp
from jax.experimental import pallas as pl
from jax.experimental.pallas import tpu as pltpu


# --------------------------------------------------------------------------
# Fused Pallas kernel
# --------------------------------------------------------------------------

def _netbn_fused_kernel(u0_ref, u1_ref, u2_ref, u3_ref,
                        m1_ref, b1_ref, m2_ref, b2_ref, fcw_ref, fcb_ref,
                        o_ref,
                        e0_ref, e1_ref, o0_ref, o1_ref, p2s_ref):
    """Whole NetBN forward for one block of B images.

    u*_ref : (Cin, 7*B, 84)   input rows split by (row mod 4); the three
                              vertical conv taps are pre-concatenated on lanes.
    m1_ref : (Cin, 84, 1280)  banded conv1 operator (BN folded), f32.
    b1_ref : (1, 640)         folded conv1 bias, tiled per pooled column.
    m2_ref : (3, 640, 512)    banded conv2 operator (BN folded), bf16.
    b2_ref : (1, 256)         folded conv2 bias, tiled per pooled column.
    fcw_ref: (10, 1280)       FC weight, pre-permuted to kernel flatten order.
    fcb_ref: (1, 10)
    o_ref  : (B, 10)          logits.
    e*/o*  : (5*B, 640) f32   staged shifted row windows of pool1 output.
    p2s_ref: (5, B, 256) f32  pool2 output regrouped h-major for the FC.
    """
    B = o_ref.shape[0]
    Cin = u0_ref.shape[0]

    def dotf(a, w):
        return jnp.dot(a, w, preferred_element_type=jnp.float32)

    # ------------------- conv1 (BN folded into m1) ------------------------
    # t_m[b*7+q, :] = conv1 output row (4q + m) of image b; columns laid out
    # as [even cols j=2jp | odd cols j=2jp+1], each block (jp, channel),
    # zero-padded to 640 lanes.
    def conv1(u_ref):
        acc = dotf(u_ref[0], m1_ref[0])
        for ci in range(1, Cin):
            acc = acc + dotf(u_ref[ci], m1_ref[ci])
        return acc                                        # (7B, 1280) f32

    b1 = b1_ref[...]                                      # (1, 640)

    # 2x2 max-pool = max over H rows {4q, 4q+1} (t0/t1) x W even/odd halves.
    t0 = conv1(u0_ref)                                    # conv rows 4q
    t1 = conv1(u1_ref)                                    # conv rows 4q+1
    p1e = jnp.maximum(jnp.maximum(t0[:, :640], t0[:, 640:]),
                      jnp.maximum(t1[:, :640], t1[:, 640:]))
    p1e = jnp.maximum(p1e + b1, 0.0)                      # pool1 rows 2q

    t2 = conv1(u2_ref)                                    # conv rows 4q+2
    t3 = conv1(u3_ref)                                    # conv rows 4q+3
    p1o = jnp.maximum(jnp.maximum(t2[:, :640], t2[:, 640:]),
                      jnp.maximum(t3[:, :640], t3[:, 640:]))
    p1o = jnp.maximum(p1o + b1, 0.0)                      # pool1 rows 2q+1

    # --------- stage shifted row windows for the batched conv2 matmuls ----
    # conv2 row 2s   uses pool1 rows (2s,   2s+1, 2s+2) = (E0, O0, E1)[s]
    # conv2 row 2s+1 uses pool1 rows (2s+1, 2s+2, 2s+3) = (O0, E1, O1)[s]
    for b in range(B):
        rs, ws = 7 * b, 5 * b
        e0_ref[ws:ws + 5, :] = p1e[rs:rs + 5, :]
        e1_ref[ws:ws + 5, :] = p1e[rs + 1:rs + 6, :]
        o0_ref[ws:ws + 5, :] = p1o[rs:rs + 5, :]
        o1_ref[ws:ws + 5, :] = p1o[rs + 1:rs + 6, :]

    # ------------- conv2 (BN folded), bf16 MXU, batched over the block ----
    bf = jnp.bfloat16
    E0, E1 = e0_ref[...].astype(bf), e1_ref[...].astype(bf)
    O0, O1 = o0_ref[...].astype(bf), o1_ref[...].astype(bf)
    w2a, w2b, w2c = m2_ref[0], m2_ref[1], m2_ref[2]       # (640, 512) bf16

    c2e = dotf(E0, w2a) + dotf(O0, w2b) + dotf(E1, w2c)   # conv2 even rows
    c2o = dotf(O0, w2a) + dotf(E1, w2b) + dotf(O1, w2c)   # conv2 odd rows

    b2 = b2_ref[...]                                      # (1, 256)
    p2 = jnp.maximum(jnp.maximum(c2e[:, :256], c2e[:, 256:]),
                     jnp.maximum(c2o[:, :256], c2o[:, 256:]))
    p2 = jnp.maximum(p2 + b2, 0.0)                        # (5B, 256), rows (b, h)

    # ------------- regroup rows (b, h) -> h-major, then batched FC ---------
    for b in range(B):
        for s in range(5):
            p2s_ref[s, b:b + 1, :] = p2[5 * b + s:5 * b + s + 1, :]

    acc = jnp.zeros((B, 10), jnp.float32)
    for s in range(5):
        acc = acc + jax.lax.dot_general(
            p2s_ref[s], fcw_ref[:, 256 * s:256 * (s + 1)],
            dimension_numbers=(((1,), (1,)), ((), ())),
            preferred_element_type=jnp.float32)
    o_ref[...] = (acc + fcb_ref[...]).astype(o_ref.dtype)


# --------------------------------------------------------------------------
# Wrapper-side parameter preparation (tiny, runs once per call in XLA)
# --------------------------------------------------------------------------

def _fold_bn(w, b, gamma, beta, mean, var, eps):
    scale = gamma / jnp.sqrt(var + eps)                   # (Cout,)
    return w * scale, b * scale + beta - mean * scale


def _band_matrix_1(w1f, cin):
    """(Cin, 84, 1280): rows = (kh, input col w); cols = (parity, jp, cout),
    each parity block (13*40=520) zero-padded to 640 lanes."""
    kw = jnp.arange(3)
    wc = jnp.arange(28)
    par = jnp.arange(2)
    jp = jnp.arange(13)
    mask = (wc[None, :, None, None] ==
            kw[:, None, None, None] + par[None, None, :, None]
            + 2 * jp[None, None, None, :])                # (3, 28, 2, 13)
    m = jnp.einsum('kwpj,akic->aiwpjc', mask.astype(jnp.float32), w1f)
    m = m.reshape(3, cin, 28, 2, 520)
    m = jnp.pad(m, ((0, 0), (0, 0), (0, 0), (0, 0), (0, 120)))
    m = m.reshape(3, cin, 28, 1280)
    return jnp.transpose(m, (1, 0, 2, 3)).reshape(cin, 84, 1280)


def _band_matrix_2(w2f):
    """(3, 640, 512) bf16: rows = (pool1 col wp, cin) padded 520->640;
    cols = (parity, jp2, cout), each parity block (5*40=200) padded to 256."""
    kw = jnp.arange(3)
    wp = jnp.arange(13)
    par = jnp.arange(2)
    jp = jnp.arange(5)
    mask = (wp[None, :, None, None] ==
            kw[:, None, None, None] + par[None, None, :, None]
            + 2 * jp[None, None, None, :])                # (3, 13, 2, 5)
    m = jnp.einsum('kwpj,akcd->awcpjd', mask.astype(jnp.float32), w2f)
    m = m.reshape(3, 520, 2, 200)
    m = jnp.pad(m, ((0, 0), (0, 120), (0, 0), (0, 56)))
    return m.reshape(3, 640, 512).astype(jnp.bfloat16)


def _permute_fc(fcw):
    """fcw: (1000, 10) with rows c*25 + h*5 + w (PyTorch NCHW flatten).
    -> (10, 1280) with cols h*256 + (w*40 + c), padded to 256 per h block."""
    m = fcw.reshape(40, 5, 5, 10)                         # (c, h, w, o)
    m = jnp.transpose(m, (1, 2, 0, 3))                    # (h, w, c, o)
    m = m.reshape(5, 200, 10)
    m = jnp.pad(m, ((0, 0), (0, 56), (0, 0)))
    return m.reshape(1280, 10).T                          # (10, 1280)


def _prep_inputs(x, n_pad):
    """x: (Np, Cin, 28, 28) NCHW.  Split rows by (row mod 4) and pre-concat
    the three vertical conv taps on the lane axis -> four (Cin, Np*7, 84)."""
    cin = x.shape[1]
    xh = [x[:, :, m::4, :] for m in range(4)]             # (Np, Cin, 7, 28)
    zero = jnp.zeros_like(xh[0][:, :, :1, :])
    sh0 = jnp.concatenate([xh[0][:, :, 1:, :], zero], axis=2)   # xh0 shifted by 1
    sh1 = jnp.concatenate([xh[1][:, :, 1:, :], zero], axis=2)   # xh1 shifted by 1

    def flat(a):                                          # -> (Cin, Np*7, 28)
        return jnp.transpose(a, (1, 0, 2, 3)).reshape(cin, n_pad * 7, 28)

    u0 = jnp.concatenate([flat(xh[0]), flat(xh[1]), flat(xh[2])], axis=-1)
    u1 = jnp.concatenate([flat(xh[1]), flat(xh[2]), flat(xh[3])], axis=-1)
    u2 = jnp.concatenate([flat(xh[2]), flat(xh[3]), flat(sh0)], axis=-1)
    u3 = jnp.concatenate([flat(xh[3]), flat(sh0), flat(sh1)], axis=-1)
    return u0, u1, u2, u3


def netbn_forward(x_nchw, p, eps=1e-5):
    """Forward pass of NetBN. x_nchw: (N, num_channels, 28, 28) -> (N, 10)."""
    N, cin, H, W = x_nchw.shape
    assert (H, W) == (28, 28), "NetBN's 5*5*40 flatten requires 28x28 inputs"

    # ---- fold BatchNorm (inference) + conv bias into the conv weights ----
    w1f, b1f = _fold_bn(p["w1"], p["b1"], p["g1"], p["be1"], p["m1"], p["v1"], eps)
    w2f, b2f = _fold_bn(p["w2"], p["b2"], p["g2"], p["be2"], p["m2"], p["v2"], eps)

    m1 = _band_matrix_1(w1f, cin)                         # (Cin, 84, 1280) f32
    m2 = _band_matrix_2(w2f)                              # (3, 640, 512)  bf16
    b1t = jnp.pad(jnp.tile(b1f, 13), (0, 120)).reshape(1, 640)
    b2t = jnp.pad(jnp.tile(b2f, 5), (0, 56)).reshape(1, 256)
    fcw_k = _permute_fc(p["fcw"])                         # (10, 1280)
    fcb = p["fcb"].reshape(1, 10)

    # ---- batch blocking: B*7 rows per block must stay sublane-aligned ----
    B = 8 if N >= 8 else N
    n_pad = ((N + B - 1) // B) * B
    xp = x_nchw if n_pad == N else jnp.pad(
        x_nchw, ((0, n_pad - N), (0, 0), (0, 0), (0, 0)))
    u0, u1, u2, u3 = _prep_inputs(xp, n_pad)

    u_spec = pl.BlockSpec((cin, B * 7, 84), lambda i: (0, i, 0))

    out = pl.pallas_call(
        _netbn_fused_kernel,
        out_shape=jax.ShapeDtypeStruct((n_pad, 10), jnp.float32),
        grid=(n_pad // B,),
        in_specs=[
            u_spec, u_spec, u_spec, u_spec,
            pl.BlockSpec((cin, 84, 1280), lambda i: (0, 0, 0)),
            pl.BlockSpec((1, 640), lambda i: (0, 0)),
            pl.BlockSpec((3, 640, 512), lambda i: (0, 0, 0)),
            pl.BlockSpec((1, 256), lambda i: (0, 0)),
            pl.BlockSpec((10, 1280), lambda i: (0, 0)),
            pl.BlockSpec((1, 10), lambda i: (0, 0)),
        ],
        out_specs=pl.BlockSpec((B, 10), lambda i: (i, 0)),
        scratch_shapes=[
            pltpu.VMEM((5 * B, 640), jnp.float32),
            pltpu.VMEM((5 * B, 640), jnp.float32),
            pltpu.VMEM((5 * B, 640), jnp.float32),
            pltpu.VMEM((5 * B, 640), jnp.float32),
            pltpu.VMEM((5, B, 256), jnp.float32),
        ],
        compiler_params=pltpu.CompilerParams(
            dimension_semantics=("parallel",),
            vmem_limit_bytes=32 * 1024 * 1024),
    )(u0, u1, u2, u3, m1, b1t, m2, b2t, fcw_k, fcb)
    return out[:N]


# --------------------------------------------------------------------------
# Pure-JAX reference (mirrors PyTorch semantics) for a sanity check
# --------------------------------------------------------------------------

def netbn_reference(x_nchw, p):
    def conv(x, w_hwio, b):
        w_oihw = jnp.transpose(w_hwio, (3, 2, 0, 1))
        y = jax.lax.conv_general_dilated(
            x, w_oihw, (1, 1), "VALID",
            dimension_numbers=("NCHW", "OIHW", "NCHW"),
            precision=jax.lax.Precision.HIGHEST)
        return y + b[None, :, None, None]

    def bn(x, g, bt, m, v):
        return (x - m[None, :, None, None]) / jnp.sqrt(
            v[None, :, None, None] + 1e-5) * g[None, :, None, None] \
            + bt[None, :, None, None]

    def pool(x):
        N, C, H, W = x.shape
        Hp, Wp = H // 2, W // 2
        x = x[:, :, :2 * Hp, :2 * Wp].reshape(N, C, Hp, 2, Wp, 2)
        return x.max(axis=(3, 5))

    x = jnp.maximum(bn(conv(x_nchw, p["w1"], p["b1"]),
                       p["g1"], p["be1"], p["m1"], p["v1"]), 0.0)
    x = pool(x)
    x = jnp.maximum(bn(conv(x, p["w2"], p["b2"]),
                       p["g2"], p["be2"], p["m2"], p["v2"]), 0.0)
    x = pool(x)
    x = x.reshape(x.shape[0], 5 * 5 * 40)
    return jnp.dot(x, p["fcw"], precision=jax.lax.Precision.HIGHEST) + p["fcb"]


# --------------------------------------------------------------------------
# Main
# --------------------------------------------------------------------------

if __name__ == "__main__":
    keys = jax.random.split(jax.random.PRNGKey(0), 16)
    num_channels = 1

    params = {
        # conv1: Conv2d(1, 40, 3, 1) -> HWIO weights
        "w1": 0.10 * jax.random.normal(keys[0], (3, 3, num_channels, 40), jnp.float32),
        "b1": 0.05 * jax.random.normal(keys[1], (40,), jnp.float32),
        "g1": 1.0 + 0.10 * jax.random.normal(keys[2], (40,), jnp.float32),
        "be1": 0.10 * jax.random.normal(keys[3], (40,), jnp.float32),
        "m1": 0.10 * jax.random.normal(keys[4], (40,), jnp.float32),
        "v1": jax.random.uniform(keys[5], (40,), jnp.float32, 0.5, 1.5),
        # conv2: Conv2d(40, 40, 3, 1)
        "w2": 0.05 * jax.random.normal(keys[6], (3, 3, 40, 40), jnp.float32),
        "b2": 0.05 * jax.random.normal(keys[7], (40,), jnp.float32),
        "g2": 1.0 + 0.10 * jax.random.normal(keys[8], (40,), jnp.float32),
        "be2": 0.10 * jax.random.normal(keys[9], (40,), jnp.float32),
        "m2": 0.10 * jax.random.normal(keys[10], (40,), jnp.float32),
        "v2": jax.random.uniform(keys[11], (40,), jnp.float32, 0.5, 1.5),
        # fc: Linear(5*5*40, 10), stored as (K, O)
        "fcw": 0.02 * jax.random.normal(keys[12], (5 * 5 * 40, 10), jnp.float32),
        "fcb": 0.05 * jax.random.normal(keys[13], (10,), jnp.float32),
    }

    # MNIST-shaped input (28x28 is required by the 5*5*40 flatten).  N=12
    # exercises both batch padding (12 -> 16) and a 2-step "parallel" grid.
    x = jax.random.normal(keys[14], (12, num_channels, 28, 28), jnp.float32)

    fwd = jax.jit(netbn_forward)
    out = jax.block_until_ready(fwd(x, params))
    ref = jax.block_until_ready(netbn_reference(x, params))

    assert out.shape == (12, 10), out.shape
    assert jnp.allclose(out, ref, rtol=1e-2, atol=1e-2), (out, ref)

    print("KERNEL_OK")
</pallas_src>

<mosaic_0001>
module attributes {stable_mosaic.version = 11 : i64} {
  func.func @_netbn_fused_kernel(%arg0: i32, %arg1: memref<1x56x84xf32, #tpu.memory_space<vmem>>, %arg2: memref<1x56x84xf32, #tpu.memory_space<vmem>>, %arg3: memref<1x56x84xf32, #tpu.memory_space<vmem>>, %arg4: memref<1x56x84xf32, #tpu.memory_space<vmem>>, %arg5: memref<1x84x1280xf32, #tpu.memory_space<vmem>>, %arg6: memref<1x640xf32, #tpu.memory_space<vmem>>, %arg7: memref<3x640x512xbf16, #tpu.memory_space<vmem>>, %arg8: memref<1x256xf32, #tpu.memory_space<vmem>>, %arg9: memref<10x1280xf32, #tpu.memory_space<vmem>>, %arg10: memref<1x10xf32, #tpu.memory_space<vmem>>, %arg11: memref<8x10xf32, #tpu.memory_space<vmem>>, %arg12: memref<40x640xf32, #tpu.memory_space<vmem>>, %arg13: memref<40x640xf32, #tpu.memory_space<vmem>>, %arg14: memref<40x640xf32, #tpu.memory_space<vmem>>, %arg15: memref<40x640xf32, #tpu.memory_space<vmem>>, %arg16: memref<5x8x256xf32, #tpu.memory_space<vmem>>) attributes {dimension_semantics = [#tpu.dimension_semantics<parallel>], iteration_bounds = array<i64: 2>, scalar_prefetch = 0 : i64, scratch_operands = 5 : i64, tpu.core_type = #tpu.core_type<tc>, window_params = [{transform_indices = @transform_0, window_bounds = array<i64: 1, 56, 84>}, {transform_indices = @transform_1, window_bounds = array<i64: 1, 56, 84>}, {transform_indices = @transform_2, window_bounds = array<i64: 1, 56, 84>}, {transform_indices = @transform_3, window_bounds = array<i64: 1, 56, 84>}, {pipeline_mode = #tpu.pipeline_mode<synchronous>, transform_indices = @transform_4, window_bounds = array<i64: 1, 84, 1280>}, {pipeline_mode = #tpu.pipeline_mode<synchronous>, transform_indices = @transform_5, window_bounds = array<i64: 1, 640>}, {pipeline_mode = #tpu.pipeline_mode<synchronous>, transform_indices = @transform_6, window_bounds = array<i64: 3, 640, 512>}, {pipeline_mode = #tpu.pipeline_mode<synchronous>, transform_indices = @transform_7, window_bounds = array<i64: 1, 256>}, {pipeline_mode = #tpu.pipeline_mode<synchronous>, transform_indices = @transform_8, window_bounds = array<i64: 10, 1280>}, {pipeline_mode = #tpu.pipeline_mode<synchronous>, transform_indices = @transform_9, window_bounds = array<i64: 1, 10>}, {transform_indices = @transform_10, window_bounds = array<i64: 8, 10>}]} {
    %c0 = arith.constant 0 : index
    %c0_0 = arith.constant 0 : index
    %0 = vector.load %arg6[%c0, %c0_0] : memref<1x640xf32, #tpu.memory_space<vmem>>, vector<1x640xf32>
    %c0_1 = arith.constant 0 : index
    %c0_2 = arith.constant 0 : index
    %c0_3 = arith.constant 0 : index
    %1 = vector.load %arg1[%c0_1, %c0_2, %c0_3] : memref<1x56x84xf32, #tpu.memory_space<vmem>>, vector<1x56x84xf32>
    %2 = vector.shape_cast %1 : vector<1x56x84xf32> to vector<56x84xf32>
    %c0_4 = arith.constant 0 : index
    %c0_5 = arith.constant 0 : index
    %c0_6 = arith.constant 0 : index
    %3 = vector.load %arg5[%c0_4, %c0_5, %c0_6] : memref<1x84x1280xf32, #tpu.memory_space<vmem>>, vector<1x84x1280xf32>
    %4 = vector.shape_cast %3 : vector<1x84x1280xf32> to vector<84x1280xf32>
    %cst = arith.constant dense<0.000000e+00> : vector<56x1280xf32>
    %5 = tpu.matmul %2, %4, %cst {dimension_numbers = #tpu.dot_dimension_numbers<[1], [0], [0], [1], [0, 0, 1, 1], [], []>} : vector<56x84xf32>, vector<84x1280xf32>, vector<56x1280xf32> -> vector<56x1280xf32>
    %c0_7 = arith.constant 0 : index
    %c0_8 = arith.constant 0 : index
    %c0_9 = arith.constant 0 : index
    %6 = vector.load %arg2[%c0_7, %c0_8, %c0_9] : memref<1x56x84xf32, #tpu.memory_space<vmem>>, vector<1x56x84xf32>
    %7 = vector.shape_cast %6 : vector<1x56x84xf32> to vector<56x84xf32>
    %c0_10 = arith.constant 0 : index
    %c0_11 = arith.constant 0 : index
    %c0_12 = arith.constant 0 : index
    %8 = vector.load %arg5[%c0_10, %c0_11, %c0_12] : memref<1x84x1280xf32, #tpu.memory_space<vmem>>, vector<1x84x1280xf32>
    %9 = vector.shape_cast %8 : vector<1x84x1280xf32> to vector<84x1280xf32>
    %cst_13 = arith.constant dense<0.000000e+00> : vector<56x1280xf32>
    %10 = tpu.matmul %7, %9, %cst_13 {dimension_numbers = #tpu.dot_dimension_numbers<[1], [0], [0], [1], [0, 0, 1, 1], [], []>} : vector<56x84xf32>, vector<84x1280xf32>, vector<56x1280xf32> -> vector<56x1280xf32>
    %11 = vector.extract_strided_slice %5 {offsets = [0, 0], sizes = [56, 640], strides = [1, 1]} : vector<56x1280xf32> to vector<56x640xf32>
    %12 = vector.extract_strided_slice %5 {offsets = [0, 640], sizes = [56, 640], strides = [1, 1]} : vector<56x1280xf32> to vector<56x640xf32>
    %13 = arith.maximumf %11, %12 : vector<56x640xf32>
    %14 = vector.extract_strided_slice %10 {offsets = [0, 0], sizes = [56, 640], strides = [1, 1]} : vector<56x1280xf32> to vector<56x640xf32>
    %15 = vector.extract_strided_slice %10 {offsets = [0, 640], sizes = [56, 640], strides = [1, 1]} : vector<56x1280xf32> to vector<56x640xf32>
    %16 = arith.maximumf %14, %15 : vector<56x640xf32>
    %17 = arith.maximumf %13, %16 : vector<56x640xf32>
    %18 = vector.broadcast %0 : vector<1x640xf32> to vector<56x640xf32>
    %19 = arith.addf %17, %18 : vector<56x640xf32>
    %cst_14 = arith.constant 0.000000e+00 : f32
    %20 = vector.broadcast %cst_14 : f32 to vector<56x640xf32>
    %21 = arith.maximumf %19, %20 : vector<56x640xf32>
    %c0_15 = arith.constant 0 : index
    %c0_16 = arith.constant 0 : index
    %c0_17 = arith.constant 0 : index
    %22 = vector.load %arg3[%c0_15, %c0_16, %c0_17] : memref<1x56x84xf32, #tpu.memory_space<vmem>>, vector<1x56x84xf32>
    %23 = vector.shape_cast %22 : vector<1x56x84xf32> to vector<56x84xf32>
    %c0_18 = arith.constant 0 : index
    %c0_19 = arith.constant 0 : index
    %c0_20 = arith.constant 0 : index
    %24 = vector.load %arg5[%c0_18, %c0_19, %c0_20] : memref<1x84x1280xf32, #tpu.memory_space<vmem>>, vector<1x84x1280xf32>
    %25 = vector.shape_cast %24 : vector<1x84x1280xf32> to vector<84x1280xf32>
    %cst_21 = arith.constant dense<0.000000e+00> : vector<56x1280xf32>
    %26 = tpu.matmul %23, %25, %cst_21 {dimension_numbers = #tpu.dot_dimension_numbers<[1], [0], [0], [1], [0, 0, 1, 1], [], []>} : vector<56x84xf32>, vector<84x1280xf32>, vector<56x1280xf32> -> vector<56x1280xf32>
    %c0_22 = arith.constant 0 : index
    %c0_23 = arith.constant 0 : index
    %c0_24 = arith.constant 0 : index
    %27 = vector.load %arg4[%c0_22, %c0_23, %c0_24] : memref<1x56x84xf32, #tpu.memory_space<vmem>>, vector<1x56x84xf32>
    %28 = vector.shape_cast %27 : vector<1x56x84xf32> to vector<56x84xf32>
    %c0_25 = arith.constant 0 : index
    %c0_26 = arith.constant 0 : index
    %c0_27 = arith.constant 0 : index
    %29 = vector.load %arg5[%c0_25, %c0_26, %c0_27] : memref<1x84x1280xf32, #tpu.memory_space<vmem>>, vector<1x84x1280xf32>
    %30 = vector.shape_cast %29 : vector<1x84x1280xf32> to vector<84x1280xf32>
    %cst_28 = arith.constant dense<0.000000e+00> : vector<56x1280xf32>
    %31 = tpu.matmul %28, %30, %cst_28 {dimension_numbers = #tpu.dot_dimension_numbers<[1], [0], [0], [1], [0, 0, 1, 1], [], []>} : vector<56x84xf32>, vector<84x1280xf32>, vector<56x1280xf32> -> vector<56x1280xf32>
    %32 = vector.extract_strided_slice %26 {offsets = [0, 0], sizes = [56, 640], strides = [1, 1]} : vector<56x1280xf32> to vector<56x640xf32>
    %33 = vector.extract_strided_slice %26 {offsets = [0, 640], sizes = [56, 640], strides = [1, 1]} : vector<56x1280xf32> to vector<56x640xf32>
    %34 = arith.maximumf %32, %33 : vector<56x640xf32>
    %35 = vector.extract_strided_slice %31 {offsets = [0, 0], sizes = [56, 640], strides = [1, 1]} : vector<56x1280xf32> to vector<56x640xf32>
    %36 = vector.extract_strided_slice %31 {offsets = [0, 640], sizes = [56, 640], strides = [1, 1]} : vector<56x1280xf32> to vector<56x640xf32>
    %37 = arith.maximumf %35, %36 : vector<56x640xf32>
    %38 = arith.maximumf %34, %37 : vector<56x640xf32>
    %39 = vector.broadcast %0 : vector<1x640xf32> to vector<56x640xf32>
    %40 = arith.addf %38, %39 : vector<56x640xf32>
    %cst_29 = arith.constant 0.000000e+00 : f32
    %41 = vector.broadcast %cst_29 : f32 to vector<56x640xf32>
    %42 = arith.maximumf %40, %41 : vector<56x640xf32>
    %43 = vector.extract_strided_slice %21 {offsets = [0, 0], sizes = [5, 640], strides = [1, 1]} : vector<56x640xf32> to vector<5x640xf32>
    %c0_30 = arith.constant 0 : index
    %c0_31 = arith.constant 0 : index
    %44 = vector.load %arg12[%c0_30, %c0_31] : memref<40x640xf32, #tpu.memory_space<vmem>>, vector<5x640xf32>
    tpu.vector_store %arg12[%c0_30, %c0_31], %43 {strides = array<i32>} : memref<40x640xf32, #tpu.memory_space<vmem>>, vector<5x640xf32>,
    %45 = vector.extract_strided_slice %21 {offsets = [1, 0], sizes = [5, 640], strides = [1, 1]} : vector<56x640xf32> to vector<5x640xf32>
    %c0_32 = arith.constant 0 : index
    %c0_33 = arith.constant 0 : index
    %46 = vector.load %arg13[%c0_32, %c0_33] : memref<40x640xf32, #tpu.memory_space<vmem>>, vector<5x640xf32>
    tpu.vector_store %arg13[%c0_32, %c0_33], %45 {strides = array<i32>} : memref<40x640xf32, #tpu.memory_space<vmem>>, vector<5x640xf32>,
    %47 = vector.extract_strided_slice %42 {offsets = [0, 0], sizes = [5, 640], strides = [1, 1]} : vector<56x640xf32> to vector<5x640xf32>
    %c0_34 = arith.constant 0 : index
    %c0_35 = arith.constant 0 : index
    %48 = vector.load %arg14[%c0_34, %c0_35] : memref<40x640xf32, #tpu.memory_space<vmem>>, vector<5x640xf32>
    tpu.vector_store %arg14[%c0_34, %c0_35], %47 {strides = array<i32>} : memref<40x640xf32, #tpu.memory_space<vmem>>, vector<5x640xf32>,
    %49 = vector.extract_strided_slice %42 {offsets = [1, 0], sizes = [5, 640], strides = [1, 1]} : vector<56x640xf32> to vector<5x640xf32>
    %c0_36 = arith.constant 0 : index
    %c0_37 = arith.constant 0 : index
    %50 = vector.load %arg15[%c0_36, %c0_37] : memref<40x640xf32, #tpu.memory_space<vmem>>, vector<5x640xf32>
    tpu.vector_store %arg15[%c0_36, %c0_37], %49 {strides = array<i32>} : memref<40x640xf32, #tpu.memory_space<vmem>>, vector<5x640xf32>,
    %51 = vector.extract_strided_slice %21 {offsets = [7, 0], sizes = [5, 640], strides = [1, 1]} : vector<56x640xf32> to vector<5x640xf32>
    %c5 = arith.constant 5 : index
    %c0_38 = arith.constant 0 : index
    %52 = vector.load %arg12[%c5, %c0_38] : memref<40x640xf32, #tpu.memory_space<vmem>>, vector<5x640xf32>
    tpu.vector_store %arg12[%c5, %c0_38], %51 {strides = array<i32>} : memref<40x640xf32, #tpu.memory_space<vmem>>, vector<5x640xf32>,
    %53 = vector.extract_strided_slice %21 {offsets = [8, 0], sizes = [5, 640], strides = [1, 1]} : vector<56x640xf32> to vector<5x640xf32>
    %c5_39 = arith.constant 5 : index
    %c0_40 = arith.constant 0 : index
    %54 = vector.load %arg13[%c5_39, %c0_40] : memref<40x640xf32, #tpu.memory_space<vmem>>, vector<5x640xf32>
    tpu.vector_store %arg13[%c5_39, %c0_40], %53 {strides = array<i32>} : memref<40x640xf32, #tpu.memory_space<vmem>>, vector<5x640xf32>,
    %55 = vector.extract_strided_slice %42 {offsets = [7, 0], sizes = [5, 640], strides = [1, 1]} : vector<56x640xf32> to vector<5x640xf32>
    %c5_41 = arith.constant 5 : index
    %c0_42 = arith.constant 0 : index
    %56 = vector.load %arg14[%c5_41, %c0_42] : memref<40x640xf32, #tpu.memory_space<vmem>>, vector<5x640xf32>
    tpu.vector_store %arg14[%c5_41, %c0_42], %55 {strides = array<i32>} : memref<40x640xf32, #tpu.memory_space<vmem>>, vector<5x640xf32>,
    %57 = vector.extract_strided_slice %42 {offsets = [8, 0], sizes = [5, 640], strides = [1, 1]} : vector<56x640xf32> to vector<5x640xf32>
    %c5_43 = arith.constant 5 : index
    %c0_44 = arith.constant 0 : index
    %58 = vector.load %arg15[%c5_43, %c0_44] : memref<40x640xf32, #tpu.memory_space<vmem>>, vector<5x640xf32>
    tpu.vector_store %arg15[%c5_43, %c0_44], %57 {strides = array<i32>} : memref<40x640xf32, #tpu.memory_space<vmem>>, vector<5x640xf32>,
    %59 = vector.extract_strided_slice %21 {offsets = [14, 0], sizes = [5, 640], strides = [1, 1]} : vector<56x640xf32> to vector<5x640xf32>
    %c10 = arith.constant 10 : index
    %c0_45 = arith.constant 0 : index
    %60 = vector.load %arg12[%c10, %c0_45] : memref<40x640xf32, #tpu.memory_space<vmem>>, vector<5x640xf32>
    tpu.vector_store %arg12[%c10, %c0_45], %59 {strides = array<i32>} : memref<40x640xf32, #tpu.memory_space<vmem>>, vector<5x640xf32>,
    %61 = vector.extract_strided_slice %21 {offsets = [15, 0], sizes = [5, 640], strides = [1, 1]} : vector<56x640xf32> to vector<5x640xf32>
    %c10_46 = arith.constant 10 : index
    %c0_47 = arith.constant 0 : index
    %62 = vector.load %arg13[%c10_46, %c0_47] : memref<40x640xf32, #tpu.memory_space<vmem>>, vector<5x640xf32>
    tpu.vector_store %arg13[%c10_46, %c0_47], %61 {strides = array<i32>} : memref<40x640xf32, #tpu.memory_space<vmem>>, vector<5x640xf32>,
    %63 = vector.extract_strided_slice %42 {offsets = [14, 0], sizes = [5, 640], strides = [1, 1]} : vector<56x640xf32> to vector<5x640xf32>
    %c10_48 = arith.constant 10 : index
    %c0_49 = arith.constant 0 : index
    %64 = vector.load %arg14[%c10_48, %c0_49] : memref<40x640xf32, #tpu.memory_space<vmem>>, vector<5x640xf32>
    tpu.vector_store %arg14[%c10_48, %c0_49], %63 {strides = array<i32>} : memref<40x640xf32, #tpu.memory_space<vmem>>, vector<5x640xf32>,
    %65 = vector.extract_strided_slice %42 {offsets = [15, 0], sizes = [5, 640], strides = [1, 1]} : vector<56x640xf32> to vector<5x640xf32>
    %c10_50 = arith.constant 10 : index
    %c0_51 = arith.constant 0 : index
    %66 = vector.load %arg15[%c10_50, %c0_51] : memref<40x640xf32, #tpu.memory_space<vmem>>, vector<5x640xf32>
    tpu.vector_store %arg15[%c10_50, %c0_51], %65 {strides = array<i32>} : memref<40x640xf32, #tpu.memory_space<vmem>>, vector<5x640xf32>,
    %67 = vector.extract_strided_slice %21 {offsets = [21, 0], sizes = [5, 640], strides = [1, 1]} : vector<56x640xf32> to vector<5x640xf32>
    %c15 = arith.constant 15 : index
    %c0_52 = arith.constant 0 : index
    %68 = vector.load %arg12[%c15, %c0_52] : memref<40x640xf32, #tpu.memory_space<vmem>>, vector<5x640xf32>
    tpu.vector_store %arg12[%c15, %c0_52], %67 {strides = array<i32>} : memref<40x640xf32, #tpu.memory_space<vmem>>, vector<5x640xf32>,
    %69 = vector.extract_strided_slice %21 {offsets = [22, 0], sizes = [5, 640], strides = [1, 1]} : vector<56x640xf32> to vector<5x640xf32>
    %c15_53 = arith.constant 15 : index
    %c0_54 = arith.constant 0 : index
    %70 = vector.load %arg13[%c15_53, %c0_54] : memref<40x640xf32, #tpu.memory_space<vmem>>, vector<5x640xf32>
    tpu.vector_store %arg13[%c15_53, %c0_54], %69 {strides = array<i32>} : memref<40x640xf32, #tpu.memory_space<vmem>>, vector<5x640xf32>,
    %71 = vector.extract_strided_slice %42 {offsets = [21, 0], sizes = [5, 640], strides = [1, 1]} : vector<56x640xf32> to vector<5x640xf32>
    %c15_55 = arith.constant 15 : index
    %c0_56 = arith.constant 0 : index
    %72 = vector.load %arg14[%c15_55, %c0_56] : memref<40x640xf32, #tpu.memory_space<vmem>>, vector<5x640xf32>
    tpu.vector_store %arg14[%c15_55, %c0_56], %71 {strides = array<i32>} : memref<40x640xf32, #tpu.memory_space<vmem>>, vector<5x640xf32>,
    %73 = vector.extract_strided_slice %42 {offsets = [22, 0], sizes = [5, 640], strides = [1, 1]} : vector<56x640xf32> to vector<5x640xf32>
    %c15_57 = arith.constant 15 : index
    %c0_58 = arith.constant 0 : index
    %74 = vector.load %arg15[%c15_57, %c0_58] : memref<40x640xf32, #tpu.memory_space<vmem>>, vector<5x640xf32>
    tpu.vector_store %arg15[%c15_57, %c0_58], %73 {strides = array<i32>} : memref<40x640xf32, #tpu.memory_space<vmem>>, vector<5x640xf32>,
    %75 = vector.extract_strided_slice %21 {offsets = [28, 0], sizes = [5, 640], strides = [1, 1]} : vector<56x640xf32> to vector<5x640xf32>
    %c20 = arith.constant 20 : index
    %c0_59 = arith.constant 0 : index
    %76 = vector.load %arg12[%c20, %c0_59] : memref<40x640xf32, #tpu.memory_space<vmem>>, vector<5x640xf32>
    tpu.vector_store %arg12[%c20, %c0_59], %75 {strides = array<i32>} : memref<40x640xf32, #tpu.memory_space<vmem>>, vector<5x640xf32>,
    %77 = vector.extract_strided_slice %21 {offsets = [29, 0], sizes = [5, 640], strides = [1, 1]} : vector<56x640xf32> to vector<5x640xf32>
    %c20_60 = arith.constant 20 : index
    %c0_61 = arith.constant 0 : index
    %78 = vector.load %arg13[%c20_60, %c0_61] : memref<40x640xf32, #tpu.memory_space<vmem>>, vector<5x640xf32>
    tpu.vector_store %arg13[%c20_60, %c0_61], %77 {strides = array<i32>} : memref<40x640xf32, #tpu.memory_space<vmem>>, vector<5x640xf32>,
    %79 = vector.extract_strided_slice %42 {offsets = [28, 0], sizes = [5, 640], strides = [1, 1]} : vector<56x640xf32> to vector<5x640xf32>
    %c20_62 = arith.constant 20 : index
    %c0_63 = arith.constant 0 : index
    %80 = vector.load %arg14[%c20_62, %c0_63] : memref<40x640xf32, #tpu.memory_space<vmem>>, vector<5x640xf32>
    tpu.vector_store %arg14[%c20_62, %c0_63], %79 {strides = array<i32>} : memref<40x640xf32, #tpu.memory_space<vmem>>, vector<5x640xf32>,
    %81 = vector.extract_strided_slice %42 {offsets = [29, 0], sizes = [5, 640], strides = [1, 1]} : vector<56x640xf32> to vector<5x640xf32>
    %c20_64 = arith.constant 20 : index
    %c0_65 = arith.constant 0 : index
    %82 = vector.load %arg15[%c20_64, %c0_65] : memref<40x640xf32, #tpu.memory_space<vmem>>, vector<5x640xf32>
    tpu.vector_store %arg15[%c20_64, %c0_65], %81 {strides = array<i32>} : memref<40x640xf32, #tpu.memory_space<vmem>>, vector<5x640xf32>,
    %83 = vector.extract_strided_slice %21 {offsets = [35, 0], sizes = [5, 640], strides = [1, 1]} : vector<56x640xf32> to vector<5x640xf32>
    %c25 = arith.constant 25 : index
    %c0_66 = arith.constant 0 : index
    %84 = vector.load %arg12[%c25, %c0_66] : memref<40x640xf32, #tpu.memory_space<vmem>>, vector<5x640xf32>
    tpu.vector_store %arg12[%c25, %c0_66], %83 {strides = array<i32>} : memref<40x640xf32, #tpu.memory_space<vmem>>, vector<5x640xf32>,
    %85 = vector.extract_strided_slice %21 {offsets = [36, 0], sizes = [5, 640], strides = [1, 1]} : vector<56x640xf32> to vector<5x640xf32>
    %c25_67 = arith.constant 25 : index
    %c0_68 = arith.constant 0 : index
    %86 = vector.load %arg13[%c25_67, %c0_68] : memref<40x640xf32, #tpu.memory_space<vmem>>, vector<5x640xf32>
    tpu.vector_store %arg13[%c25_67, %c0_68], %85 {strides = array<i32>} : memref<40x640xf32, #tpu.memory_space<vmem>>, vector<5x640xf32>,
    %87 = vector.extract_strided_slice %42 {offsets = [35, 0], sizes = [5, 640], strides = [1, 1]} : vector<56x640xf32> to vector<5x640xf32>
    %c25_69 = arith.constant 25 : index
    %c0_70 = arith.constant 0 : index
    %88 = vector.load %arg14[%c25_69, %c0_70] : memref<40x640xf32, #tpu.memory_space<vmem>>, vector<5x640xf32>
    tpu.vector_store %arg14[%c25_69, %c0_70], %87 {strides = array<i32>} : memref<40x640xf32, #tpu.memory_space<vmem>>, vector<5x640xf32>,
    %89 = vector.extract_strided_slice %42 {offsets = [36, 0], sizes = [5, 640], strides = [1, 1]} : vector<56x640xf32> to vector<5x640xf32>
    %c25_71 = arith.constant 25 : index
    %c0_72 = arith.constant 0 : index
    %90 = vector.load %arg15[%c25_71, %c0_72] : memref<40x640xf32, #tpu.memory_space<vmem>>, vector<5x640xf32>
    tpu.vector_store %arg15[%c25_71, %c0_72], %89 {strides = array<i32>} : memref<40x640xf32, #tpu.memory_space<vmem>>, vector<5x640xf32>,
    %91 = vector.extract_strided_slice %21 {offsets = [42, 0], sizes = [5, 640], strides = [1, 1]} : vector<56x640xf32> to vector<5x640xf32>
    %c30 = arith.constant 30 : index
    %c0_73 = arith.constant 0 : index
    %92 = vector.load %arg12[%c30, %c0_73] : memref<40x640xf32, #tpu.memory_space<vmem>>, vector<5x640xf32>
    tpu.vector_store %arg12[%c30, %c0_73], %91 {strides = array<i32>} : memref<40x640xf32, #tpu.memory_space<vmem>>, vector<5x640xf32>,
    %93 = vector.extract_strided_slice %21 {offsets = [43, 0], sizes = [5, 640], strides = [1, 1]} : vector<56x640xf32> to vector<5x640xf32>
    %c30_74 = arith.constant 30 : index
    %c0_75 = arith.constant 0 : index
    %94 = vector.load %arg13[%c30_74, %c0_75] : memref<40x640xf32, #tpu.memory_space<vmem>>, vector<5x640xf32>
    tpu.vector_store %arg13[%c30_74, %c0_75], %93 {strides = array<i32>} : memref<40x640xf32, #tpu.memory_space<vmem>>, vector<5x640xf32>,
    %95 = vector.extract_strided_slice %42 {offsets = [42, 0], sizes = [5, 640], strides = [1, 1]} : vector<56x640xf32> to vector<5x640xf32>
    %c30_76 = arith.constant 30 : index
    %c0_77 = arith.constant 0 : index
    %96 = vector.load %arg14[%c30_76, %c0_77] : memref<40x640xf32, #tpu.memory_space<vmem>>, vector<5x640xf32>
    tpu.vector_store %arg14[%c30_76, %c0_77], %95 {strides = array<i32>} : memref<40x640xf32, #tpu.memory_space<vmem>>, vector<5x640xf32>,
    %97 = vector.extract_strided_slice %42 {offsets = [43, 0], sizes = [5, 640], strides = [1, 1]} : vector<56x640xf32> to vector<5x640xf32>
    %c30_78 = arith.constant 30 : index
    %c0_79 = arith.constant 0 : index
    %98 = vector.load %arg15[%c30_78, %c0_79] : memref<40x640xf32, #tpu.memory_space<vmem>>, vector<5x640xf32>
    tpu.vector_store %arg15[%c30_78, %c0_79], %97 {strides = array<i32>} : memref<40x640xf32, #tpu.memory_space<vmem>>, vector<5x640xf32>,
    %99 = vector.extract_strided_slice %21 {offsets = [49, 0], sizes = [5, 640], strides = [1, 1]} : vector<56x640xf32> to vector<5x640xf32>
    %c35 = arith.constant 35 : index
    %c0_80 = arith.constant 0 : index
    %100 = vector.load %arg12[%c35, %c0_80] : memref<40x640xf32, #tpu.memory_space<vmem>>, vector<5x640xf32>
    tpu.vector_store %arg12[%c35, %c0_80], %99 {strides = array<i32>} : memref<40x640xf32, #tpu.memory_space<vmem>>, vector<5x640xf32>,
    %101 = vector.extract_strided_slice %21 {offsets = [50, 0], sizes = [5, 640], strides = [1, 1]} : vector<56x640xf32> to vector<5x640xf32>
    %c35_81 = arith.constant 35 : index
    %c0_82 = arith.constant 0 : index
    %102 = vector.load %arg13[%c35_81, %c0_82] : memref<40x640xf32, #tpu.memory_space<vmem>>, vector<5x640xf32>
    tpu.vector_store %arg13[%c35_81, %c0_82], %101 {strides = array<i32>} : memref<40x640xf32, #tpu.memory_space<vmem>>, vector<5x640xf32>,
    %103 = vector.extract_strided_slice %42 {offsets = [49, 0], sizes = [5, 640], strides = [1, 1]} : vector<56x640xf32> to vector<5x640xf32>
    %c35_83 = arith.constant 35 : index
    %c0_84 = arith.constant 0 : index
    %104 = vector.load %arg14[%c35_83, %c0_84] : memref<40x640xf32, #tpu.memory_space<vmem>>, vector<5x640xf32>
    tpu.vector_store %arg14[%c35_83, %c0_84], %103 {strides = array<i32>} : memref<40x640xf32, #tpu.memory_space<vmem>>, vector<5x640xf32>,
    %105 = vector.extract_strided_slice %42 {offsets = [50, 0], sizes = [5, 640], strides = [1, 1]} : vector<56x640xf32> to vector<5x640xf32>
    %c35_85 = arith.constant 35 : index
    %c0_86 = arith.constant 0 : index
    %106 = vector.load %arg15[%c35_85, %c0_86] : memref<40x640xf32, #tpu.memory_space<vmem>>, vector<5x640xf32>
    tpu.vector_store %arg15[%c35_85, %c0_86], %105 {strides = array<i32>} : memref<40x640xf32, #tpu.memory_space<vmem>>, vector<5x640xf32>,
    %c0_87 = arith.constant 0 : index
    %c0_88 = arith.constant 0 : index
    %107 = vector.load %arg12[%c0_87, %c0_88] : memref<40x640xf32, #tpu.memory_space<vmem>>, vector<40x640xf32>
    %108 = arith.truncf %107 : vector<40x640xf32> to vector<40x640xbf16>
    %c0_89 = arith.constant 0 : index
    %c0_90 = arith.constant 0 : index
    %109 = vector.load %arg13[%c0_89, %c0_90] : memref<40x640xf32, #tpu.memory_space<vmem>>, vector<40x640xf32>
    %110 = arith.truncf %109 : vector<40x640xf32> to vector<40x640xbf16>
    %c0_91 = arith.constant 0 : index
    %c0_92 = arith.constant 0 : index
    %111 = vector.load %arg14[%c0_91, %c0_92] : memref<40x640xf32, #tpu.memory_space<vmem>>, vector<40x640xf32>
    %112 = arith.truncf %111 : vector<40x640xf32> to vector<40x640xbf16>
    %c0_93 = arith.constant 0 : index
    %c0_94 = arith.constant 0 : index
    %113 = vector.load %arg15[%c0_93, %c0_94] : memref<40x640xf32, #tpu.memory_space<vmem>>, vector<40x640xf32>
    %114 = arith.truncf %113 : vector<40x640xf32> to vector<40x640xbf16>
    %c0_95 = arith.constant 0 : index
    %c0_96 = arith.constant 0 : index
    %c0_97 = arith.constant 0 : index
    %115 = vector.load %arg7[%c0_95, %c0_96, %c0_97] : memref<3x640x512xbf16, #tpu.memory_space<vmem>>, vector<1x640x512xbf16>
    %116 = vector.shape_cast %115 : vector<1x640x512xbf16> to vector<640x512xbf16>
    %c1 = arith.constant 1 : index
    %c0_98 = arith.constant 0 : index
    %c0_99 = arith.constant 0 : index
    %117 = vector.load %arg7[%c1, %c0_98, %c0_99] : memref<3x640x512xbf16, #tpu.memory_space<vmem>>, vector<1x640x512xbf16>
    %118 = vector.shape_cast %117 : vector<1x640x512xbf16> to vector<640x512xbf16>
    %c2 = arith.constant 2 : index
    %c0_100 = arith.constant 0 : index
    %c0_101 = arith.constant 0 : index
    %119 = vector.load %arg7[%c2, %c0_100, %c0_101] : memref<3x640x512xbf16, #tpu.memory_space<vmem>>, vector<1x640x512xbf16>
    %120 = vector.shape_cast %119 : vector<1x640x512xbf16> to vector<640x512xbf16>
    %cst_102 = arith.constant dense<0.000000e+00> : vector<40x512xf32>
    %121 = tpu.matmul %108, %116, %cst_102 {dimension_numbers = #tpu.dot_dimension_numbers<[1], [0], [0], [1], [0, 0, 1, 1], [], []>} : vector<40x640xbf16>, vector<640x512xbf16>, vector<40x512xf32> -> vector<40x512xf32>
    %cst_103 = arith.constant dense<0.000000e+00> : vector<40x512xf32>
    %122 = tpu.matmul %112, %118, %cst_103 {dimension_numbers = #tpu.dot_dimension_numbers<[1], [0], [0], [1], [0, 0, 1, 1], [], []>} : vector<40x640xbf16>, vector<640x512xbf16>, vector<40x512xf32> -> vector<40x512xf32>
    %123 = arith.addf %121, %122 : vector<40x512xf32>
    %cst_104 = arith.constant dense<0.000000e+00> : vector<40x512xf32>
    %124 = tpu.matmul %110, %120, %cst_104 {dimension_numbers = #tpu.dot_dimension_numbers<[1], [0], [0], [1], [0, 0, 1, 1], [], []>} : vector<40x640xbf16>, vector<640x512xbf16>, vector<40x512xf32> -> vector<40x512xf32>
    %125 = arith.addf %123, %124 : vector<40x512xf32>
    %cst_105 = arith.constant dense<0.000000e+00> : vector<40x512xf32>
    %126 = tpu.matmul %112, %116, %cst_105 {dimension_numbers = #tpu.dot_dimension_numbers<[1], [0], [0], [1], [0, 0, 1, 1], [], []>} : vector<40x640xbf16>, vector<640x512xbf16>, vector<40x512xf32> -> vector<40x512xf32>
    %cst_106 = arith.constant dense<0.000000e+00> : vector<40x512xf32>
    %127 = tpu.matmul %110, %118, %cst_106 {dimension_numbers = #tpu.dot_dimension_numbers<[1], [0], [0], [1], [0, 0, 1, 1], [], []>} : vector<40x640xbf16>, vector<640x512xbf16>, vector<40x512xf32> -> vector<40x512xf32>
    %128 = arith.addf %126, %127 : vector<40x512xf32>
    %cst_107 = arith.constant dense<0.000000e+00> : vector<40x512xf32>
    %129 = tpu.matmul %114, %120, %cst_107 {dimension_numbers = #tpu.dot_dimension_numbers<[1], [0], [0], [1], [0, 0, 1, 1], [], []>} : vector<40x640xbf16>, vector<640x512xbf16>, vector<40x512xf32> -> vector<40x512xf32>
    %130 = arith.addf %128, %129 : vector<40x512xf32>
    %c0_108 = arith.constant 0 : index
    %c0_109 = arith.constant 0 : index
    %131 = vector.load %arg8[%c0_108, %c0_109] : memref<1x256xf32, #tpu.memory_space<vmem>>, vector<1x256xf32>
    %132 = vector.extract_strided_slice %125 {offsets = [0, 0], sizes = [40, 256], strides = [1, 1]} : vector<40x512xf32> to vector<40x256xf32>
    %133 = vector.extract_strided_slice %125 {offsets = [0, 256], sizes = [40, 256], strides = [1, 1]} : vector<40x512xf32> to vector<40x256xf32>
    %134 = arith.maximumf %132, %133 : vector<40x256xf32>
    %135 = vector.extract_strided_slice %130 {offsets = [0, 0], sizes = [40, 256], strides = [1, 1]} : vector<40x512xf32> to vector<40x256xf32>
    %136 = vector.extract_strided_slice %130 {offsets = [0, 256], sizes = [40, 256], strides = [1, 1]} : vector<40x512xf32> to vector<40x256xf32>
    %137 = arith.maximumf %135, %136 : vector<40x256xf32>
    %138 = arith.maximumf %134, %137 : vector<40x256xf32>
    %139 = vector.broadcast %131 : vector<1x256xf32> to vector<40x256xf32>
    %140 = arith.addf %138, %139 : vector<40x256xf32>
    %cst_110 = arith.constant 0.000000e+00 : f32
    %141 = vector.broadcast %cst_110 : f32 to vector<40x256xf32>
    %142 = arith.maximumf %140, %141 : vector<40x256xf32>
    %143 = vector.extract_strided_slice %142 {offsets = [0, 0], sizes = [1, 256], strides = [1, 1]} : vector<40x256xf32> to vector<1x256xf32>
    %c0_111 = arith.constant 0 : index
    %c0_112 = arith.constant 0 : index
    %c0_113 = arith.constant 0 : index
    %144 = vector.load %arg16[%c0_111, %c0_112, %c0_113] : memref<5x8x256xf32, #tpu.memory_space<vmem>>, vector<1x1x256xf32>
    %145 = vector.shape_cast %144 : vector<1x1x256xf32> to vector<1x256xf32>
    %146 = vector.shape_cast %143 : vector<1x256xf32> to vector<1x1x256xf32>
    tpu.vector_store %arg16[%c0_111, %c0_112, %c0_113], %146 {strides = array<i32>} : memref<5x8x256xf32, #tpu.memory_space<vmem>>, vector<1x1x256xf32>,
    %147 = vector.extract_strided_slice %142 {offsets = [1, 0], sizes = [1, 256], strides = [1, 1]} : vector<40x256xf32> to vector<1x256xf32>
    %c1_114 = arith.constant 1 : index
    %c0_115 = arith.constant 0 : index
    %c0_116 = arith.constant 0 : index
    %148 = vector.load %arg16[%c1_114, %c0_115, %c0_116] : memref<5x8x256xf32, #tpu.memory_space<vmem>>, vector<1x1x256xf32>
    %149 = vector.shape_cast %148 : vector<1x1x256xf32> to vector<1x256xf32>
    %150 = vector.shape_cast %147 : vector<1x256xf32> to vector<1x1x256xf32>
    tpu.vector_store %arg16[%c1_114, %c0_115, %c0_116], %150 {strides = array<i32>} : memref<5x8x256xf32, #tpu.memory_space<vmem>>, vector<1x1x256xf32>,
    %151 = vector.extract_strided_slice %142 {offsets = [2, 0], sizes = [1, 256], strides = [1, 1]} : vector<40x256xf32> to vector<1x256xf32>
    %c2_117 = arith.constant 2 : index
    %c0_118 = arith.constant 0 : index
    %c0_119 = arith.constant 0 : index
    %152 = vector.load %arg16[%c2_117, %c0_118, %c0_119] : memref<5x8x256xf32, #tpu.memory_space<vmem>>, vector<1x1x256xf32>
    %153 = vector.shape_cast %152 : vector<1x1x256xf32> to vector<1x256xf32>
    %154 = vector.shape_cast %151 : vector<1x256xf32> to vector<1x1x256xf32>
    tpu.vector_store %arg16[%c2_117, %c0_118, %c0_119], %154 {strides = array<i32>} : memref<5x8x256xf32, #tpu.memory_space<vmem>>, vector<1x1x256xf32>,
    %155 = vector.extract_strided_slice %142 {offsets = [3, 0], sizes = [1, 256], strides = [1, 1]} : vector<40x256xf32> to vector<1x256xf32>
    %c3 = arith.constant 3 : index
    %c0_120 = arith.constant 0 : index
    %c0_121 = arith.constant 0 : index
    %156 = vector.load %arg16[%c3, %c0_120, %c0_121] : memref<5x8x256xf32, #tpu.memory_space<vmem>>, vector<1x1x256xf32>
    %157 = vector.shape_cast %156 : vector<1x1x256xf32> to vector<1x256xf32>
    %158 = vector.shape_cast %155 : vector<1x256xf32> to vector<1x1x256xf32>
    tpu.vector_store %arg16[%c3, %c0_120, %c0_121], %158 {strides = array<i32>} : memref<5x8x256xf32, #tpu.memory_space<vmem>>, vector<1x1x256xf32>,
    %159 = vector.extract_strided_slice %142 {offsets = [4, 0], sizes = [1, 256], strides = [1, 1]} : vector<40x256xf32> to vector<1x256xf32>
    %c4 = arith.constant 4 : index
    %c0_122 = arith.constant 0 : index
    %c0_123 = arith.constant 0 : index
    %160 = vector.load %arg16[%c4, %c0_122, %c0_123] : memref<5x8x256xf32, #tpu.memory_space<vmem>>, vector<1x1x256xf32>
    %161 = vector.shape_cast %160 : vector<1x1x256xf32> to vector<1x256xf32>
    %162 = vector.shape_cast %159 : vector<1x256xf32> to vector<1x1x256xf32>
    tpu.vector_store %arg16[%c4, %c0_122, %c0_123], %162 {strides = array<i32>} : memref<5x8x256xf32, #tpu.memory_space<vmem>>, vector<1x1x256xf32>,
    %163 = vector.extract_strided_slice %142 {offsets = [5, 0], sizes = [1, 256], strides = [1, 1]} : vector<40x256xf32> to vector<1x256xf32>
    %c0_124 = arith.constant 0 : index
    %c1_125 = arith.constant 1 : index
    %c0_126 = arith.constant 0 : index
    %164 = vector.load %arg16[%c0_124, %c1_125, %c0_126] : memref<5x8x256xf32, #tpu.memory_space<vmem>>, vector<1x1x256xf32>
    %165 = vector.shape_cast %164 : vector<1x1x256xf32> to vector<1x256xf32>
    %166 = vector.shape_cast %163 : vector<1x256xf32> to vector<1x1x256xf32>
    tpu.vector_store %arg16[%c0_124, %c1_125, %c0_126], %166 {strides = array<i32>} : memref<5x8x256xf32, #tpu.memory_space<vmem>>, vector<1x1x256xf32>,
    %167 = vector.extract_strided_slice %142 {offsets = [6, 0], sizes = [1, 256], strides = [1, 1]} : vector<40x256xf32> to vector<1x256xf32>
    %c1_127 = arith.constant 1 : index
    %c1_128 = arith.constant 1 : index
    %c0_129 = arith.constant 0 : index
    %168 = vector.load %arg16[%c1_127, %c1_128, %c0_129] : memref<5x8x256xf32, #tpu.memory_space<vmem>>, vector<1x1x256xf32>
    %169 = vector.shape_cast %168 : vector<1x1x256xf32> to vector<1x256xf32>
    %170 = vector.shape_cast %167 : vector<1x256xf32> to vector<1x1x256xf32>
    tpu.vector_store %arg16[%c1_127, %c1_128, %c0_129], %170 {strides = array<i32>} : memref<5x8x256xf32, #tpu.memory_space<vmem>>, vector<1x1x256xf32>,
    %171 = vector.extract_strided_slice %142 {offsets = [7, 0], sizes = [1, 256], strides = [1, 1]} : vector<40x256xf32> to vector<1x256xf32>
    %c2_130 = arith.constant 2 : index
    %c1_131 = arith.constant 1 : index
    %c0_132 = arith.constant 0 : index
    %172 = vector.load %arg16[%c2_130, %c1_131, %c0_132] : memref<5x8x256xf32, #tpu.memory_space<vmem>>, vector<1x1x256xf32>
    %173 = vector.shape_cast %172 : vector<1x1x256xf32> to vector<1x256xf32>
    %174 = vector.shape_cast %171 : vector<1x256xf32> to vector<1x1x256xf32>
    tpu.vector_store %arg16[%c2_130, %c1_131, %c0_132], %174 {strides = array<i32>} : memref<5x8x256xf32, #tpu.memory_space<vmem>>, vector<1x1x256xf32>,
    %175 = vector.extract_strided_slice %142 {offsets = [8, 0], sizes = [1, 256], strides = [1, 1]} : vector<40x256xf32> to vector<1x256xf32>
    %c3_133 = arith.constant 3 : index
    %c1_134 = arith.constant 1 : index
    %c0_135 = arith.constant 0 : index
    %176 = vector.load %arg16[%c3_133, %c1_134, %c0_135] : memref<5x8x256xf32, #tpu.memory_space<vmem>>, vector<1x1x256xf32>
    %177 = vector.shape_cast %176 : vector<1x1x256xf32> to vector<1x256xf32>
    %178 = vector.shape_cast %175 : vector<1x256xf32> to vector<1x1x256xf32>
    tpu.vector_store %arg16[%c3_133, %c1_134, %c0_135], %178 {strides = array<i32>} : memref<5x8x256xf32, #tpu.memory_space<vmem>>, vector<1x1x256xf32>,
    %179 = vector.extract_strided_slice %142 {offsets = [9, 0], sizes = [1, 256], strides = [1, 1]} : vector<40x256xf32> to vector<1x256xf32>
    %c4_136 = arith.constant 4 : index
    %c1_137 = arith.constant 1 : index
    %c0_138 = arith.constant 0 : index
    %180 = vector.load %arg16[%c4_136, %c1_137, %c0_138] : memref<5x8x256xf32, #tpu.memory_space<vmem>>, vector<1x1x256xf32>
    %181 = vector.shape_cast %180 : vector<1x1x256xf32> to vector<1x256xf32>
    %182 = vector.shape_cast %179 : vector<1x256xf32> to vector<1x1x256xf32>
    tpu.vector_store %arg16[%c4_136, %c1_137, %c0_138], %182 {strides = array<i32>} : memref<5x8x256xf32, #tpu.memory_space<vmem>>, vector<1x1x256xf32>,
    %183 = vector.extract_strided_slice %142 {offsets = [10, 0], sizes = [1, 256], strides = [1, 1]} : vector<40x256xf32> to vector<1x256xf32>
    %c0_139 = arith.constant 0 : index
    %c2_140 = arith.constant 2 : index
    %c0_141 = arith.constant 0 : index
    %184 = vector.load %arg16[%c0_139, %c2_140, %c0_141] : memref<5x8x256xf32, #tpu.memory_space<vmem>>, vector<1x1x256xf32>
    %185 = vector.shape_cast %184 : vector<1x1x256xf32> to vector<1x256xf32>
    %186 = vector.shape_cast %183 : vector<1x256xf32> to vector<1x1x256xf32>
    tpu.vector_store %arg16[%c0_139, %c2_140, %c0_141], %186 {strides = array<i32>} : memref<5x8x256xf32, #tpu.memory_space<vmem>>, vector<1x1x256xf32>,
    %187 = vector.extract_strided_slice %142 {offsets = [11, 0], sizes = [1, 256], strides = [1, 1]} : vector<40x256xf32> to vector<1x256xf32>
    %c1_142 = arith.constant 1 : index
    %c2_143 = arith.constant 2 : index
    %c0_144 = arith.constant 0 : index
    %188 = vector.load %arg16[%c1_142, %c2_143, %c0_144] : memref<5x8x256xf32, #tpu.memory_space<vmem>>, vector<1x1x256xf32>
    %189 = vector.shape_cast %188 : vector<1x1x256xf32> to vector<1x256xf32>
    %190 = vector.shape_cast %187 : vector<1x256xf32> to vector<1x1x256xf32>
    tpu.vector_store %arg16[%c1_142, %c2_143, %c0_144], %190 {strides = array<i32>} : memref<5x8x256xf32, #tpu.memory_space<vmem>>, vector<1x1x256xf32>,
    %191 = vector.extract_strided_slice %142 {offsets = [12, 0], sizes = [1, 256], strides = [1, 1]} : vector<40x256xf32> to vector<1x256xf32>
    %c2_145 = arith.constant 2 : index
    %c2_146 = arith.constant 2 : index
    %c0_147 = arith.constant 0 : index
    %192 = vector.load %arg16[%c2_145, %c2_146, %c0_147] : memref<5x8x256xf32, #tpu.memory_space<vmem>>, vector<1x1x256xf32>
    %193 = vector.shape_cast %192 : vector<1x1x256xf32> to vector<1x256xf32>
    %194 = vector.shape_cast %191 : vector<1x256xf32> to vector<1x1x256xf32>
    tpu.vector_store %arg16[%c2_145, %c2_146, %c0_147], %194 {strides = array<i32>} : memref<5x8x256xf32, #tpu.memory_space<vmem>>, vector<1x1x256xf32>,
    %195 = vector.extract_strided_slice %142 {offsets = [13, 0], sizes = [1, 256], strides = [1, 1]} : vector<40x256xf32> to vector<1x256xf32>
    %c3_148 = arith.constant 3 : index
    %c2_149 = arith.constant 2 : index
    %c0_150 = arith.constant 0 : index
    %196 = vector.load %arg16[%c3_148, %c2_149, %c0_150] : memref<5x8x256xf32, #tpu.memory_space<vmem>>, vector<1x1x256xf32>
    %197 = vector.shape_cast %196 : vector<1x1x256xf32> to vector<1x256xf32>
    %198 = vector.shape_cast %195 : vector<1x256xf32> to vector<1x1x256xf32>
    tpu.vector_store %arg16[%c3_148, %c2_149, %c0_150], %198 {strides = array<i32>} : memref<5x8x256xf32, #tpu.memory_space<vmem>>, vector<1x1x256xf32>,
    %199 = vector.extract_strided_slice %142 {offsets = [14, 0], sizes = [1, 256], strides = [1, 1]} : vector<40x256xf32> to vector<1x256xf32>
    %c4_151 = arith.constant 4 : index
    %c2_152 = arith.constant 2 : index
    %c0_153 = arith.constant 0 : index
    %200 = vector.load %arg16[%c4_151, %c2_152, %c0_153] : memref<5x8x256xf32, #tpu.memory_space<vmem>>, vector<1x1x256xf32>
    %201 = vector.shape_cast %200 : vector<1x1x256xf32> to vector<1x256xf32>
    %202 = vector.shape_cast %199 : vector<1x256xf32> to vector<1x1x256xf32>
    tpu.vector_store %arg16[%c4_151, %c2_152, %c0_153], %202 {strides = array<i32>} : memref<5x8x256xf32, #tpu.memory_space<vmem>>, vector<1x1x256xf32>,
    %203 = vector.extract_strided_slice %142 {offsets = [15, 0], sizes = [1, 256], strides = [1, 1]} : vector<40x256xf32> to vector<1x256xf32>
    %c0_154 = arith.constant 0 : index
    %c3_155 = arith.constant 3 : index
    %c0_156 = arith.constant 0 : index
    %204 = vector.load %arg16[%c0_154, %c3_155, %c0_156] : memref<5x8x256xf32, #tpu.memory_space<vmem>>, vector<1x1x256xf32>
    %205 = vector.shape_cast %204 : vector<1x1x256xf32> to vector<1x256xf32>
    %206 = vector.shape_cast %203 : vector<1x256xf32> to vector<1x1x256xf32>
    tpu.vector_store %arg16[%c0_154, %c3_155, %c0_156], %206 {strides = array<i32>} : memref<5x8x256xf32, #tpu.memory_space<vmem>>, vector<1x1x256xf32>,
    %207 = vector.extract_strided_slice %142 {offsets = [16, 0], sizes = [1, 256], strides = [1, 1]} : vector<40x256xf32> to vector<1x256xf32>
    %c1_157 = arith.constant 1 : index
    %c3_158 = arith.constant 3 : index
    %c0_159 = arith.constant 0 : index
    %208 = vector.load %arg16[%c1_157, %c3_158, %c0_159] : memref<5x8x256xf32, #tpu.memory_space<vmem>>, vector<1x1x256xf32>
    %209 = vector.shape_cast %208 : vector<1x1x256xf32> to vector<1x256xf32>
    %210 = vector.shape_cast %207 : vector<1x256xf32> to vector<1x1x256xf32>
    tpu.vector_store %arg16[%c1_157, %c3_158, %c0_159], %210 {strides = array<i32>} : memref<5x8x256xf32, #tpu.memory_space<vmem>>, vector<1x1x256xf32>,
    %211 = vector.extract_strided_slice %142 {offsets = [17, 0], sizes = [1, 256], strides = [1, 1]} : vector<40x256xf32> to vector<1x256xf32>
    %c2_160 = arith.constant 2 : index
    %c3_161 = arith.constant 3 : index
    %c0_162 = arith.constant 0 : index
    %212 = vector.load %arg16[%c2_160, %c3_161, %c0_162] : memref<5x8x256xf32, #tpu.memory_space<vmem>>, vector<1x1x256xf32>
    %213 = vector.shape_cast %212 : vector<1x1x256xf32> to vector<1x256xf32>
    %214 = vector.shape_cast %211 : vector<1x256xf32> to vector<1x1x256xf32>
    tpu.vector_store %arg16[%c2_160, %c3_161, %c0_162], %214 {strides = array<i32>} : memref<5x8x256xf32, #tpu.memory_space<vmem>>, vector<1x1x256xf32>,
    %215 = vector.extract_strided_slice %142 {offsets = [18, 0], sizes = [1, 256], strides = [1, 1]} : vector<40x256xf32> to vector<1x256xf32>
    %c3_163 = arith.constant 3 : index
    %c3_164 = arith.constant 3 : index
    %c0_165 = arith.constant 0 : index
    %216 = vector.load %arg16[%c3_163, %c3_164, %c0_165] : memref<5x8x256xf32, #tpu.memory_space<vmem>>, vector<1x1x256xf32>
    %217 = vector.shape_cast %216 : vector<1x1x256xf32> to vector<1x256xf32>
    %218 = vector.shape_cast %215 : vector<1x256xf32> to vector<1x1x256xf32>
    tpu.vector_store %arg16[%c3_163, %c3_164, %c0_165], %218 {strides = array<i32>} : memref<5x8x256xf32, #tpu.memory_space<vmem>>, vector<1x1x256xf32>,
    %219 = vector.extract_strided_slice %142 {offsets = [19, 0], sizes = [1, 256], strides = [1, 1]} : vector<40x256xf32> to vector<1x256xf32>
    %c4_166 = arith.constant 4 : index
    %c3_167 = arith.constant 3 : index
    %c0_168 = arith.constant 0 : index
    %220 = vector.load %arg16[%c4_166, %c3_167, %c0_168] : memref<5x8x256xf32, #tpu.memory_space<vmem>>, vector<1x1x256xf32>
    %221 = vector.shape_cast %220 : vector<1x1x256xf32> to vector<1x256xf32>
    %222 = vector.shape_cast %219 : vector<1x256xf32> to vector<1x1x256xf32>
    tpu.vector_store %arg16[%c4_166, %c3_167, %c0_168], %222 {strides = array<i32>} : memref<5x8x256xf32, #tpu.memory_space<vmem>>, vector<1x1x256xf32>,
    %223 = vector.extract_strided_slice %142 {offsets = [20, 0], sizes = [1, 256], strides = [1, 1]} : vector<40x256xf32> to vector<1x256xf32>
    %c0_169 = arith.constant 0 : index
    %c4_170 = arith.constant 4 : index
    %c0_171 = arith.constant 0 : index
    %224 = vector.load %arg16[%c0_169, %c4_170, %c0_171] : memref<5x8x256xf32, #tpu.memory_space<vmem>>, vector<1x1x256xf32>
    %225 = vector.shape_cast %224 : vector<1x1x256xf32> to vector<1x256xf32>
    %226 = vector.shape_cast %223 : vector<1x256xf32> to vector<1x1x256xf32>
    tpu.vector_store %arg16[%c0_169, %c4_170, %c0_171], %226 {strides = array<i32>} : memref<5x8x256xf32, #tpu.memory_space<vmem>>, vector<1x1x256xf32>,
    %227 = vector.extract_strided_slice %142 {offsets = [21, 0], sizes = [1, 256], strides = [1, 1]} : vector<40x256xf32> to vector<1x256xf32>
    %c1_172 = arith.constant 1 : index
    %c4_173 = arith.constant 4 : index
    %c0_174 = arith.constant 0 : index
    %228 = vector.load %arg16[%c1_172, %c4_173, %c0_174] : memref<5x8x256xf32, #tpu.memory_space<vmem>>, vector<1x1x256xf32>
    %229 = vector.shape_cast %228 : vector<1x1x256xf32> to vector<1x256xf32>
    %230 = vector.shape_cast %227 : vector<1x256xf32> to vector<1x1x256xf32>
    tpu.vector_store %arg16[%c1_172, %c4_173, %c0_174], %230 {strides = array<i32>} : memref<5x8x256xf32, #tpu.memory_space<vmem>>, vector<1x1x256xf32>,
    %231 = vector.extract_strided_slice %142 {offsets = [22, 0], sizes = [1, 256], strides = [1, 1]} : vector<40x256xf32> to vector<1x256xf32>
    %c2_175 = arith.constant 2 : index
    %c4_176 = arith.constant 4 : index
    %c0_177 = arith.constant 0 : index
    %232 = vector.load %arg16[%c2_175, %c4_176, %c0_177] : memref<5x8x256xf32, #tpu.memory_space<vmem>>, vector<1x1x256xf32>
    %233 = vector.shape_cast %232 : vector<1x1x256xf32> to vector<1x256xf32>
    %234 = vector.shape_cast %231 : vector<1x256xf32> to vector<1x1x256xf32>
    tpu.vector_store %arg16[%c2_175, %c4_176, %c0_177], %234 {strides = array<i32>} : memref<5x8x256xf32, #tpu.memory_space<vmem>>, vector<1x1x256xf32>,
    %235 = vector.extract_strided_slice %142 {offsets = [23, 0], sizes = [1, 256], strides = [1, 1]} : vector<40x256xf32> to vector<1x256xf32>
    %c3_178 = arith.constant 3 : index
    %c4_179 = arith.constant 4 : index
    %c0_180 = arith.constant 0 : index
    %236 = vector.load %arg16[%c3_178, %c4_179, %c0_180] : memref<5x8x256xf32, #tpu.memory_space<vmem>>, vector<1x1x256xf32>
    %237 = vector.shape_cast %236 : vector<1x1x256xf32> to vector<1x256xf32>
    %238 = vector.shape_cast %235 : vector<1x256xf32> to vector<1x1x256xf32>
    tpu.vector_store %arg16[%c3_178, %c4_179, %c0_180], %238 {strides = array<i32>} : memref<5x8x256xf32, #tpu.memory_space<vmem>>, vector<1x1x256xf32>,
    %239 = vector.extract_strided_slice %142 {offsets = [24, 0], sizes = [1, 256], strides = [1, 1]} : vector<40x256xf32> to vector<1x256xf32>
    %c4_181 = arith.constant 4 : index
    %c4_182 = arith.constant 4 : index
    %c0_183 = arith.constant 0 : index
    %240 = vector.load %arg16[%c4_181, %c4_182, %c0_183] : memref<5x8x256xf32, #tpu.memory_space<vmem>>, vector<1x1x256xf32>
    %241 = vector.shape_cast %240 : vector<1x1x256xf32> to vector<1x256xf32>
    %242 = vector.shape_cast %239 : vector<1x256xf32> to vector<1x1x256xf32>
    tpu.vector_store %arg16[%c4_181, %c4_182, %c0_183], %242 {strides = array<i32>} : memref<5x8x256xf32, #tpu.memory_space<vmem>>, vector<1x1x256xf32>,
    %243 = vector.extract_strided_slice %142 {offsets = [25, 0], sizes = [1, 256], strides = [1, 1]} : vector<40x256xf32> to vector<1x256xf32>
    %c0_184 = arith.constant 0 : index
    %c5_185 = arith.constant 5 : index
    %c0_186 = arith.constant 0 : index
    %244 = vector.load %arg16[%c0_184, %c5_185, %c0_186] : memref<5x8x256xf32, #tpu.memory_space<vmem>>, vector<1x1x256xf32>
    %245 = vector.shape_cast %244 : vector<1x1x256xf32> to vector<1x256xf32>
    %246 = vector.shape_cast %243 : vector<1x256xf32> to vector<1x1x256xf32>
    tpu.vector_store %arg16[%c0_184, %c5_185, %c0_186], %246 {strides = array<i32>} : memref<5x8x256xf32, #tpu.memory_space<vmem>>, vector<1x1x256xf32>,
    %247 = vector.extract_strided_slice %142 {offsets = [26, 0], sizes = [1, 256], strides = [1, 1]} : vector<40x256xf32> to vector<1x256xf32>
    %c1_187 = arith.constant 1 : index
    %c5_188 = arith.constant 5 : index
    %c0_189 = arith.constant 0 : index
    %248 = vector.load %arg16[%c1_187, %c5_188, %c0_189] : memref<5x8x256xf32, #tpu.memory_space<vmem>>, vector<1x1x256xf32>
    %249 = vector.shape_cast %248 : vector<1x1x256xf32> to vector<1x256xf32>
    %250 = vector.shape_cast %247 : vector<1x256xf32> to vector<1x1x256xf32>
    tpu.vector_store %arg16[%c1_187, %c5_188, %c0_189], %250 {strides = array<i32>} : memref<5x8x256xf32, #tpu.memory_space<vmem>>, vector<1x1x256xf32>,
    %251 = vector.extract_strided_slice %142 {offsets = [27, 0], sizes = [1, 256], strides = [1, 1]} : vector<40x256xf32> to vector<1x256xf32>
    %c2_190 = arith.constant 2 : index
    %c5_191 = arith.constant 5 : index
    %c0_192 = arith.constant 0 : index
    %252 = vector.load %arg16[%c2_190, %c5_191, %c0_192] : memref<5x8x256xf32, #tpu.memory_space<vmem>>, vector<1x1x256xf32>
    %253 = vector.shape_cast %252 : vector<1x1x256xf32> to vector<1x256xf32>
    %254 = vector.shape_cast %251 : vector<1x256xf32> to vector<1x1x256xf32>
    tpu.vector_store %arg16[%c2_190, %c5_191, %c0_192], %254 {strides = array<i32>} : memref<5x8x256xf32, #tpu.memory_space<vmem>>, vector<1x1x256xf32>,
    %255 = vector.extract_strided_slice %142 {offsets = [28, 0], sizes = [1, 256], strides = [1, 1]} : vector<40x256xf32> to vector<1x256xf32>
    %c3_193 = arith.constant 3 : index
    %c5_194 = arith.constant 5 : index
    %c0_195 = arith.constant 0 : index
    %256 = vector.load %arg16[%c3_193, %c5_194, %c0_195] : memref<5x8x256xf32, #tpu.memory_space<vmem>>, vector<1x1x256xf32>
    %257 = vector.shape_cast %256 : vector<1x1x256xf32> to vector<1x256xf32>
    %258 = vector.shape_cast %255 : vector<1x256xf32> to vector<1x1x256xf32>
    tpu.vector_store %arg16[%c3_193, %c5_194, %c0_195], %258 {strides = array<i32>} : memref<5x8x256xf32, #tpu.memory_space<vmem>>, vector<1x1x256xf32>,
    %259 = vector.extract_strided_slice %142 {offsets = [29, 0], sizes = [1, 256], strides = [1, 1]} : vector<40x256xf32> to vector<1x256xf32>
    %c4_196 = arith.constant 4 : index
    %c5_197 = arith.constant 5 : index
    %c0_198 = arith.constant 0 : index
    %260 = vector.load %arg16[%c4_196, %c5_197, %c0_198] : memref<5x8x256xf32, #tpu.memory_space<vmem>>, vector<1x1x256xf32>
    %261 = vector.shape_cast %260 : vector<1x1x256xf32> to vector<1x256xf32>
    %262 = vector.shape_cast %259 : vector<1x256xf32> to vector<1x1x256xf32>
    tpu.vector_store %arg16[%c4_196, %c5_197, %c0_198], %262 {strides = array<i32>} : memref<5x8x256xf32, #tpu.memory_space<vmem>>, vector<1x1x256xf32>,
    %263 = vector.extract_strided_slice %142 {offsets = [30, 0], sizes = [1, 256], strides = [1, 1]} : vector<40x256xf32> to vector<1x256xf32>
    %c0_199 = arith.constant 0 : index
    %c6 = arith.constant 6 : index
    %c0_200 = arith.constant 0 : index
    %264 = vector.load %arg16[%c0_199, %c6, %c0_200] : memref<5x8x256xf32, #tpu.memory_space<vmem>>, vector<1x1x256xf32>
    %265 = vector.shape_cast %264 : vector<1x1x256xf32> to vector<1x256xf32>
    %266 = vector.shape_cast %263 : vector<1x256xf32> to vector<1x1x256xf32>
    tpu.vector_store %arg16[%c0_199, %c6, %c0_200], %266 {strides = array<i32>} : memref<5x8x256xf32, #tpu.memory_space<vmem>>, vector<1x1x256xf32>,
    %267 = vector.extract_strided_slice %142 {offsets = [31, 0], sizes = [1, 256], strides = [1, 1]} : vector<40x256xf32> to vector<1x256xf32>
    %c1_201 = arith.constant 1 : index
    %c6_202 = arith.constant 6 : index
    %c0_203 = arith.constant 0 : index
    %268 = vector.load %arg16[%c1_201, %c6_202, %c0_203] : memref<5x8x256xf32, #tpu.memory_space<vmem>>, vector<1x1x256xf32>
    %269 = vector.shape_cast %268 : vector<1x1x256xf32> to vector<1x256xf32>
    %270 = vector.shape_cast %267 : vector<1x256xf32> to vector<1x1x256xf32>
    tpu.vector_store %arg16[%c1_201, %c6_202, %c0_203], %270 {strides = array<i32>} : memref<5x8x256xf32, #tpu.memory_space<vmem>>, vector<1x1x256xf32>,
    %271 = vector.extract_strided_slice %142 {offsets = [32, 0], sizes = [1, 256], strides = [1, 1]} : vector<40x256xf32> to vector<1x256xf32>
    %c2_204 = arith.constant 2 : index
    %c6_205 = arith.constant 6 : index
    %c0_206 = arith.constant 0 : index
    %272 = vector.load %arg16[%c2_204, %c6_205, %c0_206] : memref<5x8x256xf32, #tpu.memory_space<vmem>>, vector<1x1x256xf32>
    %273 = vector.shape_cast %272 : vector<1x1x256xf32> to vector<1x256xf32>
    %274 = vector.shape_cast %271 : vector<1x256xf32> to vector<1x1x256xf32>
    tpu.vector_store %arg16[%c2_204, %c6_205, %c0_206], %274 {strides = array<i32>} : memref<5x8x256xf32, #tpu.memory_space<vmem>>, vector<1x1x256xf32>,
    %275 = vector.extract_strided_slice %142 {offsets = [33, 0], sizes = [1, 256], strides = [1, 1]} : vector<40x256xf32> to vector<1x256xf32>
    %c3_207 = arith.constant 3 : index
    %c6_208 = arith.constant 6 : index
    %c0_209 = arith.constant 0 : index
    %276 = vector.load %arg16[%c3_207, %c6_208, %c0_209] : memref<5x8x256xf32, #tpu.memory_space<vmem>>, vector<1x1x256xf32>
    %277 = vector.shape_cast %276 : vector<1x1x256xf32> to vector<1x256xf32>
    %278 = vector.shape_cast %275 : vector<1x256xf32> to vector<1x1x256xf32>
    tpu.vector_store %arg16[%c3_207, %c6_208, %c0_209], %278 {strides = array<i32>} : memref<5x8x256xf32, #tpu.memory_space<vmem>>, vector<1x1x256xf32>,
    %279 = vector.extract_strided_slice %142 {offsets = [34, 0], sizes = [1, 256], strides = [1, 1]} : vector<40x256xf32> to vector<1x256xf32>
    %c4_210 = arith.constant 4 : index
    %c6_211 = arith.constant 6 : index
    %c0_212 = arith.constant 0 : index
    %280 = vector.load %arg16[%c4_210, %c6_211, %c0_212] : memref<5x8x256xf32, #tpu.memory_space<vmem>>, vector<1x1x256xf32>
    %281 = vector.shape_cast %280 : vector<1x1x256xf32> to vector<1x256xf32>
    %282 = vector.shape_cast %279 : vector<1x256xf32> to vector<1x1x256xf32>
    tpu.vector_store %arg16[%c4_210, %c6_211, %c0_212], %282 {strides = array<i32>} : memref<5x8x256xf32, #tpu.memory_space<vmem>>, vector<1x1x256xf32>,
    %283 = vector.extract_strided_slice %142 {offsets = [35, 0], sizes = [1, 256], strides = [1, 1]} : vector<40x256xf32> to vector<1x256xf32>
    %c0_213 = arith.constant 0 : index
    %c7 = arith.constant 7 : index
    %c0_214 = arith.constant 0 : index
    %284 = vector.load %arg16[%c0_213, %c7, %c0_214] : memref<5x8x256xf32, #tpu.memory_space<vmem>>, vector<1x1x256xf32>
    %285 = vector.shape_cast %284 : vector<1x1x256xf32> to vector<1x256xf32>
    %286 = vector.shape_cast %283 : vector<1x256xf32> to vector<1x1x256xf32>
    tpu.vector_store %arg16[%c0_213, %c7, %c0_214], %286 {strides = array<i32>} : memref<5x8x256xf32, #tpu.memory_space<vmem>>, vector<1x1x256xf32>,
    %287 = vector.extract_strided_slice %142 {offsets = [36, 0], sizes = [1, 256], strides = [1, 1]} : vector<40x256xf32> to vector<1x256xf32>
    %c1_215 = arith.constant 1 : index
    %c7_216 = arith.constant 7 : index
    %c0_217 = arith.constant 0 : index
    %288 = vector.load %arg16[%c1_215, %c7_216, %c0_217] : memref<5x8x256xf32, #tpu.memory_space<vmem>>, vector<1x1x256xf32>
    %289 = vector.shape_cast %288 : vector<1x1x256xf32> to vector<1x256xf32>
    %290 = vector.shape_cast %287 : vector<1x256xf32> to vector<1x1x256xf32>
    tpu.vector_store %arg16[%c1_215, %c7_216, %c0_217], %290 {strides = array<i32>} : memref<5x8x256xf32, #tpu.memory_space<vmem>>, vector<1x1x256xf32>,
    %291 = vector.extract_strided_slice %142 {offsets = [37, 0], sizes = [1, 256], strides = [1, 1]} : vector<40x256xf32> to vector<1x256xf32>
    %c2_218 = arith.constant 2 : index
    %c7_219 = arith.constant 7 : index
    %c0_220 = arith.constant 0 : index
    %292 = vector.load %arg16[%c2_218, %c7_219, %c0_220] : memref<5x8x256xf32, #tpu.memory_space<vmem>>, vector<1x1x256xf32>
    %293 = vector.shape_cast %292 : vector<1x1x256xf32> to vector<1x256xf32>
    %294 = vector.shape_cast %291 : vector<1x256xf32> to vector<1x1x256xf32>
    tpu.vector_store %arg16[%c2_218, %c7_219, %c0_220], %294 {strides = array<i32>} : memref<5x8x256xf32, #tpu.memory_space<vmem>>, vector<1x1x256xf32>,
    %295 = vector.extract_strided_slice %142 {offsets = [38, 0], sizes = [1, 256], strides = [1, 1]} : vector<40x256xf32> to vector<1x256xf32>
    %c3_221 = arith.constant 3 : index
    %c7_222 = arith.constant 7 : index
    %c0_223 = arith.constant 0 : index
    %296 = vector.load %arg16[%c3_221, %c7_222, %c0_223] : memref<5x8x256xf32, #tpu.memory_space<vmem>>, vector<1x1x256xf32>
    %297 = vector.shape_cast %296 : vector<1x1x256xf32> to vector<1x256xf32>
    %298 = vector.shape_cast %295 : vector<1x256xf32> to vector<1x1x256xf32>
    tpu.vector_store %arg16[%c3_221, %c7_222, %c0_223], %298 {strides = array<i32>} : memref<5x8x256xf32, #tpu.memory_space<vmem>>, vector<1x1x256xf32>,
    %299 = vector.extract_strided_slice %142 {offsets = [39, 0], sizes = [1, 256], strides = [1, 1]} : vector<40x256xf32> to vector<1x256xf32>
    %c4_224 = arith.constant 4 : index
    %c7_225 = arith.constant 7 : index
    %c0_226 = arith.constant 0 : index
    %300 = vector.load %arg16[%c4_224, %c7_225, %c0_226] : memref<5x8x256xf32, #tpu.memory_space<vmem>>, vector<1x1x256xf32>
    %301 = vector.shape_cast %300 : vector<1x1x256xf32> to vector<1x256xf32>
    %302 = vector.shape_cast %299 : vector<1x256xf32> to vector<1x1x256xf32>
    tpu.vector_store %arg16[%c4_224, %c7_225, %c0_226], %302 {strides = array<i32>} : memref<5x8x256xf32, #tpu.memory_space<vmem>>, vector<1x1x256xf32>,
    %cst_227 = arith.constant 0.000000e+00 : f32
    %303 = vector.broadcast %cst_227 : f32 to vector<8x10xf32>
    %c0_228 = arith.constant 0 : index
    %c0_229 = arith.constant 0 : index
    %c0_230 = arith.constant 0 : index
    %304 = vector.load %arg16[%c0_228, %c0_229, %c0_230] : memref<5x8x256xf32, #tpu.memory_space<vmem>>, vector<1x8x256xf32>
    %305 = vector.shape_cast %304 : vector<1x8x256xf32> to vector<8x256xf32>
    %c0_231 = arith.constant 0 : index
    %c0_232 = arith.constant 0 : index
    %306 = vector.load %arg9[%c0_231, %c0_232] : memref<10x1280xf32, #tpu.memory_space<vmem>>, vector<10x256xf32>
    %cst_233 = arith.constant dense<0.000000e+00> : vector<8x10xf32>
    %307 = tpu.matmul %305, %306, %cst_233 {dimension_numbers = #tpu.dot_dimension_numbers<[1], [1], [0], [0], [0, 0, 1, 0], [], []>} : vector<8x256xf32>, vector<10x256xf32>, vector<8x10xf32> -> vector<8x10xf32>
    %308 = arith.addf %303, %307 : vector<8x10xf32>
    %c1_234 = arith.constant 1 : index
    %c0_235 = arith.constant 0 : index
    %c0_236 = arith.constant 0 : index
    %309 = vector.load %arg16[%c1_234, %c0_235, %c0_236] : memref<5x8x256xf32, #tpu.memory_space<vmem>>, vector<1x8x256xf32>
    %310 = vector.shape_cast %309 : vector<1x8x256xf32> to vector<8x256xf32>
    %c0_237 = arith.constant 0 : index
    %c256 = arith.constant 256 : index
    %311 = vector.load %arg9[%c0_237, %c256] : memref<10x1280xf32, #tpu.memory_space<vmem>>, vector<10x256xf32>
    %cst_238 = arith.constant dense<0.000000e+00> : vector<8x10xf32>
    %312 = tpu.matmul %310, %311, %cst_238 {dimension_numbers = #tpu.dot_dimension_numbers<[1], [1], [0], [0], [0, 0, 1, 0], [], []>} : vector<8x256xf32>, vector<10x256xf32>, vector<8x10xf32> -> vector<8x10xf32>
    %313 = arith.addf %308, %312 : vector<8x10xf32>
    %c2_239 = arith.constant 2 : index
    %c0_240 = arith.constant 0 : index
    %c0_241 = arith.constant 0 : index
    %314 = vector.load %arg16[%c2_239, %c0_240, %c0_241] : memref<5x8x256xf32, #tpu.memory_space<vmem>>, vector<1x8x256xf32>
    %315 = vector.shape_cast %314 : vector<1x8x256xf32> to vector<8x256xf32>
    %c0_242 = arith.constant 0 : index
    %c512 = arith.constant 512 : index
    %316 = vector.load %arg9[%c0_242, %c512] : memref<10x1280xf32, #tpu.memory_space<vmem>>, vector<10x256xf32>
    %cst_243 = arith.constant dense<0.000000e+00> : vector<8x10xf32>
    %317 = tpu.matmul %315, %316, %cst_243 {dimension_numbers = #tpu.dot_dimension_numbers<[1], [1], [0], [0], [0, 0, 1, 0], [], []>} : vector<8x256xf32>, vector<10x256xf32>, vector<8x10xf32> -> vector<8x10xf32>
    %318 = arith.addf %313, %317 : vector<8x10xf32>
    %c3_244 = arith.constant 3 : index
    %c0_245 = arith.constant 0 : index
    %c0_246 = arith.constant 0 : index
    %319 = vector.load %arg16[%c3_244, %c0_245, %c0_246] : memref<5x8x256xf32, #tpu.memory_space<vmem>>, vector<1x8x256xf32>
    %320 = vector.shape_cast %319 : vector<1x8x256xf32> to vector<8x256xf32>
    %c0_247 = arith.constant 0 : index
    %c768 = arith.constant 768 : index
    %321 = vector.load %arg9[%c0_247, %c768] : memref<10x1280xf32, #tpu.memory_space<vmem>>, vector<10x256xf32>
    %cst_248 = arith.constant dense<0.000000e+00> : vector<8x10xf32>
    %322 = tpu.matmul %320, %321, %cst_248 {dimension_numbers = #tpu.dot_dimension_numbers<[1], [1], [0], [0], [0, 0, 1, 0], [], []>} : vector<8x256xf32>, vector<10x256xf32>, vector<8x10xf32> -> vector<8x10xf32>
    %323 = arith.addf %318, %322 : vector<8x10xf32>
    %c4_249 = arith.constant 4 : index
    %c0_250 = arith.constant 0 : index
    %c0_251 = arith.constant 0 : index
    %324 = vector.load %arg16[%c4_249, %c0_250, %c0_251] : memref<5x8x256xf32, #tpu.memory_space<vmem>>, vector<1x8x256xf32>
    %325 = vector.shape_cast %324 : vector<1x8x256xf32> to vector<8x256xf32>
    %c0_252 = arith.constant 0 : index
    %c1024 = arith.constant 1024 : index
    %326 = vector.load %arg9[%c0_252, %c1024] : memref<10x1280xf32, #tpu.memory_space<vmem>>, vector<10x256xf32>
    %cst_253 = arith.constant dense<0.000000e+00> : vector<8x10xf32>
    %327 = tpu.matmul %325, %326, %cst_253 {dimension_numbers = #tpu.dot_dimension_numbers<[1], [1], [0], [0], [0, 0, 1, 0], [], []>} : vector<8x256xf32>, vector<10x256xf32>, vector<8x10xf32> -> vector<8x10xf32>
    %328 = arith.addf %323, %327 : vector<8x10xf32>
    %c0_254 = arith.constant 0 : index
    %c0_255 = arith.constant 0 : index
    %329 = vector.load %arg10[%c0_254, %c0_255] : memref<1x10xf32, #tpu.memory_space<vmem>>, vector<1x10xf32>
    %330 = vector.broadcast %329 : vector<1x10xf32> to vector<8x10xf32>
    %331 = arith.addf %328, %330 : vector<8x10xf32>
    %c0_256 = arith.constant 0 : index
    %c0_257 = arith.constant 0 : index
    %332 = vector.load %arg11[%c0_256, %c0_257] : memref<8x10xf32, #tpu.memory_space<vmem>>, vector<8x10xf32>
    tpu.vector_store %arg11[%c0_256, %c0_257], %331 {strides = array<i32>} : memref<8x10xf32, #tpu.memory_space<vmem>>, vector<8x10xf32>,
    return
  }
  func.func @transform_0(%arg0: i32) -> (i32, i32, i32) {
    %c0_i32 = arith.constant 0 : i32
    %c0_i32_0 = arith.constant 0 : i32
    %c0_i32_1 = arith.constant 0 : i32
    return %c0_i32, %arg0, %c0_i32_0 : i32, i32, i32
  }
  func.func @transform_1(%arg0: i32) -> (i32, i32, i32) {
    %c0_i32 = arith.constant 0 : i32
    %c0_i32_0 = arith.constant 0 : i32
    %c0_i32_1 = arith.constant 0 : i32
    return %c0_i32, %arg0, %c0_i32_0 : i32, i32, i32
  }
  func.func @transform_2(%arg0: i32) -> (i32, i32, i32) {
    %c0_i32 = arith.constant 0 : i32
    %c0_i32_0 = arith.constant 0 : i32
    %c0_i32_1 = arith.constant 0 : i32
    return %c0_i32, %arg0, %c0_i32_0 : i32, i32, i32
  }
  func.func @transform_3(%arg0: i32) -> (i32, i32, i32) {
    %c0_i32 = arith.constant 0 : i32
    %c0_i32_0 = arith.constant 0 : i32
    %c0_i32_1 = arith.constant 0 : i32
    return %c0_i32, %arg0, %c0_i32_0 : i32, i32, i32
  }
  func.func @transform_4(%arg0: i32) -> (i32, i32, i32) {
    %c0_i32 = arith.constant 0 : i32
    %c0_i32_0 = arith.constant 0 : i32
    %c0_i32_1 = arith.constant 0 : i32
    %c0_i32_2 = arith.constant 0 : i32
    return %c0_i32, %c0_i32_0, %c0_i32_1 : i32, i32, i32
  }
  func.func @transform_5(%arg0: i32) -> (i32, i32) {
    %c0_i32 = arith.constant 0 : i32
    %c0_i32_0 = arith.constant 0 : i32
    %c0_i32_1 = arith.constant 0 : i32
    return %c0_i32, %c0_i32_0 : i32, i32
  }
  func.func @transform_6(%arg0: i32) -> (i32, i32, i32) {
    %c0_i32 = arith.constant 0 : i32
    %c0_i32_0 = arith.constant 0 : i32
    %c0_i32_1 = arith.constant 0 : i32
    %c0_i32_2 = arith.constant 0 : i32
    return %c0_i32, %c0_i32_0, %c0_i32_1 : i32, i32, i32
  }
  func.func @transform_7(%arg0: i32) -> (i32, i32) {
    %c0_i32 = arith.constant 0 : i32
    %c0_i32_0 = arith.constant 0 : i32
    %c0_i32_1 = arith.constant 0 : i32
    return %c0_i32, %c0_i32_0 : i32, i32
  }
  func.func @transform_8(%arg0: i32) -> (i32, i32) {
    %c0_i32 = arith.constant 0 : i32
    %c0_i32_0 = arith.constant 0 : i32
    %c0_i32_1 = arith.constant 0 : i32
    return %c0_i32, %c0_i32_0 : i32, i32
  }
  func.func @transform_9(%arg0: i32) -> (i32, i32) {
    %c0_i32 = arith.constant 0 : i32
    %c0_i32_0 = arith.constant 0 : i32
    %c0_i32_1 = arith.constant 0 : i32
    return %c0_i32, %c0_i32_0 : i32, i32
  }
  func.func @transform_10(%arg0: i32) -> (i32, i32) {
    %c0_i32 = arith.constant 0 : i32
    %c0_i32_0 = arith.constant 0 : i32
    return %arg0, %c0_i32 : i32, i32
  }
}

</mosaic_0001>

<llo_original>
// kernel: tile.13
$region0: #{tile.13}
  #allocation0 [shape = 's32[1]{0}', space=sflag, size = 0x4, scoped, tag = 'scoped memory for tile.13']
  %s0 = inlined_call_operand.vmem [shape: f32[40], index: 0, kind: input, shape index: {}]
  %s1 = inlined_call_operand.vmem [shape: f32[13,40], index: 1, kind: output, shape index: {}]
  // Predicated region
  $region2: #{tile.13} parent=0 // pred_check
    _
  $region3: #{tile.13} parent=0 // pred_check_branch
    %3 = sbr.rel (0) target = $region5
  $region4: #{tile.13} parent=0 // pred_region
    _
  $region5: #{tile.13} parent=0 // pred_fallthru
    _
  %v4 = vld [vmem:[%s0] ss:$0 sm:$0xff]
  %5 = vst [vmem:[%s1] sm:$0xff] %v4
  %s6 = scalar_lea.vmem %s1, 8
  %7 = vst [vmem:[%s6] sm:$0xff] %v4

// kernel: tile.14
$region0: #{tile.14}
  %s0 = inlined_call_operand.vmem [shape: f32[13,40], index: 0, kind: input, shape index: {}]
  %s1 = inlined_call_operand.vmem [shape: f32[520], index: 1, kind: output, shape index: {}]
  %v2 = vld [vmem:[%s0] sm:$0x1]
  %vm3 = vcmask 326656
  %4 = vst.msk [vmem:[%s1] sm:$0x1] %vm3, %v2
  %s5 = scalar_lea.vmem %s0, 3
  %v6 = vld [vmem:[%s5] sm:$0x1]
  %s7 = scalar_lea.vmem %s0, 3
  %v8 = vld [vmem:[%s7] sm:$0x1]
  %vm9 = vcmask 64512
  %v10 = vsel %vm9, %v8, %v6
  %11 = vrot.lane.b32.xlu0 %v10, 120
  %v12 = vpop.permute.xlu0 %11
  %vm13 = vcmask 261120
  %s14 = scalar_lea.vmem %s1, 1
  %15 = vst.msk [vmem:[%s14] sm:$0x1] %vm13, %v12
  %vm16 = vcmask 1048512
  %17 = vst.msk [vmem:[%s1] sm:$0x1] %vm16, %v12
  %s18 = scalar_lea.vmem %s0, 6
  %v19 = vld [vmem:[%s18] sm:$0x1]
  %s20 = scalar_lea.vmem %s0, 6
  %v21 = vld [vmem:[%s20] sm:$0x1]
  %vm22 = vcmask 130048
  %v23 = vsel %vm22, %v21, %v19
  %24 = vrot.lane.b32.xlu0 %v23, 112
  %v25 = vpop.permute.xlu0 %24
  %vm26 = vcmask 195584
  %s27 = scalar_lea.vmem %s1, 2
  %28 = vst.msk [vmem:[%s27] sm:$0x1] %vm26, %v25
  %vm29 = vcmask 1048448
  %s30 = scalar_lea.vmem %s1, 1
  %31 = vst.msk [vmem:[%s30] sm:$0x1] %vm29, %v25
  %s32 = scalar_lea.vmem %s0, 9
  %v33 = vld [vmem:[%s32] sm:$0x1]
  %s34 = scalar_lea.vmem %s0, 9
  %v35 = vld [vmem:[%s34] sm:$0x1]
  %vm36 = vcmask 195584
  %v37 = vsel %vm36, %v35, %v33
  %38 = vrot.lane.b32.xlu0 %v37, 104
  %v39 = vpop.permute.xlu0 %38
  %vm40 = vcmask 130048
  %s41 = scalar_lea.vmem %s1, 3
  %42 = vst.msk [vmem:[%s41] sm:$0x1] %vm40, %v39
  %vm43 = vcmask 1048384
  %s44 = scalar_lea.vmem %s1, 2
  %45 = vst.msk [vmem:[%s44] sm:$0x1] %vm43, %v39
  %s46 = scalar_lea.vmem %s0, 12
  %v47 = vld [vmem:[%s46] sm:$0x1]
  %s48 = scalar_lea.vmem %s0, 12
  %v49 = vld [vmem:[%s48] sm:$0x1]
  %vm50 = vcmask 261120
  %v51 = vsel %vm50, %v49, %v47
  %52 = vrot.lane.b32.xlu0 %v51, 96
  %v53 = vpop.permute.xlu0 %52
  %vm54 = vcmask 64512
  %s55 = scalar_lea.vmem %s1, 4
  %56 = vst.msk [vmem:[%s55] sm:$0x1] %vm54, %v53
  %vm57 = vcmask 1048320
  %s58 = scalar_lea.vmem %s1, 3
  %59 = vst.msk [vmem:[%s58] sm:$0x1] %vm57, %v53
  %s60 = scalar_lea.vmem %s0, 2
  %v61 = vld [vmem:[%s60] sm:$0x1]
  %62 = vrot.lane.b32.xlu0 %v61, 80
  %v63 = vpop.permute.xlu0 %62
  %vm64 = vcmask 982656
  %65 = vst.msk [vmem:[%s1] sm:$0x1] %vm64, %v63
  %s66 = scalar_lea.vmem %s0, 5
  %v67 = vld [vmem:[%s66] sm:$0x1]
  %68 = vrot.lane.b32.xlu0 %v67, 72
  %v69 = vpop.permute.xlu0 %68
  %vm70 = vcmask 917056
  %s71 = scalar_lea.vmem %s1, 1
  %72 = vst.msk [vmem:[%s71] sm:$0x1] %vm70, %v69
  %s73 = scalar_lea.vmem %s0, 8
  %v74 = vld [vmem:[%s73] sm:$0x1]
  %75 = vrot.lane.b32.xlu0 %v74, 64
  %v76 = vpop.permute.xlu0 %75
  %vm77 = vcmask 851456
  %s78 = scalar_lea.vmem %s1, 2
  %79 = vst.msk [vmem:[%s78] sm:$0x1] %vm77, %v76
  %s80 = scalar_lea.vmem %s0, 11
  %v81 = vld [vmem:[%s80] sm:$0x1]
  %82 = vrot.lane.b32.xlu0 %v81, 56
  %v83 = vpop.permute.xlu0 %82
  %vm84 = vcmask 785856
  %s85 = scalar_lea.vmem %s1, 3
  %86 = vst.msk [vmem:[%s85] sm:$0x1] %vm84, %v83
  %s87 = scalar_lea.vmem %s0, 1
  %v88 = vld [vmem:[%s87] sm:$0x1]
  %89 = vrot.lane.b32.xlu0 %v88, 40
  %v90 = vpop.permute.xlu0 %89
  %vm91 = vcmask 654656
  %92 = vst.msk [vmem:[%s1] sm:$0x1] %vm91, %v90
  %s93 = scalar_lea.vmem %s0, 4
  %v94 = vld [vmem:[%s93] sm:$0x1]
  %95 = vrot.lane.b32.xlu0 %v94, 32
  %v96 = vpop.permute.xlu0 %95
  %vm97 = vcmask 589056
  %s98 = scalar_lea.vmem %s1, 1
  %99 = vst.msk [vmem:[%s98] sm:$0x1] %vm97, %v96
  %s100 = scalar_lea.vmem %s0, 7
  %v101 = vld [vmem:[%s100] sm:$0x1]
  %102 = vrot.lane.b32.xlu0 %v101, 24
  %v103 = vpop.permute.xlu0 %102
  %vm104 = vcmask 523456
  %s105 = scalar_lea.vmem %s1, 2
  %106 = vst.msk [vmem:[%s105] sm:$0x1] %vm104, %v103
  %s107 = scalar_lea.vmem %s0, 10
  %v108 = vld [vmem:[%s107] sm:$0x1]
  %109 = vrot.lane.b32.xlu0 %v108, 16
  %v110 = vpop.permute.xlu0 %109
  %vm111 = vcmask 457856
  %s112 = scalar_lea.vmem %s1, 3
  %113 = vst.msk [vmem:[%s112] sm:$0x1] %vm111, %v110

// kernel: tile.18
$region0: #{tile.18}
  #allocation0 [shape = 's32[1]{0}', space=sflag, size = 0x4, scoped, tag = 'scoped memory for tile.18']
  %s0 = inlined_call_operand.vmem [shape: f32[40], index: 0, kind: input, shape index: {}]
  %s1 = inlined_call_operand.vmem [shape: f32[5,40], index: 1, kind: output, shape index: {}]
  // Predicated region
  $region2: #{tile.18} parent=0 // pred_check
    _
  $region3: #{tile.18} parent=0 // pred_check_branch
    %3 = sbr.rel (0) target = $region5
  $region4: #{tile.18} parent=0 // pred_region
    _
  $region5: #{tile.18} parent=0 // pred_fallthru
    _
  %v4 = vld [vmem:[%s0] ss:$0 sm:$0xff]
  %5 = vst [vmem:[%s1] sm:$0xff] %v4

// kernel: tile.19
$region0: #{tile.19}
  %s0 = inlined_call_operand.vmem [shape: f32[5,40], index: 0, kind: input, shape index: {}]
  %s1 = inlined_call_operand.vmem [shape: f32[200], index: 1, kind: output, shape index: {}]
  $region1: #{tile.19} parent=0
    #allocation0 [shape = 'u8[4096]{0}', space=vmem, size = 0x1000, scoped, tag = 'scoped mem for output reshape']
    %v2 = vld [vmem:[%s0] sm:$0x1]
    %vm3 = vcmask 326656
    %4 = vst.msk [vmem:[#allocation0] sm:$0x1] %vm3, %v2
    %s5 = scalar_lea.vmem %s0, 3
    %v6 = vld [vmem:[%s5] sm:$0x1]
    %s7 = scalar_lea.vmem %s0, 3
    %v8 = vld [vmem:[%s7] sm:$0x1]
    %vm9 = vcmask 64512
    %v10 = vsel %vm9, %v8, %v6
    %11 = vrot.lane.b32.xlu0 %v10, 120
    %v12 = vpop.permute.xlu0 %11
    %vm13 = vcmask 261120
    %s14 = scalar_lea.vmem [#allocation0], 1
    %15 = vst.msk [vmem:[%s14] sm:$0x1] %vm13, %v12
    %vm16 = vcmask 1048512
    %17 = vst.msk [vmem:[#allocation0] sm:$0x1] %vm16, %v12
    %s18 = scalar_lea.vmem %s0, 2
    %v19 = vld [vmem:[%s18] sm:$0x1]
    %20 = vrot.lane.b32.xlu0 %v19, 80
    %v21 = vpop.permute.xlu0 %20
    %vm22 = vcmask 982656
    %23 = vst.msk [vmem:[#allocation0] sm:$0x1] %vm22, %v21
    %s24 = scalar_lea.vmem %s0, 1
    %v25 = vld [vmem:[%s24] sm:$0x1]
    %26 = vrot.lane.b32.xlu0 %v25, 40
    %v27 = vpop.permute.xlu0 %26
    %vm28 = vcmask 654656
    %29 = vst.msk [vmem:[#allocation0] sm:$0x1] %vm28, %v27
    %s30 = scalar_lea.vmem %s0, 4
    %v31 = vld [vmem:[%s30] sm:$0x1]
    %32 = vrot.lane.b32.xlu0 %v31, 32
    %v33 = vpop.permute.xlu0 %32
    %vm34 = vcmask 589056
    %s35 = scalar_lea.vmem [#allocation0], 1
    %36 = vst.msk [vmem:[%s35] sm:$0x1] %vm34, %v33
    %s38 = sshllo.u32 0, 2
    %v40 = vld [vmem:[#allocation0] sm:%s38]
    %s41 = sshllo.u32 0, 2
    %42 = vst [vmem:[%s1] sm:%s41] %v40

// kernel: netbn_forward.1
$region0: #{netbn_forward.1}
  #allocation0 [shape = 'u32[]', space=smem, size = 0x4, offset = 0x4, fixed_abs, tag = 'smem constant byte address 0x4 - core index']
  #allocation1 [shape = 'u32[144,128]{1,0:T(1,128)}', space=vmem, size = 0x12000, scoped, tag = 'internal scratch']
  #allocation2 [shape = 'f32[40,640]{1,0:T(8,128)}', space=vmem, size = 0x19000, scoped, tag = 'scratch operand']
  #allocation3 [shape = 'f32[40,640]{1,0:T(8,128)}', space=vmem, size = 0x19000, scoped, tag = 'scratch operand']
  #allocation4 [shape = 'f32[40,640]{1,0:T(8,128)}', space=vmem, size = 0x19000, scoped, tag = 'scratch operand']
  #allocation5 [shape = 'f32[40,640]{1,0:T(8,128)}', space=vmem, size = 0x19000, scoped, tag = 'scratch operand']
  #allocation6 [shape = 'f32[5,8,256]{2,1,0:T(8,128)}', space=vmem, size = 0xa000, scoped, tag = 'scratch operand']
  %s0 = inlined_call_operand.vmem [shape: f32[1,112,84], index: 0, kind: input, shape index: {}]
  %s1 = inlined_call_operand.vmem [shape: f32[1,112,84], index: 1, kind: input, shape index: {}]
  %s2 = inlined_call_operand.vmem [shape: f32[1,112,84], index: 2, kind: input, shape index: {}]
  %s3 = inlined_call_operand.vmem [shape: f32[1,112,84], index: 3, kind: input, shape index: {}]
  %s4 = inlined_call_operand.vmem [shape: f32[1,84,1280], index: 4, kind: input, shape index: {}]
  %s5 = inlined_call_operand.vmem [shape: f32[1,640], index: 5, kind: input, shape index: {}]
  %s6 = inlined_call_operand.vmem [shape: bf16[3,640,512], index: 6, kind: input, shape index: {}]
  %s7 = inlined_call_operand.vmem [shape: f32[1,256], index: 7, kind: input, shape index: {}]
  %s8 = inlined_call_operand.vmem [shape: f32[10,1280], index: 8, kind: input, shape index: {}]
  %s9 = inlined_call_operand.vmem [shape: f32[1,10], index: 9, kind: input, shape index: {}]
  %s10 = inlined_call_operand.hbm [shape: f32[16,10], index: 10, kind: output, shape index: {}]
  %s11 = sld [smem:[#allocation0]]
  $region73: #{netbn_forward.1} parent=0
    _
  %s13 = ssub.s32 1, %s11
  %s14 = scalar_select 0, %s13, %s11
  $region1: #{netbn_forward.1} parent=0
    #allocation7 [shape = 'u8[8192]{0}', space=vmem, size = 0x2000, scoped, tag = 'output window, operand 0']
    #allocation8 [shape = 's32[2]{0}', space=sflag, size = 0x8, scoped, tag = 'scoped memory for netbn_forward.1']
    %15 = vsyncpa [#allocation8], 0
    %s16 = scalar_lea.sflag [#allocation8], 1
    %17 = vsyncpa %s16, 0
    loop: start=0, step=1, limit=4
    $region2: #{netbn_forward.1} parent=1 // loop_pre_header
      _
    $region3: #{netbn_forward.1} parent=1 // loop_header
      %s19 = sphi 0, %s23
      %p20 = scmp.ge.s32.totalorder %s19, 4
      %s29 = sphi 0, %s31
      %s32 = sphi 0, %s29
      %s33 = sphi 0, %s32
      %s49 = sphi 0, %s33
      %s55 = sphi 0, %s57
      %s58 = sphi 0, %s55
      %s59 = sphi 0, %s58
      %s75 = sphi 0, %s59
      %s81 = sphi 0, %s83
      %s84 = sphi 0, %s81
      %s85 = sphi 0, %s84
      %s101 = sphi 0, %s85
      %s107 = sphi 0, %s109
      %s110 = sphi 0, %s107
      %s111 = sphi 0, %s110
      %s127 = sphi 0, %s111
      %s131 = sphi 0, %s131
      %s133 = sphi 0, %s131
      %s134 = sphi 0, %s133
      %s148 = sphi 0, %s134
      %s152 = sphi 0, %s152
      %s154 = sphi 0, %s152
      %s155 = sphi 0, %s154
      %s169 = sphi 0, %s155
      %s173 = sphi 0, %s173
      %s175 = sphi 0, %s173
      %s176 = sphi 0, %s175
      %s190 = sphi 0, %s176
      %s194 = sphi 0, %s194
      %s196 = sphi 0, %s194
      %s197 = sphi 0, %s196
      %s211 = sphi 0, %s197
      %s215 = sphi 0, %s215
      %s217 = sphi 0, %s215
      %s218 = sphi 0, %s217
      %s232 = sphi 0, %s218
      %s236 = sphi 0, %s236
      %s238 = sphi 0, %s236
      %s239 = sphi 0, %s238
      %s253 = sphi 0, %s239
      %s259 = sphi 0, %s261
      %s262 = sphi 0, %s259
      %s263 = sphi 0, %s262
      %s279 = sphi 0, %s263
    $region4: #{netbn_forward.1} parent=1 // loop_header_branch
      %22 = sbr.rel (%p20) target = $region8
    $region5: #{netbn_forward.1} parent=1 // loop_body
      %s24 = ssub.s32 %s19, 1
      %s25 = ssub.s32 %s19, 2
      %s26 = sadd.s32 %s19, 1
      %s27 = ssub.s32 %s19, %s26
      %p28 = scmp.eq.s32.totalorder %s27, 0
      %s30 = sadd.s32 %s29, 1
      %s31 = scalar_select %p28, %s29, %s30
      %p34 = pneg %p28
      %p35 = scmp.eq.s32.totalorder %s19, 1
      %p36 = por %p34, %p35
      %p37 = scmp.ne.s32.totalorder %s29, %s32
      %p38 = scmp.eq.s32.totalorder %s19, 0
      %p39 = por %p37, %p38
      %p40 = scmp.ne.s32.totalorder %s29, %s32
      %p41 = scmp.eq.s32.totalorder %s24, 1
      %p42 = por %p40, %p41
      %p43 = scmp.ne.s32.totalorder %s32, %s33
      %p44 = scmp.eq.s32.totalorder %s24, 0
      %p45 = por %p43, %p44
      %p46 = scmp.ne.s32.totalorder %s32, %s33
      %p47 = scmp.eq.s32.totalorder %s25, 1
      %p48 = por %p46, %p47
      %p50 = scmp.ne.s32.totalorder %s33, %s49
      %p51 = scmp.eq.s32.totalorder %s25, 0
      %p52 = por %p50, %p51
      %s53 = ssub.s32 %s19, %s26
      %p54 = scmp.eq.s32.totalorder %s53, 0
      %s56 = sadd.s32 %s55, 1
      %s57 = scalar_select %p54, %s55, %s56
      %p60 = pneg %p54
      %p61 = scmp.eq.s32.totalorder %s19, 1
      %p62 = por %p60, %p61
      %p63 = scmp.ne.s32.totalorder %s55, %s58
      %p64 = scmp.eq.s32.totalorder %s19, 0
      %p65 = por %p63, %p64
      %p66 = scmp.ne.s32.totalorder %s55, %s58
      %p67 = scmp.eq.s32.totalorder %s24, 1
      %p68 = por %p66, %p67
      %p69 = scmp.ne.s32.totalorder %s58, %s59
      %p70 = scmp.eq.s32.totalorder %s24, 0
      %p71 = por %p69, %p70
      %p72 = scmp.ne.s32.totalorder %s58, %s59
      %p73 = scmp.eq.s32.totalorder %s25, 1
      %p74 = por %p72, %p73
      %p76 = scmp.ne.s32.totalorder %s59, %s75
      %p77 = scmp.eq.s32.totalorder %s25, 0
      %p78 = por %p76, %p77
      %s79 = ssub.s32 %s19, %s26
      %p80 = scmp.eq.s32.totalorder %s79, 0
      %s82 = sadd.s32 %s81, 1
      %s83 = scalar_select %p80, %s81, %s82
      %p86 = pneg %p80
      %p87 = scmp.eq.s32.totalorder %s19, 1
      %p88 = por %p86, %p87
      %p89 = scmp.ne.s32.totalorder %s81, %s84
      %p90 = scmp.eq.s32.totalorder %s19, 0
      %p91 = por %p89, %p90
      %p92 = scmp.ne.s32.totalorder %s81, %s84
      %p93 = scmp.eq.s32.totalorder %s24, 1
      %p94 = por %p92, %p93
      %p95 = scmp.ne.s32.totalorder %s84, %s85
      %p96 = scmp.eq.s32.totalorder %s24, 0
      %p97 = por %p95, %p96
      %p98 = scmp.ne.s32.totalorder %s84, %s85
      %p99 = scmp.eq.s32.totalorder %s25, 1
      %p100 = por %p98, %p99
      %p102 = scmp.ne.s32.totalorder %s85, %s101
      %p103 = scmp.eq.s32.totalorder %s25, 0
      %p104 = por %p102, %p103
      %s105 = ssub.s32 %s19, %s26
      %p106 = scmp.eq.s32.totalorder %s105, 0
      %s108 = sadd.s32 %s107, 1
      %s109 = scalar_select %p106, %s107, %s108
      %p112 = pneg %p106
      %p113 = scmp.eq.s32.totalorder %s19, 1
      %p114 = por %p112, %p113
      %p115 = scmp.ne.s32.totalorder %s107, %s110
      %p116 = scmp.eq.s32.totalorder %s19, 0
      %p117 = por %p115, %p116
      %p118 = scmp.ne.s32.totalorder %s107, %s110
      %p119 = scmp.eq.s32.totalorder %s24, 1
      %p120 = por %p118, %p119
      %p121 = scmp.ne.s32.totalorder %s110, %s111
      %p122 = scmp.eq.s32.totalorder %s24, 0
      %p123 = por %p121, %p122
      %p124 = scmp.ne.s32.totalorder %s110, %s111
      %p125 = scmp.eq.s32.totalorder %s25, 1
      %p126 = por %p124, %p125
      %p128 = scmp.ne.s32.totalorder %s111, %s127
      %p129 = scmp.eq.s32.totalorder %s25, 0
      %p130 = por %p128, %p129
      %s132 = sadd.s32 %s131, 1
      %p135 = scmp.eq.s32.totalorder %s19, 1
      %p136 = scmp.ne.s32.totalorder %s131, %s133
      %p137 = scmp.eq.s32.totalorder %s19, 0
      %p138 = por %p136, %p137
      %p139 = scmp.ne.s32.totalorder %s131, %s133
      %p140 = scmp.eq.s32.totalorder %s24, 1
      %p141 = por %p139, %p140
      %p142 = scmp.ne.s32.totalorder %s133, %s134
      %p143 = scmp.eq.s32.totalorder %s24, 0
      %p144 = por %p142, %p143
      %p145 = scmp.ne.s32.totalorder %s133, %s134
      %p146 = scmp.eq.s32.totalorder %s25, 1
      %p147 = por %p145, %p146
      %p149 = scmp.ne.s32.totalorder %s134, %s148
      %p150 = scmp.eq.s32.totalorder %s25, 0
      %p151 = por %p149, %p150
      %s153 = sadd.s32 %s152, 1
      %p156 = scmp.eq.s32.totalorder %s19, 1
      %p157 = scmp.ne.s32.totalorder %s152, %s154
      %p158 = scmp.eq.s32.totalorder %s19, 0
      %p159 = por %p157, %p158
      %p160 = scmp.ne.s32.totalorder %s152, %s154
      %p161 = scmp.eq.s32.totalorder %s24, 1
      %p162 = por %p160, %p161
      %p163 = scmp.ne.s32.totalorder %s154, %s155
      %p164 = scmp.eq.s32.totalorder %s24, 0
      %p165 = por %p163, %p164
      %p166 = scmp.ne.s32.totalorder %s154, %s155
      %p167 = scmp.eq.s32.totalorder %s25, 1
      %p168 = por %p166, %p167
      %p170 = scmp.ne.s32.totalorder %s155, %s169
      %p171 = scmp.eq.s32.totalorder %s25, 0
      %p172 = por %p170, %p171
      %s174 = sadd.s32 %s173, 1
      %p177 = scmp.eq.s32.totalorder %s19, 1
      %p178 = scmp.ne.s32.totalorder %s173, %s175
      %p179 = scmp.eq.s32.totalorder %s19, 0
      %p180 = por %p178, %p179
      %p181 = scmp.ne.s32.totalorder %s173, %s175
      %p182 = scmp.eq.s32.totalorder %s24, 1
      %p183 = por %p181, %p182
      %p184 = scmp.ne.s32.totalorder %s175, %s176
      %p185 = scmp.eq.s32.totalorder %s24, 0
      %p186 = por %p184, %p185
      %p187 = scmp.ne.s32.totalorder %s175, %s176
      %p188 = scmp.eq.s32.totalorder %s25, 1
      %p189 = por %p187, %p188
      %p191 = scmp.ne.s32.totalorder %s176, %s190
      %p192 = scmp.eq.s32.totalorder %s25, 0
      %p193 = por %p191, %p192
      %s195 = sadd.s32 %s194, 1
      %p198 = scmp.eq.s32.totalorder %s19, 1
      %p199 = scmp.ne.s32.totalorder %s194, %s196
      %p200 = scmp.eq.s32.totalorder %s19, 0
      %p201 = por %p199, %p200
      %p202 = scmp.ne.s32.totalorder %s194, %s196
      %p203 = scmp.eq.s32.totalorder %s24, 1
      %p204 = por %p202, %p203
      %p205 = scmp.ne.s32.totalorder %s196, %s197
      %p206 = scmp.eq.s32.totalorder %s24, 0
      %p207 = por %p205, %p206
      %p208 = scmp.ne.s32.totalorder %s196, %s197
      %p209 = scmp.eq.s32.totalorder %s25, 1
      %p210 = por %p208, %p209
      %p212 = scmp.ne.s32.totalorder %s197, %s211
      %p213 = scmp.eq.s32.totalorder %s25, 0
      %p214 = por %p212, %p213
      %s216 = sadd.s32 %s215, 1
      %p219 = scmp.eq.s32.totalorder %s19, 1
      %p220 = scmp.ne.s32.totalorder %s215, %s217
      %p221 = scmp.eq.s32.totalorder %s19, 0
      %p222 = por %p220, %p221
      %p223 = scmp.ne.s32.totalorder %s215, %s217
      %p224 = scmp.eq.s32.totalorder %s24, 1
      %p225 = por %p223, %p224
      %p226 = scmp.ne.s32.totalorder %s217, %s218
      %p227 = scmp.eq.s32.totalorder %s24, 0
      %p228 = por %p226, %p227
      %p229 = scmp.ne.s32.totalorder %s217, %s218
      %p230 = scmp.eq.s32.totalorder %s25, 1
      %p231 = por %p229, %p230
      %p233 = scmp.ne.s32.totalorder %s218, %s232
      %p234 = scmp.eq.s32.totalorder %s25, 0
      %p235 = por %p233, %p234
      %s237 = sadd.s32 %s236, 1
      %p240 = scmp.eq.s32.totalorder %s19, 1
      %p241 = scmp.ne.s32.totalorder %s236, %s238
      %p242 = scmp.eq.s32.totalorder %s19, 0
      %p243 = por %p241, %p242
      %p244 = scmp.ne.s32.totalorder %s236, %s238
      %p245 = scmp.eq.s32.totalorder %s24, 1
      %p246 = por %p244, %p245
      %p247 = scmp.ne.s32.totalorder %s238, %s239
      %p248 = scmp.eq.s32.totalorder %s24, 0
      %p249 = por %p247, %p248
      %p250 = scmp.ne.s32.totalorder %s238, %s239
      %p251 = scmp.eq.s32.totalorder %s25, 1
      %p252 = por %p250, %p251
      %p254 = scmp.ne.s32.totalorder %s239, %s253
      %p255 = scmp.eq.s32.totalorder %s25, 0
      %p256 = por %p254, %p255
      %s257 = ssub.s32 %s19, %s26
      %p258 = scmp.eq.s32.totalorder %s257, 0
      %s260 = sadd.s32 %s259, 1
      %s261 = scalar_select %p258, %s259, %s260
      %p264 = pneg %p258
      %p265 = scmp.eq.s32.totalorder %s19, 1
      %p266 = por %p264, %p265
      %p267 = scmp.ne.s32.totalorder %s259, %s262
      %p268 = scmp.eq.s32.totalorder %s19, 0
      %p269 = por %p267, %p268
      %p270 = scmp.ne.s32.totalorder %s259, %s262
      %p271 = scmp.eq.s32.totalorder %s24, 1
      %p272 = por %p270, %p271
      %p273 = scmp.ne.s32.totalorder %s262, %s263
      %p274 = scmp.eq.s32.totalorder %s24, 0
      %p275 = por %p273, %p274
      %p276 = scmp.ne.s32.totalorder %s262, %s263
      %p277 = scmp.eq.s32.totalorder %s25, 1
      %p278 = por %p276, %p277
      %p280 = scmp.ne.s32.totalorder %s263, %s279
      %p281 = scmp.eq.s32.totalorder %s25, 0
      %p282 = por %p280, %p281
      %p283 = scmp.le.s32.totalorder 1, %s19
      %p284 = scmp.lt.s32.totalorder %s19, 3
      %p285 = pnand %p283, %p284
      %p286 = pneg %p285
      // Predicated region
      $region9: #{netbn_forward.1} parent=5 // pred_check
        _
      $region10: #{netbn_forward.1} parent=5 // pred_check_branch
        %288 = sbr.rel (%p285) target = $region12
      $region11: #{netbn_forward.1} parent=5 // pred_region
        %s289 = ssub.s32 %s19, 1
        // Predicated region
        $region13: #{netbn_forward.1} parent=11 // pred_check
          %p290 = pneg %p144
        $region14: #{netbn_forward.1} parent=11 // pred_check_branch
          %292 = sbr.rel (%p290) target = $region16
        $region15: #{netbn_forward.1} parent=11 // pred_region
          _
        $region16: #{netbn_forward.1} parent=11 // pred_fallthru
          _
        // Predicated region
        $region17: #{netbn_forward.1} parent=11 // pred_check
          %p293 = pneg %p165
        $region18: #{netbn_forward.1} parent=11 // pred_check_branch
          %295 = sbr.rel (%p293) target = $region20
        $region19: #{netbn_forward.1} parent=11 // pred_region
          _
        $region20: #{netbn_forward.1} parent=11 // pred_fallthru
          _
        // Predicated region
        $region21: #{netbn_forward.1} parent=11 // pred_check
          %p296 = pneg %p186
        $region22: #{netbn_forward.1} parent=11 // pred_check_branch
          %298 = sbr.rel (%p296) target = $region24
        $region23: #{netbn_forward.1} parent=11 // pred_region
          _
        $region24: #{netbn_forward.1} parent=11 // pred_fallthru
          _
        // Predicated region
        $region25: #{netbn_forward.1} parent=11 // pred_check
          %p299 = pneg %p207
        $region26: #{netbn_forward.1} parent=11 // pred_check_branch
          %301 = sbr.rel (%p299) target = $region28
        $region27: #{netbn_forward.1} parent=11 // pred_region
          _
        $region28: #{netbn_forward.1} parent=11 // pred_fallthru
          _
        // Predicated region
        $region29: #{netbn_forward.1} parent=11 // pred_check
          %p302 = pneg %p228
        $region30: #{netbn_forward.1} parent=11 // pred_check_branch
          %304 = sbr.rel (%p302) target = $region32
        $region31: #{netbn_forward.1} parent=11 // pred_region
          _
        $region32: #{netbn_forward.1} parent=11 // pred_fallthru
          _
        // Predicated region
        $region33: #{netbn_forward.1} parent=11 // pred_check
          %p305 = pneg %p249
        $region34: #{netbn_forward.1} parent=11 // pred_check_branch
          %307 = sbr.rel (%p305) target = $region36
        $region35: #{netbn_forward.1} parent=11 // pred_region
          _
        $region36: #{netbn_forward.1} parent=11 // pred_fallthru
          _
      $region12: #{netbn_forward.1} parent=5 // pred_fallthru
        _
      %p308 = scmp.lt.s32.totalorder %s19, 2
      // Predicated region
      $region37: #{netbn_forward.1} parent=5 // pred_check
        %p309 = pneg %p308
      $region38: #{netbn_forward.1} parent=5 // pred_check_branch
        %311 = sbr.rel (%p309) target = $region40
      $region39: #{netbn_forward.1} parent=5 // pred_region
        // Predicated region
        $region41: #{netbn_forward.1} parent=39 // pred_check
          %p312 = pneg %p39
        $region42: #{netbn_forward.1} parent=39 // pred_check_branch
          %314 = sbr.rel (%p312) target = $region44
        $region43: #{netbn_forward.1} parent=39 // pred_region
          %s315 = smul.u32 7, %s19
          %p316 = scmp.lt.s32.totalorder %s315, 13
          %s317 = scalar_select %p316, %s315, 13
          %s318 = smul.addr %s317, 8
          %s319 = scalar_lea.vmem %s0, %s318
          %s320 = smul.u32 7, %s19
        $region44: #{netbn_forward.1} parent=39 // pred_fallthru
          _
        // Predicated region
        $region45: #{netbn_forward.1} parent=39 // pred_check
          %p321 = pneg %p65
        $region46: #{netbn_forward.1} parent=39 // pred_check_branch
          %323 = sbr.rel (%p321) target = $region48
        $region47: #{netbn_forward.1} parent=39 // pred_region
          %s324 = smul.u32 7, %s19
          %p325 = scmp.lt.s32.totalorder %s324, 13
          %s326 = scalar_select %p325, %s324, 13
          %s327 = smul.addr %s326, 8
          %s328 = scalar_lea.vmem %s1, %s327
          %s329 = smul.u32 7, %s19
        $region48: #{netbn_forward.1} parent=39 // pred_fallthru
          _
        // Predicated region
        $region49: #{netbn_forward.1} parent=39 // pred_check
          %p330 = pneg %p91
        $region50: #{netbn_forward.1} parent=39 // pred_check_branch
          %332 = sbr.rel (%p330) target = $region52
        $region51: #{netbn_forward.1} parent=39 // pred_region
          %s333 = smul.u32 7, %s19
          %p334 = scmp.lt.s32.totalorder %s333, 13
          %s335 = scalar_select %p334, %s333, 13
          %s336 = smul.addr %s335, 8
          %s337 = scalar_lea.vmem %s2, %s336
          %s338 = smul.u32 7, %s19
        $region52: #{netbn_forward.1} parent=39 // pred_fallthru
          _
        // Predicated region
        $region53: #{netbn_forward.1} parent=39 // pred_check
          %p339 = pneg %p117
        $region54: #{netbn_forward.1} parent=39 // pred_check_branch
          %341 = sbr.rel (%p339) target = $region56
        $region55: #{netbn_forward.1} parent=39 // pred_region
          %s342 = smul.u32 7, %s19
          %p343 = scmp.lt.s32.totalorder %s342, 13
          %s344 = scalar_select %p343, %s342, 13
          %s345 = smul.addr %s344, 8
          %s346 = scalar_lea.vmem %s3, %s345
          %s347 = smul.u32 7, %s19
        $region56: #{netbn_forward.1} parent=39 // pred_fallthru
          _
      $region40: #{netbn_forward.1} parent=5 // pred_fallthru
        _
      %p348 = scmp.le.s32.totalorder 1, %s19
      %p349 = scmp.lt.s32.totalorder %s19, 3
      %p350 = pnand %p348, %p349
      %p351 = pneg %p350
      // Predicated region
      $region57: #{netbn_forward.1} parent=5 // pred_check
        _
      $region58: #{netbn_forward.1} parent=5 // pred_check_branch
        %353 = sbr.rel (%p350) target = $region60
      $region59: #{netbn_forward.1} parent=5 // pred_region
        %s354 = ssub.s32 %s19, 1
        %s355 = smul.u32 7, %s24
        %p356 = scmp.lt.s32.totalorder %s355, 13
        %s357 = scalar_select %p356, %s355, 13
        %s358 = smul.addr %s357, 8
        %s359 = scalar_lea.vmem %s0, %s358
        %p360 = pneg %p45
        %p361 = pneg %p42
        %s362 = smul.u32 7, %s24
        %p363 = scmp.lt.s32.totalorder %s362, 13
        %s364 = scalar_select %p363, %s362, 13
        %s365 = smul.addr %s364, 8
        %s366 = scalar_lea.vmem %s1, %s365
        %p367 = pneg %p71
        %p368 = pneg %p68
        %s369 = smul.u32 7, %s24
        %p370 = scmp.lt.s32.totalorder %s369, 13
        %s371 = scalar_select %p370, %s369, 13
        %s372 = smul.addr %s371, 8
        %s373 = scalar_lea.vmem %s2, %s372
        %p374 = pneg %p97
        %p375 = pneg %p94
        %s376 = smul.u32 7, %s24
        %p377 = scmp.lt.s32.totalorder %s376, 13
        %s378 = scalar_select %p377, %s376, 13
        %s379 = smul.addr %s378, 8
        %s380 = scalar_lea.vmem %s3, %s379
        %p381 = pneg %p123
        %p382 = pneg %p120
        %p383 = pneg %p144
        %p384 = pneg %p141
        %p385 = pneg %p165
        %p386 = pneg %p162
        %p387 = pneg %p186
        %p388 = pneg %p183
        %p389 = pneg %p207
        %p390 = pneg %p204
        %p391 = pneg %p228
        %p392 = pneg %p225
        %p393 = pneg %p249
        %p394 = pneg %p246
        %p395 = pneg %p275
        %p396 = pneg %p272
        %s397 = sand.u32 %s262, 1
        %s398 = scalar_lea.sflag [#allocation8], %s397
        %s399 = sand.u32 %s262, 1
        %s400 = smul.addr %s399, 8
        %s401 = scalar_lea.vmem [#allocation7], %s400
        %s402 = smul.u32 7, %s24
        %p403 = scmp.lt.s32.totalorder %s402, 13
        %s404 = scalar_select %p403, %s402, 13
        %s405 = smul.addr %s404, 8
        %s406 = scalar_lea.vmem %s0, %s405
        %s407 = smul.u32 7, %s24
        %s408 = smul.u32 7, %s24
        %p409 = scmp.lt.s32.totalorder %s408, 13
        %s410 = scalar_select %p409, %s408, 13
        %s411 = smul.addr %s410, 8
        %s412 = scalar_lea.vmem %s1, %s411
        %s413 = smul.u32 7, %s24
        %s414 = smul.u32 7, %s24
        %p415 = scmp.lt.s32.totalorder %s414, 13
        %s416 = scalar_select %p415, %s414, 13
        %s417 = smul.addr %s416, 8
        %s418 = scalar_lea.vmem %s2, %s417
        %s419 = smul.u32 7, %s24
        %s420 = smul.u32 7, %s24
        %p421 = scmp.lt.s32.totalorder %s420, 13
        %s422 = scalar_select %p421, %s420, 13
        %s423 = smul.addr %s422, 8
        %s424 = scalar_lea.vmem %s3, %s423
        %s425 = smul.u32 7, %s24
        %v427 = vld [vmem:[%s5] sm:$0x1f]
        %v428 = vld [vmem:[%s406] sm:$0xff]
        %v429 = vld [vmem:[%s406 + $0x8] sm:$0xff]
        %v430 = vld [vmem:[%s406 + $0x10] sm:$0xff]
        %v431 = vld [vmem:[%s406 + $0x18] sm:$0xff]
        %v432 = vld [vmem:[%s406 + $0x20] sm:$0xff]
        %v433 = vld [vmem:[%s406 + $0x28] sm:$0xff]
        %v434 = vld [vmem:[%s406 + $0x30] sm:$0xff]
        %v435 = vld [vmem:[%s4] sm:$0xff]
        %v436 = vld [vmem:[%s4 + $0x8] sm:$0xff]
        %v437 = vld [vmem:[%s4 + $0x10] sm:$0xff]
        %v438 = vld [vmem:[%s4 + $0x18] sm:$0xff]
        %v439 = vld [vmem:[%s4 + $0x20] sm:$0xff]
        %v440 = vld [vmem:[%s4 + $0x28] sm:$0xff]
        %v441 = vld [vmem:[%s4 + $0x30] sm:$0xff]
        %v442 = vld [vmem:[%s4 + $0x38] sm:$0xff]
        %v443 = vld [vmem:[%s4 + $0x40] sm:$0xff]
        %v444 = vld [vmem:[%s4 + $0x48] sm:$0xff]
        %v445 = vld [vmem:[%s4 + $0x50] sm:$0xff]
        %v446 = vld [vmem:[%s4 + $0x58] sm:$0xff]
        %v447 = vld [vmem:[%s4 + $0x60] sm:$0xff]
        %v448 = vld [vmem:[%s4 + $0x68] sm:$0xff]
        %v449 = vld [vmem:[%s4 + $0x70] sm:$0xff]
        %v450 = vld [vmem:[%s4 + $0x78] sm:$0xff]
        %v451 = vld [vmem:[%s4 + $0x80] sm:$0xff]
        %v452 = vld [vmem:[%s4 + $0x88] sm:$0xff]
        %v453 = vld [vmem:[%s4 + $0x90] sm:$0xff]
        %v454 = vld [vmem:[%s4 + $0x98] sm:$0xff]
        %v455 = vld [vmem:[%s4 + $0xa0] sm:$0xff]
        %v456 = vld [vmem:[%s4 + $0xa8] sm:$0xff]
        %v457 = vld [vmem:[%s4 + $0xb0] sm:$0xff]
        %v458 = vld [vmem:[%s4 + $0xb8] sm:$0xff]
        %v459 = vld [vmem:[%s4 + $0xc0] sm:$0xff]
        %v460 = vld [vmem:[%s4 + $0xc8] sm:$0xff]
        %v461 = vld [vmem:[%s4 + $0xd0] sm:$0xff]
        %v462 = vld [vmem:[%s4 + $0xd8] sm:$0xff]
        %v463 = vld [vmem:[%s4 + $0xe0] sm:$0xff]
        %v464 = vld [vmem:[%s4 + $0xe8] sm:$0xff]
        %v465 = vld [vmem:[%s4 + $0xf0] sm:$0xff]
        %v466 = vld [vmem:[%s4 + $0xf8] sm:$0xff]
        %v467 = vld [vmem:[%s4 + $0x100] sm:$0xff]
        %v468 = vld [vmem:[%s4 + $0x108] sm:$0xff]
        %v469 = vld [vmem:[%s4 + $0x110] sm:$0xff]
        %v470 = vld [vmem:[%s4 + $0x118] sm:$0xff]
        %v471 = vld [vmem:[%s4 + $0x120] sm:$0xff]
        %v472 = vld [vmem:[%s4 + $0x128] sm:$0xff]
        %v473 = vld [vmem:[%s4 + $0x130] sm:$0xff]
        %v474 = vld [vmem:[%s4 + $0x138] sm:$0xff]
        %v475 = vld [vmem:[%s4 + $0x140] sm:$0xff]
        %v476 = vld [vmem:[%s4 + $0x148] sm:$0xff]
        %v477 = vld [vmem:[%s4 + $0x150] sm:$0xff]
        %v478 = vld [vmem:[%s4 + $0x158] sm:$0xff]
        %v479 = vld [vmem:[%s4 + $0x160] sm:$0xff]
        %v480 = vld [vmem:[%s4 + $0x168] sm:$0xff]
        %v481 = vld [vmem:[%s4 + $0x170] sm:$0xff]
        %v482 = vld [vmem:[%s4 + $0x178] sm:$0xff]
        %v483 = vld [vmem:[%s4 + $0x180] sm:$0xff]
        %v484 = vld [vmem:[%s4 + $0x188] sm:$0xff]
        %v485 = vld [vmem:[%s4 + $0x190] sm:$0xff]
        %v486 = vld [vmem:[%s4 + $0x198] sm:$0xff]
        %v487 = vld [vmem:[%s4 + $0x1a0] sm:$0xff]
        %v488 = vld [vmem:[%s4 + $0x1a8] sm:$0xff]
        %v489 = vld [vmem:[%s4 + $0x1b0] sm:$0xff]
        %v490 = vld [vmem:[%s4 + $0x1b8] sm:$0xff]
        %v491 = vld [vmem:[%s4 + $0x1c0] sm:$0xff]
        %v492 = vld [vmem:[%s4 + $0x1c8] sm:$0xff]
        %v493 = vld [vmem:[%s4 + $0x1d0] sm:$0xff]
        %v494 = vld [vmem:[%s4 + $0x1d8] sm:$0xff]
        %v495 = vld [vmem:[%s4 + $0x1e0] sm:$0xff]
        %v496 = vld [vmem:[%s4 + $0x1e8] sm:$0xff]
        %v497 = vld [vmem:[%s4 + $0x1f0] sm:$0xff]
        %v498 = vld [vmem:[%s4 + $0x1f8] sm:$0xff]
        %v499 = vld [vmem:[%s4 + $0x200] sm:$0xff]
        %v500 = vld [vmem:[%s4 + $0x208] sm:$0xff]
        %v501 = vld [vmem:[%s4 + $0x210] sm:$0xff]
        %v502 = vld [vmem:[%s4 + $0x218] sm:$0xff]
        %v503 = vld [vmem:[%s4 + $0x220] sm:$0xff]
        %v504 = vld [vmem:[%s4 + $0x228] sm:$0xff]
        %v505 = vld [vmem:[%s4 + $0x230] sm:$0xff]
        %v506 = vld [vmem:[%s4 + $0x238] sm:$0xff]
        %v507 = vld [vmem:[%s4 + $0x240] sm:$0xff]
        %v508 = vld [vmem:[%s4 + $0x248] sm:$0xff]
        %v509 = vld [vmem:[%s4 + $0x250] sm:$0xff]
        %v510 = vld [vmem:[%s4 + $0x258] sm:$0xff]
        %v511 = vld [vmem:[%s4 + $0x260] sm:$0xff]
        %v512 = vld [vmem:[%s4 + $0x268] sm:$0xff]
        %v513 = vld [vmem:[%s4 + $0x270] sm:$0xff]
        %v514 = vld [vmem:[%s4 + $0x278] sm:$0xff]
        %v515 = vld [vmem:[%s4 + $0x280] sm:$0xff]
        %v516 = vld [vmem:[%s4 + $0x288] sm:$0xff]
        %v517 = vld [vmem:[%s4 + $0x290] sm:$0xff]
        %v518 = vld [vmem:[%s4 + $0x298] sm:$0xff]
        %v519 = vld [vmem:[%s4 + $0x2a0] sm:$0xff]
        %v520 = vld [vmem:[%s4 + $0x2a8] sm:$0xff]
        %v521 = vld [vmem:[%s4 + $0x2b0] sm:$0xff]
        %v522 = vld [vmem:[%s4 + $0x2b8] sm:$0xff]
        %v523 = vld [vmem:[%s4 + $0x2c0] sm:$0xff]
        %v524 = vld [vmem:[%s4 + $0x2c8] sm:$0xff]
        %v525 = vld [vmem:[%s4 + $0x2d0] sm:$0xff]
        %v526 = vld [vmem:[%s4 + $0x2d8] sm:$0xff]
        %v527 = vld [vmem:[%s4 + $0x2e0] sm:$0xff]
        %v528 = vld [vmem:[%s4 + $0x2e8] sm:$0xff]
        %v529 = vld [vmem:[%s4 + $0x2f0] sm:$0xff]
        %v530 = vld [vmem:[%s4 + $0x2f8] sm:$0xff]
        %v531 = vld [vmem:[%s4 + $0x300] sm:$0xff]
        %v532 = vld [vmem:[%s4 + $0x308] sm:$0xff]
        %v533 = vld [vmem:[%s4 + $0x310] sm:$0xff]
        %v534 = vld [vmem:[%s4 + $0x318] sm:$0xff]
        %v535 = vld [vmem:[%s4 + $0x320] sm:$0xf]
        %v536 = vld [vmem:[%s4 + $0x328] sm:$0xf]
        %v537 = vld [vmem:[%s4 + $0x330] sm:$0xf]
        %v538 = vld [vmem:[%s4 + $0x338] sm:$0xf]
        %v539 = vld [vmem:[%s4 + $0x340] sm:$0xf]
        %v540 = vld [vmem:[%s4 + $0x348] sm:$0xf]
        %v541 = vld [vmem:[%s4 + $0x350] sm:$0xf]
        %v542 = vld [vmem:[%s4 + $0x358] sm:$0xf]
        %v543 = vld [vmem:[%s4 + $0x360] sm:$0xf]
        %v544 = vld [vmem:[%s4 + $0x368] sm:$0xf]
        %vm545 = vcmask 687104
        %v547 = vsel %vm545, %v428, 0
        %v550 = vsel %vm545, %v429, 0
        %v553 = vsel %vm545, %v430, 0
        %v556 = vsel %vm545, %v431, 0
        %v559 = vsel %vm545, %v432, 0
        %v562 = vsel %vm545, %v433, 0
        %v565 = vsel %vm545, %v434, 0
        %vm567 = vcmask 1043456
        %v569 = vsel %vm567, %v535, 0
        %v572 = vsel %vm567, %v536, 0
        %v575 = vsel %vm567, %v537, 0
        %v578 = vsel %vm567, %v538, 0
        %v581 = vsel %vm567, %v539, 0
        %v584 = vsel %vm567, %v540, 0
        %v587 = vsel %vm567, %v541, 0
        %v590 = vsel %vm567, %v542, 0
        %v593 = vsel %vm567, %v543, 0
        %v596 = vsel %vm567, %v544, 0
        %598 = vmatprep.subr.mxu0 %v436
        %599 = vmatpush1.msra.mxu0 %v435
        %600 = vmatprep.subr.mxu0 %v446
        %601 = vmatpush1.msra.mxu0 %v445
        %602 = vmatprep.subr.mxu0 %v456
        %603 = vmatpush1.msra.mxu0 %v455
        %604 = vmatprep.subr.mxu0 %v466
        %605 = vmatpush1.msra.mxu0 %v465
        %606 = vmatprep.subr.mxu0 %v476
        %607 = vmatpush1.msra.mxu0 %v475
        %608 = vmatprep.subr.mxu0 %v486
        %609 = vmatpush1.msra.mxu0 %v485
        %610 = vmatprep.subr.mxu0 %v496
        %611 = vmatpush1.msra.mxu0 %v495
        %612 = vmatprep.subr.mxu0 %v506
        %613 = vmatpush1.msra.mxu0 %v505
        %614 = vmatprep.subr.mxu0 %v516
        %615 = vmatpush1.msra.mxu0 %v515
        %616 = vmatprep.subr.mxu0 %v526
        %617 = vmatpush1.msra.mxu0 %v525
        %618 = vmatprep.subr.mxu0 %v572
        %619 = vmatpush1.msra.mxu0 %v569
        %620 = vmatprep.subr.mxu0 0.0
        %621 = vmatpush1.msra.mxu0 0.0
        %622 = vmatprep.subr.mxu0 0.0
        %623 = vmatpush1.msra.mxu0 0.0
        %624 = vmatprep.subr.mxu0 0.0
        %625 = vmatpush1.msra.mxu0 0.0
        %626 = vmatprep.subr.mxu0 0.0
        %627 = vmatpush1.msra.mxu0 0.0
        %628 = vmatprep.subr.mxu0 0.0
        %629 = vmatpush1.msra.mxu0 0.0
        %630 = vmatprep.subr.mxu0 0.0
        %631 = vmatpush1.msra.mxu0 0.0
        %632 = vmatprep.subr.mxu0 0.0
        %633 = vmatpush1.msra.mxu0 0.0
        %634 = vmatprep.subr.mxu0 0.0
        %635 = vmatpush1.msra.mxu0 0.0
        %636 = vmatprep.subr.mxu0 0.0
        %637 = vmatpush1.msra.mxu0 0.0
        %638 = vmatprep.subr.mxu0 0.0
        %639 = vmatpush1.msra.mxu0 0.0
        %640 = vmatprep.subr.mxu0 0.0
        %641 = vmatpush1.msra.mxu0 0.0
        %642 = vmatprep.subr.mxu0 0.0
        %643 = vmatpush1.msra.mxu0 0.0
        %644 = vmatprep.subr.mxu0 0.0
        %645 = vmatpush1.msra.mxu0 0.0
        %646 = vmatprep.subr.mxu0 0.0
        %647 = vmatpush1.msra.mxu0 0.0
        %648 = vmatprep.subr.mxu0 0.0
        %649 = vmatpush1.msra.mxu0 0.0
        %650 = vmatprep.subr.mxu0 0.0
        %651 = vmatpush1.msra.mxu0 0.0
        %652 = vmatprep.subr.mxu0 0.0
        %653 = vmatpush1.msra.mxu0 0.0
        %654 = vmatprep.subr.mxu0 0.0
        %655 = vmatpush1.msra.mxu0 0.0
        %656 = vmatprep.subr.mxu0 0.0
        %657 = vmatpush1.msra.mxu0 0.0
        %658 = vmatprep.subr.mxu0 0.0
        %659 = vmatpush1.msra.mxu0 0.0
        %660 = vmatprep.subr.mxu0 0.0
        %661 = vmatpush1.msra.mxu0 0.0
        %662 = vmatprep.mubr.f32.mxu0 0.0
        %663 = vmatmul.mubr.f32.gmra.mrb[0].mxu0 %v547
        %v664 = vpop.f32.mrb[0].mxu0
        %v665 = vadd.f32 0.0, %v664
        %v666 = vpop.f32.mrb[0].mxu0
        %v667 = vadd.f32 0.0, %v666
        %668 = vmatprep.mubr.f32.mxu0 0.0
        %669 = vmatmul.mubr.f32.gmra.mrb[0].mxu0 %v550
        %v670 = vpop.f32.mrb[0].mxu0
        %v671 = vadd.f32 0.0, %v670
        %v672 = vpop.f32.mrb[0].mxu0
        %v673 = vadd.f32 0.0, %v672
        %674 = vmatprep.mubr.f32.mxu0 0.0
        %675 = vmatmul.mubr.f32.gmra.mrb[0].mxu0 %v553
        %v676 = vpop.f32.mrb[0].mxu0
        %v677 = vadd.f32 0.0, %v676
        %v678 = vpop.f32.mrb[0].mxu0
        %v679 = vadd.f32 0.0, %v678
        %680 = vmatprep.mubr.f32.mxu0 0.0
        %681 = vmatmul.mubr.f32.gmra.mrb[0].mxu0 %v556
        %v682 = vpop.f32.mrb[0].mxu0
        %v683 = vadd.f32 0.0, %v682
        %v684 = vpop.f32.mrb[0].mxu0
        %v685 = vadd.f32 0.0, %v684
        %686 = vmatprep.mubr.f32.mxu0 0.0
        %687 = vmatmul.mubr.f32.gmra.mrb[0].mxu0 %v559
        %v688 = vpop.f32.mrb[0].mxu0
        %v689 = vadd.f32 0.0, %v688
        %v690 = vpop.f32.mrb[0].mxu0
        %v691 = vadd.f32 0.0, %v690
        %692 = vmatprep.mubr.f32.mxu0 0.0
        %693 = vmatmul.mubr.f32.gmra.mrb[0].mxu0 %v562
        %v694 = vpop.f32.mrb[0].mxu0
        %v695 = vadd.f32 0.0, %v694
        %v696 = vpop.f32.mrb[0].mxu0
        %v697 = vadd.f32 0.0, %v696
        %698 = vmatprep.mubr.f32.mxu0 0.0
        %699 = vmatmul.mubr.f32.gmra.mrb[0].mxu0 %v565
        %v700 = vpop.f32.mrb[0].mxu0
        %v701 = vadd.f32 0.0, %v700
        %v702 = vpop.f32.mrb[0].mxu0
        %v703 = vadd.f32 0.0, %v702
        %704 = vdwg.mxu0
        %705 = vmatprep.subr.mxu0 %v438
        %706 = vmatpush1.msra.mxu0 %v437
        %707 = vmatprep.subr.mxu0 %v448
        %708 = vmatpush1.msra.mxu0 %v447
        %709 = vmatprep.subr.mxu0 %v458
        %710 = vmatpush1.msra.mxu0 %v457
        %711 = vmatprep.subr.mxu0 %v468
        %712 = vmatpush1.msra.mxu0 %v467
        %713 = vmatprep.subr.mxu0 %v478
        %714 = vmatpush1.msra.mxu0 %v477
        %715 = vmatprep.subr.mxu0 %v488
        %716 = vmatpush1.msra.mxu0 %v487
        %717 = vmatprep.subr.mxu0 %v498
        %718 = vmatpush1.msra.mxu0 %v497
        %719 = vmatprep.subr.mxu0 %v508
        %720 = vmatpush1.msra.mxu0 %v507
        %721 = vmatprep.subr.mxu0 %v518
        %722 = vmatpush1.msra.mxu0 %v517
        %723 = vmatprep.subr.mxu0 %v528
        %724 = vmatpush1.msra.mxu0 %v527
        %725 = vmatprep.subr.mxu0 %v578
        %726 = vmatpush1.msra.mxu0 %v575
        %727 = vmatprep.subr.mxu0 0.0
        %728 = vmatpush1.msra.mxu0 0.0
        %729 = vmatprep.subr.mxu0 0.0
        %730 = vmatpush1.msra.mxu0 0.0
        %731 = vmatprep.subr.mxu0 0.0
        %732 = vmatpush1.msra.mxu0 0.0
        %733 = vmatprep.subr.mxu0 0.0
        %734 = vmatpush1.msra.mxu0 0.0
        %735 = vmatprep.subr.mxu0 0.0
        %736 = vmatpush1.msra.mxu0 0.0
        %737 = vmatprep.subr.mxu0 0.0
        %738 = vmatpush1.msra.mxu0 0.0
        %739 = vmatprep.subr.mxu0 0.0
        %740 = vmatpush1.msra.mxu0 0.0
        %741 = vmatprep.subr.mxu0 0.0
        %742 = vmatpush1.msra.mxu0 0.0
        %743 = vmatprep.subr.mxu0 0.0
        %744 = vmatpush1.msra.mxu0 0.0
        %745 = vmatprep.subr.mxu0 0.0
        %746 = vmatpush1.msra.mxu0 0.0
        %747 = vmatprep.subr.mxu0 0.0
        %748 = vmatpush1.msra.mxu0 0.0
        %749 = vmatprep.subr.mxu0 0.0
        %750 = vmatpush1.msra.mxu0 0.0
        %751 = vmatprep.subr.mxu0 0.0
        %752 = vmatpush1.msra.mxu0 0.0
        %753 = vmatprep.subr.mxu0 0.0
        %754 = vmatpush1.msra.mxu0 0.0
        %755 = vmatprep.subr.mxu0 0.0
        %756 = vmatpush1.msra.mxu0 0.0
        %757 = vmatprep.subr.mxu0 0.0
        %758 = vmatpush1.msra.mxu0 0.0
        %759 = vmatprep.subr.mxu0 0.0
        %760 = vmatpush1.msra.mxu0 0.0
        %761 = vmatprep.subr.mxu0 0.0
        %762 = vmatpush1.msra.mxu0 0.0
        %763 = vmatprep.subr.mxu0 0.0
        %764 = vmatpush1.msra.mxu0 0.0
        %765 = vmatprep.subr.mxu0 0.0
        %766 = vmatpush1.msra.mxu0 0.0
        %767 = vmatprep.subr.mxu0 0.0
        %768 = vmatpush1.msra.mxu0 0.0
        %769 = vmatprep.mubr.f32.mxu0 0.0
        %770 = vmatmul.mubr.f32.gmra.mrb[0].mxu0 %v547
        %v771 = vpop.f32.mrb[0].mxu0
        %v772 = vadd.f32 0.0, %v771
        %v773 = vpop.f32.mrb[0].mxu0
        %v774 = vadd.f32 0.0, %v773
        %775 = vmatprep.mubr.f32.mxu0 0.0
        %776 = vmatmul.mubr.f32.gmra.mrb[0].mxu0 %v550
        %v777 = vpop.f32.mrb[0].mxu0
        %v778 = vadd.f32 0.0, %v777
        %v779 = vpop.f32.mrb[0].mxu0
        %v780 = vadd.f32 0.0, %v779
        %781 = vmatprep.mubr.f32.mxu0 0.0
        %782 = vmatmul.mubr.f32.gmra.mrb[0].mxu0 %v553
        %v783 = vpop.f32.mrb[0].mxu0
        %v784 = vadd.f32 0.0, %v783
        %v785 = vpop.f32.mrb[0].mxu0
        %v786 = vadd.f32 0.0, %v785
        %787 = vmatprep.mubr.f32.mxu0 0.0
        %788 = vmatmul.mubr.f32.gmra.mrb[0].mxu0 %v556
        %v789 = vpop.f32.mrb[0].mxu0
        %v790 = vadd.f32 0.0, %v789
        %v791 = vpop.f32.mrb[0].mxu0
        %v792 = vadd.f32 0.0, %v791
        %793 = vmatprep.mubr.f32.mxu0 0.0
        %794 = vmatmul.mubr.f32.gmra.mrb[0].mxu0 %v559
        %v795 = vpop.f32.mrb[0].mxu0
        %v796 = vadd.f32 0.0, %v795
        %v797 = vpop.f32.mrb[0].mxu0
        %v798 = vadd.f32 0.0, %v797
        %799 = vmatprep.mubr.f32.mxu0 0.0
        %800 = vmatmul.mubr.f32.gmra.mrb[0].mxu0 %v562
        %v801 = vpop.f32.mrb[0].mxu0
        %v802 = vadd.f32 0.0, %v801
        %v803 = vpop.f32.mrb[0].mxu0
        %v804 = vadd.f32 0.0, %v803
        %805 = vmatprep.mubr.f32.mxu0 0.0
        %806 = vmatmul.mubr.f32.gmra.mrb[0].mxu0 %v565
        %v807 = vpop.f32.mrb[0].mxu0
        %v808 = vadd.f32 0.0, %v807
        %v809 = vpop.f32.mrb[0].mxu0
        %v810 = vadd.f32 0.0, %v809
        %811 = vdwg.mxu0
        %812 = vmatprep.subr.mxu0 %v440
        %813 = vmatpush1.msra.mxu0 %v439
        %814 = vmatprep.subr.mxu0 %v450
        %815 = vmatpush1.msra.mxu0 %v449
        %816 = vmatprep.subr.mxu0 %v460
        %817 = vmatpush1.msra.mxu0 %v459
        %818 = vmatprep.subr.mxu0 %v470
        %819 = vmatpush1.msra.mxu0 %v469
        %820 = vmatprep.subr.mxu0 %v480
        %821 = vmatpush1.msra.mxu0 %v479
        %822 = vmatprep.subr.mxu0 %v490
        %823 = vmatpush1.msra.mxu0 %v489
        %824 = vmatprep.subr.mxu0 %v500
        %825 = vmatpush1.msra.mxu0 %v499
        %826 = vmatprep.subr.mxu0 %v510
        %827 = vmatpush1.msra.mxu0 %v509
        %828 = vmatprep.subr.mxu0 %v520
        %829 = vmatpush1.msra.mxu0 %v519
        %830 = vmatprep.subr.mxu0 %v530
        %831 = vmatpush1.msra.mxu0 %v529
        %832 = vmatprep.subr.mxu0 %v584
        %833 = vmatpush1.msra.mxu0 %v581
        %834 = vmatprep.subr.mxu0 0.0
        %835 = vmatpush1.msra.mxu0 0.0
        %836 = vmatprep.subr.mxu0 0.0
        %837 = vmatpush1.msra.mxu0 0.0
        %838 = vmatprep.subr.mxu0 0.0
        %839 = vmatpush1.msra.mxu0 0.0
        %840 = vmatprep.subr.mxu0 0.0
        %841 = vmatpush1.msra.mxu0 0.0
        %842 = vmatprep.subr.mxu0 0.0
        %843 = vmatpush1.msra.mxu0 0.0
        %844 = vmatprep.subr.mxu0 0.0
        %845 = vmatpush1.msra.mxu0 0.0
        %846 = vmatprep.subr.mxu0 0.0
        %847 = vmatpush1.msra.mxu0 0.0
        %848 = vmatprep.subr.mxu0 0.0
        %849 = vmatpush1.msra.mxu0 0.0
        %850 = vmatprep.subr.mxu0 0.0
        %851 = vmatpush1.msra.mxu0 0.0
        %852 = vmatprep.subr.mxu0 0.0
        %853 = vmatpush1.msra.mxu0 0.0
        %854 = vmatprep.subr.mxu0 0.0
        %855 = vmatpush1.msra.mxu0 0.0
        %856 = vmatprep.subr.mxu0 0.0
        %857 = vmatpush1.msra.mxu0 0.0
        %858 = vmatprep.subr.mxu0 0.0
        %859 = vmatpush1.msra.mxu0 0.0
        %860 = vmatprep.subr.mxu0 0.0
        %861 = vmatpush1.msra.mxu0 0.0
        %862 = vmatprep.subr.mxu0 0.0
        %863 = vmatpush1.msra.mxu0 0.0
        %864 = vmatprep.subr.mxu0 0.0
        %865 = vmatpush1.msra.mxu0 0.0
        %866 = vmatprep.subr.mxu0 0.0
        %867 = vmatpush1.msra.mxu0 0.0
        %868 = vmatprep.subr.mxu0 0.0
        %869 = vmatpush1.msra.mxu0 0.0
        %870 = vmatprep.subr.mxu0 0.0
        %871 = vmatpush1.msra.mxu0 0.0
        %872 = vmatprep.subr.mxu0 0.0
        %873 = vmatpush1.msra.mxu0 0.0
        %874 = vmatprep.subr.mxu0 0.0
        %875 = vmatpush1.msra.mxu0 0.0
        %876 = vmatprep.mubr.f32.mxu0 0.0
        %877 = vmatmul.mubr.f32.gmra.mrb[0].mxu0 %v547
        %v878 = vpop.f32.mrb[0].mxu0
        %v879 = vadd.f32 0.0, %v878
        %v880 = vpop.f32.mrb[0].mxu0
        %v881 = vadd.f32 0.0, %v880
        %882 = vmatprep.mubr.f32.mxu0 0.0
        %883 = vmatmul.mubr.f32.gmra.mrb[0].mxu0 %v550
        %v884 = vpop.f32.mrb[0].mxu0
        %v885 = vadd.f32 0.0, %v884
        %v886 = vpop.f32.mrb[0].mxu0
        %v887 = vadd.f32 0.0, %v886
        %888 = vmatprep.mubr.f32.mxu0 0.0
        %889 = vmatmul.mubr.f32.gmra.mrb[0].mxu0 %v553
        %v890 = vpop.f32.mrb[0].mxu0
        %v891 = vadd.f32 0.0, %v890
        %v892 = vpop.f32.mrb[0].mxu0
        %v893 = vadd.f32 0.0, %v892
        %894 = vmatprep.mubr.f32.mxu0 0.0
        %895 = vmatmul.mubr.f32.gmra.mrb[0].mxu0 %v556
        %v896 = vpop.f32.mrb[0].mxu0
        %v897 = vadd.f32 0.0, %v896
        %v898 = vpop.f32.mrb[0].mxu0
        %v899 = vadd.f32 0.0, %v898
        %900 = vmatprep.mubr.f32.mxu0 0.0
        %901 = vmatmul.mubr.f32.gmra.mrb[0].mxu0 %v559
        %v902 = vpop.f32.mrb[0].mxu0
        %v903 = vadd.f32 0.0, %v902
        %v904 = vpop.f32.mrb[0].mxu0
        %v905 = vadd.f32 0.0, %v904
        %906 = vmatprep.mubr.f32.mxu0 0.0
        %907 = vmatmul.mubr.f32.gmra.mrb[0].mxu0 %v562
        %v908 = vpop.f32.mrb[0].mxu0
        %v909 = vadd.f32 0.0, %v908
        %v910 = vpop.f32.mrb[0].mxu0
        %v911 = vadd.f32 0.0, %v910
        %912 = vmatprep.mubr.f32.mxu0 0.0
        %913 = vmatmul.mubr.f32.gmra.mrb[0].mxu0 %v565
        %v914 = vpop.f32.mrb[0].mxu0
        %v915 = vadd.f32 0.0, %v914
        %v916 = vpop.f32.mrb[0].mxu0
        %v917 = vadd.f32 0.0, %v916
        %918 = vdwg.mxu0
        %919 = vmatprep.subr.mxu0 %v442
        %920 = vmatpush1.msra.mxu0 %v441
        %921 = vmatprep.subr.mxu0 %v452
        %922 = vmatpush1.msra.mxu0 %v451
        %923 = vmatprep.subr.mxu0 %v462
        %924 = vmatpush1.msra.mxu0 %v461
        %925 = vmatprep.subr.mxu0 %v472
        %926 = vmatpush1.msra.mxu0 %v471
        %927 = vmatprep.subr.mxu0 %v482
        %928 = vmatpush1.msra.mxu0 %v481
        %929 = vmatprep.subr.mxu0 %v492
        %930 = vmatpush1.msra.mxu0 %v491
        %931 = vmatprep.subr.mxu0 %v502
        %932 = vmatpush1.msra.mxu0 %v501
        %933 = vmatprep.subr.mxu0 %v512
        %934 = vmatpush1.msra.mxu0 %v511
        %935 = vmatprep.subr.mxu0 %v522
        %936 = vmatpush1.msra.mxu0 %v521
        %937 = vmatprep.subr.mxu0 %v532
        %938 = vmatpush1.msra.mxu0 %v531
        %939 = vmatprep.subr.mxu0 %v590
        %940 = vmatpush1.msra.mxu0 %v587
        %941 = vmatprep.subr.mxu0 0.0
        %942 = vmatpush1.msra.mxu0 0.0
        %943 = vmatprep.subr.mxu0 0.0
        %944 = vmatpush1.msra.mxu0 0.0
        %945 = vmatprep.subr.mxu0 0.0
        %946 = vmatpush1.msra.mxu0 0.0
        %947 = vmatprep.subr.mxu0 0.0
        %948 = vmatpush1.msra.mxu0 0.0
        %949 = vmatprep.subr.mxu0 0.0
        %950 = vmatpush1.msra.mxu0 0.0
        %951 = vmatprep.subr.mxu0 0.0
        %952 = vmatpush1.msra.mxu0 0.0
        %953 = vmatprep.subr.mxu0 0.0
        %954 = vmatpush1.msra.mxu0 0.0
        %955 = vmatprep.subr.mxu0 0.0
        %956 = vmatpush1.msra.mxu0 0.0
        %957 = vmatprep.subr.mxu0 0.0
        %958 = vmatpush1.msra.mxu0 0.0
        %959 = vmatprep.subr.mxu0 0.0
        %960 = vmatpush1.msra.mxu0 0.0
        %961 = vmatprep.subr.mxu0 0.0
        %962 = vmatpush1.msra.mxu0 0.0
        %963 = vmatprep.subr.mxu0 0.0
        %964 = vmatpush1.msra.mxu0 0.0
        %965 = vmatprep.subr.mxu0 0.0
        %966 = vmatpush1.msra.mxu0 0.0
        %967 = vmatprep.subr.mxu0 0.0
        %968 = vmatpush1.msra.mxu0 0.0
        %969 = vmatprep.subr.mxu0 0.0
        %970 = vmatpush1.msra.mxu0 0.0
        %971 = vmatprep.subr.mxu0 0.0
        %972 = vmatpush1.msra.mxu0 0.0
        %973 = vmatprep.subr.mxu0 0.0
        %974 = vmatpush1.msra.mxu0 0.0
        %975 = vmatprep.subr.mxu0 0.0
        %976 = vmatpush1.msra.mxu0 0.0
        %977 = vmatprep.subr.mxu0 0.0
        %978 = vmatpush1.msra.mxu0 0.0
        %979 = vmatprep.subr.mxu0 0.0
        %980 = vmatpush1.msra.mxu0 0.0
        %981 = vmatprep.subr.mxu0 0.0
        %982 = vmatpush1.msra.mxu0 0.0
        %983 = vmatprep.mubr.f32.mxu0 0.0
        %984 = vmatmul.mubr.f32.gmra.mrb[0].mxu0 %v547
        %v985 = vpop.f32.mrb[0].mxu0
        %v986 = vadd.f32 0.0, %v985
        %v987 = vpop.f32.mrb[0].mxu0
        %v988 = vadd.f32 0.0, %v987
        %989 = vmatprep.mubr.f32.mxu0 0.0
        %990 = vmatmul.mubr.f32.gmra.mrb[0].mxu0 %v550
        %v991 = vpop.f32.mrb[0].mxu0
        %v992 = vadd.f32 0.0, %v991
        %v993 = vpop.f32.mrb[0].mxu0
        %v994 = vadd.f32 0.0, %v993
        %995 = vmatprep.mubr.f32.mxu0 0.0
        %996 = vmatmul.mubr.f32.gmra.mrb[0].mxu0 %v553
        %v997 = vpop.f32.mrb[0].mxu0
        %v998 = vadd.f32 0.0, %v997
        %v999 = vpop.f32.mrb[0].mxu0
        %v1000 = vadd.f32 0.0, %v999
        %1001 = vmatprep.mubr.f32.mxu0 0.0
        %1002 = vmatmul.mubr.f32.gmra.mrb[0].mxu0 %v556
        %v1003 = vpop.f32.mrb[0].mxu0
        %v1004 = vadd.f32 0.0, %v1003
        %v1005 = vpop.f32.mrb[0].mxu0
        %v1006 = vadd.f32 0.0, %v1005
        %1007 = vmatprep.mubr.f32.mxu0 0.0
        %1008 = vmatmul.mubr.f32.gmra.mrb[0].mxu0 %v559
        %v1009 = vpop.f32.mrb[0].mxu0
        %v1010 = vadd.f32 0.0, %v1009
        %v1011 = vpop.f32.mrb[0].mxu0
        %v1012 = vadd.f32 0.0, %v1011
        %1013 = vmatprep.mubr.f32.mxu0 0.0
        %1014 = vmatmul.mubr.f32.gmra.mrb[0].mxu0 %v562
        %v1015 = vpop.f32.mrb[0].mxu0
        %v1016 = vadd.f32 0.0, %v1015
        %v1017 = vpop.f32.mrb[0].mxu0
        %v1018 = vadd.f32 0.0, %v1017
        %1019 = vmatprep.mubr.f32.mxu0 0.0
        %1020 = vmatmul.mubr.f32.gmra.mrb[0].mxu0 %v565
        %v1021 = vpop.f32.mrb[0].mxu0
        %v1022 = vadd.f32 0.0, %v1021
        %v1023 = vpop.f32.mrb[0].mxu0
        %v1024 = vadd.f32 0.0, %v1023
        %1025 = vdwg.mxu0
        %1026 = vmatprep.subr.mxu0 %v444
        %1027 = vmatpush1.msra.mxu0 %v443
        %1028 = vmatprep.subr.mxu0 %v454
        %1029 = vmatpush1.msra.mxu0 %v453
        %1030 = vmatprep.subr.mxu0 %v464
        %1031 = vmatpush1.msra.mxu0 %v463
        %1032 = vmatprep.subr.mxu0 %v474
        %1033 = vmatpush1.msra.mxu0 %v473
        %1034 = vmatprep.subr.mxu0 %v484
        %1035 = vmatpush1.msra.mxu0 %v483
        %1036 = vmatprep.subr.mxu0 %v494
        %1037 = vmatpush1.msra.mxu0 %v493
        %1038 = vmatprep.subr.mxu0 %v504
        %1039 = vmatpush1.msra.mxu0 %v503
        %1040 = vmatprep.subr.mxu0 %v514
        %1041 = vmatpush1.msra.mxu0 %v513
        %1042 = vmatprep.subr.mxu0 %v524
        %1043 = vmatpush1.msra.mxu0 %v523
        %1044 = vmatprep.subr.mxu0 %v534
        %1045 = vmatpush1.msra.mxu0 %v533
        %1046 = vmatprep.subr.mxu0 %v596
        %1047 = vmatpush1.msra.mxu0 %v593
        %1048 = vmatprep.subr.mxu0 0.0
        %1049 = vmatpush1.msra.mxu0 0.0
        %1050 = vmatprep.subr.mxu0 0.0
        %1051 = vmatpush1.msra.mxu0 0.0
        %1052 = vmatprep.subr.mxu0 0.0
        %1053 = vmatpush1.msra.mxu0 0.0
        %1054 = vmatprep.subr.mxu0 0.0
        %1055 = vmatpush1.msra.mxu0 0.0
        %1056 = vmatprep.subr.mxu0 0.0
        %1057 = vmatpush1.msra.mxu0 0.0
        %1058 = vmatprep.subr.mxu0 0.0
        %1059 = vmatpush1.msra.mxu0 0.0
        %1060 = vmatprep.subr.mxu0 0.0
        %1061 = vmatpush1.msra.mxu0 0.0
        %1062 = vmatprep.subr.mxu0 0.0
        %1063 = vmatpush1.msra.mxu0 0.0
        %1064 = vmatprep.subr.mxu0 0.0
        %1065 = vmatpush1.msra.mxu0 0.0
        %1066 = vmatprep.subr.mxu0 0.0
        %1067 = vmatpush1.msra.mxu0 0.0
        %1068 = vmatprep.subr.mxu0 0.0
        %1069 = vmatpush1.msra.mxu0 0.0
        %1070 = vmatprep.subr.mxu0 0.0
        %1071 = vmatpush1.msra.mxu0 0.0
        %1072 = vmatprep.subr.mxu0 0.0
        %1073 = vmatpush1.msra.mxu0 0.0
        %1074 = vmatprep.subr.mxu0 0.0
        %1075 = vmatpush1.msra.mxu0 0.0
        %1076 = vmatprep.subr.mxu0 0.0
        %1077 = vmatpush1.msra.mxu0 0.0
        %1078 = vmatprep.subr.mxu0 0.0
        %1079 = vmatpush1.msra.mxu0 0.0
        %1080 = vmatprep.subr.mxu0 0.0
        %1081 = vmatpush1.msra.mxu0 0.0
        %1082 = vmatprep.subr.mxu0 0.0
        %1083 = vmatpush1.msra.mxu0 0.0
        %1084 = vmatprep.subr.mxu0 0.0
        %1085 = vmatpush1.msra.mxu0 0.0
        %1086 = vmatprep.subr.mxu0 0.0
        %1087 = vmatpush1.msra.mxu0 0.0
        %1088 = vmatprep.subr.mxu0 0.0
        %1089 = vmatpush1.msra.mxu0 0.0
        %1090 = vmatprep.mubr.f32.mxu0 0.0
        %1091 = vmatmul.mubr.f32.gmra.mrb[0].mxu0 %v547
        %v1092 = vpop.f32.mrb[0].mxu0
        %v1093 = vadd.f32 0.0, %v1092
        %v1094 = vpop.f32.mrb[0].mxu0
        %v1095 = vadd.f32 0.0, %v1094
        %1096 = vmatprep.mubr.f32.mxu0 0.0
        %1097 = vmatmul.mubr.f32.gmra.mrb[0].mxu0 %v550
        %v1098 = vpop.f32.mrb[0].mxu0
        %v1099 = vadd.f32 0.0, %v1098
        %v1100 = vpop.f32.mrb[0].mxu0
        %v1101 = vadd.f32 0.0, %v1100
        %1102 = vmatprep.mubr.f32.mxu0 0.0
        %1103 = vmatmul.mubr.f32.gmra.mrb[0].mxu0 %v553
        %v1104 = vpop.f32.mrb[0].mxu0
        %v1105 = vadd.f32 0.0, %v1104
        %v1106 = vpop.f32.mrb[0].mxu0
        %v1107 = vadd.f32 0.0, %v1106
        %1108 = vmatprep.mubr.f32.mxu0 0.0
        %1109 = vmatmul.mubr.f32.gmra.mrb[0].mxu0 %v556
        %v1110 = vpop.f32.mrb[0].mxu0
        %v1111 = vadd.f32 0.0, %v1110
        %v1112 = vpop.f32.mrb[0].mxu0
        %v1113 = vadd.f32 0.0, %v1112
        %1114 = vmatprep.mubr.f32.mxu0 0.0
        %1115 = vmatmul.mubr.f32.gmra.mrb[0].mxu0 %v559
        %v1116 = vpop.f32.mrb[0].mxu0
        %v1117 = vadd.f32 0.0, %v1116
        %v1118 = vpop.f32.mrb[0].mxu0
        %v1119 = vadd.f32 0.0, %v1118
        %1120 = vmatprep.mubr.f32.mxu0 0.0
        %1121 = vmatmul.mubr.f32.gmra.mrb[0].mxu0 %v562
        %v1122 = vpop.f32.mrb[0].mxu0
        %v1123 = vadd.f32 0.0, %v1122
        %v1124 = vpop.f32.mrb[0].mxu0
        %v1125 = vadd.f32 0.0, %v1124
        %1126 = vmatprep.mubr.f32.mxu0 0.0
        %1127 = vmatmul.mubr.f32.gmra.mrb[0].mxu0 %v565
        %v1128 = vpop.f32.mrb[0].mxu0
        %v1129 = vadd.f32 0.0, %v1128
        %v1130 = vpop.f32.mrb[0].mxu0
        %v1131 = vadd.f32 0.0, %v1130
        %1132 = vdwg.mxu0
        %v1133 = vld [vmem:[%s412] sm:$0xff]
        %v1134 = vld [vmem:[%s412 + $0x8] sm:$0xff]
        %v1135 = vld [vmem:[%s412 + $0x10] sm:$0xff]
        %v1136 = vld [vmem:[%s412 + $0x18] sm:$0xff]
        %v1137 = vld [vmem:[%s412 + $0x20] sm:$0xff]
        %v1138 = vld [vmem:[%s412 + $0x28] sm:$0xff]
        %v1139 = vld [vmem:[%s412 + $0x30] sm:$0xff]
        %v1141 = vsel %vm545, %v1133, 0
        %v1144 = vsel %vm545, %v1134, 0
        %v1147 = vsel %vm545, %v1135, 0
        %v1150 = vsel %vm545, %v1136, 0
        %v1153 = vsel %vm545, %v1137, 0
        %v1156 = vsel %vm545, %v1138, 0
        %v1159 = vsel %vm545, %v1139, 0
        %1161 = vmatprep.subr.mxu0 %v436
        %1162 = vmatpush1.msra.mxu0 %v435
        %1163 = vmatprep.subr.mxu0 %v446
        %1164 = vmatpush1.msra.mxu0 %v445
        %1165 = vmatprep.subr.mxu0 %v456
        %1166 = vmatpush1.msra.mxu0 %v455
        %1167 = vmatprep.subr.mxu0 %v466
        %1168 = vmatpush1.msra.mxu0 %v465
        %1169 = vmatprep.subr.mxu0 %v476
        %1170 = vmatpush1.msra.mxu0 %v475
        %1171 = vmatprep.subr.mxu0 %v486
        %1172 = vmatpush1.msra.mxu0 %v485
        %1173 = vmatprep.subr.mxu0 %v496
        %1174 = vmatpush1.msra.mxu0 %v495
        %1175 = vmatprep.subr.mxu0 %v506
        %1176 = vmatpush1.msra.mxu0 %v505
        %1177 = vmatprep.subr.mxu0 %v516
        %1178 = vmatpush1.msra.mxu0 %v515
        %1179 = vmatprep.subr.mxu0 %v526
        %1180 = vmatpush1.msra.mxu0 %v525
        %1181 = vmatprep.subr.mxu0 %v572
        %1182 = vmatpush1.msra.mxu0 %v569
        %1183 = vmatprep.subr.mxu0 0.0
        %1184 = vmatpush1.msra.mxu0 0.0
        %1185 = vmatprep.subr.mxu0 0.0
        %1186 = vmatpush1.msra.mxu0 0.0
        %1187 = vmatprep.subr.mxu0 0.0
        %1188 = vmatpush1.msra.mxu0 0.0
        %1189 = vmatprep.subr.mxu0 0.0
        %1190 = vmatpush1.msra.mxu0 0.0
        %1191 = vmatprep.subr.mxu0 0.0
        %1192 = vmatpush1.msra.mxu0 0.0
        %1193 = vmatprep.subr.mxu0 0.0
        %1194 = vmatpush1.msra.mxu0 0.0
        %1195 = vmatprep.subr.mxu0 0.0
        %1196 = vmatpush1.msra.mxu0 0.0
        %1197 = vmatprep.subr.mxu0 0.0
        %1198 = vmatpush1.msra.mxu0 0.0
        %1199 = vmatprep.subr.mxu0 0.0
        %1200 = vmatpush1.msra.mxu0 0.0
        %1201 = vmatprep.subr.mxu0 0.0
        %1202 = vmatpush1.msra.mxu0 0.0
        %1203 = vmatprep.subr.mxu0 0.0
        %1204 = vmatpush1.msra.mxu0 0.0
        %1205 = vmatprep.subr.mxu0 0.0
        %1206 = vmatpush1.msra.mxu0 0.0
        %1207 = vmatprep.subr.mxu0 0.0
        %1208 = vmatpush1.msra.mxu0 0.0
        %1209 = vmatprep.subr.mxu0 0.0
        %1210 = vmatpush1.msra.mxu0 0.0
        %1211 = vmatprep.subr.mxu0 0.0
        %1212 = vmatpush1.msra.mxu0 0.0
        %1213 = vmatprep.subr.mxu0 0.0
        %1214 = vmatpush1.msra.mxu0 0.0
        %1215 = vmatprep.subr.mxu0 0.0
        %1216 = vmatpush1.msra.mxu0 0.0
        %1217 = vmatprep.subr.mxu0 0.0
        %1218 = vmatpush1.msra.mxu0 0.0
        %1219 = vmatprep.subr.mxu0 0.0
        %1220 = vmatpush1.msra.mxu0 0.0
        %1221 = vmatprep.subr.mxu0 0.0
        %1222 = vmatpush1.msra.mxu0 0.0
        %1223 = vmatprep.subr.mxu0 0.0
        %1224 = vmatpush1.msra.mxu0 0.0
        %1225 = vmatprep.mubr.f32.mxu0 0.0
        %1226 = vmatmul.mubr.f32.gmra.mrb[0].mxu0 %v1141
        %v1227 = vpop.f32.mrb[0].mxu0
        %v1228 = vadd.f32 0.0, %v1227
        %v1229 = vpop.f32.mrb[0].mxu0
        %v1230 = vadd.f32 0.0, %v1229
        %1231 = vmatprep.mubr.f32.mxu0 0.0
        %1232 = vmatmul.mubr.f32.gmra.mrb[0].mxu0 %v1144
        %v1233 = vpop.f32.mrb[0].mxu0
        %v1234 = vadd.f32 0.0, %v1233
        %v1235 = vpop.f32.mrb[0].mxu0
        %v1236 = vadd.f32 0.0, %v1235
        %1237 = vmatprep.mubr.f32.mxu0 0.0
        %1238 = vmatmul.mubr.f32.gmra.mrb[0].mxu0 %v1147
        %v1239 = vpop.f32.mrb[0].mxu0
        %v1240 = vadd.f32 0.0, %v1239
        %v1241 = vpop.f32.mrb[0].mxu0
        %v1242 = vadd.f32 0.0, %v1241
        %1243 = vmatprep.mubr.f32.mxu0 0.0
        %1244 = vmatmul.mubr.f32.gmra.mrb[0].mxu0 %v1150
        %v1245 = vpop.f32.mrb[0].mxu0
        %v1246 = vadd.f32 0.0, %v1245
        %v1247 = vpop.f32.mrb[0].mxu0
        %v1248 = vadd.f32 0.0, %v1247
        %1249 = vmatprep.mubr.f32.mxu0 0.0
        %1250 = vmatmul.mubr.f32.gmra.mrb[0].mxu0 %v1153
        %v1251 = vpop.f32.mrb[0].mxu0
        %v1252 = vadd.f32 0.0, %v1251
        %v1253 = vpop.f32.mrb[0].mxu0
        %v1254 = vadd.f32 0.0, %v1253
        %1255 = vmatprep.mubr.f32.mxu0 0.0
        %1256 = vmatmul.mubr.f32.gmra.mrb[0].mxu0 %v1156
        %v1257 = vpop.f32.mrb[0].mxu0
        %v1258 = vadd.f32 0.0, %v1257
        %v1259 = vpop.f32.mrb[0].mxu0
        %v1260 = vadd.f32 0.0, %v1259
        %1261 = vmatprep.mubr.f32.mxu0 0.0
        %1262 = vmatmul.mubr.f32.gmra.mrb[0].mxu0 %v1159
        %v1263 = vpop.f32.mrb[0].mxu0
        %v1264 = vadd.f32 0.0, %v1263
        %v1265 = vpop.f32.mrb[0].mxu0
        %v1266 = vadd.f32 0.0, %v1265
        %1267 = vdwg.mxu0
        %1268 = vmatprep.subr.mxu0 %v438
        %1269 = vmatpush1.msra.mxu0 %v437
        %1270 = vmatprep.subr.mxu0 %v448
        %1271 = vmatpush1.msra.mxu0 %v447
        %1272 = vmatprep.subr.mxu0 %v458
        %1273 = vmatpush1.msra.mxu0 %v457
        %1274 = vmatprep.subr.mxu0 %v468
        %1275 = vmatpush1.msra.mxu0 %v467
        %1276 = vmatprep.subr.mxu0 %v478
        %1277 = vmatpush1.msra.mxu0 %v477
        %1278 = vmatprep.subr.mxu0 %v488
        %1279 = vmatpush1.msra.mxu0 %v487
        %1280 = vmatprep.subr.mxu0 %v498
        %1281 = vmatpush1.msra.mxu0 %v497
        %1282 = vmatprep.subr.mxu0 %v508
        %1283 = vmatpush1.msra.mxu0 %v507
        %1284 = vmatprep.subr.mxu0 %v518
        %1285 = vmatpush1.msra.mxu0 %v517
        %1286 = vmatprep.subr.mxu0 %v528
        %1287 = vmatpush1.msra.mxu0 %v527
        %1288 = vmatprep.subr.mxu0 %v578
        %1289 = vmatpush1.msra.mxu0 %v575
        %1290 = vmatprep.subr.mxu0 0.0
        %1291 = vmatpush1.msra.mxu0 0.0
        %1292 = vmatprep.subr.mxu0 0.0
        %1293 = vmatpush1.msra.mxu0 0.0
        %1294 = vmatprep.subr.mxu0 0.0
        %1295 = vmatpush1.msra.mxu0 0.0
        %1296 = vmatprep.subr.mxu0 0.0
        %1297 = vmatpush1.msra.mxu0 0.0
        %1298 = vmatprep.subr.mxu0 0.0
        %1299 = vmatpush1.msra.mxu0 0.0
        %1300 = vmatprep.subr.mxu0 0.0
        %1301 = vmatpush1.msra.mxu0 0.0
        %1302 = vmatprep.subr.mxu0 0.0
        %1303 = vmatpush1.msra.mxu0 0.0
        %1304 = vmatprep.subr.mxu0 0.0
        %1305 = vmatpush1.msra.mxu0 0.0
        %1306 = vmatprep.subr.mxu0 0.0
        %1307 = vmatpush1.msra.mxu0 0.0
        %1308 = vmatprep.subr.mxu0 0.0
        %1309 = vmatpush1.msra.mxu0 0.0
        %1310 = vmatprep.subr.mxu0 0.0
        %1311 = vmatpush1.msra.mxu0 0.0
        %1312 = vmatprep.subr.mxu0 0.0
        %1313 = vmatpush1.msra.mxu0 0.0
        %1314 = vmatprep.subr.mxu0 0.0
        %1315 = vmatpush1.msra.mxu0 0.0
        %1316 = vmatprep.subr.mxu0 0.0
        %1317 = vmatpush1.msra.mxu0 0.0
        %1318 = vmatprep.subr.mxu0 0.0
        %1319 = vmatpush1.msra.mxu0 0.0
        %1320 = vmatprep.subr.mxu0 0.0
        %1321 = vmatpush1.msra.mxu0 0.0
        %1322 = vmatprep.subr.mxu0 0.0
        %1323 = vmatpush1.msra.mxu0 0.0
        %1324 = vmatprep.subr.mxu0 0.0
        %1325 = vmatpush1.msra.mxu0 0.0
        %1326 = vmatprep.subr.mxu0 0.0
        %1327 = vmatpush1.msra.mxu0 0.0
        %1328 = vmatprep.subr.mxu0 0.0
        %1329 = vmatpush1.msra.mxu0 0.0
        %1330 = vmatprep.subr.mxu0 0.0
        %1331 = vmatpush1.msra.mxu0 0.0
        %1332 = vmatprep.mubr.f32.mxu0 0.0
        %1333 = vmatmul.mubr.f32.gmra.mrb[0].mxu0 %v1141
        %v1334 = vpop.f32.mrb[0].mxu0
        %v1335 = vadd.f32 0.0, %v1334
        %v1336 = vpop.f32.mrb[0].mxu0
        %v1337 = vadd.f32 0.0, %v1336
        %1338 = vmatprep.mubr.f32.mxu0 0.0
        %1339 = vmatmul.mubr.f32.gmra.mrb[0].mxu0 %v1144
        %v1340 = vpop.f32.mrb[0].mxu0
        %v1341 = vadd.f32 0.0, %v1340
        %v1342 = vpop.f32.mrb[0].mxu0
        %v1343 = vadd.f32 0.0, %v1342
        %1344 = vmatprep.mubr.f32.mxu0 0.0
        %1345 = vmatmul.mubr.f32.gmra.mrb[0].mxu0 %v1147
        %v1346 = vpop.f32.mrb[0].mxu0
        %v1347 = vadd.f32 0.0, %v1346
        %v1348 = vpop.f32.mrb[0].mxu0
        %v1349 = vadd.f32 0.0, %v1348
        %1350 = vmatprep.mubr.f32.mxu0 0.0
        %1351 = vmatmul.mubr.f32.gmra.mrb[0].mxu0 %v1150
        %v1352 = vpop.f32.mrb[0].mxu0
        %v1353 = vadd.f32 0.0, %v1352
        %v1354 = vpop.f32.mrb[0].mxu0
        %v1355 = vadd.f32 0.0, %v1354
        %1356 = vmatprep.mubr.f32.mxu0 0.0
        %1357 = vmatmul.mubr.f32.gmra.mrb[0].mxu0 %v1153
        %v1358 = vpop.f32.mrb[0].mxu0
        %v1359 = vadd.f32 0.0, %v1358
        %v1360 = vpop.f32.mrb[0].mxu0
        %v1361 = vadd.f32 0.0, %v1360
        %1362 = vmatprep.mubr.f32.mxu0 0.0
        %1363 = vmatmul.mubr.f32.gmra.mrb[0].mxu0 %v1156
        %v1364 = vpop.f32.mrb[0].mxu0
        %v1365 = vadd.f32 0.0, %v1364
        %v1366 = vpop.f32.mrb[0].mxu0
        %v1367 = vadd.f32 0.0, %v1366
        %1368 = vmatprep.mubr.f32.mxu0 0.0
        %1369 = vmatmul.mubr.f32.gmra.mrb[0].mxu0 %v1159
        %v1370 = vpop.f32.mrb[0].mxu0
        %v1371 = vadd.f32 0.0, %v1370
        %v1372 = vpop.f32.mrb[0].mxu0
        %v1373 = vadd.f32 0.0, %v1372
        %1374 = vdwg.mxu0
        %1375 = vmatprep.subr.mxu0 %v440
        %1376 = vmatpush1.msra.mxu0 %v439
        %1377 = vmatprep.subr.mxu0 %v450
        %1378 = vmatpush1.msra.mxu0 %v449
        %1379 = vmatprep.subr.mxu0 %v460
        %1380 = vmatpush1.msra.mxu0 %v459
        %1381 = vmatprep.subr.mxu0 %v470
        %1382 = vmatpush1.msra.mxu0 %v469
        %1383 = vmatprep.subr.mxu0 %v480
        %1384 = vmatpush1.msra.mxu0 %v479
        %1385 = vmatprep.subr.mxu0 %v490
        %1386 = vmatpush1.msra.mxu0 %v489
        %1387 = vmatprep.subr.mxu0 %v500
        %1388 = vmatpush1.msra.mxu0 %v499
        %1389 = vmatprep.subr.mxu0 %v510
        %1390 = vmatpush1.msra.mxu0 %v509
        %1391 = vmatprep.subr.mxu0 %v520
        %1392 = vmatpush1.msra.mxu0 %v519
        %1393 = vmatprep.subr.mxu0 %v530
        %1394 = vmatpush1.msra.mxu0 %v529
        %1395 = vmatprep.subr.mxu0 %v584
        %1396 = vmatpush1.msra.mxu0 %v581
        %1397 = vmatprep.subr.mxu0 0.0
        %1398 = vmatpush1.msra.mxu0 0.0
        %1399 = vmatprep.subr.mxu0 0.0
        %1400 = vmatpush1.msra.mxu0 0.0
        %1401 = vmatprep.subr.mxu0 0.0
        %1402 = vmatpush1.msra.mxu0 0.0
        %1403 = vmatprep.subr.mxu0 0.0
        %1404 = vmatpush1.msra.mxu0 0.0
        %1405 = vmatprep.subr.mxu0 0.0
        %1406 = vmatpush1.msra.mxu0 0.0
        %1407 = vmatprep.subr.mxu0 0.0
        %1408 = vmatpush1.msra.mxu0 0.0
        %1409 = vmatprep.subr.mxu0 0.0
        %1410 = vmatpush1.msra.mxu0 0.0
        %1411 = vmatprep.subr.mxu0 0.0
        %1412 = vmatpush1.msra.mxu0 0.0
        %1413 = vmatprep.subr.mxu0 0.0
        %1414 = vmatpush1.msra.mxu0 0.0
        %1415 = vmatprep.subr.mxu0 0.0
        %1416 = vmatpush1.msra.mxu0 0.0
        %1417 = vmatprep.subr.mxu0 0.0
        %1418 = vmatpush1.msra.mxu0 0.0
        %1419 = vmatprep.subr.mxu0 0.0
        %1420 = vmatpush1.msra.mxu0 0.0
        %1421 = vmatprep.subr.mxu0 0.0
        %1422 = vmatpush1.msra.mxu0 0.0
        %1423 = vmatprep.subr.mxu0 0.0
        %1424 = vmatpush1.msra.mxu0 0.0
        %1425 = vmatprep.subr.mxu0 0.0
        %1426 = vmatpush1.msra.mxu0 0.0
        %1427 = vmatprep.subr.mxu0 0.0
        %1428 = vmatpush1.msra.mxu0 0.0
        %1429 = vmatprep.subr.mxu0 0.0
        %1430 = vmatpush1.msra.mxu0 0.0
        %1431 = vmatprep.subr.mxu0 0.0
        %1432 = vmatpush1.msra.mxu0 0.0
        %1433 = vmatprep.subr.mxu0 0.0
        %1434 = vmatpush1.msra.mxu0 0.0
        %1435 = vmatprep.subr.mxu0 0.0
        %1436 = vmatpush1.msra.mxu0 0.0
        %1437 = vmatprep.subr.mxu0 0.0
        %1438 = vmatpush1.msra.mxu0 0.0
        %1439 = vmatprep.mubr.f32.mxu0 0.0
        %1440 = vmatmul.mubr.f32.gmra.mrb[0].mxu0 %v1141
        %v1441 = vpop.f32.mrb[0].mxu0
        %v1442 = vadd.f32 0.0, %v1441
        %v1443 = vpop.f32.mrb[0].mxu0
        %v1444 = vadd.f32 0.0, %v1443
        %1445 = vmatprep.mubr.f32.mxu0 0.0
        %1446 = vmatmul.mubr.f32.gmra.mrb[0].mxu0 %v1144
        %v1447 = vpop.f32.mrb[0].mxu0
        %v1448 = vadd.f32 0.0, %v1447
        %v1449 = vpop.f32.mrb[0].mxu0
        %v1450 = vadd.f32 0.0, %v1449
        %1451 = vmatprep.mubr.f32.mxu0 0.0
        %1452 = vmatmul.mubr.f32.gmra.mrb[0].mxu0 %v1147
        %v1453 = vpop.f32.mrb[0].mxu0
        %v1454 = vadd.f32 0.0, %v1453
        %v1455 = vpop.f32.mrb[0].mxu0
        %v1456 = vadd.f32 0.0, %v1455
        %1457 = vmatprep.mubr.f32.mxu0 0.0
        %1458 = vmatmul.mubr.f32.gmra.mrb[0].mxu0 %v1150
        %v1459 = vpop.f32.mrb[0].mxu0
        %v1460 = vadd.f32 0.0, %v1459
        %v1461 = vpop.f32.mrb[0].mxu0
        %v1462 = vadd.f32 0.0, %v1461
        %1463 = vmatprep.mubr.f32.mxu0 0.0
        %1464 = vmatmul.mubr.f32.gmra.mrb[0].mxu0 %v1153
        %v1465 = vpop.f32.mrb[0].mxu0
        %v1466 = vadd.f32 0.0, %v1465
        %v1467 = vpop.f32.mrb[0].mxu0
        %v1468 = vadd.f32 0.0, %v1467
        %1469 = vmatprep.mubr.f32.mxu0 0.0
        %1470 = vmatmul.mubr.f32.gmra.mrb[0].mxu0 %v1156
        %v1471 = vpop.f32.mrb[0].mxu0
        %v1472 = vadd.f32 0.0, %v1471
        %v1473 = vpop.f32.mrb[0].mxu0
        %v1474 = vadd.f32 0.0, %v1473
        %1475 = vmatprep.mubr.f32.mxu0 0.0
        %1476 = vmatmul.mubr.f32.gmra.mrb[0].mxu0 %v1159
        %v1477 = vpop.f32.mrb[0].mxu0
        %v1478 = vadd.f32 0.0, %v1477
        %v1479 = vpop.f32.mrb[0].mxu0
        %v1480 = vadd.f32 0.0, %v1479
        %1481 = vdwg.mxu0
        %1482 = vmatprep.subr.mxu0 %v442
        %1483 = vmatpush1.msra.mxu0 %v441
        %1484 = vmatprep.subr.mxu0 %v452
        %1485 = vmatpush1.msra.mxu0 %v451
        %1486 = vmatprep.subr.mxu0 %v462
        %1487 = vmatpush1.msra.mxu0 %v461
        %1488 = vmatprep.subr.mxu0 %v472
        %1489 = vmatpush1.msra.mxu0 %v471
        %1490 = vmatprep.subr.mxu0 %v482
        %1491 = vmatpush1.msra.mxu0 %v481
        %1492 = vmatprep.subr.mxu0 %v492
        %1493 = vmatpush1.msra.mxu0 %v491
        %1494 = vmatprep.subr.mxu0 %v502
        %1495 = vmatpush1.msra.mxu0 %v501
        %1496 = vmatprep.subr.mxu0 %v512
        %1497 = vmatpush1.msra.mxu0 %v511
        %1498 = vmatprep.subr.mxu0 %v522
        %1499 = vmatpush1.msra.mxu0 %v521
        %1500 = vmatprep.subr.mxu0 %v532
        %1501 = vmatpush1.msra.mxu0 %v531
        %1502 = vmatprep.subr.mxu0 %v590
        %1503 = vmatpush1.msra.mxu0 %v587
        %1504 = vmatprep.subr.mxu0 0.0
        %1505 = vmatpush1.msra.mxu0 0.0
        %1506 = vmatprep.subr.mxu0 0.0
        %1507 = vmatpush1.msra.mxu0 0.0
        %1508 = vmatprep.subr.mxu0 0.0
        %1509 = vmatpush1.msra.mxu0 0.0
        %1510 = vmatprep.subr.mxu0 0.0
        %1511 = vmatpush1.msra.mxu0 0.0
        %1512 = vmatprep.subr.mxu0 0.0
        %1513 = vmatpush1.msra.mxu0 0.0
        %1514 = vmatprep.subr.mxu0 0.0
        %1515 = vmatpush1.msra.mxu0 0.0
        %1516 = vmatprep.subr.mxu0 0.0
        %1517 = vmatpush1.msra.mxu0 0.0
        %1518 = vmatprep.subr.mxu0 0.0
        %1519 = vmatpush1.msra.mxu0 0.0
        %1520 = vmatprep.subr.mxu0 0.0
        %1521 = vmatpush1.msra.mxu0 0.0
        %1522 = vmatprep.subr.mxu0 0.0
        %1523 = vmatpush1.msra.mxu0 0.0
        %1524 = vmatprep.subr.mxu0 0.0
        %1525 = vmatpush1.msra.mxu0 0.0
        %1526 = vmatprep.subr.mxu0 0.0
        %1527 = vmatpush1.msra.mxu0 0.0
        %1528 = vmatprep.subr.mxu0 0.0
        %1529 = vmatpush1.msra.mxu0 0.0
        %1530 = vmatprep.subr.mxu0 0.0
        %1531 = vmatpush1.msra.mxu0 0.0
        %1532 = vmatprep.subr.mxu0 0.0
        %1533 = vmatpush1.msra.mxu0 0.0
        %1534 = vmatprep.subr.mxu0 0.0
        %1535 = vmatpush1.msra.mxu0 0.0
        %1536 = vmatprep.subr.mxu0 0.0
        %1537 = vmatpush1.msra.mxu0 0.0
        %1538 = vmatprep.subr.mxu0 0.0
        %1539 = vmatpush1.msra.mxu0 0.0
        %1540 = vmatprep.subr.mxu0 0.0
        %1541 = vmatpush1.msra.mxu0 0.0
        %1542 = vmatprep.subr.mxu0 0.0
        %1543 = vmatpush1.msra.mxu0 0.0
        %1544 = vmatprep.subr.mxu0 0.0
        %1545 = vmatpush1.msra.mxu0 0.0
        %1546 = vmatprep.mubr.f32.mxu0 0.0
        %1547 = vmatmul.mubr.f32.gmra.mrb[0].mxu0 %v1141
        %v1548 = vpop.f32.mrb[0].mxu0
        %v1549 = vadd.f32 0.0, %v1548
        %v1550 = vpop.f32.mrb[0].mxu0
        %v1551 = vadd.f32 0.0, %v1550
        %1552 = vmatprep.mubr.f32.mxu0 0.0
        %1553 = vmatmul.mubr.f32.gmra.mrb[0].mxu0 %v1144
        %v1554 = vpop.f32.mrb[0].mxu0
        %v1555 = vadd.f32 0.0, %v1554
        %v1556 = vpop.f32.mrb[0].mxu0
        %v1557 = vadd.f32 0.0, %v1556
        %1558 = vmatprep.mubr.f32.mxu0 0.0
        %1559 = vmatmul.mubr.f32.gmra.mrb[0].mxu0 %v1147
        %v1560 = vpop.f32.mrb[0].mxu0
        %v1561 = vadd.f32 0.0, %v1560
        %v1562 = vpop.f32.mrb[0].mxu0
        %v1563 = vadd.f32 0.0, %v1562
        %1564 = vmatprep.mubr.f32.mxu0 0.0
        %1565 = vmatmul.mubr.f32.gmra.mrb[0].mxu0 %v1150
        %v1566 = vpop.f32.mrb[0].mxu0
        %v1567 = vadd.f32 0.0, %v1566
        %v1568 = vpop.f32.mrb[0].mxu0
        %v1569 = vadd.f32 0.0, %v1568
        %1570 = vmatprep.mubr.f32.mxu0 0.0
        %1571 = vmatmul.mubr.f32.gmra.mrb[0].mxu0 %v1153
        %v1572 = vpop.f32.mrb[0].mxu0
        %v1573 = vadd.f32 0.0, %v1572
        %v1574 = vpop.f32.mrb[0].mxu0
        %v1575 = vadd.f32 0.0, %v1574
        %1576 = vmatprep.mubr.f32.mxu0 0.0
        %1577 = vmatmul.mubr.f32.gmra.mrb[0].mxu0 %v1156
        %v1578 = vpop.f32.mrb[0].mxu0
        %v1579 = vadd.f32 0.0, %v1578
        %v1580 = vpop.f32.mrb[0].mxu0
        %v1581 = vadd.f32 0.0, %v1580
        %1582 = vmatprep.mubr.f32.mxu0 0.0
        %1583 = vmatmul.mubr.f32.gmra.mrb[0].mxu0 %v1159
        %v1584 = vpop.f32.mrb[0].mxu0
        %v1585 = vadd.f32 0.0, %v1584
        %v1586 = vpop.f32.mrb[0].mxu0
        %v1587 = vadd.f32 0.0, %v1586
        %1588 = vdwg.mxu0
        %1589 = vmatprep.subr.mxu0 %v444
        %1590 = vmatpush1.msra.mxu0 %v443
        %1591 = vmatprep.subr.mxu0 %v454
        %1592 = vmatpush1.msra.mxu0 %v453
        %1593 = vmatprep.subr.mxu0 %v464
        %1594 = vmatpush1.msra.mxu0 %v463
        %1595 = vmatprep.subr.mxu0 %v474
        %1596 = vmatpush1.msra.mxu0 %v473
        %1597 = vmatprep.subr.mxu0 %v484
        %1598 = vmatpush1.msra.mxu0 %v483
        %1599 = vmatprep.subr.mxu0 %v494
        %1600 = vmatpush1.msra.mxu0 %v493
        %1601 = vmatprep.subr.mxu0 %v504
        %1602 = vmatpush1.msra.mxu0 %v503
        %1603 = vmatprep.subr.mxu0 %v514
        %1604 = vmatpush1.msra.mxu0 %v513
        %1605 = vmatprep.subr.mxu0 %v524
        %1606 = vmatpush1.msra.mxu0 %v523
        %1607 = vmatprep.subr.mxu0 %v534
        %1608 = vmatpush1.msra.mxu0 %v533
        %1609 = vmatprep.subr.mxu0 %v596
        %1610 = vmatpush1.msra.mxu0 %v593
        %1611 = vmatprep.subr.mxu0 0.0
        %1612 = vmatpush1.msra.mxu0 0.0
        %1613 = vmatprep.subr.mxu0 0.0
        %1614 = vmatpush1.msra.mxu0 0.0
        %1615 = vmatprep.subr.mxu0 0.0
        %1616 = vmatpush1.msra.mxu0 0.0
        %1617 = vmatprep.subr.mxu0 0.0
        %1618 = vmatpush1.msra.mxu0 0.0
        %1619 = vmatprep.subr.mxu0 0.0
        %1620 = vmatpush1.msra.mxu0 0.0
        %1621 = vmatprep.subr.mxu0 0.0
        %1622 = vmatpush1.msra.mxu0 0.0
        %1623 = vmatprep.subr.mxu0 0.0
        %1624 = vmatpush1.msra.mxu0 0.0
        %1625 = vmatprep.subr.mxu0 0.0
        %1626 = vmatpush1.msra.mxu0 0.0
        %1627 = vmatprep.subr.mxu0 0.0
        %1628 = vmatpush1.msra.mxu0 0.0
        %1629 = vmatprep.subr.mxu0 0.0
        %1630 = vmatpush1.msra.mxu0 0.0
        %1631 = vmatprep.subr.mxu0 0.0
        %1632 = vmatpush1.msra.mxu0 0.0
        %1633 = vmatprep.subr.mxu0 0.0
        %1634 = vmatpush1.msra.mxu0 0.0
        %1635 = vmatprep.subr.mxu0 0.0
        %1636 = vmatpush1.msra.mxu0 0.0
        %1637 = vmatprep.subr.mxu0 0.0
        %1638 = vmatpush1.msra.mxu0 0.0
        %1639 = vmatprep.subr.mxu0 0.0
        %1640 = vmatpush1.msra.mxu0 0.0
        %1641 = vmatprep.subr.mxu0 0.0
        %1642 = vmatpush1.msra.mxu0 0.0
        %1643 = vmatprep.subr.mxu0 0.0
        %1644 = vmatpush1.msra.mxu0 0.0
        %1645 = vmatprep.subr.mxu0 0.0
        %1646 = vmatpush1.msra.mxu0 0.0
        %1647 = vmatprep.subr.mxu0 0.0
        %1648 = vmatpush1.msra.mxu0 0.0
        %1649 = vmatprep.subr.mxu0 0.0
        %1650 = vmatpush1.msra.mxu0 0.0
        %1651 = vmatprep.subr.mxu0 0.0
        %1652 = vmatpush1.msra.mxu0 0.0
        %1653 = vmatprep.mubr.f32.mxu0 0.0
        %1654 = vmatmul.mubr.f32.gmra.mrb[0].mxu0 %v1141
        %v1655 = vpop.f32.mrb[0].mxu0
        %v1656 = vadd.f32 0.0, %v1655
        %v1657 = vpop.f32.mrb[0].mxu0
        %v1658 = vadd.f32 0.0, %v1657
        %1659 = vmatprep.mubr.f32.mxu0 0.0
        %1660 = vmatmul.mubr.f32.gmra.mrb[0].mxu0 %v1144
        %v1661 = vpop.f32.mrb[0].mxu0
        %v1662 = vadd.f32 0.0, %v1661
        %v1663 = vpop.f32.mrb[0].mxu0
        %v1664 = vadd.f32 0.0, %v1663
        %1665 = vmatprep.mubr.f32.mxu0 0.0
        %1666 = vmatmul.mubr.f32.gmra.mrb[0].mxu0 %v1147
        %v1667 = vpop.f32.mrb[0].mxu0
        %v1668 = vadd.f32 0.0, %v1667
        %v1669 = vpop.f32.mrb[0].mxu0
        %v1670 = vadd.f32 0.0, %v1669
        %1671 = vmatprep.mubr.f32.mxu0 0.0
        %1672 = vmatmul.mubr.f32.gmra.mrb[0].mxu0 %v1150
        %v1673 = vpop.f32.mrb[0].mxu0
        %v1674 = vadd.f32 0.0, %v1673
        %v1675 = vpop.f32.mrb[0].mxu0
        %v1676 = vadd.f32 0.0, %v1675
        %1677 = vmatprep.mubr.f32.mxu0 0.0
        %1678 = vmatmul.mubr.f32.gmra.mrb[0].mxu0 %v1153
        %v1679 = vpop.f32.mrb[0].mxu0
        %v1680 = vadd.f32 0.0, %v1679
        %v1681 = vpop.f32.mrb[0].mxu0
        %v1682 = vadd.f32 0.0, %v1681
        %1683 = vmatprep.mubr.f32.mxu0 0.0
        %1684 = vmatmul.mubr.f32.gmra.mrb[0].mxu0 %v1156
        %v1685 = vpop.f32.mrb[0].mxu0
        %v1686 = vadd.f32 0.0, %v1685
        %v1687 = vpop.f32.mrb[0].mxu0
        %v1688 = vadd.f32 0.0, %v1687
        %1689 = vmatprep.mubr.f32.mxu0 0.0
        %1690 = vmatmul.mubr.f32.gmra.mrb[0].mxu0 %v1159
        %v1691 = vpop.f32.mrb[0].mxu0
        %v1692 = vadd.f32 0.0, %v1691
        %v1693 = vpop.f32.mrb[0].mxu0
        %v1694 = vadd.f32 0.0, %v1693
        %1695 = vdwg.mxu0
        %v1696 = vmax.f32 %v665, %v881
        %v1697 = vmax.f32 %v667, %v986
        %v1698 = vmax.f32 %v772, %v988
        %v1699 = vmax.f32 %v774, %v1093
        %v1700 = vmax.f32 %v879, %v1095
        %v1701 = vmax.f32 %v671, %v887
        %v1702 = vmax.f32 %v673, %v992
        %v1703 = vmax.f32 %v778, %v994
        %v1704 = vmax.f32 %v780, %v1099
        %v1705 = vmax.f32 %v885, %v1101
        %v1706 = vmax.f32 %v677, %v893
        %v1707 = vmax.f32 %v679, %v998
        %v1708 = vmax.f32 %v784, %v1000
        %v1709 = vmax.f32 %v786, %v1105
        %v1710 = vmax.f32 %v891, %v1107
        %v1711 = vmax.f32 %v683, %v899
        %v1712 = vmax.f32 %v685, %v1004
        %v1713 = vmax.f32 %v790, %v1006
        %v1714 = vmax.f32 %v792, %v1111
        %v1715 = vmax.f32 %v897, %v1113
        %v1716 = vmax.f32 %v689, %v905
        %v1717 = vmax.f32 %v691, %v1010
        %v1718 = vmax.f32 %v796, %v1012
        %v1719 = vmax.f32 %v798, %v1117
        %v1720 = vmax.f32 %v903, %v1119
        %v1721 = vmax.f32 %v695, %v911
        %v1722 = vmax.f32 %v697, %v1016
        %v1723 = vmax.f32 %v802, %v1018
        %v1724 = vmax.f32 %v804, %v1123
        %v1725 = vmax.f32 %v909, %v1125
        %v1726 = vmax.f32 %v701, %v917
        %v1727 = vmax.f32 %v703, %v1022
        %v1728 = vmax.f32 %v808, %v1024
        %v1729 = vmax.f32 %v810, %v1129
        %v1730 = vmax.f32 %v915, %v1131
        %v1731 = vmax.f32 %v1228, %v1444
        %v1732 = vmax.f32 %v1230, %v1549
        %v1733 = vmax.f32 %v1335, %v1551
        %v1734 = vmax.f32 %v1337, %v1656
        %v1735 = vmax.f32 %v1442, %v1658
        %v1736 = vmax.f32 %v1234, %v1450
        %v1737 = vmax.f32 %v1236, %v1555
        %v1738 = vmax.f32 %v1341, %v1557
        %v1739 = vmax.f32 %v1343, %v1662
        %v1740 = vmax.f32 %v1448, %v1664
        %v1741 = vmax.f32 %v1240, %v1456
        %v1742 = vmax.f32 %v1242, %v1561
        %v1743 = vmax.f32 %v1347, %v1563
        %v1744 = vmax.f32 %v1349, %v1668
        %v1745 = vmax.f32 %v1454, %v1670
        %v1746 = vmax.f32 %v1246, %v1462
        %v1747 = vmax.f32 %v1248, %v1567
        %v1748 = vmax.f32 %v1353, %v1569
        %v1749 = vmax.f32 %v1355, %v1674
        %v1750 = vmax.f32 %v1460, %v1676
        %v1751 = vmax.f32 %v1252, %v1468
        %v1752 = vmax.f32 %v1254, %v1573
        %v1753 = vmax.f32 %v1359, %v1575
        %v1754 = vmax.f32 %v1361, %v1680
        %v1755 = vmax.f32 %v1466, %v1682
        %v1756 = vmax.f32 %v1258, %v1474
        %v1757 = vmax.f32 %v1260, %v1579
        %v1758 = vmax.f32 %v1365, %v1581
        %v1759 = vmax.f32 %v1367, %v1686
        %v1760 = vmax.f32 %v1472, %v1688
        %v1761 = vmax.f32 %v1264, %v1480
        %v1762 = vmax.f32 %v1266, %v1585
        %v1763 = vmax.f32 %v1371, %v1587
        %v1764 = vmax.f32 %v1373, %v1692
        %v1765 = vmax.f32 %v1478, %v1694
        %v1766 = vmax.f32 %v1696, %v1731
        %v1767 = vmax.f32 %v1697, %v1732
        %v1768 = vmax.f32 %v1698, %v1733
        %v1769 = vmax.f32 %v1699, %v1734
        %v1770 = vmax.f32 %v1700, %v1735
        %v1771 = vmax.f32 %v1701, %v1736
        %v1772 = vmax.f32 %v1702, %v1737
        %v1773 = vmax.f32 %v1703, %v1738
        %v1774 = vmax.f32 %v1704, %v1739
        %v1775 = vmax.f32 %v1705, %v1740
        %v1776 = vmax.f32 %v1706, %v1741
        %v1777 = vmax.f32 %v1707, %v1742
        %v1778 = vmax.f32 %v1708, %v1743
        %v1779 = vmax.f32 %v1709, %v1744
        %v1780 = vmax.f32 %v1710, %v1745
        %v1781 = vmax.f32 %v1711, %v1746
        %v1782 = vmax.f32 %v1712, %v1747
        %v1783 = vmax.f32 %v1713, %v1748
        %v1784 = vmax.f32 %v1714, %v1749
        %v1785 = vmax.f32 %v1715, %v1750
        %v1786 = vmax.f32 %v1716, %v1751
        %v1787 = vmax.f32 %v1717, %v1752
        %v1788 = vmax.f32 %v1718, %v1753
        %v1789 = vmax.f32 %v1719, %v1754
        %v1790 = vmax.f32 %v1720, %v1755
        %v1791 = vmax.f32 %v1721, %v1756
        %v1792 = vmax.f32 %v1722, %v1757
        %v1793 = vmax.f32 %v1723, %v1758
        %v1794 = vmax.f32 %v1724, %v1759
        %v1795 = vmax.f32 %v1725, %v1760
        %v1796 = vmax.f32 %v1726, %v1761
        %v1797 = vmax.f32 %v1727, %v1762
        %v1798 = vmax.f32 %v1728, %v1763
        %v1799 = vmax.f32 %v1729, %v1764
        %v1800 = vmax.f32 %v1730, %v1765
        %v1802 = vlaneseq
        %v1803 = vshrl.u32 %v1802, 7
        %v1804 = vsub.s32 0, %v1803
        %v1805 = vrot.slane %v427, %v1804
        %v1806 = vlaneseq
        %v1807 = vshrl.u32 %v1806, 7
        %v1808 = vsub.s32 1, %v1807
        %v1809 = vrot.slane %v427, %v1808
        %v1810 = vlaneseq
        %v1811 = vshrl.u32 %v1810, 7
        %v1812 = vsub.s32 2, %v1811
        %v1813 = vrot.slane %v427, %v1812
        %v1814 = vlaneseq
        %v1815 = vshrl.u32 %v1814, 7
        %v1816 = vsub.s32 3, %v1815
        %v1817 = vrot.slane %v427, %v1816
        %v1818 = vlaneseq
        %v1819 = vshrl.u32 %v1818, 7
        %v1820 = vsub.s32 4, %v1819
        %v1821 = vrot.slane %v427, %v1820
        %v1827 = vadd.f32 %v1766, %v1805
        %v1828 = vadd.f32 %v1767, %v1809
        %v1829 = vadd.f32 %v1768, %v1813
        %v1830 = vadd.f32 %v1769, %v1817
        %v1831 = vadd.f32 %v1770, %v1821
        %v1832 = vadd.f32 %v1771, %v1805
        %v1833 = vadd.f32 %v1772, %v1809
        %v1834 = vadd.f32 %v1773, %v1813
        %v1835 = vadd.f32 %v1774, %v1817
        %v1836 = vadd.f32 %v1775, %v1821
        %v1837 = vadd.f32 %v1776, %v1805
        %v1838 = vadd.f32 %v1777, %v1809
        %v1839 = vadd.f32 %v1778, %v1813
        %v1840 = vadd.f32 %v1779, %v1817
        %v1841 = vadd.f32 %v1780, %v1821
        %v1842 = vadd.f32 %v1781, %v1805
        %v1843 = vadd.f32 %v1782, %v1809
        %v1844 = vadd.f32 %v1783, %v1813
        %v1845 = vadd.f32 %v1784, %v1817
        %v1846 = vadd.f32 %v1785, %v1821
        %v1847 = vadd.f32 %v1786, %v1805
        %v1848 = vadd.f32 %v1787, %v1809
        %v1849 = vadd.f32 %v1788, %v1813
        %v1850 = vadd.f32 %v1789, %v1817
        %v1851 = vadd.f32 %v1790, %v1821
        %v1852 = vadd.f32 %v1791, %v1805
        %v1853 = vadd.f32 %v1792, %v1809
        %v1854 = vadd.f32 %v1793, %v1813
        %v1855 = vadd.f32 %v1794, %v1817
        %v1856 = vadd.f32 %v1795, %v1821
        %v1857 = vadd.f32 %v1796, %v1805
        %v1858 = vadd.f32 %v1797, %v1809
        %v1859 = vadd.f32 %v1798, %v1813
        %v1860 = vadd.f32 %v1799, %v1817
        %v1861 = vadd.f32 %v1800, %v1821
        %v1862 = vmax.f32 %v1827, 0.0
        %v1863 = vmax.f32 %v1828, 0.0
        %v1864 = vmax.f32 %v1829, 0.0
        %v1865 = vmax.f32 %v1830, 0.0
        %v1866 = vmax.f32 %v1831, 0.0
        %v1867 = vmax.f32 %v1832, 0.0
        %v1868 = vmax.f32 %v1833, 0.0
        %v1869 = vmax.f32 %v1834, 0.0
        %v1870 = vmax.f32 %v1835, 0.0
        %v1871 = vmax.f32 %v1836, 0.0
        %v1872 = vmax.f32 %v1837, 0.0
        %v1873 = vmax.f32 %v1838, 0.0
        %v1874 = vmax.f32 %v1839, 0.0
        %v1875 = vmax.f32 %v1840, 0.0
        %v1876 = vmax.f32 %v1841, 0.0
        %v1877 = vmax.f32 %v1842, 0.0
        %v1878 = vmax.f32 %v1843, 0.0
        %v1879 = vmax.f32 %v1844, 0.0
        %v1880 = vmax.f32 %v1845, 0.0
        %v1881 = vmax.f32 %v1846, 0.0
        %v1882 = vmax.f32 %v1847, 0.0
        %v1883 = vmax.f32 %v1848, 0.0
        %v1884 = vmax.f32 %v1849, 0.0
        %v1885 = vmax.f32 %v1850, 0.0
        %v1886 = vmax.f32 %v1851, 0.0
        %v1887 = vmax.f32 %v1852, 0.0
        %v1888 = vmax.f32 %v1853, 0.0
        %v1889 = vmax.f32 %v1854, 0.0
        %v1890 = vmax.f32 %v1855, 0.0
        %v1891 = vmax.f32 %v1856, 0.0
        %v1892 = vmax.f32 %v1857, 0.0
        %v1893 = vmax.f32 %v1858, 0.0
        %v1894 = vmax.f32 %v1859, 0.0
        %v1895 = vmax.f32 %v1860, 0.0
        %v1896 = vmax.f32 %v1861, 0.0
        %v1897 = vld [vmem:[%s418] sm:$0xff]
        %v1898 = vld [vmem:[%s418 + $0x8] sm:$0xff]
        %v1899 = vld [vmem:[%s418 + $0x10] sm:$0xff]
        %v1900 = vld [vmem:[%s418 + $0x18] sm:$0xff]
        %v1901 = vld [vmem:[%s418 + $0x20] sm:$0xff]
        %v1902 = vld [vmem:[%s418 + $0x28] sm:$0xff]
        %v1903 = vld [vmem:[%s418 + $0x30] sm:$0xff]
        %v1905 = vsel %vm545, %v1897, 0
        %v1908 = vsel %vm545, %v1898, 0
        %v1911 = vsel %vm545, %v1899, 0
        %v1914 = vsel %vm545, %v1900, 0
        %v1917 = vsel %vm545, %v1901, 0
        %v1920 = vsel %vm545, %v1902, 0
        %v1923 = vsel %vm545, %v1903, 0
        %1925 = vmatprep.subr.mxu0 %v436
        %1926 = vmatpush1.msra.mxu0 %v435
        %1927 = vmatprep.subr.mxu0 %v446
        %1928 = vmatpush1.msra.mxu0 %v445
        %1929 = vmatprep.subr.mxu0 %v456
        %1930 = vmatpush1.msra.mxu0 %v455
        %1931 = vmatprep.subr.mxu0 %v466
        %1932 = vmatpush1.msra.mxu0 %v465
        %1933 = vmatprep.subr.mxu0 %v476
        %1934 = vmatpush1.msra.mxu0 %v475
        %1935 = vmatprep.subr.mxu0 %v486
        %1936 = vmatpush1.msra.mxu0 %v485
        %1937 = vmatprep.subr.mxu0 %v496
        %1938 = vmatpush1.msra.mxu0 %v495
        %1939 = vmatprep.subr.mxu0 %v506
        %1940 = vmatpush1.msra.mxu0 %v505
        %1941 = vmatprep.subr.mxu0 %v516
        %1942 = vmatpush1.msra.mxu0 %v515
        %1943 = vmatprep.subr.mxu0 %v526
        %1944 = vmatpush1.msra.mxu0 %v525
        %1945 = vmatprep.subr.mxu0 %v572
        %1946 = vmatpush1.msra.mxu0 %v569
        %1947 = vmatprep.subr.mxu0 0.0
        %1948 = vmatpush1.msra.mxu0 0.0
        %1949 = vmatprep.subr.mxu0 0.0
        %1950 = vmatpush1.msra.mxu0 0.0
        %1951 = vmatprep.subr.mxu0 0.0
        %1952 = vmatpush1.msra.mxu0 0.0
        %1953 = vmatprep.subr.mxu0 0.0
        %1954 = vmatpush1.msra.mxu0 0.0
        %1955 = vmatprep.subr.mxu0 0.0
        %1956 = vmatpush1.msra.mxu0 0.0
        %1957 = vmatprep.subr.mxu0 0.0
        %1958 = vmatpush1.msra.mxu0 0.0
        %1959 = vmatprep.subr.mxu0 0.0
        %1960 = vmatpush1.msra.mxu0 0.0
        %1961 = vmatprep.subr.mxu0 0.0
        %1962 = vmatpush1.msra.mxu0 0.0
        %1963 = vmatprep.subr.mxu0 0.0
        %1964 = vmatpush1.msra.mxu0 0.0
        %1965 = vmatprep.subr.mxu0 0.0
        %1966 = vmatpush1.msra.mxu0 0.0
        %1967 = vmatprep.subr.mxu0 0.0
        %1968 = vmatpush1.msra.mxu0 0.0
        %1969 = vmatprep.subr.mxu0 0.0
        %1970 = vmatpush1.msra.mxu0 0.0
        %1971 = vmatprep.subr.mxu0 0.0
        %1972 = vmatpush1.msra.mxu0 0.0
        %1973 = vmatprep.subr.mxu0 0.0
        %1974 = vmatpush1.msra.mxu0 0.0
        %1975 = vmatprep.subr.mxu0 0.0
        %1976 = vmatpush1.msra.mxu0 0.0
        %1977 = vmatprep.subr.mxu0 0.0
        %1978 = vmatpush1.msra.mxu0 0.0
        %1979 = vmatprep.subr.mxu0 0.0
        %1980 = vmatpush1.msra.mxu0 0.0
        %1981 = vmatprep.subr.mxu0 0.0
        %1982 = vmatpush1.msra.mxu0 0.0
        %1983 = vmatprep.subr.mxu0 0.0
        %1984 = vmatpush1.msra.mxu0 0.0
        %1985 = vmatprep.subr.mxu0 0.0
        %1986 = vmatpush1.msra.mxu0 0.0
        %1987 = vmatprep.subr.mxu0 0.0
        %1988 = vmatpush1.msra.mxu0 0.0
        %1989 = vmatprep.mubr.f32.mxu0 0.0
        %1990 = vmatmul.mubr.f32.gmra.mrb[0].mxu0 %v1905
        %v1991 = vpop.f32.mrb[0].mxu0
        %v1992 = vadd.f32 0.0, %v1991
        %v1993 = vpop.f32.mrb[0].mxu0
        %v1994 = vadd.f32 0.0, %v1993
        %1995 = vmatprep.mubr.f32.mxu0 0.0
        %1996 = vmatmul.mubr.f32.gmra.mrb[0].mxu0 %v1908
        %v1997 = vpop.f32.mrb[0].mxu0
        %v1998 = vadd.f32 0.0, %v1997
        %v1999 = vpop.f32.mrb[0].mxu0
        %v2000 = vadd.f32 0.0, %v1999
        %2001 = vmatprep.mubr.f32.mxu0 0.0
        %2002 = vmatmul.mubr.f32.gmra.mrb[0].mxu0 %v1911
        %v2003 = vpop.f32.mrb[0].mxu0
        %v2004 = vadd.f32 0.0, %v2003
        %v2005 = vpop.f32.mrb[0].mxu0
        %v2006 = vadd.f32 0.0, %v2005
        %2007 = vmatprep.mubr.f32.mxu0 0.0
        %2008 = vmatmul.mubr.f32.gmra.mrb[0].mxu0 %v1914
        %v2009 = vpop.f32.mrb[0].mxu0
        %v2010 = vadd.f32 0.0, %v2009
        %v2011 = vpop.f32.mrb[0].mxu0
        %v2012 = vadd.f32 0.0, %v2011
        %2013 = vmatprep.mubr.f32.mxu0 0.0
        %2014 = vmatmul.mubr.f32.gmra.mrb[0].mxu0 %v1917
        %v2015 = vpop.f32.mrb[0].mxu0
        %v2016 = vadd.f32 0.0, %v2015
        %v2017 = vpop.f32.mrb[0].mxu0
        %v2018 = vadd.f32 0.0, %v2017
        %2019 = vmatprep.mubr.f32.mxu0 0.0
        %2020 = vmatmul.mubr.f32.gmra.mrb[0].mxu0 %v1920
        %v2021 = vpop.f32.mrb[0].mxu0
        %v2022 = vadd.f32 0.0, %v2021
        %v2023 = vpop.f32.mrb[0].mxu0
        %v2024 = vadd.f32 0.0, %v2023
        %2025 = vmatprep.mubr.f32.mxu0 0.0
        %2026 = vmatmul.mubr.f32.gmra.mrb[0].mxu0 %v1923
        %v2027 = vpop.f32.mrb[0].mxu0
        %v2028 = vadd.f32 0.0, %v2027
        %v2029 = vpop.f32.mrb[0].mxu0
        %v2030 = vadd.f32 0.0, %v2029
        %2031 = vdwg.mxu0
        %2032 = vmatprep.subr.mxu0 %v438
        %2033 = vmatpush1.msra.mxu0 %v437
        %2034 = vmatprep.subr.mxu0 %v448
        %2035 = vmatpush1.msra.mxu0 %v447
        %2036 = vmatprep.subr.mxu0 %v458
        %2037 = vmatpush1.msra.mxu0 %v457
        %2038 = vmatprep.subr.mxu0 %v468
        %2039 = vmatpush1.msra.mxu0 %v467
        %2040 = vmatprep.subr.mxu0 %v478
        %2041 = vmatpush1.msra.mxu0 %v477
        %2042 = vmatprep.subr.mxu0 %v488
        %2043 = vmatpush1.msra.mxu0 %v487
        %2044 = vmatprep.subr.mxu0 %v498
        %2045 = vmatpush1.msra.mxu0 %v497
        %2046 = vmatprep.subr.mxu0 %v508
        %2047 = vmatpush1.msra.mxu0 %v507
        %2048 = vmatprep.subr.mxu0 %v518
        %2049 = vmatpush1.msra.mxu0 %v517
        %2050 = vmatprep.subr.mxu0 %v528
        %2051 = vmatpush1.msra.mxu0 %v527
        %2052 = vmatprep.subr.mxu0 %v578
        %2053 = vmatpush1.msra.mxu0 %v575
        %2054 = vmatprep.subr.mxu0 0.0
        %2055 = vmatpush1.msra.mxu0 0.0
        %2056 = vmatprep.subr.mxu0 0.0
        %2057 = vmatpush1.msra.mxu0 0.0
        %2058 = vmatprep.subr.mxu0 0.0
        %2059 = vmatpush1.msra.mxu0 0.0
        %2060 = vmatprep.subr.mxu0 0.0
        %2061 = vmatpush1.msra.mxu0 0.0
        %2062 = vmatprep.subr.mxu0 0.0
        %2063 = vmatpush1.msra.mxu0 0.0
        %2064 = vmatprep.subr.mxu0 0.0
        %2065 = vmatpush1.msra.mxu0 0.0
        %2066 = vmatprep.subr.mxu0 0.0
        %2067 = vmatpush1.msra.mxu0 0.0
        %2068 = vmatprep.subr.mxu0 0.0
        %2069 = vmatpush1.msra.mxu0 0.0
        %2070 = vmatprep.subr.mxu0 0.0
        %2071 = vmatpush1.msra.mxu0 0.0
        %2072 = vmatprep.subr.mxu0 0.0
        %2073 = vmatpush1.msra.mxu0 0.0
        %2074 = vmatprep.subr.mxu0 0.0
        %2075 = vmatpush1.msra.mxu0 0.0
        %2076 = vmatprep.subr.mxu0 0.0
        %2077 = vmatpush1.msra.mxu0 0.0
        %2078 = vmatprep.subr.mxu0 0.0
        %2079 = vmatpush1.msra.mxu0 0.0
        %2080 = vmatprep.subr.mxu0 0.0
        %2081 = vmatpush1.msra.mxu0 0.0
        %2082 = vmatprep.subr.mxu0 0.0
        %2083 = vmatpush1.msra.mxu0 0.0
        %2084 = vmatprep.subr.mxu0 0.0
        %2085 = vmatpush1.msra.mxu0 0.0
        %2086 = vmatprep.subr.mxu0 0.0
        %2087 = vmatpush1.msra.mxu0 0.0
        %2088 = vmatprep.subr.mxu0 0.0
        %2089 = vmatpush1.msra.mxu0 0.0
        %2090 = vmatprep.subr.mxu0 0.0
        %2091 = vmatpush1.msra.mxu0 0.0
        %2092 = vmatprep.subr.mxu0 0.0
        %2093 = vmatpush1.msra.mxu0 0.0
        %2094 = vmatprep.subr.mxu0 0.0
        %2095 = vmatpush1.msra.mxu0 0.0
        %2096 = vmatprep.mubr.f32.mxu0 0.0
        %2097 = vmatmul.mubr.f32.gmra.mrb[0].mxu0 %v1905
        %v2098 = vpop.f32.mrb[0].mxu0
        %v2099 = vadd.f32 0.0, %v2098
        %v2100 = vpop.f32.mrb[0].mxu0
        %v2101 = vadd.f32 0.0, %v2100
        %2102 = vmatprep.mubr.f32.mxu0 0.0
        %2103 = vmatmul.mubr.f32.gmra.mrb[0].mxu0 %v1908
        %v2104 = vpop.f32.mrb[0].mxu0
        %v2105 = vadd.f32 0.0, %v2104
        %v2106 = vpop.f32.mrb[0].mxu0
        %v2107 = vadd.f32 0.0, %v2106
        %2108 = vmatprep.mubr.f32.mxu0 0.0
        %2109 = vmatmul.mubr.f32.gmra.mrb[0].mxu0 %v1911
        %v2110 = vpop.f32.mrb[0].mxu0
        %v2111 = vadd.f32 0.0, %v2110
        %v2112 = vpop.f32.mrb[0].mxu0
        %v2113 = vadd.f32 0.0, %v2112
        %2114 = vmatprep.mubr.f32.mxu0 0.0
        %2115 = vmatmul.mubr.f32.gmra.mrb[0].mxu0 %v1914
        %v2116 = vpop.f32.mrb[0].mxu0
        %v2117 = vadd.f32 0.0, %v2116
        %v2118 = vpop.f32.mrb[0].mxu0
        %v2119 = vadd.f32 0.0, %v2118
        %2120 = vmatprep.mubr.f32.mxu0 0.0
        %2121 = vmatmul.mubr.f32.gmra.mrb[0].mxu0 %v1917
        %v2122 = vpop.f32.mrb[0].mxu0
        %v2123 = vadd.f32 0.0, %v2122
        %v2124 = vpop.f32.mrb[0].mxu0
        %v2125 = vadd.f32 0.0, %v2124
        %2126 = vmatprep.mubr.f32.mxu0 0.0
        %2127 = vmatmul.mubr.f32.gmra.mrb[0].mxu0 %v1920
        %v2128 = vpop.f32.mrb[0].mxu0
        %v2129 = vadd.f32 0.0, %v2128
        %v2130 = vpop.f32.mrb[0].mxu0
        %v2131 = vadd.f32 0.0, %v2130
        %2132 = vmatprep.mubr.f32.mxu0 0.0
        %2133 = vmatmul.mubr.f32.gmra.mrb[0].mxu0 %v1923
        %v2134 = vpop.f32.mrb[0].mxu0
        %v2135 = vadd.f32 0.0, %v2134
        %v2136 = vpop.f32.mrb[0].mxu0
        %v2137 = vadd.f32 0.0, %v2136
        %2138 = vdwg.mxu0
        %2139 = vmatprep.subr.mxu0 %v440
        %2140 = vmatpush1.msra.mxu0 %v439
        %2141 = vmatprep.subr.mxu0 %v450
        %2142 = vmatpush1.msra.mxu0 %v449
        %2143 = vmatprep.subr.mxu0 %v460
        %2144 = vmatpush1.msra.mxu0 %v459
        %2145 = vmatprep.subr.mxu0 %v470
        %2146 = vmatpush1.msra.mxu0 %v469
        %2147 = vmatprep.subr.mxu0 %v480
        %2148 = vmatpush1.msra.mxu0 %v479
        %2149 = vmatprep.subr.mxu0 %v490
        %2150 = vmatpush1.msra.mxu0 %v489
        %2151 = vmatprep.subr.mxu0 %v500
        %2152 = vmatpush1.msra.mxu0 %v499
        %2153 = vmatprep.subr.mxu0 %v510
        %2154 = vmatpush1.msra.mxu0 %v509
        %2155 = vmatprep.subr.mxu0 %v520
        %2156 = vmatpush1.msra.mxu0 %v519
        %2157 = vmatprep.subr.mxu0 %v530
        %2158 = vmatpush1.msra.mxu0 %v529
        %2159 = vmatprep.subr.mxu0 %v584
        %2160 = vmatpush1.msra.mxu0 %v581
        %2161 = vmatprep.subr.mxu0 0.0
        %2162 = vmatpush1.msra.mxu0 0.0
        %2163 = vmatprep.subr.mxu0 0.0
        %2164 = vmatpush1.msra.mxu0 0.0
        %2165 = vmatprep.subr.mxu0 0.0
        %2166 = vmatpush1.msra.mxu0 0.0
        %2167 = vmatprep.subr.mxu0 0.0
        %2168 = vmatpush1.msra.mxu0 0.0
        %2169 = vmatprep.subr.mxu0 0.0
        %2170 = vmatpush1.msra.mxu0 0.0
        %2171 = vmatprep.subr.mxu0 0.0
        %2172 = vmatpush1.msra.mxu0 0.0
        %2173 = vmatprep.subr.mxu0 0.0
        %2174 = vmatpush1.msra.mxu0 0.0
        %2175 = vmatprep.subr.mxu0 0.0
        %2176 = vmatpush1.msra.mxu0 0.0
        %2177 = vmatprep.subr.mxu0 0.0
        %2178 = vmatpush1.msra.mxu0 0.0
        %2179 = vmatprep.subr.mxu0 0.0
        %2180 = vmatpush1.msra.mxu0 0.0
        %2181 = vmatprep.subr.mxu0 0.0
        %2182 = vmatpush1.msra.mxu0 0.0
        %2183 = vmatprep.subr.mxu0 0.0
        %2184 = vmatpush1.msra.mxu0 0.0
        %2185 = vmatprep.subr.mxu0 0.0
        %2186 = vmatpush1.msra.mxu0 0.0
        %2187 = vmatprep.subr.mxu0 0.0
        %2188 = vmatpush1.msra.mxu0 0.0
        %2189 = vmatprep.subr.mxu0 0.0
        %2190 = vmatpush1.msra.mxu0 0.0
        %2191 = vmatprep.subr.mxu0 0.0
        %2192 = vmatpush1.msra.mxu0 0.0
        %2193 = vmatprep.subr.mxu0 0.0
        %2194 = vmatpush1.msra.mxu0 0.0
        %2195 = vmatprep.subr.mxu0 0.0
        %2196 = vmatpush1.msra.mxu0 0.0
        %2197 = vmatprep.subr.mxu0 0.0
        %2198 = vmatpush1.msra.mxu0 0.0
        %2199 = vmatprep.subr.mxu0 0.0
        %2200 = vmatpush1.msra.mxu0 0.0
        %2201 = vmatprep.subr.mxu0 0.0
        %2202 = vmatpush1.msra.mxu0 0.0
        %2203 = vmatprep.mubr.f32.mxu0 0.0
        %2204 = vmatmul.mubr.f32.gmra.mrb[0].mxu0 %v1905
        %v2205 = vpop.f32.mrb[0].mxu0
        %v2206 = vadd.f32 0.0, %v2205
        %v2207 = vpop.f32.mrb[0].mxu0
        %v2208 = vadd.f32 0.0, %v2207
        %2209 = vmatprep.mubr.f32.mxu0 0.0
        %2210 = vmatmul.mubr.f32.gmra.mrb[0].mxu0 %v1908
        %v2211 = vpop.f32.mrb[0].mxu0
        %v2212 = vadd.f32 0.0, %v2211
        %v2213 = vpop.f32.mrb[0].mxu0
        %v2214 = vadd.f32 0.0, %v2213
        %2215 = vmatprep.mubr.f32.mxu0 0.0
        %2216 = vmatmul.mubr.f32.gmra.mrb[0].mxu0 %v1911
        %v2217 = vpop.f32.mrb[0].mxu0
        %v2218 = vadd.f32 0.0, %v2217
        %v2219 = vpop.f32.mrb[0].mxu0
        %v2220 = vadd.f32 0.0, %v2219
        %2221 = vmatprep.mubr.f32.mxu0 0.0
        %2222 = vmatmul.mubr.f32.gmra.mrb[0].mxu0 %v1914
        %v2223 = vpop.f32.mrb[0].mxu0
        %v2224 = vadd.f32 0.0, %v2223
        %v2225 = vpop.f32.mrb[0].mxu0
        %v2226 = vadd.f32 0.0, %v2225
        %2227 = vmatprep.mubr.f32.mxu0 0.0
        %2228 = vmatmul.mubr.f32.gmra.mrb[0].mxu0 %v1917
        %v2229 = vpop.f32.mrb[0].mxu0
        %v2230 = vadd.f32 0.0, %v2229
        %v2231 = vpop.f32.mrb[0].mxu0
        %v2232 = vadd.f32 0.0, %v2231
        %2233 = vmatprep.mubr.f32.mxu0 0.0
        %2234 = vmatmul.mubr.f32.gmra.mrb[0].mxu0 %v1920
        %v2235 = vpop.f32.mrb[0].mxu0
        %v2236 = vadd.f32 0.0, %v2235
        %v2237 = vpop.f32.mrb[0].mxu0
        %v2238 = vadd.f32 0.0, %v2237
        %2239 = vmatprep.mubr.f32.mxu0 0.0
        %2240 = vmatmul.mubr.f32.gmra.mrb[0].mxu0 %v1923
        %v2241 = vpop.f32.mrb[0].mxu0
        %v2242 = vadd.f32 0.0, %v2241
        %v2243 = vpop.f32.mrb[0].mxu0
        %v2244 = vadd.f32 0.0, %v2243
        %2245 = vdwg.mxu0
        %2246 = vmatprep.subr.mxu0 %v442
        %2247 = vmatpush1.msra.mxu0 %v441
        %2248 = vmatprep.subr.mxu0 %v452
        %2249 = vmatpush1.msra.mxu0 %v451
        %2250 = vmatprep.subr.mxu0 %v462
        %2251 = vmatpush1.msra.mxu0 %v461
        %2252 = vmatprep.subr.mxu0 %v472
        %2253 = vmatpush1.msra.mxu0 %v471
        %2254 = vmatprep.subr.mxu0 %v482
        %2255 = vmatpush1.msra.mxu0 %v481
        %2256 = vmatprep.subr.mxu0 %v492
        %2257 = vmatpush1.msra.mxu0 %v491
        %2258 = vmatprep.subr.mxu0 %v502
        %2259 = vmatpush1.msra.mxu0 %v501
        %2260 = vmatprep.subr.mxu0 %v512
        %2261 = vmatpush1.msra.mxu0 %v511
        %2262 = vmatprep.subr.mxu0 %v522
        %2263 = vmatpush1.msra.mxu0 %v521
        %2264 = vmatprep.subr.mxu0 %v532
        %2265 = vmatpush1.msra.mxu0 %v531
        %2266 = vmatprep.subr.mxu0 %v590
        %2267 = vmatpush1.msra.mxu0 %v587
        %2268 = vmatprep.subr.mxu0 0.0
        %2269 = vmatpush1.msra.mxu0 0.0
        %2270 = vmatprep.subr.mxu0 0.0
        %2271 = vmatpush1.msra.mxu0 0.0
        %2272 = vmatprep.subr.mxu0 0.0
        %2273 = vmatpush1.msra.mxu0 0.0
        %2274 = vmatprep.subr.mxu0 0.0
        %2275 = vmatpush1.msra.mxu0 0.0
        %2276 = vmatprep.subr.mxu0 0.0
        %2277 = vmatpush1.msra.mxu0 0.0
        %2278 = vmatprep.subr.mxu0 0.0
        %2279 = vmatpush1.msra.mxu0 0.0
        %2280 = vmatprep.subr.mxu0 0.0
        %2281 = vmatpush1.msra.mxu0 0.0
        %2282 = vmatprep.subr.mxu0 0.0
        %2283 = vmatpush1.msra.mxu0 0.0
        %2284 = vmatprep.subr.mxu0 0.0
        %2285 = vmatpush1.msra.mxu0 0.0
        %2286 = vmatprep.subr.mxu0 0.0
        %2287 = vmatpush1.msra.mxu0 0.0
        %2288 = vmatprep.subr.mxu0 0.0
        %2289 = vmatpush1.msra.mxu0 0.0
        %2290 = vmatprep.subr.mxu0 0.0
        %2291 = vmatpush1.msra.mxu0 0.0
        %2292 = vmatprep.subr.mxu0 0.0
        %2293 = vmatpush1.msra.mxu0 0.0
        %2294 = vmatprep.subr.mxu0 0.0
        %2295 = vmatpush1.msra.mxu0 0.0
        %2296 = vmatprep.subr.mxu0 0.0
        %2297 = vmatpush1.msra.mxu0 0.0
        %2298 = vmatprep.subr.mxu0 0.0
        %2299 = vmatpush1.msra.mxu0 0.0
        %2300 = vmatprep.subr.mxu0 0.0
        %2301 = vmatpush1.msra.mxu0 0.0
        %2302 = vmatprep.subr.mxu0 0.0
        %2303 = vmatpush1.msra.mxu0 0.0
        %2304 = vmatprep.subr.mxu0 0.0
        %2305 = vmatpush1.msra.mxu0 0.0
        %2306 = vmatprep.subr.mxu0 0.0
        %2307 = vmatpush1.msra.mxu0 0.0
        %2308 = vmatprep.subr.mxu0 0.0
        %2309 = vmatpush1.msra.mxu0 0.0
        %2310 = vmatprep.mubr.f32.mxu0 0.0
        %2311 = vmatmul.mubr.f32.gmra.mrb[0].mxu0 %v1905
        %v2312 = vpop.f32.mrb[0].mxu0
        %v2313 = vadd.f32 0.0, %v2312
        %v2314 = vpop.f32.mrb[0].mxu0
        %v2315 = vadd.f32 0.0, %v2314
        %2316 = vmatprep.mubr.f32.mxu0 0.0
        %2317 = vmatmul.mubr.f32.gmra.mrb[0].mxu0 %v1908
        %v2318 = vpop.f32.mrb[0].mxu0
        %v2319 = vadd.f32 0.0, %v2318
        %v2320 = vpop.f32.mrb[0].mxu0
        %v2321 = vadd.f32 0.0, %v2320
        %2322 = vmatprep.mubr.f32.mxu0 0.0
        %2323 = vmatmul.mubr.f32.gmra.mrb[0].mxu0 %v1911
        %v2324 = vpop.f32.mrb[0].mxu0
        %v2325 = vadd.f32 0.0, %v2324
        %v2326 = vpop.f32.mrb[0].mxu0
        %v2327 = vadd.f32 0.0, %v2326
        %2328 = vmatprep.mubr.f32.mxu0 0.0
        %2329 = vmatmul.mubr.f32.gmra.mrb[0].mxu0 %v1914
        %v2330 = vpop.f32.mrb[0].mxu0
        %v2331 = vadd.f32 0.0, %v2330
        %v2332 = vpop.f32.mrb[0].mxu0
        %v2333 = vadd.f32 0.0, %v2332
        %2334 = vmatprep.mubr.f32.mxu0 0.0
        %2335 = vmatmul.mubr.f32.gmra.mrb[0].mxu0 %v1917
        %v2336 = vpop.f32.mrb[0].mxu0
        %v2337 = vadd.f32 0.0, %v2336
        %v2338 = vpop.f32.mrb[0].mxu0
        %v2339 = vadd.f32 0.0, %v2338
        %2340 = vmatprep.mubr.f32.mxu0 0.0
        %2341 = vmatmul.mubr.f32.gmra.mrb[0].mxu0 %v1920
        %v2342 = vpop.f32.mrb[0].mxu0
        %v2343 = vadd.f32 0.0, %v2342
        %v2344 = vpop.f32.mrb[0].mxu0
        %v2345 = vadd.f32 0.0, %v2344
        %2346 = vmatprep.mubr.f32.mxu0 0.0
        %2347 = vmatmul.mubr.f32.gmra.mrb[0].mxu0 %v1923
        %v2348 = vpop.f32.mrb[0].mxu0
        %v2349 = vadd.f32 0.0, %v2348
        %v2350 = vpop.f32.mrb[0].mxu0
        %v2351 = vadd.f32 0.0, %v2350
        %2352 = vdwg.mxu0
        %2353 = vmatprep.subr.mxu0 %v444
        %2354 = vmatpush1.msra.mxu0 %v443
        %2355 = vmatprep.subr.mxu0 %v454
        %2356 = vmatpush1.msra.mxu0 %v453
        %2357 = vmatprep.subr.mxu0 %v464
        %2358 = vmatpush1.msra.mxu0 %v463
        %2359 = vmatprep.subr.mxu0 %v474
        %2360 = vmatpush1.msra.mxu0 %v473
        %2361 = vmatprep.subr.mxu0 %v484
        %2362 = vmatpush1.msra.mxu0 %v483
        %2363 = vmatprep.subr.mxu0 %v494
        %2364 = vmatpush1.msra.mxu0 %v493
        %2365 = vmatprep.subr.mxu0 %v504
        %2366 = vmatpush1.msra.mxu0 %v503
        %2367 = vmatprep.subr.mxu0 %v514
        %2368 = vmatpush1.msra.mxu0 %v513
        %2369 = vmatprep.subr.mxu0 %v524
        %2370 = vmatpush1.msra.mxu0 %v523
        %2371 = vmatprep.subr.mxu0 %v534
        %2372 = vmatpush1.msra.mxu0 %v533
        %2373 = vmatprep.subr.mxu0 %v596
        %2374 = vmatpush1.msra.mxu0 %v593
        %2375 = vmatprep.subr.mxu0 0.0
        %2376 = vmatpush1.msra.mxu0 0.0
        %2377 = vmatprep.subr.mxu0 0.0
        %2378 = vmatpush1.msra.mxu0 0.0
        %2379 = vmatprep.subr.mxu0 0.0
        %2380 = vmatpush1.msra.mxu0 0.0
        %2381 = vmatprep.subr.mxu0 0.0
        %2382 = vmatpush1.msra.mxu0 0.0
        %2383 = vmatprep.subr.mxu0 0.0
        %2384 = vmatpush1.msra.mxu0 0.0
        %2385 = vmatprep.subr.mxu0 0.0
        %2386 = vmatpush1.msra.mxu0 0.0
        %2387 = vmatprep.subr.mxu0 0.0
        %2388 = vmatpush1.msra.mxu0 0.0
        %2389 = vmatprep.subr.mxu0 0.0
        %2390 = vmatpush1.msra.mxu0 0.0
        %2391 = vmatprep.subr.mxu0 0.0
        %2392 = vmatpush1.msra.mxu0 0.0
        %2393 = vmatprep.subr.mxu0 0.0
        %2394 = vmatpush1.msra.mxu0 0.0
        %2395 = vmatprep.subr.mxu0 0.0
        %2396 = vmatpush1.msra.mxu0 0.0
        %2397 = vmatprep.subr.mxu0 0.0
        %2398 = vmatpush1.msra.mxu0 0.0
        %2399 = vmatprep.subr.mxu0 0.0
        %2400 = vmatpush1.msra.mxu0 0.0
        %2401 = vmatprep.subr.mxu0 0.0
        %2402 = vmatpush1.msra.mxu0 0.0
        %2403 = vmatprep.subr.mxu0 0.0
        %2404 = vmatpush1.msra.mxu0 0.0
        %2405 = vmatprep.subr.mxu0 0.0
        %2406 = vmatpush1.msra.mxu0 0.0
        %2407 = vmatprep.subr.mxu0 0.0
        %2408 = vmatpush1.msra.mxu0 0.0
        %2409 = vmatprep.subr.mxu0 0.0
        %2410 = vmatpush1.msra.mxu0 0.0
        %2411 = vmatprep.subr.mxu0 0.0
        %2412 = vmatpush1.msra.mxu0 0.0
        %2413 = vmatprep.subr.mxu0 0.0
        %2414 = vmatpush1.msra.mxu0 0.0
        %2415 = vmatprep.subr.mxu0 0.0
        %2416 = vmatpush1.msra.mxu0 0.0
        %2417 = vmatprep.mubr.f32.mxu0 0.0
        %2418 = vmatmul.mubr.f32.gmra.mrb[0].mxu0 %v1905
        %v2419 = vpop.f32.mrb[0].mxu0
        %v2420 = vadd.f32 0.0, %v2419
        %v2421 = vpop.f32.mrb[0].mxu0
        %v2422 = vadd.f32 0.0, %v2421
        %2423 = vmatprep.mubr.f32.mxu0 0.0
        %2424 = vmatmul.mubr.f32.gmra.mrb[0].mxu0 %v1908
        %v2425 = vpop.f32.mrb[0].mxu0
        %v2426 = vadd.f32 0.0, %v2425
        %v2427 = vpop.f32.mrb[0].mxu0
        %v2428 = vadd.f32 0.0, %v2427
        %2429 = vmatprep.mubr.f32.mxu0 0.0
        %2430 = vmatmul.mubr.f32.gmra.mrb[0].mxu0 %v1911
        %v2431 = vpop.f32.mrb[0].mxu0
        %v2432 = vadd.f32 0.0, %v2431
        %v2433 = vpop.f32.mrb[0].mxu0
        %v2434 = vadd.f32 0.0, %v2433
        %2435 = vmatprep.mubr.f32.mxu0 0.0
        %2436 = vmatmul.mubr.f32.gmra.mrb[0].mxu0 %v1914
        %v2437 = vpop.f32.mrb[0].mxu0
        %v2438 = vadd.f32 0.0, %v2437
        %v2439 = vpop.f32.mrb[0].mxu0
        %v2440 = vadd.f32 0.0, %v2439
        %2441 = vmatprep.mubr.f32.mxu0 0.0
        %2442 = vmatmul.mubr.f32.gmra.mrb[0].mxu0 %v1917
        %v2443 = vpop.f32.mrb[0].mxu0
        %v2444 = vadd.f32 0.0, %v2443
        %v2445 = vpop.f32.mrb[0].mxu0
        %v2446 = vadd.f32 0.0, %v2445
        %2447 = vmatprep.mubr.f32.mxu0 0.0
        %2448 = vmatmul.mubr.f32.gmra.mrb[0].mxu0 %v1920
        %v2449 = vpop.f32.mrb[0].mxu0
        %v2450 = vadd.f32 0.0, %v2449
        %v2451 = vpop.f32.mrb[0].mxu0
        %v2452 = vadd.f32 0.0, %v2451
        %2453 = vmatprep.mubr.f32.mxu0 0.0
        %2454 = vmatmul.mubr.f32.gmra.mrb[0].mxu0 %v1923
        %v2455 = vpop.f32.mrb[0].mxu0
        %v2456 = vadd.f32 0.0, %v2455
        %v2457 = vpop.f32.mrb[0].mxu0
        %v2458 = vadd.f32 0.0, %v2457
        %2459 = vdwg.mxu0
        %v2460 = vld [vmem:[%s424] sm:$0xff]
        %v2461 = vld [vmem:[%s424 + $0x8] sm:$0xff]
        %v2462 = vld [vmem:[%s424 + $0x10] sm:$0xff]
        %v2463 = vld [vmem:[%s424 + $0x18] sm:$0xff]
        %v2464 = vld [vmem:[%s424 + $0x20] sm:$0xff]
        %v2465 = vld [vmem:[%s424 + $0x28] sm:$0xff]
        %v2466 = vld [vmem:[%s424 + $0x30] sm:$0xff]
        %v2468 = vsel %vm545, %v2460, 0
        %v2471 = vsel %vm545, %v2461, 0
        %v2474 = vsel %vm545, %v2462, 0
        %v2477 = vsel %vm545, %v2463, 0
        %v2480 = vsel %vm545, %v2464, 0
        %v2483 = vsel %vm545, %v2465, 0
        %v2486 = vsel %vm545, %v2466, 0
        %2488 = vmatprep.subr.mxu0 %v436
        %2489 = vmatpush1.msra.mxu0 %v435
        %2490 = vmatprep.subr.mxu0 %v446
        %2491 = vmatpush1.msra.mxu0 %v445
        %2492 = vmatprep.subr.mxu0 %v456
        %2493 = vmatpush1.msra.mxu0 %v455
        %2494 = vmatprep.subr.mxu0 %v466
        %2495 = vmatpush1.msra.mxu0 %v465
        %2496 = vmatprep.subr.mxu0 %v476
        %2497 = vmatpush1.msra.mxu0 %v475
        %2498 = vmatprep.subr.mxu0 %v486
        %2499 = vmatpush1.msra.mxu0 %v485
        %2500 = vmatprep.subr.mxu0 %v496
        %2501 = vmatpush1.msra.mxu0 %v495
        %2502 = vmatprep.subr.mxu0 %v506
        %2503 = vmatpush1.msra.mxu0 %v505
        %2504 = vmatprep.subr.mxu0 %v516
        %2505 = vmatpush1.msra.mxu0 %v515
        %2506 = vmatprep.subr.mxu0 %v526
        %2507 = vmatpush1.msra.mxu0 %v525
        %2508 = vmatprep.subr.mxu0 %v572
        %2509 = vmatpush1.msra.mxu0 %v569
        %2510 = vmatprep.subr.mxu0 0.0
        %2511 = vmatpush1.msra.mxu0 0.0
        %2512 = vmatprep.subr.mxu0 0.0
        %2513 = vmatpush1.msra.mxu0 0.0
        %2514 = vmatprep.subr.mxu0 0.0
        %2515 = vmatpush1.msra.mxu0 0.0
        %2516 = vmatprep.subr.mxu0 0.0
        %2517 = vmatpush1.msra.mxu0 0.0
        %2518 = vmatprep.subr.mxu0 0.0
        %2519 = vmatpush1.msra.mxu0 0.0
        %2520 = vmatprep.subr.mxu0 0.0
        %2521 = vmatpush1.msra.mxu0 0.0
        %2522 = vmatprep.subr.mxu0 0.0
        %2523 = vmatpush1.msra.mxu0 0.0
        %2524 = vmatprep.subr.mxu0 0.0
        %2525 = vmatpush1.msra.mxu0 0.0
        %2526 = vmatprep.subr.mxu0 0.0
        %2527 = vmatpush1.msra.mxu0 0.0
        %2528 = vmatprep.subr.mxu0 0.0
        %2529 = vmatpush1.msra.mxu0 0.0
        %2530 = vmatprep.subr.mxu0 0.0
        %2531 = vmatpush1.msra.mxu0 0.0
        %2532 = vmatprep.subr.mxu0 0.0
        %2533 = vmatpush1.msra.mxu0 0.0
        %2534 = vmatprep.subr.mxu0 0.0
        %2535 = vmatpush1.msra.mxu0 0.0
        %2536 = vmatprep.subr.mxu0 0.0
        %2537 = vmatpush1.msra.mxu0 0.0
        %2538 = vmatprep.subr.mxu0 0.0
        %2539 = vmatpush1.msra.mxu0 0.0
        %2540 = vmatprep.subr.mxu0 0.0
        %2541 = vmatpush1.msra.mxu0 0.0
        %2542 = vmatprep.subr.mxu0 0.0
        %2543 = vmatpush1.msra.mxu0 0.0
        %2544 = vmatprep.subr.mxu0 0.0
        %2545 = vmatpush1.msra.mxu0 0.0
        %2546 = vmatprep.subr.mxu0 0.0
        %2547 = vmatpush1.msra.mxu0 0.0
        %2548 = vmatprep.subr.mxu0 0.0
        %2549 = vmatpush1.msra.mxu0 0.0
        %2550 = vmatprep.subr.mxu0 0.0
        %2551 = vmatpush1.msra.mxu0 0.0
        %2552 = vmatprep.mubr.f32.mxu0 0.0
        %2553 = vmatmul.mubr.f32.gmra.mrb[0].mxu0 %v2468
        %v2554 = vpop.f32.mrb[0].mxu0
        %v2555 = vadd.f32 0.0, %v2554
        %v2556 = vpop.f32.mrb[0].mxu0
        %v2557 = vadd.f32 0.0, %v2556
        %2558 = vmatprep.mubr.f32.mxu0 0.0
        %2559 = vmatmul.mubr.f32.gmra.mrb[0].mxu0 %v2471
        %v2560 = vpop.f32.mrb[0].mxu0
        %v2561 = vadd.f32 0.0, %v2560
        %v2562 = vpop.f32.mrb[0].mxu0
        %v2563 = vadd.f32 0.0, %v2562
        %2564 = vmatprep.mubr.f32.mxu0 0.0
        %2565 = vmatmul.mubr.f32.gmra.mrb[0].mxu0 %v2474
        %v2566 = vpop.f32.mrb[0].mxu0
        %v2567 = vadd.f32 0.0, %v2566
        %v2568 = vpop.f32.mrb[0].mxu0
        %v2569 = vadd.f32 0.0, %v2568
        %2570 = vmatprep.mubr.f32.mxu0 0.0
        %2571 = vmatmul.mubr.f32.gmra.mrb[0].mxu0 %v2477
        %v2572 = vpop.f32.mrb[0].mxu0
        %v2573 = vadd.f32 0.0, %v2572
        %v2574 = vpop.f32.mrb[0].mxu0
        %v2575 = vadd.f32 0.0, %v2574
        %2576 = vmatprep.mubr.f32.mxu0 0.0
        %2577 = vmatmul.mubr.f32.gmra.mrb[0].mxu0 %v2480
        %v2578 = vpop.f32.mrb[0].mxu0
        %v2579 = vadd.f32 0.0, %v2578
        %v2580 = vpop.f32.mrb[0].mxu0
        %v2581 = vadd.f32 0.0, %v2580
        %2582 = vmatprep.mubr.f32.mxu0 0.0
        %2583 = vmatmul.mubr.f32.gmra.mrb[0].mxu0 %v2483
        %v2584 = vpop.f32.mrb[0].mxu0
        %v2585 = vadd.f32 0.0, %v2584
        %v2586 = vpop.f32.mrb[0].mxu0
        %v2587 = vadd.f32 0.0, %v2586
        %2588 = vmatprep.mubr.f32.mxu0 0.0
        %2589 = vmatmul.mubr.f32.gmra.mrb[0].mxu0 %v2486
        %v2590 = vpop.f32.mrb[0].mxu0
        %v2591 = vadd.f32 0.0, %v2590
        %v2592 = vpop.f32.mrb[0].mxu0
        %v2593 = vadd.f32 0.0, %v2592
        %2594 = vdwg.mxu0
        %2595 = vmatprep.subr.mxu0 %v438
        %2596 = vmatpush1.msra.mxu0 %v437
        %2597 = vmatprep.subr.mxu0 %v448
        %2598 = vmatpush1.msra.mxu0 %v447
        %2599 = vmatprep.subr.mxu0 %v458
        %2600 = vmatpush1.msra.mxu0 %v457
        %2601 = vmatprep.subr.mxu0 %v468
        %2602 = vmatpush1.msra.mxu0 %v467
        %2603 = vmatprep.subr.mxu0 %v478
        %2604 = vmatpush1.msra.mxu0 %v477
        %2605 = vmatprep.subr.mxu0 %v488
        %2606 = vmatpush1.msra.mxu0 %v487
        %2607 = vmatprep.subr.mxu0 %v498
        %2608 = vmatpush1.msra.mxu0 %v497
        %2609 = vmatprep.subr.mxu0 %v508
        %2610 = vmatpush1.msra.mxu0 %v507
        %2611 = vmatprep.subr.mxu0 %v518
        %2612 = vmatpush1.msra.mxu0 %v517
        %2613 = vmatprep.subr.mxu0 %v528
        %2614 = vmatpush1.msra.mxu0 %v527
        %2615 = vmatprep.subr.mxu0 %v578
        %2616 = vmatpush1.msra.mxu0 %v575
        %2617 = vmatprep.subr.mxu0 0.0
        %2618 = vmatpush1.msra.mxu0 0.0
        %2619 = vmatprep.subr.mxu0 0.0
        %2620 = vmatpush1.msra.mxu0 0.0
        %2621 = vmatprep.subr.mxu0 0.0
        %2622 = vmatpush1.msra.mxu0 0.0
        %2623 = vmatprep.subr.mxu0 0.0
        %2624 = vmatpush1.msra.mxu0 0.0
        %2625 = vmatprep.subr.mxu0 0.0
        %2626 = vmatpush1.msra.mxu0 0.0
        %2627 = vmatprep.subr.mxu0 0.0
        %2628 = vmatpush1.msra.mxu0 0.0
        %2629 = vmatprep.subr.mxu0 0.0
        %2630 = vmatpush1.msra.mxu0 0.0
        %2631 = vmatprep.subr.mxu0 0.0
        %2632 = vmatpush1.msra.mxu0 0.0
        %2633 = vmatprep.subr.mxu0 0.0
        %2634 = vmatpush1.msra.mxu0 0.0
        %2635 = vmatprep.subr.mxu0 0.0
        %2636 = vmatpush1.msra.mxu0 0.0
        %2637 = vmatprep.subr.mxu0 0.0
        %2638 = vmatpush1.msra.mxu0 0.0
        %2639 = vmatprep.subr.mxu0 0.0
        %2640 = vmatpush1.msra.mxu0 0.0
        %2641 = vmatprep.subr.mxu0 0.0
        %2642 = vmatpush1.msra.mxu0 0.0
        %2643 = vmatprep.subr.mxu0 0.0
        %2644 = vmatpush1.msra.mxu0 0.0
        %2645 = vmatprep.subr.mxu0 0.0
        %2646 = vmatpush1.msra.mxu0 0.0
        %2647 = vmatprep.subr.mxu0 0.0
        %2648 = vmatpush1.msra.mxu0 0.0
        %2649 = vmatprep.subr.mxu0 0.0
        %2650 = vmatpush1.msra.mxu0 0.0
        %2651 = vmatprep.subr.mxu0 0.0
        %2652 = vmatpush1.msra.mxu0 0.0
        %2653 = vmatprep.subr.mxu0 0.0
        %2654 = vmatpush1.msra.mxu0 0.0
        %2655 = vmatprep.subr.mxu0 0.0
        %2656 = vmatpush1.msra.mxu0 0.0
        %2657 = vmatprep.subr.mxu0 0.0
        %2658 = vmatpush1.msra.mxu0 0.0
        %2659 = vmatprep.mubr.f32.mxu0 0.0
        %2660 = vmatmul.mubr.f32.gmra.mrb[0].mxu0 %v2468
        %v2661 = vpop.f32.mrb[0].mxu0
        %v2662 = vadd.f32 0.0, %v2661
        %v2663 = vpop.f32.mrb[0].mxu0
        %v2664 = vadd.f32 0.0, %v2663
        %2665 = vmatprep.mubr.f32.mxu0 0.0
        %2666 = vmatmul.mubr.f32.gmra.mrb[0].mxu0 %v2471
        %v2667 = vpop.f32.mrb[0].mxu0
        %v2668 = vadd.f32 0.0, %v2667
        %v2669 = vpop.f32.mrb[0].mxu0
        %v2670 = vadd.f32 0.0, %v2669
        %2671 = vmatprep.mubr.f32.mxu0 0.0
        %2672 = vmatmul.mubr.f32.gmra.mrb[0].mxu0 %v2474
        %v2673 = vpop.f32.mrb[0].mxu0
        %v2674 = vadd.f32 0.0, %v2673
        %v2675 = vpop.f32.mrb[0].mxu0
        %v2676 = vadd.f32 0.0, %v2675
        %2677 = vmatprep.mubr.f32.mxu0 0.0
        %2678 = vmatmul.mubr.f32.gmra.mrb[0].mxu0 %v2477
        %v2679 = vpop.f32.mrb[0].mxu0
        %v2680 = vadd.f32 0.0, %v2679
        %v2681 = vpop.f32.mrb[0].mxu0
        %v2682 = vadd.f32 0.0, %v2681
        %2683 = vmatprep.mubr.f32.mxu0 0.0
        %2684 = vmatmul.mubr.f32.gmra.mrb[0].mxu0 %v2480
        %v2685 = vpop.f32.mrb[0].mxu0
        %v2686 = vadd.f32 0.0, %v2685
        %v2687 = vpop.f32.mrb[0].mxu0
        %v2688 = vadd.f32 0.0, %v2687
        %2689 = vmatprep.mubr.f32.mxu0 0.0
        %2690 = vmatmul.mubr.f32.gmra.mrb[0].mxu0 %v2483
        %v2691 = vpop.f32.mrb[0].mxu0
        %v2692 = vadd.f32 0.0, %v2691
        %v2693 = vpop.f32.mrb[0].mxu0
        %v2694 = vadd.f32 0.0, %v2693
        %2695 = vmatprep.mubr.f32.mxu0 0.0
        %2696 = vmatmul.mubr.f32.gmra.mrb[0].mxu0 %v2486
        %v2697 = vpop.f32.mrb[0].mxu0
        %v2698 = vadd.f32 0.0, %v2697
        %v2699 = vpop.f32.mrb[0].mxu0
        %v2700 = vadd.f32 0.0, %v2699
        %2701 = vdwg.mxu0
        %2702 = vmatprep.subr.mxu0 %v440
        %2703 = vmatpush1.msra.mxu0 %v439
        %2704 = vmatprep.subr.mxu0 %v450
        %2705 = vmatpush1.msra.mxu0 %v449
        %2706 = vmatprep.subr.mxu0 %v460
        %2707 = vmatpush1.msra.mxu0 %v459
        %2708 = vmatprep.subr.mxu0 %v470
        %2709 = vmatpush1.msra.mxu0 %v469
        %2710 = vmatprep.subr.mxu0 %v480
        %2711 = vmatpush1.msra.mxu0 %v479
        %2712 = vmatprep.subr.mxu0 %v490
        %2713 = vmatpush1.msra.mxu0 %v489
        %2714 = vmatprep.subr.mxu0 %v500
        %2715 = vmatpush1.msra.mxu0 %v499
        %2716 = vmatprep.subr.mxu0 %v510
        %2717 = vmatpush1.msra.mxu0 %v509
        %2718 = vmatprep.subr.mxu0 %v520
        %2719 = vmatpush1.msra.mxu0 %v519
        %2720 = vmatprep.subr.mxu0 %v530
        %2721 = vmatpush1.msra.mxu0 %v529
        %2722 = vmatprep.subr.mxu0 %v584
        %2723 = vmatpush1.msra.mxu0 %v581
        %2724 = vmatprep.subr.mxu0 0.0
        %2725 = vmatpush1.msra.mxu0 0.0
        %2726 = vmatprep.subr.mxu0 0.0
        %2727 = vmatpush1.msra.mxu0 0.0
        %2728 = vmatprep.subr.mxu0 0.0
        %2729 = vmatpush1.msra.mxu0 0.0
        %2730 = vmatprep.subr.mxu0 0.0
        %2731 = vmatpush1.msra.mxu0 0.0
        %2732 = vmatprep.subr.mxu0 0.0
        %2733 = vmatpush1.msra.mxu0 0.0
        %2734 = vmatprep.subr.mxu0 0.0
        %2735 = vmatpush1.msra.mxu0 0.0
        %2736 = vmatprep.subr.mxu0 0.0
        %2737 = vmatpush1.msra.mxu0 0.0
        %2738 = vmatprep.subr.mxu0 0.0
        %2739 = vmatpush1.msra.mxu0 0.0
        %2740 = vmatprep.subr.mxu0 0.0
        %2741 = vmatpush1.msra.mxu0 0.0
        %2742 = vmatprep.subr.mxu0 0.0
        %2743 = vmatpush1.msra.mxu0 0.0
        %2744 = vmatprep.subr.mxu0 0.0
        %2745 = vmatpush1.msra.mxu0 0.0
        %2746 = vmatprep.subr.mxu0 0.0
        %2747 = vmatpush1.msra.mxu0 0.0
        %2748 = vmatprep.subr.mxu0 0.0
        %2749 = vmatpush1.msra.mxu0 0.0
        %2750 = vmatprep.subr.mxu0 0.0
        %2751 = vmatpush1.msra.mxu0 0.0
        %2752 = vmatprep.subr.mxu0 0.0
        %2753 = vmatpush1.msra.mxu0 0.0
        %2754 = vmatprep.subr.mxu0 0.0
        %2755 = vmatpush1.msra.mxu0 0.0
        %2756 = vmatprep.subr.mxu0 0.0
        %2757 = vmatpush1.msra.mxu0 0.0
        %2758 = vmatprep.subr.mxu0 0.0
        %2759 = vmatpush1.msra.mxu0 0.0
        %2760 = vmatprep.subr.mxu0 0.0
        %2761 = vmatpush1.msra.mxu0 0.0
        %2762 = vmatprep.subr.mxu0 0.0
        %2763 = vmatpush1.msra.mxu0 0.0
        %2764 = vmatprep.subr.mxu0 0.0
        %2765 = vmatpush1.msra.mxu0 0.0
        %2766 = vmatprep.mubr.f32.mxu0 0.0
        %2767 = vmatmul.mubr.f32.gmra.mrb[0].mxu0 %v2468
        %v2768 = vpop.f32.mrb[0].mxu0
        %v2769 = vadd.f32 0.0, %v2768
        %v2770 = vpop.f32.mrb[0].mxu0
        %v2771 = vadd.f32 0.0, %v2770
        %2772 = vmatprep.mubr.f32.mxu0 0.0
        %2773 = vmatmul.mubr.f32.gmra.mrb[0].mxu0 %v2471
        %v2774 = vpop.f32.mrb[0].mxu0
        %v2775 = vadd.f32 0.0, %v2774
        %v2776 = vpop.f32.mrb[0].mxu0
        %v2777 = vadd.f32 0.0, %v2776
        %2778 = vmatprep.mubr.f32.mxu0 0.0
        %2779 = vmatmul.mubr.f32.gmra.mrb[0].mxu0 %v2474
        %v2780 = vpop.f32.mrb[0].mxu0
        %v2781 = vadd.f32 0.0, %v2780
        %v2782 = vpop.f32.mrb[0].mxu0
        %v2783 = vadd.f32 0.0, %v2782
        %2784 = vmatprep.mubr.f32.mxu0 0.0
        %2785 = vmatmul.mubr.f32.gmra.mrb[0].mxu0 %v2477
        %v2786 = vpop.f32.mrb[0].mxu0
        %v2787 = vadd.f32 0.0, %v2786
        %v2788 = vpop.f32.mrb[0].mxu0
        %v2789 = vadd.f32 0.0, %v2788
        %2790 = vmatprep.mubr.f32.mxu0 0.0
        %2791 = vmatmul.mubr.f32.gmra.mrb[0].mxu0 %v2480
        %v2792 = vpop.f32.mrb[0].mxu0
        %v2793 = vadd.f32 0.0, %v2792
        %v2794 = vpop.f32.mrb[0].mxu0
        %v2795 = vadd.f32 0.0, %v2794
        %2796 = vmatprep.mubr.f32.mxu0 0.0
        %2797 = vmatmul.mubr.f32.gmra.mrb[0].mxu0 %v2483
        %v2798 = vpop.f32.mrb[0].mxu0
        %v2799 = vadd.f32 0.0, %v2798
        %v2800 = vpop.f32.mrb[0].mxu0
        %v2801 = vadd.f32 0.0, %v2800
        %2802 = vmatprep.mubr.f32.mxu0 0.0
        %2803 = vmatmul.mubr.f32.gmra.mrb[0].mxu0 %v2486
        %v2804 = vpop.f32.mrb[0].mxu0
        %v2805 = vadd.f32 0.0, %v2804
        %v2806 = vpop.f32.mrb[0].mxu0
        %v2807 = vadd.f32 0.0, %v2806
        %2808 = vdwg.mxu0
        %2809 = vmatprep.subr.mxu0 %v442
        %2810 = vmatpush1.msra.mxu0 %v441
        %2811 = vmatprep.subr.mxu0 %v452
        %2812 = vmatpush1.msra.mxu0 %v451
        %2813 = vmatprep.subr.mxu0 %v462
        %2814 = vmatpush1.msra.mxu0 %v461
        %2815 = vmatprep.subr.mxu0 %v472
        %2816 = vmatpush1.msra.mxu0 %v471
        %2817 = vmatprep.subr.mxu0 %v482
        %2818 = vmatpush1.msra.mxu0 %v481
        %2819 = vmatprep.subr.mxu0 %v492
        %2820 = vmatpush1.msra.mxu0 %v491
        %2821 = vmatprep.subr.mxu0 %v502
        %2822 = vmatpush1.msra.mxu0 %v501
        %2823 = vmatprep.subr.mxu0 %v512
        %2824 = vmatpush1.msra.mxu0 %v511
        %2825 = vmatprep.subr.mxu0 %v522
        %2826 = vmatpush1.msra.mxu0 %v521
        %2827 = vmatprep.subr.mxu0 %v532
        %2828 = vmatpush1.msra.mxu0 %v531
        %2829 = vmatprep.subr.mxu0 %v590
        %2830 = vmatpush1.msra.mxu0 %v587
        %2831 = vmatprep.subr.mxu0 0.0
        %2832 = vmatpush1.msra.mxu0 0.0
        %2833 = vmatprep.subr.mxu0 0.0
        %2834 = vmatpush1.msra.mxu0 0.0
        %2835 = vmatprep.subr.mxu0 0.0
        %2836 = vmatpush1.msra.mxu0 0.0
        %2837 = vmatprep.subr.mxu0 0.0
        %2838 = vmatpush1.msra.mxu0 0.0
        %2839 = vmatprep.subr.mxu0 0.0
        %2840 = vmatpush1.msra.mxu0 0.0
        %2841 = vmatprep.subr.mxu0 0.0
        %2842 = vmatpush1.msra.mxu0 0.0
        %2843 = vmatprep.subr.mxu0 0.0
        %2844 = vmatpush1.msra.mxu0 0.0
        %2845 = vmatprep.subr.mxu0 0.0
        %2846 = vmatpush1.msra.mxu0 0.0
        %2847 = vmatprep.subr.mxu0 0.0
        %2848 = vmatpush1.msra.mxu0 0.0
        %2849 = vmatprep.subr.mxu0 0.0
        %2850 = vmatpush1.msra.mxu0 0.0
        %2851 = vmatprep.subr.mxu0 0.0
        %2852 = vmatpush1.msra.mxu0 0.0
        %2853 = vmatprep.subr.mxu0 0.0
        %2854 = vmatpush1.msra.mxu0 0.0
        %2855 = vmatprep.subr.mxu0 0.0
        %2856 = vmatpush1.msra.mxu0 0.0
        %2857 = vmatprep.subr.mxu0 0.0
        %2858 = vmatpush1.msra.mxu0 0.0
        %2859 = vmatprep.subr.mxu0 0.0
        %2860 = vmatpush1.msra.mxu0 0.0
        %2861 = vmatprep.subr.mxu0 0.0
        %2862 = vmatpush1.msra.mxu0 0.0
        %2863 = vmatprep.subr.mxu0 0.0
        %2864 = vmatpush1.msra.mxu0 0.0
        %2865 = vmatprep.subr.mxu0 0.0
        %2866 = vmatpush1.msra.mxu0 0.0
        %2867 = vmatprep.subr.mxu0 0.0
        %2868 = vmatpush1.msra.mxu0 0.0
        %2869 = vmatprep.subr.mxu0 0.0
        %2870 = vmatpush1.msra.mxu0 0.0
        %2871 = vmatprep.subr.mxu0 0.0
        %2872 = vmatpush1.msra.mxu0 0.0
        %2873 = vmatprep.mubr.f32.mxu0 0.0
        %2874 = vmatmul.mubr.f32.gmra.mrb[0].mxu0 %v2468
        %v2875 = vpop.f32.mrb[0].mxu0
        %v2876 = vadd.f32 0.0, %v2875
        %v2877 = vpop.f32.mrb[0].mxu0
        %v2878 = vadd.f32 0.0, %v2877
        %2879 = vmatprep.mubr.f32.mxu0 0.0
        %2880 = vmatmul.mubr.f32.gmra.mrb[0].mxu0 %v2471
        %v2881 = vpop.f32.mrb[0].mxu0
        %v2882 = vadd.f32 0.0, %v2881
        %v2883 = vpop.f32.mrb[0].mxu0
        %v2884 = vadd.f32 0.0, %v2883
        %2885 = vmatprep.mubr.f32.mxu0 0.0
        %2886 = vmatmul.mubr.f32.gmra.mrb[0].mxu0 %v2474
        %v2887 = vpop.f32.mrb[0].mxu0
        %v2888 = vadd.f32 0.0, %v2887
        %v2889 = vpop.f32.mrb[0].mxu0
        %v2890 = vadd.f32 0.0, %v2889
        %2891 = vmatprep.mubr.f32.mxu0 0.0
        %2892 = vmatmul.mubr.f32.gmra.mrb[0].mxu0 %v2477
        %v2893 = vpop.f32.mrb[0].mxu0
        %v2894 = vadd.f32 0.0, %v2893
        %v2895 = vpop.f32.mrb[0].mxu0
        %v2896 = vadd.f32 0.0, %v2895
        %2897 = vmatprep.mubr.f32.mxu0 0.0
        %2898 = vmatmul.mubr.f32.gmra.mrb[0].mxu0 %v2480
        %v2899 = vpop.f32.mrb[0].mxu0
        %v2900 = vadd.f32 0.0, %v2899
        %v2901 = vpop.f32.mrb[0].mxu0
        %v2902 = vadd.f32 0.0, %v2901
        %2903 = vmatprep.mubr.f32.mxu0 0.0
        %2904 = vmatmul.mubr.f32.gmra.mrb[0].mxu0 %v2483
        %v2905 = vpop.f32.mrb[0].mxu0
        %v2906 = vadd.f32 0.0, %v2905
        %v2907 = vpop.f32.mrb[0].mxu0
        %v2908 = vadd.f32 0.0, %v2907
        %2909 = vmatprep.mubr.f32.mxu0 0.0
        %2910 = vmatmul.mubr.f32.gmra.mrb[0].mxu0 %v2486
        %v2911 = vpop.f32.mrb[0].mxu0
        %v2912 = vadd.f32 0.0, %v2911
        %v2913 = vpop.f32.mrb[0].mxu0
        %v2914 = vadd.f32 0.0, %v2913
        %2915 = vdwg.mxu0
        %2916 = vmatprep.subr.mxu0 %v444
        %2917 = vmatpush1.msra.mxu0 %v443
        %2918 = vmatprep.subr.mxu0 %v454
        %2919 = vmatpush1.msra.mxu0 %v453
        %2920 = vmatprep.subr.mxu0 %v464
        %2921 = vmatpush1.msra.mxu0 %v463
        %2922 = vmatprep.subr.mxu0 %v474
        %2923 = vmatpush1.msra.mxu0 %v473
        %2924 = vmatprep.subr.mxu0 %v484
        %2925 = vmatpush1.msra.mxu0 %v483
        %2926 = vmatprep.subr.mxu0 %v494
        %2927 = vmatpush1.msra.mxu0 %v493
        %2928 = vmatprep.subr.mxu0 %v504
        %2929 = vmatpush1.msra.mxu0 %v503
        %2930 = vmatprep.subr.mxu0 %v514
        %2931 = vmatpush1.msra.mxu0 %v513
        %2932 = vmatprep.subr.mxu0 %v524
        %2933 = vmatpush1.msra.mxu0 %v523
        %2934 = vmatprep.subr.mxu0 %v534
        %2935 = vmatpush1.msra.mxu0 %v533
        %2936 = vmatprep.subr.mxu0 %v596
        %2937 = vmatpush1.msra.mxu0 %v593
        %2938 = vmatprep.subr.mxu0 0.0
        %2939 = vmatpush1.msra.mxu0 0.0
        %2940 = vmatprep.subr.mxu0 0.0
        %2941 = vmatpush1.msra.mxu0 0.0
        %2942 = vmatprep.subr.mxu0 0.0
        %2943 = vmatpush1.msra.mxu0 0.0
        %2944 = vmatprep.subr.mxu0 0.0
        %2945 = vmatpush1.msra.mxu0 0.0
        %2946 = vmatprep.subr.mxu0 0.0
        %2947 = vmatpush1.msra.mxu0 0.0
        %2948 = vmatprep.subr.mxu0 0.0
        %2949 = vmatpush1.msra.mxu0 0.0
        %2950 = vmatprep.subr.mxu0 0.0
        %2951 = vmatpush1.msra.mxu0 0.0
        %2952 = vmatprep.subr.mxu0 0.0
        %2953 = vmatpush1.msra.mxu0 0.0
        %2954 = vmatprep.subr.mxu0 0.0
        %2955 = vmatpush1.msra.mxu0 0.0
        %2956 = vmatprep.subr.mxu0 0.0
        %2957 = vmatpush1.msra.mxu0 0.0
        %2958 = vmatprep.subr.mxu0 0.0
        %2959 = vmatpush1.msra.mxu0 0.0
        %2960 = vmatprep.subr.mxu0 0.0
        %2961 = vmatpush1.msra.mxu0 0.0
        %2962 = vmatprep.subr.mxu0 0.0
        %2963 = vmatpush1.msra.mxu0 0.0
        %2964 = vmatprep.subr.mxu0 0.0
        %2965 = vmatpush1.msra.mxu0 0.0
        %2966 = vmatprep.subr.mxu0 0.0
        %2967 = vmatpush1.msra.mxu0 0.0
        %2968 = vmatprep.subr.mxu0 0.0
        %2969 = vmatpush1.msra.mxu0 0.0
        %2970 = vmatprep.subr.mxu0 0.0
        %2971 = vmatpush1.msra.mxu0 0.0
        %2972 = vmatprep.subr.mxu0 0.0
        %2973 = vmatpush1.msra.mxu0 0.0
        %2974 = vmatprep.subr.mxu0 0.0
        %2975 = vmatpush1.msra.mxu0 0.0
        %2976 = vmatprep.subr.mxu0 0.0
        %2977 = vmatpush1.msra.mxu0 0.0
        %2978 = vmatprep.subr.mxu0 0.0
        %2979 = vmatpush1.msra.mxu0 0.0
        %2980 = vmatprep.mubr.f32.mxu0 0.0
        %2981 = vmatmul.mubr.f32.gmra.mrb[0].mxu0 %v2468
        %v2982 = vpop.f32.mrb[0].mxu0
        %v2983 = vadd.f32 0.0, %v2982
        %v2984 = vpop.f32.mrb[0].mxu0
        %v2985 = vadd.f32 0.0, %v2984
        %2986 = vmatprep.mubr.f32.mxu0 0.0
        %2987 = vmatmul.mubr.f32.gmra.mrb[0].mxu0 %v2471
        %v2988 = vpop.f32.mrb[0].mxu0
        %v2989 = vadd.f32 0.0, %v2988
        %v2990 = vpop.f32.mrb[0].mxu0
        %v2991 = vadd.f32 0.0, %v2990
        %2992 = vmatprep.mubr.f32.mxu0 0.0
        %2993 = vmatmul.mubr.f32.gmra.mrb[0].mxu0 %v2474
        %v2994 = vpop.f32.mrb[0].mxu0
        %v2995 = vadd.f32 0.0, %v2994
        %v2996 = vpop.f32.mrb[0].mxu0
        %v2997 = vadd.f32 0.0, %v2996
        %2998 = vmatprep.mubr.f32.mxu0 0.0
        %2999 = vmatmul.mubr.f32.gmra.mrb[0].mxu0 %v2477
        %v3000 = vpop.f32.mrb[0].mxu0
        %v3001 = vadd.f32 0.0, %v3000
        %v3002 = vpop.f32.mrb[0].mxu0
        %v3003 = vadd.f32 0.0, %v3002
        %3004 = vmatprep.mubr.f32.mxu0 0.0
        %3005 = vmatmul.mubr.f32.gmra.mrb[0].mxu0 %v2480
        %v3006 = vpop.f32.mrb[0].mxu0
        %v3007 = vadd.f32 0.0, %v3006
        %v3008 = vpop.f32.mrb[0].mxu0
        %v3009 = vadd.f32 0.0, %v3008
        %3010 = vmatprep.mubr.f32.mxu0 0.0
        %3011 = vmatmul.mubr.f32.gmra.mrb[0].mxu0 %v2483
        %v3012 = vpop.f32.mrb[0].mxu0
        %v3013 = vadd.f32 0.0, %v3012
        %v3014 = vpop.f32.mrb[0].mxu0
        %v3015 = vadd.f32 0.0, %v3014
        %3016 = vmatprep.mubr.f32.mxu0 0.0
        %3017 = vmatmul.mubr.f32.gmra.mrb[0].mxu0 %v2486
        %v3018 = vpop.f32.mrb[0].mxu0
        %v3019 = vadd.f32 0.0, %v3018
        %v3020 = vpop.f32.mrb[0].mxu0
        %v3021 = vadd.f32 0.0, %v3020
        %3022 = vdwg.mxu0
        %v3023 = vmax.f32 %v1992, %v2208
        %v3024 = vmax.f32 %v1994, %v2313
        %v3025 = vmax.f32 %v2099, %v2315
        %v3026 = vmax.f32 %v2101, %v2420
        %v3027 = vmax.f32 %v2206, %v2422
        %v3028 = vmax.f32 %v1998, %v2214
        %v3029 = vmax.f32 %v2000, %v2319
        %v3030 = vmax.f32 %v2105, %v2321
        %v3031 = vmax.f32 %v2107, %v2426
        %v3032 = vmax.f32 %v2212, %v2428
        %v3033 = vmax.f32 %v2004, %v2220
        %v3034 = vmax.f32 %v2006, %v2325
        %v3035 = vmax.f32 %v2111, %v2327
        %v3036 = vmax.f32 %v2113, %v2432
        %v3037 = vmax.f32 %v2218, %v2434
        %v3038 = vmax.f32 %v2010, %v2226
        %v3039 = vmax.f32 %v2012, %v2331
        %v3040 = vmax.f32 %v2117, %v2333
        %v3041 = vmax.f32 %v2119, %v2438
        %v3042 = vmax.f32 %v2224, %v2440
        %v3043 = vmax.f32 %v2016, %v2232
        %v3044 = vmax.f32 %v2018, %v2337
        %v3045 = vmax.f32 %v2123, %v2339
        %v3046 = vmax.f32 %v2125, %v2444
        %v3047 = vmax.f32 %v2230, %v2446
        %v3048 = vmax.f32 %v2022, %v2238
        %v3049 = vmax.f32 %v2024, %v2343
        %v3050 = vmax.f32 %v2129, %v2345
        %v3051 = vmax.f32 %v2131, %v2450
        %v3052 = vmax.f32 %v2236, %v2452
        %v3053 = vmax.f32 %v2028, %v2244
        %v3054 = vmax.f32 %v2030, %v2349
        %v3055 = vmax.f32 %v2135, %v2351
        %v3056 = vmax.f32 %v2137, %v2456
        %v3057 = vmax.f32 %v2242, %v2458
        %v3058 = vmax.f32 %v2555, %v2771
        %v3059 = vmax.f32 %v2557, %v2876
        %v3060 = vmax.f32 %v2662, %v2878
        %v3061 = vmax.f32 %v2664, %v2983
        %v3062 = vmax.f32 %v2769, %v2985
        %v3063 = vmax.f32 %v2561, %v2777
        %v3064 = vmax.f32 %v2563, %v2882
        %v3065 = vmax.f32 %v2668, %v2884
        %v3066 = vmax.f32 %v2670, %v2989
        %v3067 = vmax.f32 %v2775, %v2991
        %v3068 = vmax.f32 %v2567, %v2783
        %v3069 = vmax.f32 %v2569, %v2888
        %v3070 = vmax.f32 %v2674, %v2890
        %v3071 = vmax.f32 %v2676, %v2995
        %v3072 = vmax.f32 %v2781, %v2997
        %v3073 = vmax.f32 %v2573, %v2789
        %v3074 = vmax.f32 %v2575, %v2894
        %v3075 = vmax.f32 %v2680, %v2896
        %v3076 = vmax.f32 %v2682, %v3001
        %v3077 = vmax.f32 %v2787, %v3003
        %v3078 = vmax.f32 %v2579, %v2795
        %v3079 = vmax.f32 %v2581, %v2900
        %v3080 = vmax.f32 %v2686, %v2902
        %v3081 = vmax.f32 %v2688, %v3007
        %v3082 = vmax.f32 %v2793, %v3009
        %v3083 = vmax.f32 %v2585, %v2801
        %v3084 = vmax.f32 %v2587, %v2906
        %v3085 = vmax.f32 %v2692, %v2908
        %v3086 = vmax.f32 %v2694, %v3013
        %v3087 = vmax.f32 %v2799, %v3015
        %v3088 = vmax.f32 %v2591, %v2807
        %v3089 = vmax.f32 %v2593, %v2912
        %v3090 = vmax.f32 %v2698, %v2914
        %v3091 = vmax.f32 %v2700, %v3019
        %v3092 = vmax.f32 %v2805, %v3021
        %v3093 = vmax.f32 %v3023, %v3058
        %v3094 = vmax.f32 %v3024, %v3059
        %v3095 = vmax.f32 %v3025, %v3060
        %v3096 = vmax.f32 %v3026, %v3061
        %v3097 = vmax.f32 %v3027, %v3062
        %v3098 = vmax.f32 %v3028, %v3063
        %v3099 = vmax.f32 %v3029, %v3064
        %v3100 = vmax.f32 %v3030, %v3065
        %v3101 = vmax.f32 %v3031, %v3066
        %v3102 = vmax.f32 %v3032, %v3067
        %v3103 = vmax.f32 %v3033, %v3068
        %v3104 = vmax.f32 %v3034, %v3069
        %v3105 = vmax.f32 %v3035, %v3070
        %v3106 = vmax.f32 %v3036, %v3071
        %v3107 = vmax.f32 %v3037, %v3072
        %v3108 = vmax.f32 %v3038, %v3073
        %v3109 = vmax.f32 %v3039, %v3074
        %v3110 = vmax.f32 %v3040, %v3075
        %v3111 = vmax.f32 %v3041, %v3076
        %v3112 = vmax.f32 %v3042, %v3077
        %v3113 = vmax.f32 %v3043, %v3078
        %v3114 = vmax.f32 %v3044, %v3079
        %v3115 = vmax.f32 %v3045, %v3080
        %v3116 = vmax.f32 %v3046, %v3081
        %v3117 = vmax.f32 %v3047, %v3082
        %v3118 = vmax.f32 %v3048, %v3083
        %v3119 = vmax.f32 %v3049, %v3084
        %v3120 = vmax.f32 %v3050, %v3085
        %v3121 = vmax.f32 %v3051, %v3086
        %v3122 = vmax.f32 %v3052, %v3087
        %v3123 = vmax.f32 %v3053, %v3088
        %v3124 = vmax.f32 %v3054, %v3089
        %v3125 = vmax.f32 %v3055, %v3090
        %v3126 = vmax.f32 %v3056, %v3091
        %v3127 = vmax.f32 %v3057, %v3092
        %v3128 = vadd.f32 %v3093, %v1805
        %v3129 = vadd.f32 %v3094, %v1809
        %v3130 = vadd.f32 %v3095, %v1813
        %v3131 = vadd.f32 %v3096, %v1817
        %v3132 = vadd.f32 %v3097, %v1821
        %v3133 = vadd.f32 %v3098, %v1805
        %v3134 = vadd.f32 %v3099, %v1809
        %v3135 = vadd.f32 %v3100, %v1813
        %v3136 = vadd.f32 %v3101, %v1817
        %v3137 = vadd.f32 %v3102, %v1821
        %v3138 = vadd.f32 %v3103, %v1805
        %v3139 = vadd.f32 %v3104, %v1809
        %v3140 = vadd.f32 %v3105, %v1813
        %v3141 = vadd.f32 %v3106, %v1817
        %v3142 = vadd.f32 %v3107, %v1821
        %v3143 = vadd.f32 %v3108, %v1805
        %v3144 = vadd.f32 %v3109, %v1809
        %v3145 = vadd.f32 %v3110, %v1813
        %v3146 = vadd.f32 %v3111, %v1817
        %v3147 = vadd.f32 %v3112, %v1821
        %v3148 = vadd.f32 %v3113, %v1805
        %v3149 = vadd.f32 %v3114, %v1809
        %v3150 = vadd.f32 %v3115, %v1813
        %v3151 = vadd.f32 %v3116, %v1817
        %v3152 = vadd.f32 %v3117, %v1821
        %v3153 = vadd.f32 %v3118, %v1805
        %v3154 = vadd.f32 %v3119, %v1809
        %v3155 = vadd.f32 %v3120, %v1813
        %v3156 = vadd.f32 %v3121, %v1817
        %v3157 = vadd.f32 %v3122, %v1821
        %v3158 = vadd.f32 %v3123, %v1805
        %v3159 = vadd.f32 %v3124, %v1809
        %v3160 = vadd.f32 %v3125, %v1813
        %v3161 = vadd.f32 %v3126, %v1817
        %v3162 = vadd.f32 %v3127, %v1821
        %v3163 = vmax.f32 %v3128, 0.0
        %v3164 = vmax.f32 %v3129, 0.0
        %v3165 = vmax.f32 %v3130, 0.0
        %v3166 = vmax.f32 %v3131, 0.0
        %v3167 = vmax.f32 %v3132, 0.0
        %v3168 = vmax.f32 %v3133, 0.0
        %v3169 = vmax.f32 %v3134, 0.0
        %v3170 = vmax.f32 %v3135, 0.0
        %v3171 = vmax.f32 %v3136, 0.0
        %v3172 = vmax.f32 %v3137, 0.0
        %v3173 = vmax.f32 %v3138, 0.0
        %v3174 = vmax.f32 %v3139, 0.0
        %v3175 = vmax.f32 %v3140, 0.0
        %v3176 = vmax.f32 %v3141, 0.0
        %v3177 = vmax.f32 %v3142, 0.0
        %v3178 = vmax.f32 %v3143, 0.0
        %v3179 = vmax.f32 %v3144, 0.0
        %v3180 = vmax.f32 %v3145, 0.0
        %v3181 = vmax.f32 %v3146, 0.0
        %v3182 = vmax.f32 %v3147, 0.0
        %v3183 = vmax.f32 %v3148, 0.0
        %v3184 = vmax.f32 %v3149, 0.0
        %v3185 = vmax.f32 %v3150, 0.0
        %v3186 = vmax.f32 %v3151, 0.0
        %v3187 = vmax.f32 %v3152, 0.0
        %v3188 = vmax.f32 %v3153, 0.0
        %v3189 = vmax.f32 %v3154, 0.0
        %v3190 = vmax.f32 %v3155, 0.0
        %v3191 = vmax.f32 %v3156, 0.0
        %v3192 = vmax.f32 %v3157, 0.0
        %v3193 = vmax.f32 %v3158, 0.0
        %v3194 = vmax.f32 %v3159, 0.0
        %v3195 = vmax.f32 %v3160, 0.0
        %v3196 = vmax.f32 %v3161, 0.0
        %v3197 = vmax.f32 %v3162, 0.0
        %3198 = vst [vmem:[#allocation2] sm:$0x1f] %v1862
        %3199 = vst [vmem:[#allocation2 + $0x8] sm:$0x1f] %v1863
        %3200 = vst [vmem:[#allocation2 + $0x10] sm:$0x1f] %v1864
        %3201 = vst [vmem:[#allocation2 + $0x18] sm:$0x1f] %v1865
        %3202 = vst [vmem:[#allocation2 + $0x20] sm:$0x1f] %v1866
        %v3208 = vrot.slane %v1862, 1
        %v3209 = vrot.slane %v1863, 1
        %v3210 = vrot.slane %v1864, 1
        %v3211 = vrot.slane %v1865, 1
        %v3212 = vrot.slane %v1866, 1
        %3218 = vst [vmem:[#allocation3] sm:$0x1f] %v3208
        %3219 = vst [vmem:[#allocation3 + $0x8] sm:$0x1f] %v3209
        %3220 = vst [vmem:[#allocation3 + $0x10] sm:$0x1f] %v3210
        %3221 = vst [vmem:[#allocation3 + $0x18] sm:$0x1f] %v3211
        %3222 = vst [vmem:[#allocation3 + $0x20] sm:$0x1f] %v3212
        %3223 = vst [vmem:[#allocation4] sm:$0x1f] %v3163
        %3224 = vst [vmem:[#allocation4 + $0x8] sm:$0x1f] %v3164
        %3225 = vst [vmem:[#allocation4 + $0x10] sm:$0x1f] %v3165
        %3226 = vst [vmem:[#allocation4 + $0x18] sm:$0x1f] %v3166
        %3227 = vst [vmem:[#allocation4 + $0x20] sm:$0x1f] %v3167
        %v3233 = vrot.slane %v3163, 1
        %v3234 = vrot.slane %v3164, 1
        %v3235 = vrot.slane %v3165, 1
        %v3236 = vrot.slane %v3166, 1
        %v3237 = vrot.slane %v3167, 1
        %3243 = vst [vmem:[#allocation5] sm:$0x1f] %v3233
        %3244 = vst [vmem:[#allocation5 + $0x8] sm:$0x1f] %v3234
        %3245 = vst [vmem:[#allocation5 + $0x10] sm:$0x1f] %v3235
        %3246 = vst [vmem:[#allocation5 + $0x18] sm:$0x1f] %v3236
        %3247 = vst [vmem:[#allocation5 + $0x20] sm:$0x1f] %v3237
        %vm3253 = vcmask 1045504
        %v3254 = vrot.slane %v1862, 2
        %v3255 = vrot.slane %v1867, 2
        %v3256 = vsel %vm3253, %v3254, %v3255
        %v3257 = vrot.slane %v1863, 2
        %v3258 = vrot.slane %v1868, 2
        %v3259 = vsel %vm3253, %v3257, %v3258
        %v3260 = vrot.slane %v1864, 2
        %v3261 = vrot.slane %v1869, 2
        %v3262 = vsel %vm3253, %v3260, %v3261
        %v3263 = vrot.slane %v1865, 2
        %v3264 = vrot.slane %v1870, 2
        %v3265 = vsel %vm3253, %v3263, %v3264
        %v3266 = vrot.slane %v1866, 2
        %v3267 = vrot.slane %v1871, 2
        %v3268 = vsel %vm3253, %v3266, %v3267
        %3279 = vst [vmem:[#allocation2] sm:$0xe0] %v3256
        %3280 = vst [vmem:[#allocation2 + $0x8] sm:$0xe0] %v3259
        %3281 = vst [vmem:[#allocation2 + $0x10] sm:$0xe0] %v3262
        %3282 = vst [vmem:[#allocation2 + $0x18] sm:$0xe0] %v3265
        %3283 = vst [vmem:[#allocation2 + $0x20] sm:$0xe0] %v3268
        %3284 = vst [vmem:[#allocation2 + $0x28] sm:$0x3] %v3255
        %3285 = vst [vmem:[#allocation2 + $0x30] sm:$0x3] %v3258
        %3286 = vst [vmem:[#allocation2 + $0x38] sm:$0x3] %v3261
        %3287 = vst [vmem:[#allocation2 + $0x40] sm:$0x3] %v3264
        %3288 = vst [vmem:[#allocation2 + $0x48] sm:$0x3] %v3267
        %v3289 = vrot.slane %v1867, 3
        %v3290 = vrot.slane %v1868, 3
        %v3291 = vrot.slane %v1869, 3
        %v3292 = vrot.slane %v1870, 3
        %v3293 = vrot.slane %v1871, 3
        %3299 = vst [vmem:[#allocation3] sm:$0xe0] %v3289
        %3300 = vst [vmem:[#allocation3 + $0x8] sm:$0xe0] %v3290
        %3301 = vst [vmem:[#allocation3 + $0x10] sm:$0xe0] %v3291
        %3302 = vst [vmem:[#allocation3 + $0x18] sm:$0xe0] %v3292
        %3303 = vst [vmem:[#allocation3 + $0x20] sm:$0xe0] %v3293
        %3304 = vst [vmem:[#allocation3 + $0x28] sm:$0x3] %v3289
        %3305 = vst [vmem:[#allocation3 + $0x30] sm:$0x3] %v3290
        %3306 = vst [vmem:[#allocation3 + $0x38] sm:$0x3] %v3291
        %3307 = vst [vmem:[#allocation3 + $0x40] sm:$0x3] %v3292
        %3308 = vst [vmem:[#allocation3 + $0x48] sm:$0x3] %v3293
        %v3314 = vrot.slane %v3163, 2
        %v3315 = vrot.slane %v3168, 2
        %v3316 = vsel %vm3253, %v3314, %v3315
        %v3317 = vrot.slane %v3164, 2
        %v3318 = vrot.slane %v3169, 2
        %v3319 = vsel %vm3253, %v3317, %v3318
        %v3320 = vrot.slane %v3165, 2
        %v3321 = vrot.slane %v3170, 2
        %v3322 = vsel %vm3253, %v3320, %v3321
        %v3323 = vrot.slane %v3166, 2
        %v3324 = vrot.slane %v3171, 2
        %v3325 = vsel %vm3253, %v3323, %v3324
        %v3326 = vrot.slane %v3167, 2
        %v3327 = vrot.slane %v3172, 2
        %v3328 = vsel %vm3253, %v3326, %v3327
        %3339 = vst [vmem:[#allocation4] sm:$0xe0] %v3316
        %3340 = vst [vmem:[#allocation4 + $0x8] sm:$0xe0] %v3319
        %3341 = vst [vmem:[#allocation4 + $0x10] sm:$0xe0] %v3322
        %3342 = vst [vmem:[#allocation4 + $0x18] sm:$0xe0] %v3325
        %3343 = vst [vmem:[#allocation4 + $0x20] sm:$0xe0] %v3328
        %3344 = vst [vmem:[#allocation4 + $0x28] sm:$0x3] %v3315
        %3345 = vst [vmem:[#allocation4 + $0x30] sm:$0x3] %v3318
        %3346 = vst [vmem:[#allocation4 + $0x38] sm:$0x3] %v3321
        %3347 = vst [vmem:[#allocation4 + $0x40] sm:$0x3] %v3324
        %3348 = vst [vmem:[#allocation4 + $0x48] sm:$0x3] %v3327
        %v3349 = vrot.slane %v3168, 3
        %v3350 = vrot.slane %v3169, 3
        %v3351 = vrot.slane %v3170, 3
        %v3352 = vrot.slane %v3171, 3
        %v3353 = vrot.slane %v3172, 3
        %3359 = vst [vmem:[#allocation5] sm:$0xe0] %v3349
        %3360 = vst [vmem:[#allocation5 + $0x8] sm:$0xe0] %v3350
        %3361 = vst [vmem:[#allocation5 + $0x10] sm:$0xe0] %v3351
        %3362 = vst [vmem:[#allocation5 + $0x18] sm:$0xe0] %v3352
        %3363 = vst [vmem:[#allocation5 + $0x20] sm:$0xe0] %v3353
        %3364 = vst [vmem:[#allocation5 + $0x28] sm:$0x3] %v3349
        %3365 = vst [vmem:[#allocation5 + $0x30] sm:$0x3] %v3350
        %3366 = vst [vmem:[#allocation5 + $0x38] sm:$0x3] %v3351
        %3367 = vst [vmem:[#allocation5 + $0x40] sm:$0x3] %v3352
        %3368 = vst [vmem:[#allocation5 + $0x48] sm:$0x3] %v3353
        %v3374 = vrot.slane %v1867, 4
        %v3375 = vrot.slane %v1872, 4
        %v3376 = vsel %vm567, %v3374, %v3375
        %v3377 = vrot.slane %v1868, 4
        %v3378 = vrot.slane %v1873, 4
        %v3379 = vsel %vm567, %v3377, %v3378
        %v3380 = vrot.slane %v1869, 4
        %v3381 = vrot.slane %v1874, 4
        %v3382 = vsel %vm567, %v3380, %v3381
        %v3383 = vrot.slane %v1870, 4
        %v3384 = vrot.slane %v1875, 4
        %v3385 = vsel %vm567, %v3383, %v3384
        %v3386 = vrot.slane %v1871, 4
        %v3387 = vrot.slane %v1876, 4
        %v3388 = vsel %vm567, %v3386, %v3387
        %3394 = vst [vmem:[#allocation2 + $0x28] sm:$0x7c] %v3376
        %3395 = vst [vmem:[#allocation2 + $0x30] sm:$0x7c] %v3379
        %3396 = vst [vmem:[#allocation2 + $0x38] sm:$0x7c] %v3382
        %3397 = vst [vmem:[#allocation2 + $0x40] sm:$0x7c] %v3385
        %3398 = vst [vmem:[#allocation2 + $0x48] sm:$0x7c] %v3388
        %vm3399 = vcmask 1042432
        %v3400 = vrot.slane %v1867, 5
        %v3401 = vrot.slane %v1872, 5
        %v3402 = vsel %vm3399, %v3400, %v3401
        %v3403 = vrot.slane %v1868, 5
        %v3404 = vrot.slane %v1873, 5
        %v3405 = vsel %vm3399, %v3403, %v3404
        %v3406 = vrot.slane %v1869, 5
        %v3407 = vrot.slane %v1874, 5
        %v3408 = vsel %vm3399, %v3406, %v3407
        %v3409 = vrot.slane %v1870, 5
        %v3410 = vrot.slane %v1875, 5
        %v3411 = vsel %vm3399, %v3409, %v3410
        %v3412 = vrot.slane %v1871, 5
        %v3413 = vrot.slane %v1876, 5
        %v3414 = vsel %vm3399, %v3412, %v3413
        %3420 = vst [vmem:[#allocation3 + $0x28] sm:$0x7c] %v3402
        %3421 = vst [vmem:[#allocation3 + $0x30] sm:$0x7c] %v3405
        %3422 = vst [vmem:[#allocation3 + $0x38] sm:$0x7c] %v3408
        %3423 = vst [vmem:[#allocation3 + $0x40] sm:$0x7c] %v3411
        %3424 = vst [vmem:[#allocation3 + $0x48] sm:$0x7c] %v3414
        %v3430 = vrot.slane %v3168, 4
        %v3431 = vrot.slane %v3173, 4
        %v3432 = vsel %vm567, %v3430, %v3431
        %v3433 = vrot.slane %v3169, 4
        %v3434 = vrot.slane %v3174, 4
        %v3435 = vsel %vm567, %v3433, %v3434
        %v3436 = vrot.slane %v3170, 4
        %v3437 = vrot.slane %v3175, 4
        %v3438 = vsel %vm567, %v3436, %v3437
        %v3439 = vrot.slane %v3171, 4
        %v3440 = vrot.slane %v3176, 4
        %v3441 = vsel %vm567, %v3439, %v3440
        %v3442 = vrot.slane %v3172, 4
        %v3443 = vrot.slane %v3177, 4
        %v3444 = vsel %vm567, %v3442, %v3443
        %3450 = vst [vmem:[#allocation4 + $0x28] sm:$0x7c] %v3432
        %3451 = vst [vmem:[#allocation4 + $0x30] sm:$0x7c] %v3435
        %3452 = vst [vmem:[#allocation4 + $0x38] sm:$0x7c] %v3438
        %3453 = vst [vmem:[#allocation4 + $0x40] sm:$0x7c] %v3441
        %3454 = vst [vmem:[#allocation4 + $0x48] sm:$0x7c] %v3444
        %v3455 = vrot.slane %v3168, 5
        %v3456 = vrot.slane %v3173, 5
        %v3457 = vsel %vm3399, %v3455, %v3456
        %v3458 = vrot.slane %v3169, 5
        %v3459 = vrot.slane %v3174, 5
        %v3460 = vsel %vm3399, %v3458, %v3459
        %v3461 = vrot.slane %v3170, 5
        %v3462 = vrot.slane %v3175, 5
        %v3463 = vsel %vm3399, %v3461, %v3462
        %v3464 = vrot.slane %v3171, 5
        %v3465 = vrot.slane %v3176, 5
        %v3466 = vsel %vm3399, %v3464, %v3465
        %v3467 = vrot.slane %v3172, 5
        %v3468 = vrot.slane %v3177, 5
        %v3469 = vsel %vm3399, %v3467, %v3468
        %3475 = vst [vmem:[#allocation5 + $0x28] sm:$0x7c] %v3457
        %3476 = vst [vmem:[#allocation5 + $0x30] sm:$0x7c] %v3460
        %3477 = vst [vmem:[#allocation5 + $0x38] sm:$0x7c] %v3463
        %3478 = vst [vmem:[#allocation5 + $0x40] sm:$0x7c] %v3466
        %3479 = vst [vmem:[#allocation5 + $0x48] sm:$0x7c] %v3469
        %vm3485 = vcmask 1041408
        %v3486 = vrot.slane %v1872, 6
        %v3487 = vrot.slane %v1873, 6
        %v3488 = vrot.slane %v1874, 6
        %v3489 = vrot.slane %v1875, 6
        %v3490 = vrot.slane %v1876, 6
        %v3491 = vrot.slane %v1877, 6
        %v3492 = vsel %vm3485, %v3486, %v3491
        %v3493 = vrot.slane %v1878, 6
        %v3494 = vsel %vm3485, %v3487, %v3493
        %v3495 = vrot.slane %v1879, 6
        %v3496 = vsel %vm3485, %v3488, %v3495
        %v3497 = vrot.slane %v1880, 6
        %v3498 = vsel %vm3485, %v3489, %v3497
        %v3499 = vrot.slane %v1881, 6
        %v3500 = vsel %vm3485, %v3490, %v3499
        %3511 = vst [vmem:[#allocation2 + $0x28] sm:$0x80] %v3486
        %3512 = vst [vmem:[#allocation2 + $0x30] sm:$0x80] %v3487
        %3513 = vst [vmem:[#allocation2 + $0x38] sm:$0x80] %v3488
        %3514 = vst [vmem:[#allocation2 + $0x40] sm:$0x80] %v3489
        %3515 = vst [vmem:[#allocation2 + $0x48] sm:$0x80] %v3490
        %3516 = vst [vmem:[#allocation2 + $0x50] sm:$0xf] %v3492
        %3517 = vst [vmem:[#allocation2 + $0x58] sm:$0xf] %v3494
        %3518 = vst [vmem:[#allocation2 + $0x60] sm:$0xf] %v3496
        %3519 = vst [vmem:[#allocation2 + $0x68] sm:$0xf] %v3498
        %3520 = vst [vmem:[#allocation2 + $0x70] sm:$0xf] %v3500
        %vm3521 = vcmask 1040384
        %v3522 = vrot.slane %v1872, 7
        %v3523 = vrot.slane %v1873, 7
        %v3524 = vrot.slane %v1874, 7
        %v3525 = vrot.slane %v1875, 7
        %v3526 = vrot.slane %v1876, 7
        %v3527 = vrot.slane %v1877, 7
        %v3528 = vsel %vm3521, %v3522, %v3527
        %v3529 = vrot.slane %v1878, 7
        %v3530 = vsel %vm3521, %v3523, %v3529
        %v3531 = vrot.slane %v1879, 7
        %v3532 = vsel %vm3521, %v3524, %v3531
        %v3533 = vrot.slane %v1880, 7
        %v3534 = vsel %vm3521, %v3525, %v3533
        %v3535 = vrot.slane %v1881, 7
        %v3536 = vsel %vm3521, %v3526, %v3535
        %3547 = vst [vmem:[#allocation3 + $0x28] sm:$0x80] %v3522
        %3548 = vst [vmem:[#allocation3 + $0x30] sm:$0x80] %v3523
        %3549 = vst [vmem:[#allocation3 + $0x38] sm:$0x80] %v3524
        %3550 = vst [vmem:[#allocation3 + $0x40] sm:$0x80] %v3525
        %3551 = vst [vmem:[#allocation3 + $0x48] sm:$0x80] %v3526
        %3552 = vst [vmem:[#allocation3 + $0x50] sm:$0xf] %v3528
        %3553 = vst [vmem:[#allocation3 + $0x58] sm:$0xf] %v3530
        %3554 = vst [vmem:[#allocation3 + $0x60] sm:$0xf] %v3532
        %3555 = vst [vmem:[#allocation3 + $0x68] sm:$0xf] %v3534
        %3556 = vst [vmem:[#allocation3 + $0x70] sm:$0xf] %v3536
        %v3562 = vrot.slane %v3173, 6
        %v3563 = vrot.slane %v3174, 6
        %v3564 = vrot.slane %v3175, 6
        %v3565 = vrot.slane %v3176, 6
        %v3566 = vrot.slane %v3177, 6
        %v3567 = vrot.slane %v3178, 6
        %v3568 = vsel %vm3485, %v3562, %v3567
        %v3569 = vrot.slane %v3179, 6
        %v3570 = vsel %vm3485, %v3563, %v3569
        %v3571 = vrot.slane %v3180, 6
        %v3572 = vsel %vm3485, %v3564, %v3571
        %v3573 = vrot.slane %v3181, 6
        %v3574 = vsel %vm3485, %v3565, %v3573
        %v3575 = vrot.slane %v3182, 6
        %v3576 = vsel %vm3485, %v3566, %v3575
        %3587 = vst [vmem:[#allocation4 + $0x28] sm:$0x80] %v3562
        %3588 = vst [vmem:[#allocation4 + $0x30] sm:$0x80] %v3563
        %3589 = vst [vmem:[#allocation4 + $0x38] sm:$0x80] %v3564
        %3590 = vst [vmem:[#allocation4 + $0x40] sm:$0x80] %v3565
        %3591 = vst [vmem:[#allocation4 + $0x48] sm:$0x80] %v3566
        %3592 = vst [vmem:[#allocation4 + $0x50] sm:$0xf] %v3568
        %3593 = vst [vmem:[#allocation4 + $0x58] sm:$0xf] %v3570
        %3594 = vst [vmem:[#allocation4 + $0x60] sm:$0xf] %v3572
        %3595 = vst [vmem:[#allocation4 + $0x68] sm:$0xf] %v3574
        %3596 = vst [vmem:[#allocation4 + $0x70] sm:$0xf] %v3576
        %v3597 = vrot.slane %v3173, 7
        %v3598 = vrot.slane %v3174, 7
        %v3599 = vrot.slane %v3175, 7
        %v3600 = vrot.slane %v3176, 7
        %v3601 = vrot.slane %v3177, 7
        %v3602 = vrot.slane %v3178, 7
        %v3603 = vsel %vm3521, %v3597, %v3602
        %v3604 = vrot.slane %v3179, 7
        %v3605 = vsel %vm3521, %v3598, %v3604
        %v3606 = vrot.slane %v3180, 7
        %v3607 = vsel %vm3521, %v3599, %v3606
        %v3608 = vrot.slane %v3181, 7
        %v3609 = vsel %vm3521, %v3600, %v3608
        %v3610 = vrot.slane %v3182, 7
        %v3611 = vsel %vm3521, %v3601, %v3610
        %3622 = vst [vmem:[#allocation5 + $0x28] sm:$0x80] %v3597
        %3623 = vst [vmem:[#allocation5 + $0x30] sm:$0x80] %v3598
        %3624 = vst [vmem:[#allocation5 + $0x38] sm:$0x80] %v3599
        %3625 = vst [vmem:[#allocation5 + $0x40] sm:$0x80] %v3600
        %3626 = vst [vmem:[#allocation5 + $0x48] sm:$0x80] %v3601
        %3627 = vst [vmem:[#allocation5 + $0x50] sm:$0xf] %v3603
        %3628 = vst [vmem:[#allocation5 + $0x58] sm:$0xf] %v3605
        %3629 = vst [vmem:[#allocation5 + $0x60] sm:$0xf] %v3607
        %3630 = vst [vmem:[#allocation5 + $0x68] sm:$0xf] %v3609
        %3631 = vst [vmem:[#allocation5 + $0x70] sm:$0xf] %v3611
        %3632 = vst [vmem:[#allocation2 + $0x50] sm:$0xf0] %v1877
        %3633 = vst [vmem:[#allocation2 + $0x58] sm:$0xf0] %v1878
        %3634 = vst [vmem:[#allocation2 + $0x60] sm:$0xf0] %v1879
        %3635 = vst [vmem:[#allocation2 + $0x68] sm:$0xf0] %v1880
        %3636 = vst [vmem:[#allocation2 + $0x70] sm:$0xf0] %v1881
        %3637 = vst [vmem:[#allocation2 + $0x78] sm:$0x1] %v1882
        %3638 = vst [vmem:[#allocation2 + $0x80] sm:$0x1] %v1883
        %3639 = vst [vmem:[#allocation2 + $0x88] sm:$0x1] %v1884
        %3640 = vst [vmem:[#allocation2 + $0x90] sm:$0x1] %v1885
        %3641 = vst [vmem:[#allocation2 + $0x98] sm:$0x1] %v1886
        %vm3647 = vcmask 1046528
        %v3648 = vrot.slane %v1877, 1
        %v3649 = vrot.slane %v1882, 1
        %v3650 = vsel %vm3647, %v3648, %v3649
        %v3651 = vrot.slane %v1878, 1
        %v3652 = vrot.slane %v1883, 1
        %v3653 = vsel %vm3647, %v3651, %v3652
        %v3654 = vrot.slane %v1879, 1
        %v3655 = vrot.slane %v1884, 1
        %v3656 = vsel %vm3647, %v3654, %v3655
        %v3657 = vrot.slane %v1880, 1
        %v3658 = vrot.slane %v1885, 1
        %v3659 = vsel %vm3647, %v3657, %v3658
        %v3660 = vrot.slane %v1881, 1
        %v3661 = vrot.slane %v1886, 1
        %v3662 = vsel %vm3647, %v3660, %v3661
        %3673 = vst [vmem:[#allocation3 + $0x50] sm:$0xf0] %v3650
        %3674 = vst [vmem:[#allocation3 + $0x58] sm:$0xf0] %v3653
        %3675 = vst [vmem:[#allocation3 + $0x60] sm:$0xf0] %v3656
        %3676 = vst [vmem:[#allocation3 + $0x68] sm:$0xf0] %v3659
        %3677 = vst [vmem:[#allocation3 + $0x70] sm:$0xf0] %v3662
        %3678 = vst [vmem:[#allocation3 + $0x78] sm:$0x1] %v3649
        %3679 = vst [vmem:[#allocation3 + $0x80] sm:$0x1] %v3652
        %3680 = vst [vmem:[#allocation3 + $0x88] sm:$0x1] %v3655
        %3681 = vst [vmem:[#allocation3 + $0x90] sm:$0x1] %v3658
        %3682 = vst [vmem:[#allocation3 + $0x98] sm:$0x1] %v3661
        %3683 = vst [vmem:[#allocation4 + $0x50] sm:$0xf0] %v3178
        %3684 = vst [vmem:[#allocation4 + $0x58] sm:$0xf0] %v3179
        %3685 = vst [vmem:[#allocation4 + $0x60] sm:$0xf0] %v3180
        %3686 = vst [vmem:[#allocation4 + $0x68] sm:$0xf0] %v3181
        %3687 = vst [vmem:[#allocation4 + $0x70] sm:$0xf0] %v3182
        %3688 = vst [vmem:[#allocation4 + $0x78] sm:$0x1] %v3183
        %3689 = vst [vmem:[#allocation4 + $0x80] sm:$0x1] %v3184
        %3690 = vst [vmem:[#allocation4 + $0x88] sm:$0x1] %v3185
        %3691 = vst [vmem:[#allocation4 + $0x90] sm:$0x1] %v3186
        %3692 = vst [vmem:[#allocation4 + $0x98] sm:$0x1] %v3187
        %v3698 = vrot.slane %v3178, 1
        %v3699 = vrot.slane %v3183, 1
        %v3700 = vsel %vm3647, %v3698, %v3699
        %v3701 = vrot.slane %v3179, 1
        %v3702 = vrot.slane %v3184, 1
        %v3703 = vsel %vm3647, %v3701, %v3702
        %v3704 = vrot.slane %v3180, 1
        %v3705 = vrot.slane %v3185, 1
        %v3706 = vsel %vm3647, %v3704, %v3705
        %v3707 = vrot.slane %v3181, 1
        %v3708 = vrot.slane %v3186, 1
        %v3709 = vsel %vm3647, %v3707, %v3708
        %v3710 = vrot.slane %v3182, 1
        %v3711 = vrot.slane %v3187, 1
        %v3712 = vsel %vm3647, %v3710, %v3711
        %3723 = vst [vmem:[#allocation5 + $0x50] sm:$0xf0] %v3700
        %3724 = vst [vmem:[#allocation5 + $0x58] sm:$0xf0] %v3703
        %3725 = vst [vmem:[#allocation5 + $0x60] sm:$0xf0] %v3706
        %3726 = vst [vmem:[#allocation5 + $0x68] sm:$0xf0] %v3709
        %3727 = vst [vmem:[#allocation5 + $0x70] sm:$0xf0] %v3712
        %3728 = vst [vmem:[#allocation5 + $0x78] sm:$0x1] %v3699
        %3729 = vst [vmem:[#allocation5 + $0x80] sm:$0x1] %v3702
        %3730 = vst [vmem:[#allocation5 + $0x88] sm:$0x1] %v3705
        %3731 = vst [vmem:[#allocation5 + $0x90] sm:$0x1] %v3708
        %3732 = vst [vmem:[#allocation5 + $0x98] sm:$0x1] %v3711
        %v3733 = vrot.slane %v1882, 2
        %v3734 = vrot.slane %v1883, 2
        %v3735 = vrot.slane %v1884, 2
        %v3736 = vrot.slane %v1885, 2
        %v3737 = vrot.slane %v1886, 2
        %3743 = vst [vmem:[#allocation2 + $0x78] sm:$0x3e] %v3733
        %3744 = vst [vmem:[#allocation2 + $0x80] sm:$0x3e] %v3734
        %3745 = vst [vmem:[#allocation2 + $0x88] sm:$0x3e] %v3735
        %3746 = vst [vmem:[#allocation2 + $0x90] sm:$0x3e] %v3736
        %3747 = vst [vmem:[#allocation2 + $0x98] sm:$0x3e] %v3737
        %vm3753 = vcmask 1044480
        %v3754 = vrot.slane %v1882, 3
        %v3755 = vrot.slane %v1887, 3
        %v3756 = vsel %vm3753, %v3754, %v3755
        %v3757 = vrot.slane %v1883, 3
        %v3758 = vrot.slane %v1888, 3
        %v3759 = vsel %vm3753, %v3757, %v3758
        %v3760 = vrot.slane %v1884, 3
        %v3761 = vrot.slane %v1889, 3
        %v3762 = vsel %vm3753, %v3760, %v3761
        %v3763 = vrot.slane %v1885, 3
        %v3764 = vrot.slane %v1890, 3
        %v3765 = vsel %vm3753, %v3763, %v3764
        %v3766 = vrot.slane %v1886, 3
        %v3767 = vrot.slane %v1891, 3
        %v3768 = vsel %vm3753, %v3766, %v3767
        %3774 = vst [vmem:[#allocation3 + $0x78] sm:$0x3e] %v3756
        %3775 = vst [vmem:[#allocation3 + $0x80] sm:$0x3e] %v3759
        %3776 = vst [vmem:[#allocation3 + $0x88] sm:$0x3e] %v3762
        %3777 = vst [vmem:[#allocation3 + $0x90] sm:$0x3e] %v3765
        %3778 = vst [vmem:[#allocation3 + $0x98] sm:$0x3e] %v3768
        %v3779 = vrot.slane %v3183, 2
        %v3780 = vrot.slane %v3184, 2
        %v3781 = vrot.slane %v3185, 2
        %v3782 = vrot.slane %v3186, 2
        %v3783 = vrot.slane %v3187, 2
        %3789 = vst [vmem:[#allocation4 + $0x78] sm:$0x3e] %v3779
        %3790 = vst [vmem:[#allocation4 + $0x80] sm:$0x3e] %v3780
        %3791 = vst [vmem:[#allocation4 + $0x88] sm:$0x3e] %v3781
        %3792 = vst [vmem:[#allocation4 + $0x90] sm:$0x3e] %v3782
        %3793 = vst [vmem:[#allocation4 + $0x98] sm:$0x3e] %v3783
        %v3799 = vrot.slane %v3183, 3
        %v3800 = vrot.slane %v3188, 3
        %v3801 = vsel %vm3753, %v3799, %v3800
        %v3802 = vrot.slane %v3184, 3
        %v3803 = vrot.slane %v3189, 3
        %v3804 = vsel %vm3753, %v3802, %v3803
        %v3805 = vrot.slane %v3185, 3
        %v3806 = vrot.slane %v3190, 3
        %v3807 = vsel %vm3753, %v3805, %v3806
        %v3808 = vrot.slane %v3186, 3
        %v3809 = vrot.slane %v3191, 3
        %v3810 = vsel %vm3753, %v3808, %v3809
        %v3811 = vrot.slane %v3187, 3
        %v3812 = vrot.slane %v3192, 3
        %v3813 = vsel %vm3753, %v3811, %v3812
        %3819 = vst [vmem:[#allocation5 + $0x78] sm:$0x3e] %v3801
        %3820 = vst [vmem:[#allocation5 + $0x80] sm:$0x3e] %v3804
        %3821 = vst [vmem:[#allocation5 + $0x88] sm:$0x3e] %v3807
        %3822 = vst [vmem:[#allocation5 + $0x90] sm:$0x3e] %v3810
        %3823 = vst [vmem:[#allocation5 + $0x98] sm:$0x3e] %v3813
        %v3824 = vrot.slane %v1887, 4
        %v3825 = vrot.slane %v1888, 4
        %v3826 = vrot.slane %v1889, 4
        %v3827 = vrot.slane %v1890, 4
        %v3828 = vrot.slane %v1891, 4
        %3834 = vst [vmem:[#allocation2 + $0x78] sm:$0xc0] %v3824
        %3835 = vst [vmem:[#allocation2 + $0x80] sm:$0xc0] %v3825
        %3836 = vst [vmem:[#allocation2 + $0x88] sm:$0xc0] %v3826
        %3837 = vst [vmem:[#allocation2 + $0x90] sm:$0xc0] %v3827
        %3838 = vst [vmem:[#allocation2 + $0x98] sm:$0xc0] %v3828
        %3839 = vst [vmem:[#allocation2 + $0xa0] sm:$0x7] %v3824
        %3840 = vst [vmem:[#allocation2 + $0xa8] sm:$0x7] %v3825
        %3841 = vst [vmem:[#allocation2 + $0xb0] sm:$0x7] %v3826
        %3842 = vst [vmem:[#allocation2 + $0xb8] sm:$0x7] %v3827
        %3843 = vst [vmem:[#allocation2 + $0xc0] sm:$0x7] %v3828
        %v3844 = vrot.slane %v1887, 5
        %v3845 = vrot.slane %v1888, 5
        %v3846 = vrot.slane %v1889, 5
        %v3847 = vrot.slane %v1890, 5
        %v3848 = vrot.slane %v1891, 5
        %3854 = vst [vmem:[#allocation3 + $0x78] sm:$0xc0] %v3844
        %3855 = vst [vmem:[#allocation3 + $0x80] sm:$0xc0] %v3845
        %3856 = vst [vmem:[#allocation3 + $0x88] sm:$0xc0] %v3846
        %3857 = vst [vmem:[#allocation3 + $0x90] sm:$0xc0] %v3847
        %3858 = vst [vmem:[#allocation3 + $0x98] sm:$0xc0] %v3848
        %3859 = vst [vmem:[#allocation3 + $0xa0] sm:$0x7] %v3844
        %3860 = vst [vmem:[#allocation3 + $0xa8] sm:$0x7] %v3845
        %3861 = vst [vmem:[#allocation3 + $0xb0] sm:$0x7] %v3846
        %3862 = vst [vmem:[#allocation3 + $0xb8] sm:$0x7] %v3847
        %3863 = vst [vmem:[#allocation3 + $0xc0] sm:$0x7] %v3848
        %v3864 = vrot.slane %v3188, 4
        %v3865 = vrot.slane %v3189, 4
        %v3866 = vrot.slane %v3190, 4
        %v3867 = vrot.slane %v3191, 4
        %v3868 = vrot.slane %v3192, 4
        %3874 = vst [vmem:[#allocation4 + $0x78] sm:$0xc0] %v3864
        %3875 = vst [vmem:[#allocation4 + $0x80] sm:$0xc0] %v3865
        %3876 = vst [vmem:[#allocation4 + $0x88] sm:$0xc0] %v3866
        %3877 = vst [vmem:[#allocation4 + $0x90] sm:$0xc0] %v3867
        %3878 = vst [vmem:[#allocation4 + $0x98] sm:$0xc0] %v3868
        %3879 = vst [vmem:[#allocation4 + $0xa0] sm:$0x7] %v3864
        %3880 = vst [vmem:[#allocation4 + $0xa8] sm:$0x7] %v3865
        %3881 = vst [vmem:[#allocation4 + $0xb0] sm:$0x7] %v3866
        %3882 = vst [vmem:[#allocation4 + $0xb8] sm:$0x7] %v3867
        %3883 = vst [vmem:[#allocation4 + $0xc0] sm:$0x7] %v3868
        %v3884 = vrot.slane %v3188, 5
        %v3885 = vrot.slane %v3189, 5
        %v3886 = vrot.slane %v3190, 5
        %v3887 = vrot.slane %v3191, 5
        %v3888 = vrot.slane %v3192, 5
        %3894 = vst [vmem:[#allocation5 + $0x78] sm:$0xc0] %v3884
        %3895 = vst [vmem:[#allocation5 + $0x80] sm:$0xc0] %v3885
        %3896 = vst [vmem:[#allocation5 + $0x88] sm:$0xc0] %v3886
        %3897 = vst [vmem:[#allocation5 + $0x90] sm:$0xc0] %v3887
        %3898 = vst [vmem:[#allocation5 + $0x98] sm:$0xc0] %v3888
        %3899 = vst [vmem:[#allocation5 + $0xa0] sm:$0x7] %v3884
        %3900 = vst [vmem:[#allocation5 + $0xa8] sm:$0x7] %v3885
        %3901 = vst [vmem:[#allocation5 + $0xb0] sm:$0x7] %v3886
        %3902 = vst [vmem:[#allocation5 + $0xb8] sm:$0x7] %v3887
        %3903 = vst [vmem:[#allocation5 + $0xc0] sm:$0x7] %v3888
        %v3909 = vrot.slane %v1892, 6
        %v3910 = vrot.slane %v1893, 6
        %v3911 = vrot.slane %v1894, 6
        %v3912 = vrot.slane %v1895, 6
        %v3913 = vrot.slane %v1896, 6
        %3919 = vst [vmem:[#allocation2 + $0xa0] sm:$0xf8] %v3909
        %3920 = vst [vmem:[#allocation2 + $0xa8] sm:$0xf8] %v3910
        %3921 = vst [vmem:[#allocation2 + $0xb0] sm:$0xf8] %v3911
        %3922 = vst [vmem:[#allocation2 + $0xb8] sm:$0xf8] %v3912
        %3923 = vst [vmem:[#allocation2 + $0xc0] sm:$0xf8] %v3913
        %v3924 = vrot.slane %v1892, 7
        %v3925 = vrot.slane %v1893, 7
        %v3926 = vrot.slane %v1894, 7
        %v3927 = vrot.slane %v1895, 7
        %v3928 = vrot.slane %v1896, 7
        %3934 = vst [vmem:[#allocation3 + $0xa0] sm:$0xf8] %v3924
        %3935 = vst [vmem:[#allocation3 + $0xa8] sm:$0xf8] %v3925
        %3936 = vst [vmem:[#allocation3 + $0xb0] sm:$0xf8] %v3926
        %3937 = vst [vmem:[#allocation3 + $0xb8] sm:$0xf8] %v3927
        %3938 = vst [vmem:[#allocation3 + $0xc0] sm:$0xf8] %v3928
        %v3944 = vrot.slane %v3193, 6
        %v3945 = vrot.slane %v3194, 6
        %v3946 = vrot.slane %v3195, 6
        %v3947 = vrot.slane %v3196, 6
        %v3948 = vrot.slane %v3197, 6
        %3954 = vst [vmem:[#allocation4 + $0xa0] sm:$0xf8] %v3944
        %3955 = vst [vmem:[#allocation4 + $0xa8] sm:$0xf8] %v3945
        %3956 = vst [vmem:[#allocation4 + $0xb0] sm:$0xf8] %v3946
        %3957 = vst [vmem:[#allocation4 + $0xb8] sm:$0xf8] %v3947
        %3958 = vst [vmem:[#allocation4 + $0xc0] sm:$0xf8] %v3948
        %v3959 = vrot.slane %v3193, 7
        %v3960 = vrot.slane %v3194, 7
        %v3961 = vrot.slane %v3195, 7
        %v3962 = vrot.slane %v3196, 7
        %v3963 = vrot.slane %v3197, 7
        %3969 = vst [vmem:[#allocation5 + $0xa0] sm:$0xf8] %v3959
        %3970 = vst [vmem:[#allocation5 + $0xa8] sm:$0xf8] %v3960
        %3971 = vst [vmem:[#allocation5 + $0xb0] sm:$0xf8] %v3961
        %3972 = vst [vmem:[#allocation5 + $0xb8] sm:$0xf8] %v3962
        %3973 = vst [vmem:[#allocation5 + $0xc0] sm:$0xf8] %v3963
        %v3974 = vld [vmem:[#allocation2] sm:$0xff]
        %v3975 = vld [vmem:[#allocation2 + $0x8] sm:$0xff]
        %v3976 = vld [vmem:[#allocation2 + $0x10] sm:$0xff]
        %v3977 = vld [vmem:[#allocation2 + $0x18] sm:$0xff]
        %v3978 = vld [vmem:[#allocation2 + $0x20] sm:$0xff]
        %v3979 = vld [vmem:[#allocation2 + $0x28] sm:$0xff]
        %v3980 = vld [vmem:[#allocation2 + $0x30] sm:$0xff]
        %v3981 = vld [vmem:[#allocation2 + $0x38] sm:$0xff]
        %v3982 = vld [vmem:[#allocation2 + $0x40] sm:$0xff]
        %v3983 = vld [vmem:[#allocation2 + $0x48] sm:$0xff]
        %v3984 = vld [vmem:[#allocation2 + $0x50] sm:$0xff]
        %v3985 = vld [vmem:[#allocation2 + $0x58] sm:$0xff]
        %v3986 = vld [vmem:[#allocation2 + $0x60] sm:$0xff]
        %v3987 = vld [vmem:[#allocation2 + $0x68] sm:$0xff]
        %v3988 = vld [vmem:[#allocation2 + $0x70] sm:$0xff]
        %v3989 = vld [vmem:[#allocation2 + $0x78] sm:$0xff]
        %v3990 = vld [vmem:[#allocation2 + $0x80] sm:$0xff]
        %v3991 = vld [vmem:[#allocation2 + $0x88] sm:$0xff]
        %v3992 = vld [vmem:[#allocation2 + $0x90] sm:$0xff]
        %v3993 = vld [vmem:[#allocation2 + $0x98] sm:$0xff]
        %v3994 = vld [vmem:[#allocation2 + $0xa0] sm:$0xff]
        %v3995 = vld [vmem:[#allocation2 + $0xa8] sm:$0xff]
        %v3996 = vld [vmem:[#allocation2 + $0xb0] sm:$0xff]
        %v3997 = vld [vmem:[#allocation2 + $0xb8] sm:$0xff]
        %v3998 = vld [vmem:[#allocation2 + $0xc0] sm:$0xff]
        %v3999 = vpack.c.bf16 %v3979, %v3974
        %v4000 = vpack.c.bf16 %v3980, %v3975
        %v4001 = vpack.c.bf16 %v3981, %v3976
        %v4002 = vpack.c.bf16 %v3982, %v3977
        %v4003 = vpack.c.bf16 %v3983, %v3978
        %v4004 = vpack.c.bf16 %v3989, %v3984
        %v4005 = vpack.c.bf16 %v3990, %v3985
        %v4006 = vpack.c.bf16 %v3991, %v3986
        %v4007 = vpack.c.bf16 %v3992, %v3987
        %v4008 = vpack.c.bf16 %v3993, %v3988
        %v4009 = vpack.c.bf16 %v3994, %v3994
        %v4010 = vpack.c.bf16 %v3995, %v3995
        %v4011 = vpack.c.bf16 %v3996, %v3996
        %v4012 = vpack.c.bf16 %v3997, %v3997
        %v4013 = vpack.c.bf16 %v3998, %v3998
        %v4014 = vld [vmem:[#allocation3] sm:$0xff]
        %v4015 = vld [vmem:[#allocation3 + $0x8] sm:$0xff]
        %v4016 = vld [vmem:[#allocation3 + $0x10] sm:$0xff]
        %v4017 = vld [vmem:[#allocation3 + $0x18] sm:$0xff]
        %v4018 = vld [vmem:[#allocation3 + $0x20] sm:$0xff]
        %v4019 = vld [vmem:[#allocation3 + $0x28] sm:$0xff]
        %v4020 = vld [vmem:[#allocation3 + $0x30] sm:$0xff]
        %v4021 = vld [vmem:[#allocation3 + $0x38] sm:$0xff]
        %v4022 = vld [vmem:[#allocation3 + $0x40] sm:$0xff]
        %v4023 = vld [vmem:[#allocation3 + $0x48] sm:$0xff]
        %v4024 = vld [vmem:[#allocation3 + $0x50] sm:$0xff]
        %v4025 = vld [vmem:[#allocation3 + $0x58] sm:$0xff]
        %v4026 = vld [vmem:[#allocation3 + $0x60] sm:$0xff]
        %v4027 = vld [vmem:[#allocation3 + $0x68] sm:$0xff]
        %v4028 = vld [vmem:[#allocation3 + $0x70] sm:$0xff]
        %v4029 = vld [vmem:[#allocation3 + $0x78] sm:$0xff]
        %v4030 = vld [vmem:[#allocation3 + $0x80] sm:$0xff]
        %v4031 = vld [vmem:[#allocation3 + $0x88] sm:$0xff]
        %v4032 = vld [vmem:[#allocation3 + $0x90] sm:$0xff]
        %v4033 = vld [vmem:[#allocation3 + $0x98] sm:$0xff]
        %v4034 = vld [vmem:[#allocation3 + $0xa0] sm:$0xff]
        %v4035 = vld [vmem:[#allocation3 + $0xa8] sm:$0xff]
        %v4036 = vld [vmem:[#allocation3 + $0xb0] sm:$0xff]
        %v4037 = vld [vmem:[#allocation3 + $0xb8] sm:$0xff]
        %v4038 = vld [vmem:[#allocation3 + $0xc0] sm:$0xff]
        %v4039 = vpack.c.bf16 %v4019, %v4014
        %v4040 = vpack.c.bf16 %v4020, %v4015
        %v4041 = vpack.c.bf16 %v4021, %v4016
        %v4042 = vpack.c.bf16 %v4022, %v4017
        %v4043 = vpack.c.bf16 %v4023, %v4018
        %v4044 = vpack.c.bf16 %v4029, %v4024
        %v4045 = vpack.c.bf16 %v4030, %v4025
        %v4046 = vpack.c.bf16 %v4031, %v4026
        %v4047 = vpack.c.bf16 %v4032, %v4027
        %v4048 = vpack.c.bf16 %v4033, %v4028
        %v4049 = vpack.c.bf16 %v4034, %v4034
        %v4050 = vpack.c.bf16 %v4035, %v4035
        %v4051 = vpack.c.bf16 %v4036, %v4036
        %v4052 = vpack.c.bf16 %v4037, %v4037
        %v4053 = vpack.c.bf16 %v4038, %v4038
        %v4054 = vld [vmem:[#allocation4] sm:$0xff]
        %v4055 = vld [vmem:[#allocation4 + $0x8] sm:$0xff]
        %v4056 = vld [vmem:[#allocation4 + $0x10] sm:$0xff]
        %v4057 = vld [vmem:[#allocation4 + $0x18] sm:$0xff]
        %v4058 = vld [vmem:[#allocation4 + $0x20] sm:$0xff]
        %v4059 = vld [vmem:[#allocation4 + $0x28] sm:$0xff]
        %v4060 = vld [vmem:[#allocation4 + $0x30] sm:$0xff]
        %v4061 = vld [vmem:[#allocation4 + $0x38] sm:$0xff]
        %v4062 = vld [vmem:[#allocation4 + $0x40] sm:$0xff]
        %v4063 = vld [vmem:[#allocation4 + $0x48] sm:$0xff]
        %v4064 = vld [vmem:[#allocation4 + $0x50] sm:$0xff]
        %v4065 = vld [vmem:[#allocation4 + $0x58] sm:$0xff]
        %v4066 = vld [vmem:[#allocation4 + $0x60] sm:$0xff]
        %v4067 = vld [vmem:[#allocation4 + $0x68] sm:$0xff]
        %v4068 = vld [vmem:[#allocation4 + $0x70] sm:$0xff]
        %v4069 = vld [vmem:[#allocation4 + $0x78] sm:$0xff]
        %v4070 = vld [vmem:[#allocation4 + $0x80] sm:$0xff]
        %v4071 = vld [vmem:[#allocation4 + $0x88] sm:$0xff]
        %v4072 = vld [vmem:[#allocation4 + $0x90] sm:$0xff]
        %v4073 = vld [vmem:[#allocation4 + $0x98] sm:$0xff]
        %v4074 = vld [vmem:[#allocation4 + $0xa0] sm:$0xff]
        %v4075 = vld [vmem:[#allocation4 + $0xa8] sm:$0xff]
        %v4076 = vld [vmem:[#allocation4 + $0xb0] sm:$0xff]
        %v4077 = vld [vmem:[#allocation4 + $0xb8] sm:$0xff]
        %v4078 = vld [vmem:[#allocation4 + $0xc0] sm:$0xff]
        %v4079 = vpack.c.bf16 %v4059, %v4054
        %v4080 = vpack.c.bf16 %v4060, %v4055
        %v4081 = vpack.c.bf16 %v4061, %v4056
        %v4082 = vpack.c.bf16 %v4062, %v4057
        %v4083 = vpack.c.bf16 %v4063, %v4058
        %v4084 = vpack.c.bf16 %v4069, %v4064
        %v4085 = vpack.c.bf16 %v4070, %v4065
        %v4086 = vpack.c.bf16 %v4071, %v4066
        %v4087 = vpack.c.bf16 %v4072, %v4067
        %v4088 = vpack.c.bf16 %v4073, %v4068
        %v4089 = vpack.c.bf16 %v4074, %v4074
        %v4090 = vpack.c.bf16 %v4075, %v4075
        %v4091 = vpack.c.bf16 %v4076, %v4076
        %v4092 = vpack.c.bf16 %v4077, %v4077
        %v4093 = vpack.c.bf16 %v4078, %v4078
        %v4094 = vld [vmem:[#allocation5] sm:$0xff]
        %v4095 = vld [vmem:[#allocation5 + $0x8] sm:$0xff]
        %v4096 = vld [vmem:[#allocation5 + $0x10] sm:$0xff]
        %v4097 = vld [vmem:[#allocation5 + $0x18] sm:$0xff]
        %v4098 = vld [vmem:[#allocation5 + $0x20] sm:$0xff]
        %v4099 = vld [vmem:[#allocation5 + $0x28] sm:$0xff]
        %v4100 = vld [vmem:[#allocation5 + $0x30] sm:$0xff]
        %v4101 = vld [vmem:[#allocation5 + $0x38] sm:$0xff]
        %v4102 = vld [vmem:[#allocation5 + $0x40] sm:$0xff]
        %v4103 = vld [vmem:[#allocation5 + $0x48] sm:$0xff]
        %v4104 = vld [vmem:[#allocation5 + $0x50] sm:$0xff]
        %v4105 = vld [vmem:[#allocation5 + $0x58] sm:$0xff]
        %v4106 = vld [vmem:[#allocation5 + $0x60] sm:$0xff]
        %v4107 = vld [vmem:[#allocation5 + $0x68] sm:$0xff]
        %v4108 = vld [vmem:[#allocation5 + $0x70] sm:$0xff]
        %v4109 = vld [vmem:[#allocation5 + $0x78] sm:$0xff]
        %v4110 = vld [vmem:[#allocation5 + $0x80] sm:$0xff]
        %v4111 = vld [vmem:[#allocation5 + $0x88] sm:$0xff]
        %v4112 = vld [vmem:[#allocation5 + $0x90] sm:$0xff]
        %v4113 = vld [vmem:[#allocation5 + $0x98] sm:$0xff]
        %v4114 = vld [vmem:[#allocation5 + $0xa0] sm:$0xff]
        %v4115 = vld [vmem:[#allocation5 + $0xa8] sm:$0xff]
        %v4116 = vld [vmem:[#allocation5 + $0xb0] sm:$0xff]
        %v4117 = vld [vmem:[#allocation5 + $0xb8] sm:$0xff]
        %v4118 = vld [vmem:[#allocation5 + $0xc0] sm:$0xff]
        %v4119 = vpack.c.bf16 %v4099, %v4094
        %v4120 = vpack.c.bf16 %v4100, %v4095
        %v4121 = vpack.c.bf16 %v4101, %v4096
        %v4122 = vpack.c.bf16 %v4102, %v4097
        %v4123 = vpack.c.bf16 %v4103, %v4098
        %v4124 = vpack.c.bf16 %v4109, %v4104
        %v4125 = vpack.c.bf16 %v4110, %v4105
        %v4126 = vpack.c.bf16 %v4111, %v4106
        %v4127 = vpack.c.bf16 %v4112, %v4107
        %v4128 = vpack.c.bf16 %v4113, %v4108
        %v4129 = vpack.c.bf16 %v4114, %v4114
        %v4130 = vpack.c.bf16 %v4115, %v4115
        %v4131 = vpack.c.bf16 %v4116, %v4116
        %v4132 = vpack.c.bf16 %v4117, %v4117
        %v4133 = vpack.c.bf16 %v4118, %v4118
        %v4134 = vld [vmem:[%s6] sm:$0xff]
        %v4135 = vld [vmem:[%s6 + $0x8] sm:$0xff]
        %v4136 = vld [vmem:[%s6 + $0x10] sm:$0xff]
        %v4137 = vld [vmem:[%s6 + $0x18] sm:$0xff]
        %v4138 = vld [vmem:[%s6 + $0x20] sm:$0xff]
        %v4139 = vld [vmem:[%s6 + $0x28] sm:$0xff]
        %v4140 = vld [vmem:[%s6 + $0x30] sm:$0xff]
        %v4141 = vld [vmem:[%s6 + $0x38] sm:$0xff]
        %v4142 = vld [vmem:[%s6 + $0x40] sm:$0xff]
        %v4143 = vld [vmem:[%s6 + $0x48] sm:$0xff]
        %v4144 = vld [vmem:[%s6 + $0x50] sm:$0xff]
        %v4145 = vld [vmem:[%s6 + $0x58] sm:$0xff]
        %v4146 = vld [vmem:[%s6 + $0x60] sm:$0xff]
        %v4147 = vld [vmem:[%s6 + $0x68] sm:$0xff]
        %v4148 = vld [vmem:[%s6 + $0x70] sm:$0xff]
        %v4149 = vld [vmem:[%s6 + $0x78] sm:$0xff]
        %v4150 = vld [vmem:[%s6 + $0x80] sm:$0xff]
        %v4151 = vld [vmem:[%s6 + $0x88] sm:$0xff]
        %v4152 = vld [vmem:[%s6 + $0x90] sm:$0xff]
        %v4153 = vld [vmem:[%s6 + $0x98] sm:$0xff]
        %v4154 = vld [vmem:[%s6 + $0xa0] sm:$0xff]
        %v4155 = vld [vmem:[%s6 + $0xa8] sm:$0xff]
        %v4156 = vld [vmem:[%s6 + $0xb0] sm:$0xff]
        %v4157 = vld [vmem:[%s6 + $0xb8] sm:$0xff]
        %v4158 = vld [vmem:[%s6 + $0xc0] sm:$0xff]
        %v4159 = vld [vmem:[%s6 + $0xc8] sm:$0xff]
        %v4160 = vld [vmem:[%s6 + $0xd0] sm:$0xff]
        %v4161 = vld [vmem:[%s6 + $0xd8] sm:$0xff]
        %v4162 = vld [vmem:[%s6 + $0xe0] sm:$0xff]
        %v4163 = vld [vmem:[%s6 + $0xe8] sm:$0xff]
        %v4164 = vld [vmem:[%s6 + $0xf0] sm:$0xff]
        %v4165 = vld [vmem:[%s6 + $0xf8] sm:$0xff]
        %v4166 = vld [vmem:[%s6 + $0x100] sm:$0xff]
        %v4167 = vld [vmem:[%s6 + $0x108] sm:$0xff]
        %v4168 = vld [vmem:[%s6 + $0x110] sm:$0xff]
        %v4169 = vld [vmem:[%s6 + $0x118] sm:$0xff]
        %v4170 = vld [vmem:[%s6 + $0x120] sm:$0xff]
        %v4171 = vld [vmem:[%s6 + $0x128] sm:$0xff]
        %v4172 = vld [vmem:[%s6 + $0x130] sm:$0xff]
        %v4173 = vld [vmem:[%s6 + $0x138] sm:$0xff]
        %v4174 = vld [vmem:[%s6 + $0x140] sm:$0xff]
        %v4175 = vld [vmem:[%s6 + $0x148] sm:$0xff]
        %v4176 = vld [vmem:[%s6 + $0x150] sm:$0xff]
        %v4177 = vld [vmem:[%s6 + $0x158] sm:$0xff]
        %v4178 = vld [vmem:[%s6 + $0x160] sm:$0xff]
        %v4179 = vld [vmem:[%s6 + $0x168] sm:$0xff]
        %v4180 = vld [vmem:[%s6 + $0x170] sm:$0xff]
        %v4181 = vld [vmem:[%s6 + $0x178] sm:$0xff]
        %v4182 = vld [vmem:[%s6 + $0x180] sm:$0xff]
        %v4183 = vld [vmem:[%s6 + $0x188] sm:$0xff]
        %v4184 = vld [vmem:[%s6 + $0x190] sm:$0xff]
        %v4185 = vld [vmem:[%s6 + $0x198] sm:$0xff]
        %v4186 = vld [vmem:[%s6 + $0x1a0] sm:$0xff]
        %v4187 = vld [vmem:[%s6 + $0x1a8] sm:$0xff]
        %v4188 = vld [vmem:[%s6 + $0x1b0] sm:$0xff]
        %v4189 = vld [vmem:[%s6 + $0x1b8] sm:$0xff]
        %v4190 = vld [vmem:[%s6 + $0x1c0] sm:$0xff]
        %v4191 = vld [vmem:[%s6 + $0x1c8] sm:$0xff]
        %v4192 = vld [vmem:[%s6 + $0x1d0] sm:$0xff]
        %v4193 = vld [vmem:[%s6 + $0x1d8] sm:$0xff]
        %v4194 = vld [vmem:[%s6 + $0x1e0] sm:$0xff]
        %v4195 = vld [vmem:[%s6 + $0x1e8] sm:$0xff]
        %v4196 = vld [vmem:[%s6 + $0x1f0] sm:$0xff]
        %v4197 = vld [vmem:[%s6 + $0x1f8] sm:$0xff]
        %v4198 = vld [vmem:[%s6 + $0x200] sm:$0xff]
        %v4199 = vld [vmem:[%s6 + $0x208] sm:$0xff]
        %v4200 = vld [vmem:[%s6 + $0x210] sm:$0xff]
        %v4201 = vld [vmem:[%s6 + $0x218] sm:$0xff]
        %v4202 = vld [vmem:[%s6 + $0x220] sm:$0xff]
        %v4203 = vld [vmem:[%s6 + $0x228] sm:$0xff]
        %v4204 = vld [vmem:[%s6 + $0x230] sm:$0xff]
        %v4205 = vld [vmem:[%s6 + $0x238] sm:$0xff]
        %v4206 = vld [vmem:[%s6 + $0x240] sm:$0xff]
        %v4207 = vld [vmem:[%s6 + $0x248] sm:$0xff]
        %v4208 = vld [vmem:[%s6 + $0x250] sm:$0xff]
        %v4209 = vld [vmem:[%s6 + $0x258] sm:$0xff]
        %v4210 = vld [vmem:[%s6 + $0x260] sm:$0xff]
        %v4211 = vld [vmem:[%s6 + $0x268] sm:$0xff]
        %v4212 = vld [vmem:[%s6 + $0x270] sm:$0xff]
        %v4213 = vld [vmem:[%s6 + $0x278] sm:$0xff]
        %v4214 = vld [vmem:[%s6 + $0x280] sm:$0xff]
        %v4215 = vld [vmem:[%s6 + $0x288] sm:$0xff]
        %v4216 = vld [vmem:[%s6 + $0x290] sm:$0xff]
        %v4217 = vld [vmem:[%s6 + $0x298] sm:$0xff]
        %v4218 = vld [vmem:[%s6 + $0x2a0] sm:$0xff]
        %v4219 = vld [vmem:[%s6 + $0x2a8] sm:$0xff]
        %v4220 = vld [vmem:[%s6 + $0x2b0] sm:$0xff]
        %v4221 = vld [vmem:[%s6 + $0x2b8] sm:$0xff]
        %v4222 = vld [vmem:[%s6 + $0x2c0] sm:$0xff]
        %v4223 = vld [vmem:[%s6 + $0x2c8] sm:$0xff]
        %v4224 = vld [vmem:[%s6 + $0x2d0] sm:$0xff]
        %v4225 = vld [vmem:[%s6 + $0x2d8] sm:$0xff]
        %v4226 = vld [vmem:[%s6 + $0x2e0] sm:$0xff]
        %v4227 = vld [vmem:[%s6 + $0x2e8] sm:$0xff]
        %v4228 = vld [vmem:[%s6 + $0x2f0] sm:$0xff]
        %v4229 = vld [vmem:[%s6 + $0x2f8] sm:$0xff]
        %v4230 = vld [vmem:[%s6 + $0x300] sm:$0xff]
        %v4231 = vld [vmem:[%s6 + $0x308] sm:$0xff]
        %v4232 = vld [vmem:[%s6 + $0x310] sm:$0xff]
        %v4233 = vld [vmem:[%s6 + $0x318] sm:$0xff]
        %v4234 = vld [vmem:[%s6 + $0x320] sm:$0xff]
        %v4235 = vld [vmem:[%s6 + $0x328] sm:$0xff]
        %v4236 = vld [vmem:[%s6 + $0x330] sm:$0xff]
        %v4237 = vld [vmem:[%s6 + $0x338] sm:$0xff]
        %v4238 = vld [vmem:[%s6 + $0x340] sm:$0xff]
        %v4239 = vld [vmem:[%s6 + $0x348] sm:$0xff]
        %v4240 = vld [vmem:[%s6 + $0x350] sm:$0xff]
        %v4241 = vld [vmem:[%s6 + $0x358] sm:$0xff]
        %v4242 = vld [vmem:[%s6 + $0x360] sm:$0xff]
        %v4243 = vld [vmem:[%s6 + $0x368] sm:$0xff]
        %v4244 = vld [vmem:[%s6 + $0x370] sm:$0xff]
        %v4245 = vld [vmem:[%s6 + $0x378] sm:$0xff]
        %v4246 = vld [vmem:[%s6 + $0x380] sm:$0xff]
        %v4247 = vld [vmem:[%s6 + $0x388] sm:$0xff]
        %v4248 = vld [vmem:[%s6 + $0x390] sm:$0xff]
        %v4249 = vld [vmem:[%s6 + $0x398] sm:$0xff]
        %v4250 = vld [vmem:[%s6 + $0x3a0] sm:$0xff]
        %v4251 = vld [vmem:[%s6 + $0x3a8] sm:$0xff]
        %v4252 = vld [vmem:[%s6 + $0x3b0] sm:$0xff]
        %v4253 = vld [vmem:[%s6 + $0x3b8] sm:$0xff]
        %v4254 = vld [vmem:[%s6 + $0x3c0] sm:$0xff]
        %v4255 = vld [vmem:[%s6 + $0x3c8] sm:$0xff]
        %v4256 = vld [vmem:[%s6 + $0x3d0] sm:$0xff]
        %v4257 = vld [vmem:[%s6 + $0x3d8] sm:$0xff]
        %v4258 = vld [vmem:[%s6 + $0x3e0] sm:$0xff]
        %v4259 = vld [vmem:[%s6 + $0x3e8] sm:$0xff]
        %v4260 = vld [vmem:[%s6 + $0x3f0] sm:$0xff]
        %v4261 = vld [vmem:[%s6 + $0x3f8] sm:$0xff]
        %v4262 = vld [vmem:[%s6 + $0x400] sm:$0xff]
        %v4263 = vld [vmem:[%s6 + $0x408] sm:$0xff]
        %v4264 = vld [vmem:[%s6 + $0x410] sm:$0xff]
        %v4265 = vld [vmem:[%s6 + $0x418] sm:$0xff]
        %v4266 = vld [vmem:[%s6 + $0x420] sm:$0xff]
        %v4267 = vld [vmem:[%s6 + $0x428] sm:$0xff]
        %v4268 = vld [vmem:[%s6 + $0x430] sm:$0xff]
        %v4269 = vld [vmem:[%s6 + $0x438] sm:$0xff]
        %v4270 = vld [vmem:[%s6 + $0x440] sm:$0xff]
        %v4271 = vld [vmem:[%s6 + $0x448] sm:$0xff]
        %v4272 = vld [vmem:[%s6 + $0x450] sm:$0xff]
        %v4273 = vld [vmem:[%s6 + $0x458] sm:$0xff]
        %v4274 = vld [vmem:[%s6 + $0x460] sm:$0xff]
        %v4275 = vld [vmem:[%s6 + $0x468] sm:$0xff]
        %v4276 = vld [vmem:[%s6 + $0x470] sm:$0xff]
        %v4277 = vld [vmem:[%s6 + $0x478] sm:$0xff]
        %v4278 = vld [vmem:[%s6 + $0x480] sm:$0xff]
        %v4279 = vld [vmem:[%s6 + $0x488] sm:$0xff]
        %v4280 = vld [vmem:[%s6 + $0x490] sm:$0xff]
        %v4281 = vld [vmem:[%s6 + $0x498] sm:$0xff]
        %v4282 = vld [vmem:[%s6 + $0x4a0] sm:$0xff]
        %v4283 = vld [vmem:[%s6 + $0x4a8] sm:$0xff]
        %v4284 = vld [vmem:[%s6 + $0x4b0] sm:$0xff]
        %v4285 = vld [vmem:[%s6 + $0x4b8] sm:$0xff]
        %v4286 = vld [vmem:[%s6 + $0x4c0] sm:$0xff]
        %v4287 = vld [vmem:[%s6 + $0x4c8] sm:$0xff]
        %v4288 = vld [vmem:[%s6 + $0x4d0] sm:$0xff]
        %v4289 = vld [vmem:[%s6 + $0x4d8] sm:$0xff]
        %v4290 = vld [vmem:[%s6 + $0x4e0] sm:$0xff]
        %v4291 = vld [vmem:[%s6 + $0x4e8] sm:$0xff]
        %v4292 = vld [vmem:[%s6 + $0x4f0] sm:$0xff]
        %v4293 = vld [vmem:[%s6 + $0x4f8] sm:$0xff]
        %s4294 = scalar_lea.vmem %s6, 1280
        %v4295 = vld [vmem:[%s4294] sm:$0xff]
        %v4296 = vld [vmem:[%s4294 + $0x8] sm:$0xff]
        %v4297 = vld [vmem:[%s4294 + $0x10] sm:$0xff]
        %v4298 = vld [vmem:[%s4294 + $0x18] sm:$0xff]
        %v4299 = vld [vmem:[%s4294 + $0x20] sm:$0xff]
        %v4300 = vld [vmem:[%s4294 + $0x28] sm:$0xff]
        %v4301 = vld [vmem:[%s4294 + $0x30] sm:$0xff]
        %v4302 = vld [vmem:[%s4294 + $0x38] sm:$0xff]
        %v4303 = vld [vmem:[%s4294 + $0x40] sm:$0xff]
        %v4304 = vld [vmem:[%s4294 + $0x48] sm:$0xff]
        %v4305 = vld [vmem:[%s4294 + $0x50] sm:$0xff]
        %v4306 = vld [vmem:[%s4294 + $0x58] sm:$0xff]
        %v4307 = vld [vmem:[%s4294 + $0x60] sm:$0xff]
        %v4308 = vld [vmem:[%s4294 + $0x68] sm:$0xff]
        %v4309 = vld [vmem:[%s4294 + $0x70] sm:$0xff]
        %v4310 = vld [vmem:[%s4294 + $0x78] sm:$0xff]
        %v4311 = vld [vmem:[%s4294 + $0x80] sm:$0xff]
        %v4312 = vld [vmem:[%s4294 + $0x88] sm:$0xff]
        %v4313 = vld [vmem:[%s4294 + $0x90] sm:$0xff]
        %v4314 = vld [vmem:[%s4294 + $0x98] sm:$0xff]
        %v4315 = vld [vmem:[%s4294 + $0xa0] sm:$0xff]
        %v4316 = vld [vmem:[%s4294 + $0xa8] sm:$0xff]
        %v4317 = vld [vmem:[%s4294 + $0xb0] sm:$0xff]
        %v4318 = vld [vmem:[%s4294 + $0xb8] sm:$0xff]
        %v4319 = vld [vmem:[%s4294 + $0xc0] sm:$0xff]
        %v4320 = vld [vmem:[%s4294 + $0xc8] sm:$0xff]
        %v4321 = vld [vmem:[%s4294 + $0xd0] sm:$0xff]
        %v4322 = vld [vmem:[%s4294 + $0xd8] sm:$0xff]
        %v4323 = vld [vmem:[%s4294 + $0xe0] sm:$0xff]
        %v4324 = vld [vmem:[%s4294 + $0xe8] sm:$0xff]
        %v4325 = vld [vmem:[%s4294 + $0xf0] sm:$0xff]
        %v4326 = vld [vmem:[%s4294 + $0xf8] sm:$0xff]
        %v4327 = vld [vmem:[%s4294 + $0x100] sm:$0xff]
        %v4328 = vld [vmem:[%s4294 + $0x108] sm:$0xff]
        %v4329 = vld [vmem:[%s4294 + $0x110] sm:$0xff]
        %v4330 = vld [vmem:[%s4294 + $0x118] sm:$0xff]
        %v4331 = vld [vmem:[%s4294 + $0x120] sm:$0xff]
        %v4332 = vld [vmem:[%s4294 + $0x128] sm:$0xff]
        %v4333 = vld [vmem:[%s4294 + $0x130] sm:$0xff]
        %v4334 = vld [vmem:[%s4294 + $0x138] sm:$0xff]
        %v4335 = vld [vmem:[%s4294 + $0x140] sm:$0xff]
        %v4336 = vld [vmem:[%s4294 + $0x148] sm:$0xff]
        %v4337 = vld [vmem:[%s4294 + $0x150] sm:$0xff]
        %v4338 = vld [vmem:[%s4294 + $0x158] sm:$0xff]
        %v4339 = vld [vmem:[%s4294 + $0x160] sm:$0xff]
        %v4340 = vld [vmem:[%s4294 + $0x168] sm:$0xff]
        %v4341 = vld [vmem:[%s4294 + $0x170] sm:$0xff]
        %v4342 = vld [vmem:[%s4294 + $0x178] sm:$0xff]
        %v4343 = vld [vmem:[%s4294 + $0x180] sm:$0xff]
        %v4344 = vld [vmem:[%s4294 + $0x188] sm:$0xff]
        %v4345 = vld [vmem:[%s4294 + $0x190] sm:$0xff]
        %v4346 = vld [vmem:[%s4294 + $0x198] sm:$0xff]
        %v4347 = vld [vmem:[%s4294 + $0x1a0] sm:$0xff]
        %v4348 = vld [vmem:[%s4294 + $0x1a8] sm:$0xff]
        %v4349 = vld [vmem:[%s4294 + $0x1b0] sm:$0xff]
        %v4350 = vld [vmem:[%s4294 + $0x1b8] sm:$0xff]
        %v4351 = vld [vmem:[%s4294 + $0x1c0] sm:$0xff]
        %v4352 = vld [vmem:[%s4294 + $0x1c8] sm:$0xff]
        %v4353 = vld [vmem:[%s4294 + $0x1d0] sm:$0xff]
        %v4354 = vld [vmem:[%s4294 + $0x1d8] sm:$0xff]
        %v4355 = vld [vmem:[%s4294 + $0x1e0] sm:$0xff]
        %v4356 = vld [vmem:[%s4294 + $0x1e8] sm:$0xff]
        %v4357 = vld [vmem:[%s4294 + $0x1f0] sm:$0xff]
        %v4358 = vld [vmem:[%s4294 + $0x1f8] sm:$0xff]
        %v4359 = vld [vmem:[%s4294 + $0x200] sm:$0xff]
        %v4360 = vld [vmem:[%s4294 + $0x208] sm:$0xff]
        %v4361 = vld [vmem:[%s4294 + $0x210] sm:$0xff]
        %v4362 = vld [vmem:[%s4294 + $0x218] sm:$0xff]
        %v4363 = vld [vmem:[%s4294 + $0x220] sm:$0xff]
        %v4364 = vld [vmem:[%s4294 + $0x228] sm:$0xff]
        %v4365 = vld [vmem:[%s4294 + $0x230] sm:$0xff]
        %v4366 = vld [vmem:[%s4294 + $0x238] sm:$0xff]
        %v4367 = vld [vmem:[%s4294 + $0x240] sm:$0xff]
        %v4368 = vld [vmem:[%s4294 + $0x248] sm:$0xff]
        %v4369 = vld [vmem:[%s4294 + $0x250] sm:$0xff]
        %v4370 = vld [vmem:[%s4294 + $0x258] sm:$0xff]
        %v4371 = vld [vmem:[%s4294 + $0x260] sm:$0xff]
        %v4372 = vld [vmem:[%s4294 + $0x268] sm:$0xff]
        %v4373 = vld [vmem:[%s4294 + $0x270] sm:$0xff]
        %v4374 = vld [vmem:[%s4294 + $0x278] sm:$0xff]
        %v4375 = vld [vmem:[%s4294 + $0x280] sm:$0xff]
        %v4376 = vld [vmem:[%s4294 + $0x288] sm:$0xff]
        %v4377 = vld [vmem:[%s4294 + $0x290] sm:$0xff]
        %v4378 = vld [vmem:[%s4294 + $0x298] sm:$0xff]
        %v4379 = vld [vmem:[%s4294 + $0x2a0] sm:$0xff]
        %v4380 = vld [vmem:[%s4294 + $0x2a8] sm:$0xff]
        %v4381 = vld [vmem:[%s4294 + $0x2b0] sm:$0xff]
        %v4382 = vld [vmem:[%s4294 + $0x2b8] sm:$0xff]
        %v4383 = vld [vmem:[%s4294 + $0x2c0] sm:$0xff]
        %v4384 = vld [vmem:[%s4294 + $0x2c8] sm:$0xff]
        %v4385 = vld [vmem:[%s4294 + $0x2d0] sm:$0xff]
        %v4386 = vld [vmem:[%s4294 + $0x2d8] sm:$0xff]
        %v4387 = vld [vmem:[%s4294 + $0x2e0] sm:$0xff]
        %v4388 = vld [vmem:[%s4294 + $0x2e8] sm:$0xff]
        %v4389 = vld [vmem:[%s4294 + $0x2f0] sm:$0xff]
        %v4390 = vld [vmem:[%s4294 + $0x2f8] sm:$0xff]
        %v4391 = vld [vmem:[%s4294 + $0x300] sm:$0xff]
        %v4392 = vld [vmem:[%s4294 + $0x308] sm:$0xff]
        %v4393 = vld [vmem:[%s4294 + $0x310] sm:$0xff]
        %v4394 = vld [vmem:[%s4294 + $0x318] sm:$0xff]
        %v4395 = vld [vmem:[%s4294 + $0x320] sm:$0xff]
        %v4396 = vld [vmem:[%s4294 + $0x328] sm:$0xff]
        %v4397 = vld [vmem:[%s4294 + $0x330] sm:$0xff]
        %v4398 = vld [vmem:[%s4294 + $0x338] sm:$0xff]
        %v4399 = vld [vmem:[%s4294 + $0x340] sm:$0xff]
        %v4400 = vld [vmem:[%s4294 + $0x348] sm:$0xff]
        %v4401 = vld [vmem:[%s4294 + $0x350] sm:$0xff]
        %v4402 = vld [vmem:[%s4294 + $0x358] sm:$0xff]
        %v4403 = vld [vmem:[%s4294 + $0x360] sm:$0xff]
        %v4404 = vld [vmem:[%s4294 + $0x368] sm:$0xff]
        %v4405 = vld [vmem:[%s4294 + $0x370] sm:$0xff]
        %v4406 = vld [vmem:[%s4294 + $0x378] sm:$0xff]
        %v4407 = vld [vmem:[%s4294 + $0x380] sm:$0xff]
        %v4408 = vld [vmem:[%s4294 + $0x388] sm:$0xff]
        %v4409 = vld [vmem:[%s4294 + $0x390] sm:$0xff]
        %v4410 = vld [vmem:[%s4294 + $0x398] sm:$0xff]
        %v4411 = vld [vmem:[%s4294 + $0x3a0] sm:$0xff]
        %v4412 = vld [vmem:[%s4294 + $0x3a8] sm:$0xff]
        %v4413 = vld [vmem:[%s4294 + $0x3b0] sm:$0xff]
        %v4414 = vld [vmem:[%s4294 + $0x3b8] sm:$0xff]
        %v4415 = vld [vmem:[%s4294 + $0x3c0] sm:$0xff]
        %v4416 = vld [vmem:[%s4294 + $0x3c8] sm:$0xff]
        %v4417 = vld [vmem:[%s4294 + $0x3d0] sm:$0xff]
        %v4418 = vld [vmem:[%s4294 + $0x3d8] sm:$0xff]
        %v4419 = vld [vmem:[%s4294 + $0x3e0] sm:$0xff]
        %v4420 = vld [vmem:[%s4294 + $0x3e8] sm:$0xff]
        %v4421 = vld [vmem:[%s4294 + $0x3f0] sm:$0xff]
        %v4422 = vld [vmem:[%s4294 + $0x3f8] sm:$0xff]
        %v4423 = vld [vmem:[%s4294 + $0x400] sm:$0xff]
        %v4424 = vld [vmem:[%s4294 + $0x408] sm:$0xff]
        %v4425 = vld [vmem:[%s4294 + $0x410] sm:$0xff]
        %v4426 = vld [vmem:[%s4294 + $0x418] sm:$0xff]
        %v4427 = vld [vmem:[%s4294 + $0x420] sm:$0xff]
        %v4428 = vld [vmem:[%s4294 + $0x428] sm:$0xff]
        %v4429 = vld [vmem:[%s4294 + $0x430] sm:$0xff]
        %v4430 = vld [vmem:[%s4294 + $0x438] sm:$0xff]
        %v4431 = vld [vmem:[%s4294 + $0x440] sm:$0xff]
        %v4432 = vld [vmem:[%s4294 + $0x448] sm:$0xff]
        %v4433 = vld [vmem:[%s4294 + $0x450] sm:$0xff]
        %v4434 = vld [vmem:[%s4294 + $0x458] sm:$0xff]
        %v4435 = vld [vmem:[%s4294 + $0x460] sm:$0xff]
        %v4436 = vld [vmem:[%s4294 + $0x468] sm:$0xff]
        %v4437 = vld [vmem:[%s4294 + $0x470] sm:$0xff]
        %v4438 = vld [vmem:[%s4294 + $0x478] sm:$0xff]
        %v4439 = vld [vmem:[%s4294 + $0x480] sm:$0xff]
        %v4440 = vld [vmem:[%s4294 + $0x488] sm:$0xff]
        %v4441 = vld [vmem:[%s4294 + $0x490] sm:$0xff]
        %v4442 = vld [vmem:[%s4294 + $0x498] sm:$0xff]
        %v4443 = vld [vmem:[%s4294 + $0x4a0] sm:$0xff]
        %v4444 = vld [vmem:[%s4294 + $0x4a8] sm:$0xff]
        %v4445 = vld [vmem:[%s4294 + $0x4b0] sm:$0xff]
        %v4446 = vld [vmem:[%s4294 + $0x4b8] sm:$0xff]
        %v4447 = vld [vmem:[%s4294 + $0x4c0] sm:$0xff]
        %v4448 = vld [vmem:[%s4294 + $0x4c8] sm:$0xff]
        %v4449 = vld [vmem:[%s4294 + $0x4d0] sm:$0xff]
        %v4450 = vld [vmem:[%s4294 + $0x4d8] sm:$0xff]
        %v4451 = vld [vmem:[%s4294 + $0x4e0] sm:$0xff]
        %v4452 = vld [vmem:[%s4294 + $0x4e8] sm:$0xff]
        %v4453 = vld [vmem:[%s4294 + $0x4f0] sm:$0xff]
        %v4454 = vld [vmem:[%s4294 + $0x4f8] sm:$0xff]
        %s4455 = scalar_lea.vmem %s6, 2560
        %v4456 = vld [vmem:[%s4455] sm:$0xff]
        %v4457 = vld [vmem:[%s4455 + $0x8] sm:$0xff]
        %v4458 = vld [vmem:[%s4455 + $0x10] sm:$0xff]
        %v4459 = vld [vmem:[%s4455 + $0x18] sm:$0xff]
        %v4460 = vld [vmem:[%s4455 + $0x20] sm:$0xff]
        %v4461 = vld [vmem:[%s4455 + $0x28] sm:$0xff]
        %v4462 = vld [vmem:[%s4455 + $0x30] sm:$0xff]
        %v4463 = vld [vmem:[%s4455 + $0x38] sm:$0xff]
        %v4464 = vld [vmem:[%s4455 + $0x40] sm:$0xff]
        %v4465 = vld [vmem:[%s4455 + $0x48] sm:$0xff]
        %v4466 = vld [vmem:[%s4455 + $0x50] sm:$0xff]
        %v4467 = vld [vmem:[%s4455 + $0x58] sm:$0xff]
        %v4468 = vld [vmem:[%s4455 + $0x60] sm:$0xff]
        %v4469 = vld [vmem:[%s4455 + $0x68] sm:$0xff]
        %v4470 = vld [vmem:[%s4455 + $0x70] sm:$0xff]
        %v4471 = vld [vmem:[%s4455 + $0x78] sm:$0xff]
        %v4472 = vld [vmem:[%s4455 + $0x80] sm:$0xff]
        %v4473 = vld [vmem:[%s4455 + $0x88] sm:$0xff]
        %v4474 = vld [vmem:[%s4455 + $0x90] sm:$0xff]
        %v4475 = vld [vmem:[%s4455 + $0x98] sm:$0xff]
        %v4476 = vld [vmem:[%s4455 + $0xa0] sm:$0xff]
        %v4477 = vld [vmem:[%s4455 + $0xa8] sm:$0xff]
        %v4478 = vld [vmem:[%s4455 + $0xb0] sm:$0xff]
        %v4479 = vld [vmem:[%s4455 + $0xb8] sm:$0xff]
        %v4480 = vld [vmem:[%s4455 + $0xc0] sm:$0xff]
        %v4481 = vld [vmem:[%s4455 + $0xc8] sm:$0xff]
        %v4482 = vld [vmem:[%s4455 + $0xd0] sm:$0xff]
        %v4483 = vld [vmem:[%s4455 + $0xd8] sm:$0xff]
        %v4484 = vld [vmem:[%s4455 + $0xe0] sm:$0xff]
        %v4485 = vld [vmem:[%s4455 + $0xe8] sm:$0xff]
        %v4486 = vld [vmem:[%s4455 + $0xf0] sm:$0xff]
        %v4487 = vld [vmem:[%s4455 + $0xf8] sm:$0xff]
        %v4488 = vld [vmem:[%s4455 + $0x100] sm:$0xff]
        %v4489 = vld [vmem:[%s4455 + $0x108] sm:$0xff]
        %v4490 = vld [vmem:[%s4455 + $0x110] sm:$0xff]
        %v4491 = vld [vmem:[%s4455 + $0x118] sm:$0xff]
        %v4492 = vld [vmem:[%s4455 + $0x120] sm:$0xff]
        %v4493 = vld [vmem:[%s4455 + $0x128] sm:$0xff]
        %v4494 = vld [vmem:[%s4455 + $0x130] sm:$0xff]
        %v4495 = vld [vmem:[%s4455 + $0x138] sm:$0xff]
        %v4496 = vld [vmem:[%s4455 + $0x140] sm:$0xff]
        %v4497 = vld [vmem:[%s4455 + $0x148] sm:$0xff]
        %v4498 = vld [vmem:[%s4455 + $0x150] sm:$0xff]
        %v4499 = vld [vmem:[%s4455 + $0x158] sm:$0xff]
        %v4500 = vld [vmem:[%s4455 + $0x160] sm:$0xff]
        %v4501 = vld [vmem:[%s4455 + $0x168] sm:$0xff]
        %v4502 = vld [vmem:[%s4455 + $0x170] sm:$0xff]
        %v4503 = vld [vmem:[%s4455 + $0x178] sm:$0xff]
        %v4504 = vld [vmem:[%s4455 + $0x180] sm:$0xff]
        %v4505 = vld [vmem:[%s4455 + $0x188] sm:$0xff]
        %v4506 = vld [vmem:[%s4455 + $0x190] sm:$0xff]
        %v4507 = vld [vmem:[%s4455 + $0x198] sm:$0xff]
        %v4508 = vld [vmem:[%s4455 + $0x1a0] sm:$0xff]
        %v4509 = vld [vmem:[%s4455 + $0x1a8] sm:$0xff]
        %v4510 = vld [vmem:[%s4455 + $0x1b0] sm:$0xff]
        %v4511 = vld [vmem:[%s4455 + $0x1b8] sm:$0xff]
        %v4512 = vld [vmem:[%s4455 + $0x1c0] sm:$0xff]
        %v4513 = vld [vmem:[%s4455 + $0x1c8] sm:$0xff]
        %v4514 = vld [vmem:[%s4455 + $0x1d0] sm:$0xff]
        %v4515 = vld [vmem:[%s4455 + $0x1d8] sm:$0xff]
        %v4516 = vld [vmem:[%s4455 + $0x1e0] sm:$0xff]
        %v4517 = vld [vmem:[%s4455 + $0x1e8] sm:$0xff]
        %v4518 = vld [vmem:[%s4455 + $0x1f0] sm:$0xff]
        %v4519 = vld [vmem:[%s4455 + $0x1f8] sm:$0xff]
        %v4520 = vld [vmem:[%s4455 + $0x200] sm:$0xff]
        %v4521 = vld [vmem:[%s4455 + $0x208] sm:$0xff]
        %v4522 = vld [vmem:[%s4455 + $0x210] sm:$0xff]
        %v4523 = vld [vmem:[%s4455 + $0x218] sm:$0xff]
        %v4524 = vld [vmem:[%s4455 + $0x220] sm:$0xff]
        %v4525 = vld [vmem:[%s4455 + $0x228] sm:$0xff]
        %v4526 = vld [vmem:[%s4455 + $0x230] sm:$0xff]
        %v4527 = vld [vmem:[%s4455 + $0x238] sm:$0xff]
        %v4528 = vld [vmem:[%s4455 + $0x240] sm:$0xff]
        %v4529 = vld [vmem:[%s4455 + $0x248] sm:$0xff]
        %v4530 = vld [vmem:[%s4455 + $0x250] sm:$0xff]
        %v4531 = vld [vmem:[%s4455 + $0x258] sm:$0xff]
        %v4532 = vld [vmem:[%s4455 + $0x260] sm:$0xff]
        %v4533 = vld [vmem:[%s4455 + $0x268] sm:$0xff]
        %v4534 = vld [vmem:[%s4455 + $0x270] sm:$0xff]
        %v4535 = vld [vmem:[%s4455 + $0x278] sm:$0xff]
        %v4536 = vld [vmem:[%s4455 + $0x280] sm:$0xff]
        %v4537 = vld [vmem:[%s4455 + $0x288] sm:$0xff]
        %v4538 = vld [vmem:[%s4455 + $0x290] sm:$0xff]
        %v4539 = vld [vmem:[%s4455 + $0x298] sm:$0xff]
        %v4540 = vld [vmem:[%s4455 + $0x2a0] sm:$0xff]
        %v4541 = vld [vmem:[%s4455 + $0x2a8] sm:$0xff]
        %v4542 = vld [vmem:[%s4455 + $0x2b0] sm:$0xff]
        %v4543 = vld [vmem:[%s4455 + $0x2b8] sm:$0xff]
        %v4544 = vld [vmem:[%s4455 + $0x2c0] sm:$0xff]
        %v4545 = vld [vmem:[%s4455 + $0x2c8] sm:$0xff]
        %v4546 = vld [vmem:[%s4455 + $0x2d0] sm:$0xff]
        %v4547 = vld [vmem:[%s4455 + $0x2d8] sm:$0xff]
        %v4548 = vld [vmem:[%s4455 + $0x2e0] sm:$0xff]
        %v4549 = vld [vmem:[%s4455 + $0x2e8] sm:$0xff]
        %v4550 = vld [vmem:[%s4455 + $0x2f0] sm:$0xff]
        %v4551 = vld [vmem:[%s4455 + $0x2f8] sm:$0xff]
        %v4552 = vld [vmem:[%s4455 + $0x300] sm:$0xff]
        %v4553 = vld [vmem:[%s4455 + $0x308] sm:$0xff]
        %v4554 = vld [vmem:[%s4455 + $0x310] sm:$0xff]
        %v4555 = vld [vmem:[%s4455 + $0x318] sm:$0xff]
        %v4556 = vld [vmem:[%s4455 + $0x320] sm:$0xff]
        %v4557 = vld [vmem:[%s4455 + $0x328] sm:$0xff]
        %v4558 = vld [vmem:[%s4455 + $0x330] sm:$0xff]
        %v4559 = vld [vmem:[%s4455 + $0x338] sm:$0xff]
        %v4560 = vld [vmem:[%s4455 + $0x340] sm:$0xff]
        %v4561 = vld [vmem:[%s4455 + $0x348] sm:$0xff]
        %v4562 = vld [vmem:[%s4455 + $0x350] sm:$0xff]
        %v4563 = vld [vmem:[%s4455 + $0x358] sm:$0xff]
        %v4564 = vld [vmem:[%s4455 + $0x360] sm:$0xff]
        %v4565 = vld [vmem:[%s4455 + $0x368] sm:$0xff]
        %v4566 = vld [vmem:[%s4455 + $0x370] sm:$0xff]
        %v4567 = vld [vmem:[%s4455 + $0x378] sm:$0xff]
        %v4568 = vld [vmem:[%s4455 + $0x380] sm:$0xff]
        %v4569 = vld [vmem:[%s4455 + $0x388] sm:$0xff]
        %v4570 = vld [vmem:[%s4455 + $0x390] sm:$0xff]
        %v4571 = vld [vmem:[%s4455 + $0x398] sm:$0xff]
        %v4572 = vld [vmem:[%s4455 + $0x3a0] sm:$0xff]
        %v4573 = vld [vmem:[%s4455 + $0x3a8] sm:$0xff]
        %v4574 = vld [vmem:[%s4455 + $0x3b0] sm:$0xff]
        %v4575 = vld [vmem:[%s4455 + $0x3b8] sm:$0xff]
        %v4576 = vld [vmem:[%s4455 + $0x3c0] sm:$0xff]
        %v4577 = vld [vmem:[%s4455 + $0x3c8] sm:$0xff]
        %v4578 = vld [vmem:[%s4455 + $0x3d0] sm:$0xff]
        %v4579 = vld [vmem:[%s4455 + $0x3d8] sm:$0xff]
        %v4580 = vld [vmem:[%s4455 + $0x3e0] sm:$0xff]
        %v4581 = vld [vmem:[%s4455 + $0x3e8] sm:$0xff]
        %v4582 = vld [vmem:[%s4455 + $0x3f0] sm:$0xff]
        %v4583 = vld [vmem:[%s4455 + $0x3f8] sm:$0xff]
        %v4584 = vld [vmem:[%s4455 + $0x400] sm:$0xff]
        %v4585 = vld [vmem:[%s4455 + $0x408] sm:$0xff]
        %v4586 = vld [vmem:[%s4455 + $0x410] sm:$0xff]
        %v4587 = vld [vmem:[%s4455 + $0x418] sm:$0xff]
        %v4588 = vld [vmem:[%s4455 + $0x420] sm:$0xff]
        %v4589 = vld [vmem:[%s4455 + $0x428] sm:$0xff]
        %v4590 = vld [vmem:[%s4455 + $0x430] sm:$0xff]
        %v4591 = vld [vmem:[%s4455 + $0x438] sm:$0xff]
        %v4592 = vld [vmem:[%s4455 + $0x440] sm:$0xff]
        %v4593 = vld [vmem:[%s4455 + $0x448] sm:$0xff]
        %v4594 = vld [vmem:[%s4455 + $0x450] sm:$0xff]
        %v4595 = vld [vmem:[%s4455 + $0x458] sm:$0xff]
        %v4596 = vld [vmem:[%s4455 + $0x460] sm:$0xff]
        %v4597 = vld [vmem:[%s4455 + $0x468] sm:$0xff]
        %v4598 = vld [vmem:[%s4455 + $0x470] sm:$0xff]
        %v4599 = vld [vmem:[%s4455 + $0x478] sm:$0xff]
        %v4600 = vld [vmem:[%s4455 + $0x480] sm:$0xff]
        %v4601 = vld [vmem:[%s4455 + $0x488] sm:$0xff]
        %v4602 = vld [vmem:[%s4455 + $0x490] sm:$0xff]
        %v4603 = vld [vmem:[%s4455 + $0x498] sm:$0xff]
        %v4604 = vld [vmem:[%s4455 + $0x4a0] sm:$0xff]
        %v4605 = vld [vmem:[%s4455 + $0x4a8] sm:$0xff]
        %v4606 = vld [vmem:[%s4455 + $0x4b0] sm:$0xff]
        %v4607 = vld [vmem:[%s4455 + $0x4b8] sm:$0xff]
        %v4608 = vld [vmem:[%s4455 + $0x4c0] sm:$0xff]
        %v4609 = vld [vmem:[%s4455 + $0x4c8] sm:$0xff]
        %v4610 = vld [vmem:[%s4455 + $0x4d0] sm:$0xff]
        %v4611 = vld [vmem:[%s4455 + $0x4d8] sm:$0xff]
        %v4612 = vld [vmem:[%s4455 + $0x4e0] sm:$0xff]
        %v4613 = vld [vmem:[%s4455 + $0x4e8] sm:$0xff]
        %v4614 = vld [vmem:[%s4455 + $0x4f0] sm:$0xff]
        %v4615 = vld [vmem:[%s4455 + $0x4f8] sm:$0xff]
        %v4776 = vunpack.c.l.b16 %v4295
        %v4777 = vunpack.c.h.b16 %v4295
        %v4778 = vunpack.c.l.b16 %v4296
        %v4779 = vunpack.c.h.b16 %v4296
        %v4780 = vunpack.c.l.b16 %v4297
        %v4781 = vunpack.c.h.b16 %v4297
        %v4782 = vunpack.c.l.b16 %v4298
        %v4783 = vunpack.c.h.b16 %v4298
        %v4784 = vunpack.c.l.b16 %v4299
        %v4785 = vunpack.c.h.b16 %v4299
        %v4786 = vunpack.c.l.b16 %v4300
        %v4787 = vunpack.c.h.b16 %v4300
        %v4788 = vunpack.c.l.b16 %v4301
        %v4789 = vunpack.c.h.b16 %v4301
        %v4790 = vunpack.c.l.b16 %v4302
        %v4791 = vunpack.c.h.b16 %v4302
        %v4792 = vunpack.c.l.b16 %v4303
        %v4793 = vunpack.c.h.b16 %v4303
        %v4794 = vunpack.c.l.b16 %v4304
        %v4795 = vunpack.c.h.b16 %v4304
        %v4796 = vunpack.c.l.b16 %v4305
        %v4797 = vunpack.c.h.b16 %v4305
        %v4798 = vunpack.c.l.b16 %v4306
        %v4799 = vunpack.c.h.b16 %v4306
        %v4800 = vunpack.c.l.b16 %v4307
        %v4801 = vunpack.c.h.b16 %v4307
        %v4802 = vunpack.c.l.b16 %v4308
        %v4803 = vunpack.c.h.b16 %v4308
        %v4804 = vunpack.c.l.b16 %v4309
        %v4805 = vunpack.c.h.b16 %v4309
        %v4806 = vunpack.c.l.b16 %v4310
        %v4807 = vunpack.c.h.b16 %v4310
        %v4808 = vunpack.c.l.b16 %v4311
        %v4809 = vunpack.c.h.b16 %v4311
        %v4810 = vunpack.c.l.b16 %v4312
        %v4811 = vunpack.c.h.b16 %v4312
        %v4812 = vunpack.c.l.b16 %v4313
        %v4813 = vunpack.c.h.b16 %v4313
        %v4814 = vunpack.c.l.b16 %v4314
        %v4815 = vunpack.c.h.b16 %v4314
        %v4816 = vunpack.c.l.b16 %v4315
        %v4817 = vunpack.c.h.b16 %v4315
        %v4818 = vunpack.c.l.b16 %v4316
        %v4819 = vunpack.c.h.b16 %v4316
        %v4820 = vunpack.c.l.b16 %v4317
        %v4821 = vunpack.c.h.b16 %v4317
        %v4822 = vunpack.c.l.b16 %v4318
        %v4823 = vunpack.c.h.b16 %v4318
        %v4824 = vunpack.c.l.b16 %v4319
        %v4825 = vunpack.c.h.b16 %v4319
        %v4826 = vunpack.c.l.b16 %v4320
        %v4827 = vunpack.c.h.b16 %v4320
        %v4828 = vunpack.c.l.b16 %v4321
        %v4829 = vunpack.c.h.b16 %v4321
        %v4830 = vunpack.c.l.b16 %v4322
        %v4831 = vunpack.c.h.b16 %v4322
        %v4832 = vunpack.c.l.b16 %v4323
        %v4833 = vunpack.c.h.b16 %v4323
        %v4834 = vunpack.c.l.b16 %v4324
        %v4835 = vunpack.c.h.b16 %v4324
        %v4836 = vunpack.c.l.b16 %v4325
        %v4837 = vunpack.c.h.b16 %v4325
        %v4838 = vunpack.c.l.b16 %v4326
        %v4839 = vunpack.c.h.b16 %v4326
        %v4840 = vunpack.c.l.b16 %v4327
        %v4841 = vunpack.c.h.b16 %v4327
        %v4842 = vunpack.c.l.b16 %v4328
        %v4843 = vunpack.c.h.b16 %v4328
        %v4844 = vunpack.c.l.b16 %v4329
        %v4845 = vunpack.c.h.b16 %v4329
        %v4846 = vunpack.c.l.b16 %v4330
        %v4847 = vunpack.c.h.b16 %v4330
        %v4848 = vunpack.c.l.b16 %v4331
        %v4849 = vunpack.c.h.b16 %v4331
        %v4850 = vunpack.c.l.b16 %v4332
        %v4851 = vunpack.c.h.b16 %v4332
        %v4852 = vunpack.c.l.b16 %v4333
        %v4853 = vunpack.c.h.b16 %v4333
        %v4854 = vunpack.c.l.b16 %v4334
        %v4855 = vunpack.c.h.b16 %v4334
        %v4856 = vunpack.c.l.b16 %v4335
        %v4857 = vunpack.c.h.b16 %v4335
        %v4858 = vunpack.c.l.b16 %v4336
        %v4859 = vunpack.c.h.b16 %v4336
        %v4860 = vunpack.c.l.b16 %v4337
        %v4861 = vunpack.c.h.b16 %v4337
        %v4862 = vunpack.c.l.b16 %v4338
        %v4863 = vunpack.c.h.b16 %v4338
        %v4864 = vunpack.c.l.b16 %v4339
        %v4865 = vunpack.c.h.b16 %v4339
        %v4866 = vunpack.c.l.b16 %v4340
        %v4867 = vunpack.c.h.b16 %v4340
        %v4868 = vunpack.c.l.b16 %v4341
        %v4869 = vunpack.c.h.b16 %v4341
        %v4870 = vunpack.c.l.b16 %v4342
        %v4871 = vunpack.c.h.b16 %v4342
        %v4872 = vunpack.c.l.b16 %v4343
        %v4873 = vunpack.c.h.b16 %v4343
        %v4874 = vunpack.c.l.b16 %v4344
        %v4875 = vunpack.c.h.b16 %v4344
        %v4876 = vunpack.c.l.b16 %v4345
        %v4877 = vunpack.c.h.b16 %v4345
        %v4878 = vunpack.c.l.b16 %v4346
        %v4879 = vunpack.c.h.b16 %v4346
        %v4880 = vunpack.c.l.b16 %v4347
        %v4881 = vunpack.c.h.b16 %v4347
        %v4882 = vunpack.c.l.b16 %v4348
        %v4883 = vunpack.c.h.b16 %v4348
        %v4884 = vunpack.c.l.b16 %v4349
        %v4885 = vunpack.c.h.b16 %v4349
        %v4886 = vunpack.c.l.b16 %v4350
        %v4887 = vunpack.c.h.b16 %v4350
        %v4888 = vunpack.c.l.b16 %v4351
        %v4889 = vunpack.c.h.b16 %v4351
        %v4890 = vunpack.c.l.b16 %v4352
        %v4891 = vunpack.c.h.b16 %v4352
        %v4892 = vunpack.c.l.b16 %v4353
        %v4893 = vunpack.c.h.b16 %v4353
        %v4894 = vunpack.c.l.b16 %v4354
        %v4895 = vunpack.c.h.b16 %v4354
        %v4896 = vunpack.c.l.b16 %v4355
        %v4897 = vunpack.c.h.b16 %v4355
        %v4898 = vunpack.c.l.b16 %v4356
        %v4899 = vunpack.c.h.b16 %v4356
        %v4900 = vunpack.c.l.b16 %v4357
        %v4901 = vunpack.c.h.b16 %v4357
        %v4902 = vunpack.c.l.b16 %v4358
        %v4903 = vunpack.c.h.b16 %v4358
        %v4904 = vunpack.c.l.b16 %v4359
        %v4905 = vunpack.c.h.b16 %v4359
        %v4906 = vunpack.c.l.b16 %v4360
        %v4907 = vunpack.c.h.b16 %v4360
        %v4908 = vunpack.c.l.b16 %v4361
        %v4909 = vunpack.c.h.b16 %v4361
        %v4910 = vunpack.c.l.b16 %v4362
        %v4911 = vunpack.c.h.b16 %v4362
        %v4912 = vunpack.c.l.b16 %v4363
        %v4913 = vunpack.c.h.b16 %v4363
        %v4914 = vunpack.c.l.b16 %v4364
        %v4915 = vunpack.c.h.b16 %v4364
        %v4916 = vunpack.c.l.b16 %v4365
        %v4917 = vunpack.c.h.b16 %v4365
        %v4918 = vunpack.c.l.b16 %v4366
        %v4919 = vunpack.c.h.b16 %v4366
        %v4920 = vunpack.c.l.b16 %v4367
        %v4921 = vunpack.c.h.b16 %v4367
        %v4922 = vunpack.c.l.b16 %v4368
        %v4923 = vunpack.c.h.b16 %v4368
        %v4924 = vunpack.c.l.b16 %v4369
        %v4925 = vunpack.c.h.b16 %v4369
        %v4926 = vunpack.c.l.b16 %v4370
        %v4927 = vunpack.c.h.b16 %v4370
        %v4928 = vunpack.c.l.b16 %v4371
        %v4929 = vunpack.c.h.b16 %v4371
        %v4930 = vunpack.c.l.b16 %v4372
        %v4931 = vunpack.c.h.b16 %v4372
        %v4932 = vunpack.c.l.b16 %v4373
        %v4933 = vunpack.c.h.b16 %v4373
        %v4934 = vunpack.c.l.b16 %v4374
        %v4935 = vunpack.c.h.b16 %v4374
        %v4936 = vunpack.c.l.b16 %v4375
        %v4937 = vunpack.c.h.b16 %v4375
        %v4938 = vunpack.c.l.b16 %v4376
        %v4939 = vunpack.c.h.b16 %v4376
        %v4940 = vunpack.c.l.b16 %v4377
        %v4941 = vunpack.c.h.b16 %v4377
        %v4942 = vunpack.c.l.b16 %v4378
        %v4943 = vunpack.c.h.b16 %v4378
        %v4944 = vunpack.c.l.b16 %v4379
        %v4945 = vunpack.c.h.b16 %v4379
        %v4946 = vunpack.c.l.b16 %v4380
        %v4947 = vunpack.c.h.b16 %v4380
        %v4948 = vunpack.c.l.b16 %v4381
        %v4949 = vunpack.c.h.b16 %v4381
        %v4950 = vunpack.c.l.b16 %v4382
        %v4951 = vunpack.c.h.b16 %v4382
        %v4952 = vunpack.c.l.b16 %v4383
        %v4953 = vunpack.c.h.b16 %v4383
        %v4954 = vunpack.c.l.b16 %v4384
        %v4955 = vunpack.c.h.b16 %v4384
        %v4956 = vunpack.c.l.b16 %v4385
        %v4957 = vunpack.c.h.b16 %v4385
        %v4958 = vunpack.c.l.b16 %v4386
        %v4959 = vunpack.c.h.b16 %v4386
        %v4960 = vunpack.c.l.b16 %v4387
        %v4961 = vunpack.c.h.b16 %v4387
        %v4962 = vunpack.c.l.b16 %v4388
        %v4963 = vunpack.c.h.b16 %v4388
        %v4964 = vunpack.c.l.b16 %v4389
        %v4965 = vunpack.c.h.b16 %v4389
        %v4966 = vunpack.c.l.b16 %v4390
        %v4967 = vunpack.c.h.b16 %v4390
        %v4968 = vunpack.c.l.b16 %v4391
        %v4969 = vunpack.c.h.b16 %v4391
        %v4970 = vunpack.c.l.b16 %v4392
        %v4971 = vunpack.c.h.b16 %v4392
        %v4972 = vunpack.c.l.b16 %v4393
        %v4973 = vunpack.c.h.b16 %v4393
        %v4974 = vunpack.c.l.b16 %v4394
        %v4975 = vunpack.c.h.b16 %v4394
        %v4976 = vunpack.c.l.b16 %v4395
        %v4977 = vunpack.c.h.b16 %v4395
        %v4978 = vunpack.c.l.b16 %v4396
        %v4979 = vunpack.c.h.b16 %v4396
        %v4980 = vunpack.c.l.b16 %v4397
        %v4981 = vunpack.c.h.b16 %v4397
        %v4982 = vunpack.c.l.b16 %v4398
        %v4983 = vunpack.c.h.b16 %v4398
        %v4984 = vunpack.c.l.b16 %v4399
        %v4985 = vunpack.c.h.b16 %v4399
        %v4986 = vunpack.c.l.b16 %v4400
        %v4987 = vunpack.c.h.b16 %v4400
        %v4988 = vunpack.c.l.b16 %v4401
        %v4989 = vunpack.c.h.b16 %v4401
        %v4990 = vunpack.c.l.b16 %v4402
        %v4991 = vunpack.c.h.b16 %v4402
        %v4992 = vunpack.c.l.b16 %v4403
        %v4993 = vunpack.c.h.b16 %v4403
        %v4994 = vunpack.c.l.b16 %v4404
        %v4995 = vunpack.c.h.b16 %v4404
        %v4996 = vunpack.c.l.b16 %v4405
        %v4997 = vunpack.c.h.b16 %v4405
        %v4998 = vunpack.c.l.b16 %v4406
        %v4999 = vunpack.c.h.b16 %v4406
        %v5000 = vunpack.c.l.b16 %v4407
        %v5001 = vunpack.c.h.b16 %v4407
        %v5002 = vunpack.c.l.b16 %v4408
        %v5003 = vunpack.c.h.b16 %v4408
        %v5004 = vunpack.c.l.b16 %v4409
        %v5005 = vunpack.c.h.b16 %v4409
        %v5006 = vunpack.c.l.b16 %v4410
        %v5007 = vunpack.c.h.b16 %v4410
        %v5008 = vunpack.c.l.b16 %v4411
        %v5009 = vunpack.c.h.b16 %v4411
        %v5010 = vunpack.c.l.b16 %v4412
        %v5011 = vunpack.c.h.b16 %v4412
        %v5012 = vunpack.c.l.b16 %v4413
        %v5013 = vunpack.c.h.b16 %v4413
        %v5014 = vunpack.c.l.b16 %v4414
        %v5015 = vunpack.c.h.b16 %v4414
        %v5016 = vunpack.c.l.b16 %v4415
        %v5017 = vunpack.c.h.b16 %v4415
        %v5018 = vunpack.c.l.b16 %v4416
        %v5019 = vunpack.c.h.b16 %v4416
        %v5020 = vunpack.c.l.b16 %v4417
        %v5021 = vunpack.c.h.b16 %v4417
        %v5022 = vunpack.c.l.b16 %v4418
        %v5023 = vunpack.c.h.b16 %v4418
        %v5024 = vunpack.c.l.b16 %v4419
        %v5025 = vunpack.c.h.b16 %v4419
        %v5026 = vunpack.c.l.b16 %v4420
        %v5027 = vunpack.c.h.b16 %v4420
        %v5028 = vunpack.c.l.b16 %v4421
        %v5029 = vunpack.c.h.b16 %v4421
        %v5030 = vunpack.c.l.b16 %v4422
        %v5031 = vunpack.c.h.b16 %v4422
        %v5032 = vunpack.c.l.b16 %v4423
        %v5033 = vunpack.c.h.b16 %v4423
        %v5034 = vunpack.c.l.b16 %v4424
        %v5035 = vunpack.c.h.b16 %v4424
        %v5036 = vunpack.c.l.b16 %v4425
        %v5037 = vunpack.c.h.b16 %v4425
        %v5038 = vunpack.c.l.b16 %v4426
        %v5039 = vunpack.c.h.b16 %v4426
        %v5040 = vunpack.c.l.b16 %v4427
        %v5041 = vunpack.c.h.b16 %v4427
        %v5042 = vunpack.c.l.b16 %v4428
        %v5043 = vunpack.c.h.b16 %v4428
        %v5044 = vunpack.c.l.b16 %v4429
        %v5045 = vunpack.c.h.b16 %v4429
        %v5046 = vunpack.c.l.b16 %v4430
        %v5047 = vunpack.c.h.b16 %v4430
        %v5048 = vunpack.c.l.b16 %v4431
        %v5049 = vunpack.c.h.b16 %v4431
        %v5050 = vunpack.c.l.b16 %v4432
        %v5051 = vunpack.c.h.b16 %v4432
        %v5052 = vunpack.c.l.b16 %v4433
        %v5053 = vunpack.c.h.b16 %v4433
        %v5054 = vunpack.c.l.b16 %v4434
        %v5055 = vunpack.c.h.b16 %v4434
        %v5056 = vunpack.c.l.b16 %v4435
        %v5057 = vunpack.c.h.b16 %v4435
        %v5058 = vunpack.c.l.b16 %v4436
        %v5059 = vunpack.c.h.b16 %v4436
        %v5060 = vunpack.c.l.b16 %v4437
        %v5061 = vunpack.c.h.b16 %v4437
        %v5062 = vunpack.c.l.b16 %v4438
        %v5063 = vunpack.c.h.b16 %v4438
        %v5064 = vunpack.c.l.b16 %v4439
        %v5065 = vunpack.c.h.b16 %v4439
        %v5066 = vunpack.c.l.b16 %v4440
        %v5067 = vunpack.c.h.b16 %v4440
        %v5068 = vunpack.c.l.b16 %v4441
        %v5069 = vunpack.c.h.b16 %v4441
        %v5070 = vunpack.c.l.b16 %v4442
        %v5071 = vunpack.c.h.b16 %v4442
        %v5072 = vunpack.c.l.b16 %v4443
        %v5073 = vunpack.c.h.b16 %v4443
        %v5074 = vunpack.c.l.b16 %v4444
        %v5075 = vunpack.c.h.b16 %v4444
        %v5076 = vunpack.c.l.b16 %v4445
        %v5077 = vunpack.c.h.b16 %v4445
        %v5078 = vunpack.c.l.b16 %v4446
        %v5079 = vunpack.c.h.b16 %v4446
        %v5080 = vunpack.c.l.b16 %v4447
        %v5081 = vunpack.c.h.b16 %v4447
        %v5082 = vunpack.c.l.b16 %v4448
        %v5083 = vunpack.c.h.b16 %v4448
        %v5084 = vunpack.c.l.b16 %v4449
        %v5085 = vunpack.c.h.b16 %v4449
        %v5086 = vunpack.c.l.b16 %v4450
        %v5087 = vunpack.c.h.b16 %v4450
        %v5088 = vunpack.c.l.b16 %v4451
        %v5089 = vunpack.c.h.b16 %v4451
        %v5090 = vunpack.c.l.b16 %v4452
        %v5091 = vunpack.c.h.b16 %v4452
        %v5092 = vunpack.c.l.b16 %v4453
        %v5093 = vunpack.c.h.b16 %v4453
        %v5094 = vunpack.c.l.b16 %v4454
        %v5095 = vunpack.c.h.b16 %v4454
        %v5096 = vpack.c.b16 %v4780, %v4776
        %v5097 = vpack.c.b16 %v4781, %v4777
        %v5098 = vpack.c.b16 %v4782, %v4778
        %v5099 = vpack.c.b16 %v4783, %v4779
        %v5100 = vpack.c.b16 %v4788, %v4784
        %v5101 = vpack.c.b16 %v4789, %v4785
        %v5102 = vpack.c.b16 %v4790, %v4786
        %v5103 = vpack.c.b16 %v4791, %v4787
        %v5104 = vpack.c.b16 %v4796, %v4792
        %v5105 = vpack.c.b16 %v4797, %v4793
        %v5106 = vpack.c.b16 %v4798, %v4794
        %v5107 = vpack.c.b16 %v4799, %v4795
        %v5108 = vpack.c.b16 %v4804, %v4800
        %v5109 = vpack.c.b16 %v4805, %v4801
        %v5110 = vpack.c.b16 %v4806, %v4802
        %v5111 = vpack.c.b16 %v4807, %v4803
        %v5112 = vpack.c.b16 %v4812, %v4808
        %v5113 = vpack.c.b16 %v4813, %v4809
        %v5114 = vpack.c.b16 %v4814, %v4810
        %v5115 = vpack.c.b16 %v4815, %v4811
        %v5116 = vpack.c.b16 %v4820, %v4816
        %v5117 = vpack.c.b16 %v4821, %v4817
        %v5118 = vpack.c.b16 %v4822, %v4818
        %v5119 = vpack.c.b16 %v4823, %v4819
        %v5120 = vpack.c.b16 %v4828, %v4824
        %v5121 = vpack.c.b16 %v4829, %v4825
        %v5122 = vpack.c.b16 %v4830, %v4826
        %v5123 = vpack.c.b16 %v4831, %v4827
        %v5124 = vpack.c.b16 %v4836, %v4832
        %v5125 = vpack.c.b16 %v4837, %v4833
        %v5126 = vpack.c.b16 %v4838, %v4834
        %v5127 = vpack.c.b16 %v4839, %v4835
        %v5128 = vpack.c.b16 %v4844, %v4840
        %v5129 = vpack.c.b16 %v4845, %v4841
        %v5130 = vpack.c.b16 %v4846, %v4842
        %v5131 = vpack.c.b16 %v4847, %v4843
        %v5132 = vpack.c.b16 %v4852, %v4848
        %v5133 = vpack.c.b16 %v4853, %v4849
        %v5134 = vpack.c.b16 %v4854, %v4850
        %v5135 = vpack.c.b16 %v4855, %v4851
        %v5136 = vpack.c.b16 %v4860, %v4856
        %v5137 = vpack.c.b16 %v4861, %v4857
        %v5138 = vpack.c.b16 %v4862, %v4858
        %v5139 = vpack.c.b16 %v4863, %v4859
        %v5140 = vpack.c.b16 %v4868, %v4864
        %v5141 = vpack.c.b16 %v4869, %v4865
        %v5142 = vpack.c.b16 %v4870, %v4866
        %v5143 = vpack.c.b16 %v4871, %v4867
        %v5144 = vpack.c.b16 %v4876, %v4872
        %v5145 = vpack.c.b16 %v4877, %v4873
        %v5146 = vpack.c.b16 %v4878, %v4874
        %v5147 = vpack.c.b16 %v4879, %v4875
        %v5148 = vpack.c.b16 %v4884, %v4880
        %v5149 = vpack.c.b16 %v4885, %v4881
        %v5150 = vpack.c.b16 %v4886, %v4882
        %v5151 = vpack.c.b16 %v4887, %v4883
        %v5152 = vpack.c.b16 %v4892, %v4888
        %v5153 = vpack.c.b16 %v4893, %v4889
        %v5154 = vpack.c.b16 %v4894, %v4890
        %v5155 = vpack.c.b16 %v4895, %v4891
        %v5156 = vpack.c.b16 %v4900, %v4896
        %v5157 = vpack.c.b16 %v4901, %v4897
        %v5158 = vpack.c.b16 %v4902, %v4898
        %v5159 = vpack.c.b16 %v4903, %v4899
        %v5160 = vpack.c.b16 %v4908, %v4904
        %v5161 = vpack.c.b16 %v4909, %v4905
        %v5162 = vpack.c.b16 %v4910, %v4906
        %v5163 = vpack.c.b16 %v4911, %v4907
        %v5164 = vpack.c.b16 %v4916, %v4912
        %v5165 = vpack.c.b16 %v4917, %v4913
        %v5166 = vpack.c.b16 %v4918, %v4914
        %v5167 = vpack.c.b16 %v4919, %v4915
        %v5168 = vpack.c.b16 %v4924, %v4920
        %v5169 = vpack.c.b16 %v4925, %v4921
        %v5170 = vpack.c.b16 %v4926, %v4922
        %v5171 = vpack.c.b16 %v4927, %v4923
        %v5172 = vpack.c.b16 %v4932, %v4928
        %v5173 = vpack.c.b16 %v4933, %v4929
        %v5174 = vpack.c.b16 %v4934, %v4930
        %v5175 = vpack.c.b16 %v4935, %v4931
        %v5176 = vpack.c.b16 %v4940, %v4936
        %v5177 = vpack.c.b16 %v4941, %v4937
        %v5178 = vpack.c.b16 %v4942, %v4938
        %v5179 = vpack.c.b16 %v4943, %v4939
        %v5180 = vpack.c.b16 %v4948, %v4944
        %v5181 = vpack.c.b16 %v4949, %v4945
        %v5182 = vpack.c.b16 %v4950, %v4946
        %v5183 = vpack.c.b16 %v4951, %v4947
        %v5184 = vpack.c.b16 %v4956, %v4952
        %v5185 = vpack.c.b16 %v4957, %v4953
        %v5186 = vpack.c.b16 %v4958, %v4954
        %v5187 = vpack.c.b16 %v4959, %v4955
        %v5188 = vpack.c.b16 %v4964, %v4960
        %v5189 = vpack.c.b16 %v4965, %v4961
        %v5190 = vpack.c.b16 %v4966, %v4962
        %v5191 = vpack.c.b16 %v4967, %v4963
        %v5192 = vpack.c.b16 %v4972, %v4968
        %v5193 = vpack.c.b16 %v4973, %v4969
        %v5194 = vpack.c.b16 %v4974, %v4970
        %v5195 = vpack.c.b16 %v4975, %v4971
        %v5196 = vpack.c.b16 %v4980, %v4976
        %v5197 = vpack.c.b16 %v4981, %v4977
        %v5198 = vpack.c.b16 %v4982, %v4978
        %v5199 = vpack.c.b16 %v4983, %v4979
        %v5200 = vpack.c.b16 %v4988, %v4984
        %v5201 = vpack.c.b16 %v4989, %v4985
        %v5202 = vpack.c.b16 %v4990, %v4986
        %v5203 = vpack.c.b16 %v4991, %v4987
        %v5204 = vpack.c.b16 %v4996, %v4992
        %v5205 = vpack.c.b16 %v4997, %v4993
        %v5206 = vpack.c.b16 %v4998, %v4994
        %v5207 = vpack.c.b16 %v4999, %v4995
        %v5208 = vpack.c.b16 %v5004, %v5000
        %v5209 = vpack.c.b16 %v5005, %v5001
        %v5210 = vpack.c.b16 %v5006, %v5002
        %v5211 = vpack.c.b16 %v5007, %v5003
        %v5212 = vpack.c.b16 %v5012, %v5008
        %v5213 = vpack.c.b16 %v5013, %v5009
        %v5214 = vpack.c.b16 %v5014, %v5010
        %v5215 = vpack.c.b16 %v5015, %v5011
        %v5216 = vpack.c.b16 %v5020, %v5016
        %v5217 = vpack.c.b16 %v5021, %v5017
        %v5218 = vpack.c.b16 %v5022, %v5018
        %v5219 = vpack.c.b16 %v5023, %v5019
        %v5220 = vpack.c.b16 %v5028, %v5024
        %v5221 = vpack.c.b16 %v5029, %v5025
        %v5222 = vpack.c.b16 %v5030, %v5026
        %v5223 = vpack.c.b16 %v5031, %v5027
        %v5224 = vpack.c.b16 %v5036, %v5032
        %v5225 = vpack.c.b16 %v5037, %v5033
        %v5226 = vpack.c.b16 %v5038, %v5034
        %v5227 = vpack.c.b16 %v5039, %v5035
        %v5228 = vpack.c.b16 %v5044, %v5040
        %v5229 = vpack.c.b16 %v5045, %v5041
        %v5230 = vpack.c.b16 %v5046, %v5042
        %v5231 = vpack.c.b16 %v5047, %v5043
        %v5232 = vpack.c.b16 %v5052, %v5048
        %v5233 = vpack.c.b16 %v5053, %v5049
        %v5234 = vpack.c.b16 %v5054, %v5050
        %v5235 = vpack.c.b16 %v5055, %v5051
        %v5236 = vpack.c.b16 %v5060, %v5056
        %v5237 = vpack.c.b16 %v5061, %v5057
        %v5238 = vpack.c.b16 %v5062, %v5058
        %v5239 = vpack.c.b16 %v5063, %v5059
        %v5240 = vpack.c.b16 %v5068, %v5064
        %v5241 = vpack.c.b16 %v5069, %v5065
        %v5242 = vpack.c.b16 %v5070, %v5066
        %v5243 = vpack.c.b16 %v5071, %v5067
        %v5244 = vpack.c.b16 %v5076, %v5072
        %v5245 = vpack.c.b16 %v5077, %v5073
        %v5246 = vpack.c.b16 %v5078, %v5074
        %v5247 = vpack.c.b16 %v5079, %v5075
        %v5248 = vpack.c.b16 %v5084, %v5080
        %v5249 = vpack.c.b16 %v5085, %v5081
        %v5250 = vpack.c.b16 %v5086, %v5082
        %v5251 = vpack.c.b16 %v5087, %v5083
        %v5252 = vpack.c.b16 %v5092, %v5088
        %v5253 = vpack.c.b16 %v5093, %v5089
        %v5254 = vpack.c.b16 %v5094, %v5090
        %v5255 = vpack.c.b16 %v5095, %v5091
        %5416 = vmatprep.subr.bf16.mxu0 %v5097
        %5417 = vmatpush1.bf16.msra.mxu0 %v5096
        %5418 = vmatprep.subr.bf16.mxu0 %v5101
        %5419 = vmatpush1.bf16.msra.mxu0 %v5100
        %5420 = vmatprep.subr.bf16.mxu0 %v5105
        %5421 = vmatpush1.bf16.msra.mxu0 %v5104
        %5422 = vmatprep.subr.bf16.mxu0 %v5109
        %5423 = vmatpush1.bf16.msra.mxu0 %v5108
        %5424 = vmatprep.subr.bf16.mxu0 %v5113
        %5425 = vmatpush1.bf16.msra.mxu0 %v5112
        %5426 = vmatprep.subr.bf16.mxu0 %v5117
        %5427 = vmatpush1.bf16.msra.mxu0 %v5116
        %5428 = vmatprep.subr.bf16.mxu0 %v5121
        %5429 = vmatpush1.bf16.msra.mxu0 %v5120
        %5430 = vmatprep.subr.bf16.mxu0 %v5125
        %5431 = vmatpush1.bf16.msra.mxu0 %v5124
        %5432 = vmatprep.subr.bf16.mxu0 %v5129
        %5433 = vmatpush1.bf16.msra.mxu0 %v5128
        %5434 = vmatprep.subr.bf16.mxu0 %v5133
        %5435 = vmatpush1.bf16.msra.mxu0 %v5132
        %5436 = vmatprep.subr.bf16.mxu0 %v5137
        %5437 = vmatpush1.bf16.msra.mxu0 %v5136
        %5438 = vmatprep.subr.bf16.mxu0 %v5141
        %5439 = vmatpush1.bf16.msra.mxu0 %v5140
        %5440 = vmatprep.subr.bf16.mxu0 %v5145
        %5441 = vmatpush1.bf16.msra.mxu0 %v5144
        %5442 = vmatprep.subr.bf16.mxu0 %v5149
        %5443 = vmatpush1.bf16.msra.mxu0 %v5148
        %5444 = vmatprep.subr.bf16.mxu0 %v5153
        %5445 = vmatpush1.bf16.msra.mxu0 %v5152
        %5446 = vmatprep.subr.bf16.mxu0 %v5157
        %5447 = vmatpush1.bf16.msra.mxu0 %v5156
        %5448 = vmatprep.mubr.bf16.mxu0 %v4080
        %5449 = vmatmul.mubr.bf16.gmra.mrb[0].mxu0 %v4079
        %v5450 = vpop.f32.mrb[0].mxu0
        %v5451 = vadd.f32 0.0, %v5450
        %v5452 = vpop.f32.mrb[0].mxu0
        %v5453 = vadd.f32 0.0, %v5452
        %v5454 = vpop.f32.mrb[0].mxu0
        %v5455 = vadd.f32 0.0, %v5454
        %v5456 = vpop.f32.mrb[0].mxu0
        %v5457 = vadd.f32 0.0, %v5456
        %5458 = vmatprep.mubr.bf16.mxu0 %v4085
        %5459 = vmatmul.mubr.bf16.gmra.mrb[0].mxu0 %v4084
        %v5460 = vpop.f32.mrb[0].mxu0
        %v5461 = vadd.f32 0.0, %v5460
        %v5462 = vpop.f32.mrb[0].mxu0
        %v5463 = vadd.f32 0.0, %v5462
        %v5464 = vpop.f32.mrb[0].mxu0
        %v5465 = vadd.f32 0.0, %v5464
        %v5466 = vpop.f32.mrb[0].mxu0
        %v5467 = vadd.f32 0.0, %v5466
        %5468 = vmatprep.mubr.bf16.mxu0 %v4090
        %5469 = vmatmul.mubr.bf16.gmra.mrb[0].mxu0 %v4089
        %v5470 = vpop.f32.mrb[0].mxu0
        %v5471 = vadd.f32 0.0, %v5470
        %v5472 = vpop.f32.mrb[0].mxu0
        %v5473 = vadd.f32 0.0, %v5472
        %v5474 = vpop.f32.mrb[0].mxu0
        %v5475 = vpop.f32.mrb[0].mxu0
        %5476 = vdwg.mxu0
        %5477 = vmatprep.subr.bf16.mxu0 %v5161
        %5478 = vmatpush1.bf16.msra.mxu0 %v5160
        %5479 = vmatprep.subr.bf16.mxu0 %v5165
        %5480 = vmatpush1.bf16.msra.mxu0 %v5164
        %5481 = vmatprep.subr.bf16.mxu0 %v5169
        %5482 = vmatpush1.bf16.msra.mxu0 %v5168
        %5483 = vmatprep.subr.bf16.mxu0 %v5173
        %5484 = vmatpush1.bf16.msra.mxu0 %v5172
        %5485 = vmatprep.subr.bf16.mxu0 %v5177
        %5486 = vmatpush1.bf16.msra.mxu0 %v5176
        %5487 = vmatprep.subr.bf16.mxu0 %v5181
        %5488 = vmatpush1.bf16.msra.mxu0 %v5180
        %5489 = vmatprep.subr.bf16.mxu0 %v5185
        %5490 = vmatpush1.bf16.msra.mxu0 %v5184
        %5491 = vmatprep.subr.bf16.mxu0 %v5189
        %5492 = vmatpush1.bf16.msra.mxu0 %v5188
        %5493 = vmatprep.subr.bf16.mxu0 %v5193
        %5494 = vmatpush1.bf16.msra.mxu0 %v5192
        %5495 = vmatprep.subr.bf16.mxu0 %v5197
        %5496 = vmatpush1.bf16.msra.mxu0 %v5196
        %5497 = vmatprep.subr.bf16.mxu0 %v5201
        %5498 = vmatpush1.bf16.msra.mxu0 %v5200
        %5499 = vmatprep.subr.bf16.mxu0 %v5205
        %5500 = vmatpush1.bf16.msra.mxu0 %v5204
        %5501 = vmatprep.subr.bf16.mxu0 %v5209
        %5502 = vmatpush1.bf16.msra.mxu0 %v5208
        %5503 = vmatprep.subr.bf16.mxu0 %v5213
        %5504 = vmatpush1.bf16.msra.mxu0 %v5212
        %5505 = vmatprep.subr.bf16.mxu0 %v5217
        %5506 = vmatpush1.bf16.msra.mxu0 %v5216
        %5507 = vmatprep.subr.bf16.mxu0 %v5221
        %5508 = vmatpush1.bf16.msra.mxu0 %v5220
        %5509 = vmatprep.mubr.bf16.mxu0 %v4082
        %5510 = vmatmul.mubr.bf16.gmra.mrb[0].mxu0 %v4081
        %v5511 = vpop.f32.mrb[0].mxu0
        %v5512 = vadd.f32 %v5451, %v5511
        %v5513 = vpop.f32.mrb[0].mxu0
        %v5514 = vadd.f32 %v5453, %v5513
        %v5515 = vpop.f32.mrb[0].mxu0
        %v5516 = vadd.f32 %v5455, %v5515
        %v5517 = vpop.f32.mrb[0].mxu0
        %v5518 = vadd.f32 %v5457, %v5517
        %5519 = vmatprep.mubr.bf16.mxu0 %v4087
        %5520 = vmatmul.mubr.bf16.gmra.mrb[0].mxu0 %v4086
        %v5521 = vpop.f32.mrb[0].mxu0
        %v5522 = vadd.f32 %v5461, %v5521
        %v5523 = vpop.f32.mrb[0].mxu0
        %v5524 = vadd.f32 %v5463, %v5523
        %v5525 = vpop.f32.mrb[0].mxu0
        %v5526 = vadd.f32 %v5465, %v5525
        %v5527 = vpop.f32.mrb[0].mxu0
        %v5528 = vadd.f32 %v5467, %v5527
        %5529 = vmatprep.mubr.bf16.mxu0 %v4092
        %5530 = vmatmul.mubr.bf16.gmra.mrb[0].mxu0 %v4091
        %v5531 = vpop.f32.mrb[0].mxu0
        %v5532 = vadd.f32 %v5471, %v5531
        %v5533 = vpop.f32.mrb[0].mxu0
        %v5534 = vadd.f32 %v5473, %v5533
        %v5535 = vpop.f32.mrb[0].mxu0
        %v5536 = vpop.f32.mrb[0].mxu0
        %5537 = vdwg.mxu0
        %5538 = vmatprep.subr.bf16.mxu0 %v5225
        %5539 = vmatpush1.bf16.msra.mxu0 %v5224
        %5540 = vmatprep.subr.bf16.mxu0 %v5229
        %5541 = vmatpush1.bf16.msra.mxu0 %v5228
        %5542 = vmatprep.subr.bf16.mxu0 %v5233
        %5543 = vmatpush1.bf16.msra.mxu0 %v5232
        %5544 = vmatprep.subr.bf16.mxu0 %v5237
        %5545 = vmatpush1.bf16.msra.mxu0 %v5236
        %5546 = vmatprep.subr.bf16.mxu0 %v5241
        %5547 = vmatpush1.bf16.msra.mxu0 %v5240
        %5548 = vmatprep.subr.bf16.mxu0 %v5245
        %5549 = vmatpush1.bf16.msra.mxu0 %v5244
        %5550 = vmatprep.subr.bf16.mxu0 %v5249
        %5551 = vmatpush1.bf16.msra.mxu0 %v5248
        %5552 = vmatprep.subr.bf16.mxu0 %v5253
        %5553 = vmatpush1.bf16.msra.mxu0 %v5252
        %5554 = vmatprep.subr.bf16.mxu0 0
        %5555 = vmatpush1.bf16.msra.mxu0 0
        %5556 = vmatprep.subr.bf16.mxu0 0
        %5557 = vmatpush1.bf16.msra.mxu0 0
        %5558 = vmatprep.subr.bf16.mxu0 0
        %5559 = vmatpush1.bf16.msra.mxu0 0
        %5560 = vmatprep.subr.bf16.mxu0 0
        %5561 = vmatpush1.bf16.msra.mxu0 0
        %5562 = vmatprep.subr.bf16.mxu0 0
        %5563 = vmatpush1.bf16.msra.mxu0 0
        %5564 = vmatprep.subr.bf16.mxu0 0
        %5565 = vmatpush1.bf16.msra.mxu0 0
        %5566 = vmatprep.subr.bf16.mxu0 0
        %5567 = vmatpush1.bf16.msra.mxu0 0
        %5568 = vmatprep.subr.bf16.mxu0 0
        %5569 = vmatpush1.bf16.msra.mxu0 0
        %5570 = vmatprep.mubr.bf16.mxu0 0
        %5571 = vmatmul.mubr.bf16.gmra.mrb[0].mxu0 %v4083
        %v5572 = vpop.f32.mrb[0].mxu0
        %v5573 = vadd.f32 %v5512, %v5572
        %v5574 = vpop.f32.mrb[0].mxu0
        %v5575 = vadd.f32 %v5514, %v5574
        %v5576 = vpop.f32.mrb[0].mxu0
        %v5577 = vadd.f32 %v5516, %v5576
        %v5578 = vpop.f32.mrb[0].mxu0
        %v5579 = vadd.f32 %v5518, %v5578
        %5580 = vmatprep.mubr.bf16.mxu0 0
        %5581 = vmatmul.mubr.bf16.gmra.mrb[0].mxu0 %v4088
        %v5582 = vpop.f32.mrb[0].mxu0
        %v5583 = vadd.f32 %v5522, %v5582
        %v5584 = vpop.f32.mrb[0].mxu0
        %v5585 = vadd.f32 %v5524, %v5584
        %v5586 = vpop.f32.mrb[0].mxu0
        %v5587 = vadd.f32 %v5526, %v5586
        %v5588 = vpop.f32.mrb[0].mxu0
        %v5589 = vadd.f32 %v5528, %v5588
        %5590 = vmatprep.mubr.bf16.mxu0 0
        %5591 = vmatmul.mubr.bf16.gmra.mrb[0].mxu0 %v4093
        %v5592 = vpop.f32.mrb[0].mxu0
        %v5593 = vadd.f32 %v5532, %v5592
        %v5594 = vpop.f32.mrb[0].mxu0
        %v5595 = vadd.f32 %v5534, %v5594
        %v5596 = vpop.f32.mrb[0].mxu0
        %v5597 = vpop.f32.mrb[0].mxu0
        %5598 = vdwg.mxu0
        %5599 = vmatprep.subr.bf16.mxu0 %v5099
        %5600 = vmatpush1.bf16.msra.mxu0 %v5098
        %5601 = vmatprep.subr.bf16.mxu0 %v5103
        %5602 = vmatpush1.bf16.msra.mxu0 %v5102
        %5603 = vmatprep.subr.bf16.mxu0 %v5107
        %5604 = vmatpush1.bf16.msra.mxu0 %v5106
        %5605 = vmatprep.subr.bf16.mxu0 %v5111
        %5606 = vmatpush1.bf16.msra.mxu0 %v5110
        %5607 = vmatprep.subr.bf16.mxu0 %v5115
        %5608 = vmatpush1.bf16.msra.mxu0 %v5114
        %5609 = vmatprep.subr.bf16.mxu0 %v5119
        %5610 = vmatpush1.bf16.msra.mxu0 %v5118
        %5611 = vmatprep.subr.bf16.mxu0 %v5123
        %5612 = vmatpush1.bf16.msra.mxu0 %v5122
        %5613 = vmatprep.subr.bf16.mxu0 %v5127
        %5614 = vmatpush1.bf16.msra.mxu0 %v5126
        %5615 = vmatprep.subr.bf16.mxu0 %v5131
        %5616 = vmatpush1.bf16.msra.mxu0 %v5130
        %5617 = vmatprep.subr.bf16.mxu0 %v5135
        %5618 = vmatpush1.bf16.msra.mxu0 %v5134
        %5619 = vmatprep.subr.bf16.mxu0 %v5139
        %5620 = vmatpush1.bf16.msra.mxu0 %v5138
        %5621 = vmatprep.subr.bf16.mxu0 %v5143
        %5622 = vmatpush1.bf16.msra.mxu0 %v5142
        %5623 = vmatprep.subr.bf16.mxu0 %v5147
        %5624 = vmatpush1.bf16.msra.mxu0 %v5146
        %5625 = vmatprep.subr.bf16.mxu0 %v5151
        %5626 = vmatpush1.bf16.msra.mxu0 %v5150
        %5627 = vmatprep.subr.bf16.mxu0 %v5155
        %5628 = vmatpush1.bf16.msra.mxu0 %v5154
        %5629 = vmatprep.subr.bf16.mxu0 %v5159
        %5630 = vmatpush1.bf16.msra.mxu0 %v5158
        %5631 = vmatprep.mubr.bf16.mxu0 %v4080
        %5632 = vmatmul.mubr.bf16.gmra.mrb[0].mxu0 %v4079
        %v5633 = vpop.f32.mrb[0].mxu0
        %v5634 = vadd.f32 0.0, %v5633
        %v5635 = vpop.f32.mrb[0].mxu0
        %v5636 = vadd.f32 0.0, %v5635
        %v5637 = vpop.f32.mrb[0].mxu0
        %v5638 = vadd.f32 0.0, %v5637
        %v5639 = vpop.f32.mrb[0].mxu0
        %v5640 = vadd.f32 0.0, %v5639
        %5641 = vmatprep.mubr.bf16.mxu0 %v4085
        %5642 = vmatmul.mubr.bf16.gmra.mrb[0].mxu0 %v4084
        %v5643 = vpop.f32.mrb[0].mxu0
        %v5644 = vadd.f32 0.0, %v5643
        %v5645 = vpop.f32.mrb[0].mxu0
        %v5646 = vadd.f32 0.0, %v5645
        %v5647 = vpop.f32.mrb[0].mxu0
        %v5648 = vadd.f32 0.0, %v5647
        %v5649 = vpop.f32.mrb[0].mxu0
        %v5650 = vadd.f32 0.0, %v5649
        %5651 = vmatprep.mubr.bf16.mxu0 %v4090
        %5652 = vmatmul.mubr.bf16.gmra.mrb[0].mxu0 %v4089
        %v5653 = vpop.f32.mrb[0].mxu0
        %v5654 = vadd.f32 0.0, %v5653
        %v5655 = vpop.f32.mrb[0].mxu0
        %v5656 = vadd.f32 0.0, %v5655
        %v5657 = vpop.f32.mrb[0].mxu0
        %v5658 = vpop.f32.mrb[0].mxu0
        %5659 = vdwg.mxu0
        %5660 = vmatprep.subr.bf16.mxu0 %v5163
        %5661 = vmatpush1.bf16.msra.mxu0 %v5162
        %5662 = vmatprep.subr.bf16.mxu0 %v5167
        %5663 = vmatpush1.bf16.msra.mxu0 %v5166
        %5664 = vmatprep.subr.bf16.mxu0 %v5171
        %5665 = vmatpush1.bf16.msra.mxu0 %v5170
        %5666 = vmatprep.subr.bf16.mxu0 %v5175
        %5667 = vmatpush1.bf16.msra.mxu0 %v5174
        %5668 = vmatprep.subr.bf16.mxu0 %v5179
        %5669 = vmatpush1.bf16.msra.mxu0 %v5178
        %5670 = vmatprep.subr.bf16.mxu0 %v5183
        %5671 = vmatpush1.bf16.msra.mxu0 %v5182
        %5672 = vmatprep.subr.bf16.mxu0 %v5187
        %5673 = vmatpush1.bf16.msra.mxu0 %v5186
        %5674 = vmatprep.subr.bf16.mxu0 %v5191
        %5675 = vmatpush1.bf16.msra.mxu0 %v5190
        %5676 = vmatprep.subr.bf16.mxu0 %v5195
        %5677 = vmatpush1.bf16.msra.mxu0 %v5194
        %5678 = vmatprep.subr.bf16.mxu0 %v5199
        %5679 = vmatpush1.bf16.msra.mxu0 %v5198
        %5680 = vmatprep.subr.bf16.mxu0 %v5203
        %5681 = vmatpush1.bf16.msra.mxu0 %v5202
        %5682 = vmatprep.subr.bf16.mxu0 %v5207
        %5683 = vmatpush1.bf16.msra.mxu0 %v5206
        %5684 = vmatprep.subr.bf16.mxu0 %v5211
        %5685 = vmatpush1.bf16.msra.mxu0 %v5210
        %5686 = vmatprep.subr.bf16.mxu0 %v5215
        %5687 = vmatpush1.bf16.msra.mxu0 %v5214
        %5688 = vmatprep.subr.bf16.mxu0 %v5219
        %5689 = vmatpush1.bf16.msra.mxu0 %v5218
        %5690 = vmatprep.subr.bf16.mxu0 %v5223
        %5691 = vmatpush1.bf16.msra.mxu0 %v5222
        %5692 = vmatprep.mubr.bf16.mxu0 %v4082
        %5693 = vmatmul.mubr.bf16.gmra.mrb[0].mxu0 %v4081
        %v5694 = vpop.f32.mrb[0].mxu0
        %v5695 = vadd.f32 %v5634, %v5694
        %v5696 = vpop.f32.mrb[0].mxu0
        %v5697 = vadd.f32 %v5636, %v5696
        %v5698 = vpop.f32.mrb[0].mxu0
        %v5699 = vadd.f32 %v5638, %v5698
        %v5700 = vpop.f32.mrb[0].mxu0
        %v5701 = vadd.f32 %v5640, %v5700
        %5702 = vmatprep.mubr.bf16.mxu0 %v4087
        %5703 = vmatmul.mubr.bf16.gmra.mrb[0].mxu0 %v4086
        %v5704 = vpop.f32.mrb[0].mxu0
        %v5705 = vadd.f32 %v5644, %v5704
        %v5706 = vpop.f32.mrb[0].mxu0
        %v5707 = vadd.f32 %v5646, %v5706
        %v5708 = vpop.f32.mrb[0].mxu0
        %v5709 = vadd.f32 %v5648, %v5708
        %v5710 = vpop.f32.mrb[0].mxu0
        %v5711 = vadd.f32 %v5650, %v5710
        %5712 = vmatprep.mubr.bf16.mxu0 %v4092
        %5713 = vmatmul.mubr.bf16.gmra.mrb[0].mxu0 %v4091
        %v5714 = vpop.f32.mrb[0].mxu0
        %v5715 = vadd.f32 %v5654, %v5714
        %v5716 = vpop.f32.mrb[0].mxu0
        %v5717 = vadd.f32 %v5656, %v5716
        %v5718 = vpop.f32.mrb[0].mxu0
        %v5719 = vpop.f32.mrb[0].mxu0
        %5720 = vdwg.mxu0
        %5721 = vmatprep.subr.bf16.mxu0 %v5227
        %5722 = vmatpush1.bf16.msra.mxu0 %v5226
        %5723 = vmatprep.subr.bf16.mxu0 %v5231
        %5724 = vmatpush1.bf16.msra.mxu0 %v5230
        %5725 = vmatprep.subr.bf16.mxu0 %v5235
        %5726 = vmatpush1.bf16.msra.mxu0 %v5234
        %5727 = vmatprep.subr.bf16.mxu0 %v5239
        %5728 = vmatpush1.bf16.msra.mxu0 %v5238
        %5729 = vmatprep.subr.bf16.mxu0 %v5243
        %5730 = vmatpush1.bf16.msra.mxu0 %v5242
        %5731 = vmatprep.subr.bf16.mxu0 %v5247
        %5732 = vmatpush1.bf16.msra.mxu0 %v5246
        %5733 = vmatprep.subr.bf16.mxu0 %v5251
        %5734 = vmatpush1.bf16.msra.mxu0 %v5250
        %5735 = vmatprep.subr.bf16.mxu0 %v5255
        %5736 = vmatpush1.bf16.msra.mxu0 %v5254
        %5737 = vmatprep.subr.bf16.mxu0 0
        %5738 = vmatpush1.bf16.msra.mxu0 0
        %5739 = vmatprep.subr.bf16.mxu0 0
        %5740 = vmatpush1.bf16.msra.mxu0 0
        %5741 = vmatprep.subr.bf16.mxu0 0
        %5742 = vmatpush1.bf16.msra.mxu0 0
        %5743 = vmatprep.subr.bf16.mxu0 0
        %5744 = vmatpush1.bf16.msra.mxu0 0
        %5745 = vmatprep.subr.bf16.mxu0 0
        %5746 = vmatpush1.bf16.msra.mxu0 0
        %5747 = vmatprep.subr.bf16.mxu0 0
        %5748 = vmatpush1.bf16.msra.mxu0 0
        %5749 = vmatprep.subr.bf16.mxu0 0
        %5750 = vmatpush1.bf16.msra.mxu0 0
        %5751 = vmatprep.subr.bf16.mxu0 0
        %5752 = vmatpush1.bf16.msra.mxu0 0
        %5753 = vmatprep.mubr.bf16.mxu0 0
        %5754 = vmatmul.mubr.bf16.gmra.mrb[0].mxu0 %v4083
        %v5755 = vpop.f32.mrb[0].mxu0
        %v5756 = vadd.f32 %v5695, %v5755
        %v5757 = vpop.f32.mrb[0].mxu0
        %v5758 = vadd.f32 %v5697, %v5757
        %v5759 = vpop.f32.mrb[0].mxu0
        %v5760 = vadd.f32 %v5699, %v5759
        %v5761 = vpop.f32.mrb[0].mxu0
        %v5762 = vadd.f32 %v5701, %v5761
        %5763 = vmatprep.mubr.bf16.mxu0 0
        %5764 = vmatmul.mubr.bf16.gmra.mrb[0].mxu0 %v4088
        %v5765 = vpop.f32.mrb[0].mxu0
        %v5766 = vadd.f32 %v5705, %v5765
        %v5767 = vpop.f32.mrb[0].mxu0
        %v5768 = vadd.f32 %v5707, %v5767
        %v5769 = vpop.f32.mrb[0].mxu0
        %v5770 = vadd.f32 %v5709, %v5769
        %v5771 = vpop.f32.mrb[0].mxu0
        %v5772 = vadd.f32 %v5711, %v5771
        %5773 = vmatprep.mubr.bf16.mxu0 0
        %5774 = vmatmul.mubr.bf16.gmra.mrb[0].mxu0 %v4093
        %v5775 = vpop.f32.mrb[0].mxu0
        %v5776 = vadd.f32 %v5715, %v5775
        %v5777 = vpop.f32.mrb[0].mxu0
        %v5778 = vadd.f32 %v5717, %v5777
        %v5779 = vpop.f32.mrb[0].mxu0
        %v5780 = vpop.f32.mrb[0].mxu0
        %5781 = vdwg.mxu0
        %v5942 = vunpack.c.l.b16 %v4134
        %v5943 = vunpack.c.h.b16 %v4134
        %v5944 = vunpack.c.l.b16 %v4135
        %v5945 = vunpack.c.h.b16 %v4135
        %v5946 = vunpack.c.l.b16 %v4136
        %v5947 = vunpack.c.h.b16 %v4136
        %v5948 = vunpack.c.l.b16 %v4137
        %v5949 = vunpack.c.h.b16 %v4137
        %v5950 = vunpack.c.l.b16 %v4138
        %v5951 = vunpack.c.h.b16 %v4138
        %v5952 = vunpack.c.l.b16 %v4139
        %v5953 = vunpack.c.h.b16 %v4139
        %v5954 = vunpack.c.l.b16 %v4140
        %v5955 = vunpack.c.h.b16 %v4140
        %v5956 = vunpack.c.l.b16 %v4141
        %v5957 = vunpack.c.h.b16 %v4141
        %v5958 = vunpack.c.l.b16 %v4142
        %v5959 = vunpack.c.h.b16 %v4142
        %v5960 = vunpack.c.l.b16 %v4143
        %v5961 = vunpack.c.h.b16 %v4143
        %v5962 = vunpack.c.l.b16 %v4144
        %v5963 = vunpack.c.h.b16 %v4144
        %v5964 = vunpack.c.l.b16 %v4145
        %v5965 = vunpack.c.h.b16 %v4145
        %v5966 = vunpack.c.l.b16 %v4146
        %v5967 = vunpack.c.h.b16 %v4146
        %v5968 = vunpack.c.l.b16 %v4147
        %v5969 = vunpack.c.h.b16 %v4147
        %v5970 = vunpack.c.l.b16 %v4148
        %v5971 = vunpack.c.h.b16 %v4148
        %v5972 = vunpack.c.l.b16 %v4149
        %v5973 = vunpack.c.h.b16 %v4149
        %v5974 = vunpack.c.l.b16 %v4150
        %v5975 = vunpack.c.h.b16 %v4150
        %v5976 = vunpack.c.l.b16 %v4151
        %v5977 = vunpack.c.h.b16 %v4151
        %v5978 = vunpack.c.l.b16 %v4152
        %v5979 = vunpack.c.h.b16 %v4152
        %v5980 = vunpack.c.l.b16 %v4153
        %v5981 = vunpack.c.h.b16 %v4153
        %v5982 = vunpack.c.l.b16 %v4154
        %v5983 = vunpack.c.h.b16 %v4154
        %v5984 = vunpack.c.l.b16 %v4155
        %v5985 = vunpack.c.h.b16 %v4155
        %v5986 = vunpack.c.l.b16 %v4156
        %v5987 = vunpack.c.h.b16 %v4156
        %v5988 = vunpack.c.l.b16 %v4157
        %v5989 = vunpack.c.h.b16 %v4157
        %v5990 = vunpack.c.l.b16 %v4158
        %v5991 = vunpack.c.h.b16 %v4158
        %v5992 = vunpack.c.l.b16 %v4159
        %v5993 = vunpack.c.h.b16 %v4159
        %v5994 = vunpack.c.l.b16 %v4160
        %v5995 = vunpack.c.h.b16 %v4160
        %v5996 = vunpack.c.l.b16 %v4161
        %v5997 = vunpack.c.h.b16 %v4161
        %v5998 = vunpack.c.l.b16 %v4162
        %v5999 = vunpack.c.h.b16 %v4162
        %v6000 = vunpack.c.l.b16 %v4163
        %v6001 = vunpack.c.h.b16 %v4163
        %v6002 = vunpack.c.l.b16 %v4164
        %v6003 = vunpack.c.h.b16 %v4164
        %v6004 = vunpack.c.l.b16 %v4165
        %v6005 = vunpack.c.h.b16 %v4165
        %v6006 = vunpack.c.l.b16 %v4166
        %v6007 = vunpack.c.h.b16 %v4166
        %v6008 = vunpack.c.l.b16 %v4167
        %v6009 = vunpack.c.h.b16 %v4167
        %v6010 = vunpack.c.l.b16 %v4168
        %v6011 = vunpack.c.h.b16 %v4168
        %v6012 = vunpack.c.l.b16 %v4169
        %v6013 = vunpack.c.h.b16 %v4169
        %v6014 = vunpack.c.l.b16 %v4170
        %v6015 = vunpack.c.h.b16 %v4170
        %v6016 = vunpack.c.l.b16 %v4171
        %v6017 = vunpack.c.h.b16 %v4171
        %v6018 = vunpack.c.l.b16 %v4172
        %v6019 = vunpack.c.h.b16 %v4172
        %v6020 = vunpack.c.l.b16 %v4173
        %v6021 = vunpack.c.h.b16 %v4173
        %v6022 = vunpack.c.l.b16 %v4174
        %v6023 = vunpack.c.h.b16 %v4174
        %v6024 = vunpack.c.l.b16 %v4175
        %v6025 = vunpack.c.h.b16 %v4175
        %v6026 = vunpack.c.l.b16 %v4176
        %v6027 = vunpack.c.h.b16 %v4176
        %v6028 = vunpack.c.l.b16 %v4177
        %v6029 = vunpack.c.h.b16 %v4177
        %v6030 = vunpack.c.l.b16 %v4178
        %v6031 = vunpack.c.h.b16 %v4178
        %v6032 = vunpack.c.l.b16 %v4179
        %v6033 = vunpack.c.h.b16 %v4179
        %v6034 = vunpack.c.l.b16 %v4180
        %v6035 = vunpack.c.h.b16 %v4180
        %v6036 = vunpack.c.l.b16 %v4181
        %v6037 = vunpack.c.h.b16 %v4181
        %v6038 = vunpack.c.l.b16 %v4182
        %v6039 = vunpack.c.h.b16 %v4182
        %v6040 = vunpack.c.l.b16 %v4183
        %v6041 = vunpack.c.h.b16 %v4183
        %v6042 = vunpack.c.l.b16 %v4184
        %v6043 = vunpack.c.h.b16 %v4184
        %v6044 = vunpack.c.l.b16 %v4185
        %v6045 = vunpack.c.h.b16 %v4185
        %v6046 = vunpack.c.l.b16 %v4186
        %v6047 = vunpack.c.h.b16 %v4186
        %v6048 = vunpack.c.l.b16 %v4187
        %v6049 = vunpack.c.h.b16 %v4187
        %v6050 = vunpack.c.l.b16 %v4188
        %v6051 = vunpack.c.h.b16 %v4188
        %v6052 = vunpack.c.l.b16 %v4189
        %v6053 = vunpack.c.h.b16 %v4189
        %v6054 = vunpack.c.l.b16 %v4190
        %v6055 = vunpack.c.h.b16 %v4190
        %v6056 = vunpack.c.l.b16 %v4191
        %v6057 = vunpack.c.h.b16 %v4191
        %v6058 = vunpack.c.l.b16 %v4192
        %v6059 = vunpack.c.h.b16 %v4192
        %v6060 = vunpack.c.l.b16 %v4193
        %v6061 = vunpack.c.h.b16 %v4193
        %v6062 = vunpack.c.l.b16 %v4194
        %v6063 = vunpack.c.h.b16 %v4194
        %v6064 = vunpack.c.l.b16 %v4195
        %v6065 = vunpack.c.h.b16 %v4195
        %v6066 = vunpack.c.l.b16 %v4196
        %v6067 = vunpack.c.h.b16 %v4196
        %v6068 = vunpack.c.l.b16 %v4197
        %v6069 = vunpack.c.h.b16 %v4197
        %v6070 = vunpack.c.l.b16 %v4198
        %v6071 = vunpack.c.h.b16 %v4198
        %v6072 = vunpack.c.l.b16 %v4199
        %v6073 = vunpack.c.h.b16 %v4199
        %v6074 = vunpack.c.l.b16 %v4200
        %v6075 = vunpack.c.h.b16 %v4200
        %v6076 = vunpack.c.l.b16 %v4201
        %v6077 = vunpack.c.h.b16 %v4201
        %v6078 = vunpack.c.l.b16 %v4202
        %v6079 = vunpack.c.h.b16 %v4202
        %v6080 = vunpack.c.l.b16 %v4203
        %v6081 = vunpack.c.h.b16 %v4203
        %v6082 = vunpack.c.l.b16 %v4204
        %v6083 = vunpack.c.h.b16 %v4204
        %v6084 = vunpack.c.l.b16 %v4205
        %v6085 = vunpack.c.h.b16 %v4205
        %v6086 = vunpack.c.l.b16 %v4206
        %v6087 = vunpack.c.h.b16 %v4206
        %v6088 = vunpack.c.l.b16 %v4207
        %v6089 = vunpack.c.h.b16 %v4207
        %v6090 = vunpack.c.l.b16 %v4208
        %v6091 = vunpack.c.h.b16 %v4208
        %v6092 = vunpack.c.l.b16 %v4209
        %v6093 = vunpack.c.h.b16 %v4209
        %v6094 = vunpack.c.l.b16 %v4210
        %v6095 = vunpack.c.h.b16 %v4210
        %v6096 = vunpack.c.l.b16 %v4211
        %v6097 = vunpack.c.h.b16 %v4211
        %v6098 = vunpack.c.l.b16 %v4212
        %v6099 = vunpack.c.h.b16 %v4212
        %v6100 = vunpack.c.l.b16 %v4213
        %v6101 = vunpack.c.h.b16 %v4213
        %v6102 = vunpack.c.l.b16 %v4214
        %v6103 = vunpack.c.h.b16 %v4214
        %v6104 = vunpack.c.l.b16 %v4215
        %v6105 = vunpack.c.h.b16 %v4215
        %v6106 = vunpack.c.l.b16 %v4216
        %v6107 = vunpack.c.h.b16 %v4216
        %v6108 = vunpack.c.l.b16 %v4217
        %v6109 = vunpack.c.h.b16 %v4217
        %v6110 = vunpack.c.l.b16 %v4218
        %v6111 = vunpack.c.h.b16 %v4218
        %v6112 = vunpack.c.l.b16 %v4219
        %v6113 = vunpack.c.h.b16 %v4219
        %v6114 = vunpack.c.l.b16 %v4220
        %v6115 = vunpack.c.h.b16 %v4220
        %v6116 = vunpack.c.l.b16 %v4221
        %v6117 = vunpack.c.h.b16 %v4221
        %v6118 = vunpack.c.l.b16 %v4222
        %v6119 = vunpack.c.h.b16 %v4222
        %v6120 = vunpack.c.l.b16 %v4223
        %v6121 = vunpack.c.h.b16 %v4223
        %v6122 = vunpack.c.l.b16 %v4224
        %v6123 = vunpack.c.h.b16 %v4224
        %v6124 = vunpack.c.l.b16 %v4225
        %v6125 = vunpack.c.h.b16 %v4225
        %v6126 = vunpack.c.l.b16 %v4226
        %v6127 = vunpack.c.h.b16 %v4226
        %v6128 = vunpack.c.l.b16 %v4227
        %v6129 = vunpack.c.h.b16 %v4227
        %v6130 = vunpack.c.l.b16 %v4228
        %v6131 = vunpack.c.h.b16 %v4228
        %v6132 = vunpack.c.l.b16 %v4229
        %v6133 = vunpack.c.h.b16 %v4229
        %v6134 = vunpack.c.l.b16 %v4230
        %v6135 = vunpack.c.h.b16 %v4230
        %v6136 = vunpack.c.l.b16 %v4231
        %v6137 = vunpack.c.h.b16 %v4231
        %v6138 = vunpack.c.l.b16 %v4232
        %v6139 = vunpack.c.h.b16 %v4232
        %v6140 = vunpack.c.l.b16 %v4233
        %v6141 = vunpack.c.h.b16 %v4233
        %v6142 = vunpack.c.l.b16 %v4234
        %v6143 = vunpack.c.h.b16 %v4234
        %v6144 = vunpack.c.l.b16 %v4235
        %v6145 = vunpack.c.h.b16 %v4235
        %v6146 = vunpack.c.l.b16 %v4236
        %v6147 = vunpack.c.h.b16 %v4236
        %v6148 = vunpack.c.l.b16 %v4237
        %v6149 = vunpack.c.h.b16 %v4237
        %v6150 = vunpack.c.l.b16 %v4238
        %v6151 = vunpack.c.h.b16 %v4238
        %v6152 = vunpack.c.l.b16 %v4239
        %v6153 = vunpack.c.h.b16 %v4239
        %v6154 = vunpack.c.l.b16 %v4240
        %v6155 = vunpack.c.h.b16 %v4240
        %v6156 = vunpack.c.l.b16 %v4241
        %v6157 = vunpack.c.h.b16 %v4241
        %v6158 = vunpack.c.l.b16 %v4242
        %v6159 = vunpack.c.h.b16 %v4242
        %v6160 = vunpack.c.l.b16 %v4243
        %v6161 = vunpack.c.h.b16 %v4243
        %v6162 = vunpack.c.l.b16 %v4244
        %v6163 = vunpack.c.h.b16 %v4244
        %v6164 = vunpack.c.l.b16 %v4245
        %v6165 = vunpack.c.h.b16 %v4245
        %v6166 = vunpack.c.l.b16 %v4246
        %v6167 = vunpack.c.h.b16 %v4246
        %v6168 = vunpack.c.l.b16 %v4247
        %v6169 = vunpack.c.h.b16 %v4247
        %v6170 = vunpack.c.l.b16 %v4248
        %v6171 = vunpack.c.h.b16 %v4248
        %v6172 = vunpack.c.l.b16 %v4249
        %v6173 = vunpack.c.h.b16 %v4249
        %v6174 = vunpack.c.l.b16 %v4250
        %v6175 = vunpack.c.h.b16 %v4250
        %v6176 = vunpack.c.l.b16 %v4251
        %v6177 = vunpack.c.h.b16 %v4251
        %v6178 = vunpack.c.l.b16 %v4252
        %v6179 = vunpack.c.h.b16 %v4252
        %v6180 = vunpack.c.l.b16 %v4253
        %v6181 = vunpack.c.h.b16 %v4253
        %v6182 = vunpack.c.l.b16 %v4254
        %v6183 = vunpack.c.h.b16 %v4254
        %v6184 = vunpack.c.l.b16 %v4255
        %v6185 = vunpack.c.h.b16 %v4255
        %v6186 = vunpack.c.l.b16 %v4256
        %v6187 = vunpack.c.h.b16 %v4256
        %v6188 = vunpack.c.l.b16 %v4257
        %v6189 = vunpack.c.h.b16 %v4257
        %v6190 = vunpack.c.l.b16 %v4258
        %v6191 = vunpack.c.h.b16 %v4258
        %v6192 = vunpack.c.l.b16 %v4259
        %v6193 = vunpack.c.h.b16 %v4259
        %v6194 = vunpack.c.l.b16 %v4260
        %v6195 = vunpack.c.h.b16 %v4260
        %v6196 = vunpack.c.l.b16 %v4261
        %v6197 = vunpack.c.h.b16 %v4261
        %v6198 = vunpack.c.l.b16 %v4262
        %v6199 = vunpack.c.h.b16 %v4262
        %v6200 = vunpack.c.l.b16 %v4263
        %v6201 = vunpack.c.h.b16 %v4263
        %v6202 = vunpack.c.l.b16 %v4264
        %v6203 = vunpack.c.h.b16 %v4264
        %v6204 = vunpack.c.l.b16 %v4265
        %v6205 = vunpack.c.h.b16 %v4265
        %v6206 = vunpack.c.l.b16 %v4266
        %v6207 = vunpack.c.h.b16 %v4266
        %v6208 = vunpack.c.l.b16 %v4267
        %v6209 = vunpack.c.h.b16 %v4267
        %v6210 = vunpack.c.l.b16 %v4268
        %v6211 = vunpack.c.h.b16 %v4268
        %v6212 = vunpack.c.l.b16 %v4269
        %v6213 = vunpack.c.h.b16 %v4269
        %v6214 = vunpack.c.l.b16 %v4270
        %v6215 = vunpack.c.h.b16 %v4270
        %v6216 = vunpack.c.l.b16 %v4271
        %v6217 = vunpack.c.h.b16 %v4271
        %v6218 = vunpack.c.l.b16 %v4272
        %v6219 = vunpack.c.h.b16 %v4272
        %v6220 = vunpack.c.l.b16 %v4273
        %v6221 = vunpack.c.h.b16 %v4273
        %v6222 = vunpack.c.l.b16 %v4274
        %v6223 = vunpack.c.h.b16 %v4274
        %v6224 = vunpack.c.l.b16 %v4275
        %v6225 = vunpack.c.h.b16 %v4275
        %v6226 = vunpack.c.l.b16 %v4276
        %v6227 = vunpack.c.h.b16 %v4276
        %v6228 = vunpack.c.l.b16 %v4277
        %v6229 = vunpack.c.h.b16 %v4277
        %v6230 = vunpack.c.l.b16 %v4278
        %v6231 = vunpack.c.h.b16 %v4278
        %v6232 = vunpack.c.l.b16 %v4279
        %v6233 = vunpack.c.h.b16 %v4279
        %v6234 = vunpack.c.l.b16 %v4280
        %v6235 = vunpack.c.h.b16 %v4280
        %v6236 = vunpack.c.l.b16 %v4281
        %v6237 = vunpack.c.h.b16 %v4281
        %v6238 = vunpack.c.l.b16 %v4282
        %v6239 = vunpack.c.h.b16 %v4282
        %v6240 = vunpack.c.l.b16 %v4283
        %v6241 = vunpack.c.h.b16 %v4283
        %v6242 = vunpack.c.l.b16 %v4284
        %v6243 = vunpack.c.h.b16 %v4284
        %v6244 = vunpack.c.l.b16 %v4285
        %v6245 = vunpack.c.h.b16 %v4285
        %v6246 = vunpack.c.l.b16 %v4286
        %v6247 = vunpack.c.h.b16 %v4286
        %v6248 = vunpack.c.l.b16 %v4287
        %v6249 = vunpack.c.h.b16 %v4287
        %v6250 = vunpack.c.l.b16 %v4288
        %v6251 = vunpack.c.h.b16 %v4288
        %v6252 = vunpack.c.l.b16 %v4289
        %v6253 = vunpack.c.h.b16 %v4289
        %v6254 = vunpack.c.l.b16 %v4290
        %v6255 = vunpack.c.h.b16 %v4290
        %v6256 = vunpack.c.l.b16 %v4291
        %v6257 = vunpack.c.h.b16 %v4291
        %v6258 = vunpack.c.l.b16 %v4292
        %v6259 = vunpack.c.h.b16 %v4292
        %v6260 = vunpack.c.l.b16 %v4293
        %v6261 = vunpack.c.h.b16 %v4293
        %v6262 = vpack.c.b16 %v5946, %v5942
        %v6263 = vpack.c.b16 %v5947, %v5943
        %v6264 = vpack.c.b16 %v5948, %v5944
        %v6265 = vpack.c.b16 %v5949, %v5945
        %v6266 = vpack.c.b16 %v5954, %v5950
        %v6267 = vpack.c.b16 %v5955, %v5951
        %v6268 = vpack.c.b16 %v5956, %v5952
        %v6269 = vpack.c.b16 %v5957, %v5953
        %v6270 = vpack.c.b16 %v5962, %v5958
        %v6271 = vpack.c.b16 %v5963, %v5959
        %v6272 = vpack.c.b16 %v5964, %v5960
        %v6273 = vpack.c.b16 %v5965, %v5961
        %v6274 = vpack.c.b16 %v5970, %v5966
        %v6275 = vpack.c.b16 %v5971, %v5967
        %v6276 = vpack.c.b16 %v5972, %v5968
        %v6277 = vpack.c.b16 %v5973, %v5969
        %v6278 = vpack.c.b16 %v5978, %v5974
        %v6279 = vpack.c.b16 %v5979, %v5975
        %v6280 = vpack.c.b16 %v5980, %v5976
        %v6281 = vpack.c.b16 %v5981, %v5977
        %v6282 = vpack.c.b16 %v5986, %v5982
        %v6283 = vpack.c.b16 %v5987, %v5983
        %v6284 = vpack.c.b16 %v5988, %v5984
        %v6285 = vpack.c.b16 %v5989, %v5985
        %v6286 = vpack.c.b16 %v5994, %v5990
        %v6287 = vpack.c.b16 %v5995, %v5991
        %v6288 = vpack.c.b16 %v5996, %v5992
        %v6289 = vpack.c.b16 %v5997, %v5993
        %v6290 = vpack.c.b16 %v6002, %v5998
        %v6291 = vpack.c.b16 %v6003, %v5999
        %v6292 = vpack.c.b16 %v6004, %v6000
        %v6293 = vpack.c.b16 %v6005, %v6001
        %v6294 = vpack.c.b16 %v6010, %v6006
        %v6295 = vpack.c.b16 %v6011, %v6007
        %v6296 = vpack.c.b16 %v6012, %v6008
        %v6297 = vpack.c.b16 %v6013, %v6009
        %v6298 = vpack.c.b16 %v6018, %v6014
        %v6299 = vpack.c.b16 %v6019, %v6015
        %v6300 = vpack.c.b16 %v6020, %v6016
        %v6301 = vpack.c.b16 %v6021, %v6017
        %v6302 = vpack.c.b16 %v6026, %v6022
        %v6303 = vpack.c.b16 %v6027, %v6023
        %v6304 = vpack.c.b16 %v6028, %v6024
        %v6305 = vpack.c.b16 %v6029, %v6025
        %v6306 = vpack.c.b16 %v6034, %v6030
        %v6307 = vpack.c.b16 %v6035, %v6031
        %v6308 = vpack.c.b16 %v6036, %v6032
        %v6309 = vpack.c.b16 %v6037, %v6033
        %v6310 = vpack.c.b16 %v6042, %v6038
        %v6311 = vpack.c.b16 %v6043, %v6039
        %v6312 = vpack.c.b16 %v6044, %v6040
        %v6313 = vpack.c.b16 %v6045, %v6041
        %v6314 = vpack.c.b16 %v6050, %v6046
        %v6315 = vpack.c.b16 %v6051, %v6047
        %v6316 = vpack.c.b16 %v6052, %v6048
        %v6317 = vpack.c.b16 %v6053, %v6049
        %v6318 = vpack.c.b16 %v6058, %v6054
        %v6319 = vpack.c.b16 %v6059, %v6055
        %v6320 = vpack.c.b16 %v6060, %v6056
        %v6321 = vpack.c.b16 %v6061, %v6057
        %v6322 = vpack.c.b16 %v6066, %v6062
        %v6323 = vpack.c.b16 %v6067, %v6063
        %v6324 = vpack.c.b16 %v6068, %v6064
        %v6325 = vpack.c.b16 %v6069, %v6065
        %v6326 = vpack.c.b16 %v6074, %v6070
        %v6327 = vpack.c.b16 %v6075, %v6071
        %v6328 = vpack.c.b16 %v6076, %v6072
        %v6329 = vpack.c.b16 %v6077, %v6073
        %v6330 = vpack.c.b16 %v6082, %v6078
        %v6331 = vpack.c.b16 %v6083, %v6079
        %v6332 = vpack.c.b16 %v6084, %v6080
        %v6333 = vpack.c.b16 %v6085, %v6081
        %v6334 = vpack.c.b16 %v6090, %v6086
        %v6335 = vpack.c.b16 %v6091, %v6087
        %v6336 = vpack.c.b16 %v6092, %v6088
        %v6337 = vpack.c.b16 %v6093, %v6089
        %v6338 = vpack.c.b16 %v6098, %v6094
        %v6339 = vpack.c.b16 %v6099, %v6095
        %v6340 = vpack.c.b16 %v6100, %v6096
        %v6341 = vpack.c.b16 %v6101, %v6097
        %v6342 = vpack.c.b16 %v6106, %v6102
        %v6343 = vpack.c.b16 %v6107, %v6103
        %v6344 = vpack.c.b16 %v6108, %v6104
        %v6345 = vpack.c.b16 %v6109, %v6105
        %v6346 = vpack.c.b16 %v6114, %v6110
        %v6347 = vpack.c.b16 %v6115, %v6111
        %v6348 = vpack.c.b16 %v6116, %v6112
        %v6349 = vpack.c.b16 %v6117, %v6113
        %v6350 = vpack.c.b16 %v6122, %v6118
        %v6351 = vpack.c.b16 %v6123, %v6119
        %v6352 = vpack.c.b16 %v6124, %v6120
        %v6353 = vpack.c.b16 %v6125, %v6121
        %v6354 = vpack.c.b16 %v6130, %v6126
        %v6355 = vpack.c.b16 %v6131, %v6127
        %v6356 = vpack.c.b16 %v6132, %v6128
        %v6357 = vpack.c.b16 %v6133, %v6129
        %v6358 = vpack.c.b16 %v6138, %v6134
        %v6359 = vpack.c.b16 %v6139, %v6135
        %v6360 = vpack.c.b16 %v6140, %v6136
        %v6361 = vpack.c.b16 %v6141, %v6137
        %v6362 = vpack.c.b16 %v6146, %v6142
        %v6363 = vpack.c.b16 %v6147, %v6143
        %v6364 = vpack.c.b16 %v6148, %v6144
        %v6365 = vpack.c.b16 %v6149, %v6145
        %v6366 = vpack.c.b16 %v6154, %v6150
        %v6367 = vpack.c.b16 %v6155, %v6151
        %v6368 = vpack.c.b16 %v6156, %v6152
        %v6369 = vpack.c.b16 %v6157, %v6153
        %v6370 = vpack.c.b16 %v6162, %v6158
        %v6371 = vpack.c.b16 %v6163, %v6159
        %v6372 = vpack.c.b16 %v6164, %v6160
        %v6373 = vpack.c.b16 %v6165, %v6161
        %v6374 = vpack.c.b16 %v6170, %v6166
        %v6375 = vpack.c.b16 %v6171, %v6167
        %v6376 = vpack.c.b16 %v6172, %v6168
        %v6377 = vpack.c.b16 %v6173, %v6169
        %v6378 = vpack.c.b16 %v6178, %v6174
        %v6379 = vpack.c.b16 %v6179, %v6175
        %v6380 = vpack.c.b16 %v6180, %v6176
        %v6381 = vpack.c.b16 %v6181, %v6177
        %v6382 = vpack.c.b16 %v6186, %v6182
        %v6383 = vpack.c.b16 %v6187, %v6183
        %v6384 = vpack.c.b16 %v6188, %v6184
        %v6385 = vpack.c.b16 %v6189, %v6185
        %v6386 = vpack.c.b16 %v6194, %v6190
        %v6387 = vpack.c.b16 %v6195, %v6191
        %v6388 = vpack.c.b16 %v6196, %v6192
        %v6389 = vpack.c.b16 %v6197, %v6193
        %v6390 = vpack.c.b16 %v6202, %v6198
        %v6391 = vpack.c.b16 %v6203, %v6199
        %v6392 = vpack.c.b16 %v6204, %v6200
        %v6393 = vpack.c.b16 %v6205, %v6201
        %v6394 = vpack.c.b16 %v6210, %v6206
        %v6395 = vpack.c.b16 %v6211, %v6207
        %v6396 = vpack.c.b16 %v6212, %v6208
        %v6397 = vpack.c.b16 %v6213, %v6209
        %v6398 = vpack.c.b16 %v6218, %v6214
        %v6399 = vpack.c.b16 %v6219, %v6215
        %v6400 = vpack.c.b16 %v6220, %v6216
        %v6401 = vpack.c.b16 %v6221, %v6217
        %v6402 = vpack.c.b16 %v6226, %v6222
        %v6403 = vpack.c.b16 %v6227, %v6223
        %v6404 = vpack.c.b16 %v6228, %v6224
        %v6405 = vpack.c.b16 %v6229, %v6225
        %v6406 = vpack.c.b16 %v6234, %v6230
        %v6407 = vpack.c.b16 %v6235, %v6231
        %v6408 = vpack.c.b16 %v6236, %v6232
        %v6409 = vpack.c.b16 %v6237, %v6233
        %v6410 = vpack.c.b16 %v6242, %v6238
        %v6411 = vpack.c.b16 %v6243, %v6239
        %v6412 = vpack.c.b16 %v6244, %v6240
        %v6413 = vpack.c.b16 %v6245, %v6241
        %v6414 = vpack.c.b16 %v6250, %v6246
        %v6415 = vpack.c.b16 %v6251, %v6247
        %v6416 = vpack.c.b16 %v6252, %v6248
        %v6417 = vpack.c.b16 %v6253, %v6249
        %v6418 = vpack.c.b16 %v6258, %v6254
        %v6419 = vpack.c.b16 %v6259, %v6255
        %v6420 = vpack.c.b16 %v6260, %v6256
        %v6421 = vpack.c.b16 %v6261, %v6257
        %6582 = vmatprep.subr.bf16.mxu0 %v6263
        %6583 = vmatpush1.bf16.msra.mxu0 %v6262
        %6584 = vmatprep.subr.bf16.mxu0 %v6267
        %6585 = vmatpush1.bf16.msra.mxu0 %v6266
        %6586 = vmatprep.subr.bf16.mxu0 %v6271
        %6587 = vmatpush1.bf16.msra.mxu0 %v6270
        %6588 = vmatprep.subr.bf16.mxu0 %v6275
        %6589 = vmatpush1.bf16.msra.mxu0 %v6274
        %6590 = vmatprep.subr.bf16.mxu0 %v6279
        %6591 = vmatpush1.bf16.msra.mxu0 %v6278
        %6592 = vmatprep.subr.bf16.mxu0 %v6283
        %6593 = vmatpush1.bf16.msra.mxu0 %v6282
        %6594 = vmatprep.subr.bf16.mxu0 %v6287
        %6595 = vmatpush1.bf16.msra.mxu0 %v6286
        %6596 = vmatprep.subr.bf16.mxu0 %v6291
        %6597 = vmatpush1.bf16.msra.mxu0 %v6290
        %6598 = vmatprep.subr.bf16.mxu0 %v6295
        %6599 = vmatpush1.bf16.msra.mxu0 %v6294
        %6600 = vmatprep.subr.bf16.mxu0 %v6299
        %6601 = vmatpush1.bf16.msra.mxu0 %v6298
        %6602 = vmatprep.subr.bf16.mxu0 %v6303
        %6603 = vmatpush1.bf16.msra.mxu0 %v6302
        %6604 = vmatprep.subr.bf16.mxu0 %v6307
        %6605 = vmatpush1.bf16.msra.mxu0 %v6306
        %6606 = vmatprep.subr.bf16.mxu0 %v6311
        %6607 = vmatpush1.bf16.msra.mxu0 %v6310
        %6608 = vmatprep.subr.bf16.mxu0 %v6315
        %6609 = vmatpush1.bf16.msra.mxu0 %v6314
        %6610 = vmatprep.subr.bf16.mxu0 %v6319
        %6611 = vmatpush1.bf16.msra.mxu0 %v6318
        %6612 = vmatprep.subr.bf16.mxu0 %v6323
        %6613 = vmatpush1.bf16.msra.mxu0 %v6322
        %6614 = vmatprep.mubr.bf16.mxu0 %v4000
        %6615 = vmatmul.mubr.bf16.gmra.mrb[0].mxu0 %v3999
        %v6616 = vpop.f32.mrb[0].mxu0
        %v6617 = vadd.f32 %v5573, %v6616
        %v6618 = vpop.f32.mrb[0].mxu0
        %v6619 = vadd.f32 %v5575, %v6618
        %v6620 = vpop.f32.mrb[0].mxu0
        %v6621 = vadd.f32 %v5577, %v6620
        %v6622 = vpop.f32.mrb[0].mxu0
        %v6623 = vadd.f32 %v5579, %v6622
        %6624 = vmatprep.mubr.bf16.mxu0 %v4005
        %6625 = vmatmul.mubr.bf16.gmra.mrb[0].mxu0 %v4004
        %v6626 = vpop.f32.mrb[0].mxu0
        %v6627 = vadd.f32 %v5583, %v6626
        %v6628 = vpop.f32.mrb[0].mxu0
        %v6629 = vadd.f32 %v5585, %v6628
        %v6630 = vpop.f32.mrb[0].mxu0
        %v6631 = vadd.f32 %v5587, %v6630
        %v6632 = vpop.f32.mrb[0].mxu0
        %v6633 = vadd.f32 %v5589, %v6632
        %6634 = vmatprep.mubr.bf16.mxu0 %v4010
        %6635 = vmatmul.mubr.bf16.gmra.mrb[0].mxu0 %v4009
        %v6636 = vpop.f32.mrb[0].mxu0
        %v6637 = vadd.f32 %v5593, %v6636
        %v6638 = vpop.f32.mrb[0].mxu0
        %v6639 = vadd.f32 %v5595, %v6638
        %v6640 = vpop.f32.mrb[0].mxu0
        %v6641 = vpop.f32.mrb[0].mxu0
        %6642 = vdwg.mxu0
        %6643 = vmatprep.subr.bf16.mxu0 %v6327
        %6644 = vmatpush1.bf16.msra.mxu0 %v6326
        %6645 = vmatprep.subr.bf16.mxu0 %v6331
        %6646 = vmatpush1.bf16.msra.mxu0 %v6330
        %6647 = vmatprep.subr.bf16.mxu0 %v6335
        %6648 = vmatpush1.bf16.msra.mxu0 %v6334
        %6649 = vmatprep.subr.bf16.mxu0 %v6339
        %6650 = vmatpush1.bf16.msra.mxu0 %v6338
        %6651 = vmatprep.subr.bf16.mxu0 %v6343
        %6652 = vmatpush1.bf16.msra.mxu0 %v6342
        %6653 = vmatprep.subr.bf16.mxu0 %v6347
        %6654 = vmatpush1.bf16.msra.mxu0 %v6346
        %6655 = vmatprep.subr.bf16.mxu0 %v6351
        %6656 = vmatpush1.bf16.msra.mxu0 %v6350
        %6657 = vmatprep.subr.bf16.mxu0 %v6355
        %6658 = vmatpush1.bf16.msra.mxu0 %v6354
        %6659 = vmatprep.subr.bf16.mxu0 %v6359
        %6660 = vmatpush1.bf16.msra.mxu0 %v6358
        %6661 = vmatprep.subr.bf16.mxu0 %v6363
        %6662 = vmatpush1.bf16.msra.mxu0 %v6362
        %6663 = vmatprep.subr.bf16.mxu0 %v6367
        %6664 = vmatpush1.bf16.msra.mxu0 %v6366
        %6665 = vmatprep.subr.bf16.mxu0 %v6371
        %6666 = vmatpush1.bf16.msra.mxu0 %v6370
        %6667 = vmatprep.subr.bf16.mxu0 %v6375
        %6668 = vmatpush1.bf16.msra.mxu0 %v6374
        %6669 = vmatprep.subr.bf16.mxu0 %v6379
        %6670 = vmatpush1.bf16.msra.mxu0 %v6378
        %6671 = vmatprep.subr.bf16.mxu0 %v6383
        %6672 = vmatpush1.bf16.msra.mxu0 %v6382
        %6673 = vmatprep.subr.bf16.mxu0 %v6387
        %6674 = vmatpush1.bf16.msra.mxu0 %v6386
        %6675 = vmatprep.mubr.bf16.mxu0 %v4002
        %6676 = vmatmul.mubr.bf16.gmra.mrb[0].mxu0 %v4001
        %v6677 = vpop.f32.mrb[0].mxu0
        %v6678 = vadd.f32 %v6617, %v6677
        %v6679 = vpop.f32.mrb[0].mxu0
        %v6680 = vadd.f32 %v6619, %v6679
        %v6681 = vpop.f32.mrb[0].mxu0
        %v6682 = vadd.f32 %v6621, %v6681
        %v6683 = vpop.f32.mrb[0].mxu0
        %v6684 = vadd.f32 %v6623, %v6683
        %6685 = vmatprep.mubr.bf16.mxu0 %v4007
        %6686 = vmatmul.mubr.bf16.gmra.mrb[0].mxu0 %v4006
        %v6687 = vpop.f32.mrb[0].mxu0
        %v6688 = vadd.f32 %v6627, %v6687
        %v6689 = vpop.f32.mrb[0].mxu0
        %v6690 = vadd.f32 %v6629, %v6689
        %v6691 = vpop.f32.mrb[0].mxu0
        %v6692 = vadd.f32 %v6631, %v6691
        %v6693 = vpop.f32.mrb[0].mxu0
        %v6694 = vadd.f32 %v6633, %v6693
        %6695 = vmatprep.mubr.bf16.mxu0 %v4012
        %6696 = vmatmul.mubr.bf16.gmra.mrb[0].mxu0 %v4011
        %v6697 = vpop.f32.mrb[0].mxu0
        %v6698 = vadd.f32 %v6637, %v6697
        %v6699 = vpop.f32.mrb[0].mxu0
        %v6700 = vadd.f32 %v6639, %v6699
        %v6701 = vpop.f32.mrb[0].mxu0
        %v6702 = vpop.f32.mrb[0].mxu0
        %6703 = vdwg.mxu0
        %6704 = vmatprep.subr.bf16.mxu0 %v6391
        %6705 = vmatpush1.bf16.msra.mxu0 %v6390
        %6706 = vmatprep.subr.bf16.mxu0 %v6395
        %6707 = vmatpush1.bf16.msra.mxu0 %v6394
        %6708 = vmatprep.subr.bf16.mxu0 %v6399
        %6709 = vmatpush1.bf16.msra.mxu0 %v6398
        %6710 = vmatprep.subr.bf16.mxu0 %v6403
        %6711 = vmatpush1.bf16.msra.mxu0 %v6402
        %6712 = vmatprep.subr.bf16.mxu0 %v6407
        %6713 = vmatpush1.bf16.msra.mxu0 %v6406
        %6714 = vmatprep.subr.bf16.mxu0 %v6411
        %6715 = vmatpush1.bf16.msra.mxu0 %v6410
        %6716 = vmatprep.subr.bf16.mxu0 %v6415
        %6717 = vmatpush1.bf16.msra.mxu0 %v6414
        %6718 = vmatprep.subr.bf16.mxu0 %v6419
        %6719 = vmatpush1.bf16.msra.mxu0 %v6418
        %6720 = vmatprep.subr.bf16.mxu0 0
        %6721 = vmatpush1.bf16.msra.mxu0 0
        %6722 = vmatprep.subr.bf16.mxu0 0
        %6723 = vmatpush1.bf16.msra.mxu0 0
        %6724 = vmatprep.subr.bf16.mxu0 0
        %6725 = vmatpush1.bf16.msra.mxu0 0
        %6726 = vmatprep.subr.bf16.mxu0 0
        %6727 = vmatpush1.bf16.msra.mxu0 0
        %6728 = vmatprep.subr.bf16.mxu0 0
        %6729 = vmatpush1.bf16.msra.mxu0 0
        %6730 = vmatprep.subr.bf16.mxu0 0
        %6731 = vmatpush1.bf16.msra.mxu0 0
        %6732 = vmatprep.subr.bf16.mxu0 0
        %6733 = vmatpush1.bf16.msra.mxu0 0
        %6734 = vmatprep.subr.bf16.mxu0 0
        %6735 = vmatpush1.bf16.msra.mxu0 0
        %6736 = vmatprep.mubr.bf16.mxu0 0
        %6737 = vmatmul.mubr.bf16.gmra.mrb[0].mxu0 %v4003
        %v6738 = vpop.f32.mrb[0].mxu0
        %v6739 = vadd.f32 %v6678, %v6738
        %v6740 = vpop.f32.mrb[0].mxu0
        %v6741 = vadd.f32 %v6680, %v6740
        %v6742 = vpop.f32.mrb[0].mxu0
        %v6743 = vadd.f32 %v6682, %v6742
        %v6744 = vpop.f32.mrb[0].mxu0
        %v6745 = vadd.f32 %v6684, %v6744
        %6746 = vmatprep.mubr.bf16.mxu0 0
        %6747 = vmatmul.mubr.bf16.gmra.mrb[0].mxu0 %v4008
        %v6748 = vpop.f32.mrb[0].mxu0
        %v6749 = vadd.f32 %v6688, %v6748
        %v6750 = vpop.f32.mrb[0].mxu0
        %v6751 = vadd.f32 %v6690, %v6750
        %v6752 = vpop.f32.mrb[0].mxu0
        %v6753 = vadd.f32 %v6692, %v6752
        %v6754 = vpop.f32.mrb[0].mxu0
        %v6755 = vadd.f32 %v6694, %v6754
        %6756 = vmatprep.mubr.bf16.mxu0 0
        %6757 = vmatmul.mubr.bf16.gmra.mrb[0].mxu0 %v4013
        %v6758 = vpop.f32.mrb[0].mxu0
        %v6759 = vadd.f32 %v6698, %v6758
        %v6760 = vpop.f32.mrb[0].mxu0
        %v6761 = vadd.f32 %v6700, %v6760
        %v6762 = vpop.f32.mrb[0].mxu0
        %v6763 = vpop.f32.mrb[0].mxu0
        %6764 = vdwg.mxu0
        %6765 = vmatprep.subr.bf16.mxu0 %v6265
        %6766 = vmatpush1.bf16.msra.mxu0 %v6264
        %6767 = vmatprep.subr.bf16.mxu0 %v6269
        %6768 = vmatpush1.bf16.msra.mxu0 %v6268
        %6769 = vmatprep.subr.bf16.mxu0 %v6273
        %6770 = vmatpush1.bf16.msra.mxu0 %v6272
        %6771 = vmatprep.subr.bf16.mxu0 %v6277
        %6772 = vmatpush1.bf16.msra.mxu0 %v6276
        %6773 = vmatprep.subr.bf16.mxu0 %v6281
        %6774 = vmatpush1.bf16.msra.mxu0 %v6280
        %6775 = vmatprep.subr.bf16.mxu0 %v6285
        %6776 = vmatpush1.bf16.msra.mxu0 %v6284
        %6777 = vmatprep.subr.bf16.mxu0 %v6289
        %6778 = vmatpush1.bf16.msra.mxu0 %v6288
        %6779 = vmatprep.subr.bf16.mxu0 %v6293
        %6780 = vmatpush1.bf16.msra.mxu0 %v6292
        %6781 = vmatprep.subr.bf16.mxu0 %v6297
        %6782 = vmatpush1.bf16.msra.mxu0 %v6296
        %6783 = vmatprep.subr.bf16.mxu0 %v6301
        %6784 = vmatpush1.bf16.msra.mxu0 %v6300
        %6785 = vmatprep.subr.bf16.mxu0 %v6305
        %6786 = vmatpush1.bf16.msra.mxu0 %v6304
        %6787 = vmatprep.subr.bf16.mxu0 %v6309
        %6788 = vmatpush1.bf16.msra.mxu0 %v6308
        %6789 = vmatprep.subr.bf16.mxu0 %v6313
        %6790 = vmatpush1.bf16.msra.mxu0 %v6312
        %6791 = vmatprep.subr.bf16.mxu0 %v6317
        %6792 = vmatpush1.bf16.msra.mxu0 %v6316
        %6793 = vmatprep.subr.bf16.mxu0 %v6321
        %6794 = vmatpush1.bf16.msra.mxu0 %v6320
        %6795 = vmatprep.subr.bf16.mxu0 %v6325
        %6796 = vmatpush1.bf16.msra.mxu0 %v6324
        %6797 = vmatprep.mubr.bf16.mxu0 %v4000
        %6798 = vmatmul.mubr.bf16.gmra.mrb[0].mxu0 %v3999
        %v6799 = vpop.f32.mrb[0].mxu0
        %v6800 = vadd.f32 %v5756, %v6799
        %v6801 = vpop.f32.mrb[0].mxu0
        %v6802 = vadd.f32 %v5758, %v6801
        %v6803 = vpop.f32.mrb[0].mxu0
        %v6804 = vadd.f32 %v5760, %v6803
        %v6805 = vpop.f32.mrb[0].mxu0
        %v6806 = vadd.f32 %v5762, %v6805
        %6807 = vmatprep.mubr.bf16.mxu0 %v4005
        %6808 = vmatmul.mubr.bf16.gmra.mrb[0].mxu0 %v4004
        %v6809 = vpop.f32.mrb[0].mxu0
        %v6810 = vadd.f32 %v5766, %v6809
        %v6811 = vpop.f32.mrb[0].mxu0
        %v6812 = vadd.f32 %v5768, %v6811
        %v6813 = vpop.f32.mrb[0].mxu0
        %v6814 = vadd.f32 %v5770, %v6813
        %v6815 = vpop.f32.mrb[0].mxu0
        %v6816 = vadd.f32 %v5772, %v6815
        %6817 = vmatprep.mubr.bf16.mxu0 %v4010
        %6818 = vmatmul.mubr.bf16.gmra.mrb[0].mxu0 %v4009
        %v6819 = vpop.f32.mrb[0].mxu0
        %v6820 = vadd.f32 %v5776, %v6819
        %v6821 = vpop.f32.mrb[0].mxu0
        %v6822 = vadd.f32 %v5778, %v6821
        %v6823 = vpop.f32.mrb[0].mxu0
        %v6824 = vpop.f32.mrb[0].mxu0
        %6825 = vdwg.mxu0
        %6826 = vmatprep.subr.bf16.mxu0 %v6329
        %6827 = vmatpush1.bf16.msra.mxu0 %v6328
        %6828 = vmatprep.subr.bf16.mxu0 %v6333
        %6829 = vmatpush1.bf16.msra.mxu0 %v6332
        %6830 = vmatprep.subr.bf16.mxu0 %v6337
        %6831 = vmatpush1.bf16.msra.mxu0 %v6336
        %6832 = vmatprep.subr.bf16.mxu0 %v6341
        %6833 = vmatpush1.bf16.msra.mxu0 %v6340
        %6834 = vmatprep.subr.bf16.mxu0 %v6345
        %6835 = vmatpush1.bf16.msra.mxu0 %v6344
        %6836 = vmatprep.subr.bf16.mxu0 %v6349
        %6837 = vmatpush1.bf16.msra.mxu0 %v6348
        %6838 = vmatprep.subr.bf16.mxu0 %v6353
        %6839 = vmatpush1.bf16.msra.mxu0 %v6352
        %6840 = vmatprep.subr.bf16.mxu0 %v6357
        %6841 = vmatpush1.bf16.msra.mxu0 %v6356
        %6842 = vmatprep.subr.bf16.mxu0 %v6361
        %6843 = vmatpush1.bf16.msra.mxu0 %v6360
        %6844 = vmatprep.subr.bf16.mxu0 %v6365
        %6845 = vmatpush1.bf16.msra.mxu0 %v6364
        %6846 = vmatprep.subr.bf16.mxu0 %v6369
        %6847 = vmatpush1.bf16.msra.mxu0 %v6368
        %6848 = vmatprep.subr.bf16.mxu0 %v6373
        %6849 = vmatpush1.bf16.msra.mxu0 %v6372
        %6850 = vmatprep.subr.bf16.mxu0 %v6377
        %6851 = vmatpush1.bf16.msra.mxu0 %v6376
        %6852 = vmatprep.subr.bf16.mxu0 %v6381
        %6853 = vmatpush1.bf16.msra.mxu0 %v6380
        %6854 = vmatprep.subr.bf16.mxu0 %v6385
        %6855 = vmatpush1.bf16.msra.mxu0 %v6384
        %6856 = vmatprep.subr.bf16.mxu0 %v6389
        %6857 = vmatpush1.bf16.msra.mxu0 %v6388
        %6858 = vmatprep.mubr.bf16.mxu0 %v4002
        %6859 = vmatmul.mubr.bf16.gmra.mrb[0].mxu0 %v4001
        %v6860 = vpop.f32.mrb[0].mxu0
        %v6861 = vadd.f32 %v6800, %v6860
        %v6862 = vpop.f32.mrb[0].mxu0
        %v6863 = vadd.f32 %v6802, %v6862
        %v6864 = vpop.f32.mrb[0].mxu0
        %v6865 = vadd.f32 %v6804, %v6864
        %v6866 = vpop.f32.mrb[0].mxu0
        %v6867 = vadd.f32 %v6806, %v6866
        %6868 = vmatprep.mubr.bf16.mxu0 %v4007
        %6869 = vmatmul.mubr.bf16.gmra.mrb[0].mxu0 %v4006
        %v6870 = vpop.f32.mrb[0].mxu0
        %v6871 = vadd.f32 %v6810, %v6870
        %v6872 = vpop.f32.mrb[0].mxu0
        %v6873 = vadd.f32 %v6812, %v6872
        %v6874 = vpop.f32.mrb[0].mxu0
        %v6875 = vadd.f32 %v6814, %v6874
        %v6876 = vpop.f32.mrb[0].mxu0
        %v6877 = vadd.f32 %v6816, %v6876
        %6878 = vmatprep.mubr.bf16.mxu0 %v4012
        %6879 = vmatmul.mubr.bf16.gmra.mrb[0].mxu0 %v4011
        %v6880 = vpop.f32.mrb[0].mxu0
        %v6881 = vadd.f32 %v6820, %v6880
        %v6882 = vpop.f32.mrb[0].mxu0
        %v6883 = vadd.f32 %v6822, %v6882
        %v6884 = vpop.f32.mrb[0].mxu0
        %v6885 = vpop.f32.mrb[0].mxu0
        %6886 = vdwg.mxu0
        %6887 = vmatprep.subr.bf16.mxu0 %v6393
        %6888 = vmatpush1.bf16.msra.mxu0 %v6392
        %6889 = vmatprep.subr.bf16.mxu0 %v6397
        %6890 = vmatpush1.bf16.msra.mxu0 %v6396
        %6891 = vmatprep.subr.bf16.mxu0 %v6401
        %6892 = vmatpush1.bf16.msra.mxu0 %v6400
        %6893 = vmatprep.subr.bf16.mxu0 %v6405
        %6894 = vmatpush1.bf16.msra.mxu0 %v6404
        %6895 = vmatprep.subr.bf16.mxu0 %v6409
        %6896 = vmatpush1.bf16.msra.mxu0 %v6408
        %6897 = vmatprep.subr.bf16.mxu0 %v6413
        %6898 = vmatpush1.bf16.msra.mxu0 %v6412
        %6899 = vmatprep.subr.bf16.mxu0 %v6417
        %6900 = vmatpush1.bf16.msra.mxu0 %v6416
        %6901 = vmatprep.subr.bf16.mxu0 %v6421
        %6902 = vmatpush1.bf16.msra.mxu0 %v6420
        %6903 = vmatprep.subr.bf16.mxu0 0
        %6904 = vmatpush1.bf16.msra.mxu0 0
        %6905 = vmatprep.subr.bf16.mxu0 0
        %6906 = vmatpush1.bf16.msra.mxu0 0
        %6907 = vmatprep.subr.bf16.mxu0 0
        %6908 = vmatpush1.bf16.msra.mxu0 0
        %6909 = vmatprep.subr.bf16.mxu0 0
        %6910 = vmatpush1.bf16.msra.mxu0 0
        %6911 = vmatprep.subr.bf16.mxu0 0
        %6912 = vmatpush1.bf16.msra.mxu0 0
        %6913 = vmatprep.subr.bf16.mxu0 0
        %6914 = vmatpush1.bf16.msra.mxu0 0
        %6915 = vmatprep.subr.bf16.mxu0 0
        %6916 = vmatpush1.bf16.msra.mxu0 0
        %6917 = vmatprep.subr.bf16.mxu0 0
        %6918 = vmatpush1.bf16.msra.mxu0 0
        %6919 = vmatprep.mubr.bf16.mxu0 0
        %6920 = vmatmul.mubr.bf16.gmra.mrb[0].mxu0 %v4003
        %v6921 = vpop.f32.mrb[0].mxu0
        %v6922 = vadd.f32 %v6861, %v6921
        %v6923 = vpop.f32.mrb[0].mxu0
        %v6924 = vadd.f32 %v6863, %v6923
        %v6925 = vpop.f32.mrb[0].mxu0
        %v6926 = vadd.f32 %v6865, %v6925
        %v6927 = vpop.f32.mrb[0].mxu0
        %v6928 = vadd.f32 %v6867, %v6927
        %6929 = vmatprep.mubr.bf16.mxu0 0
        %6930 = vmatmul.mubr.bf16.gmra.mrb[0].mxu0 %v4008
        %v6931 = vpop.f32.mrb[0].mxu0
        %v6932 = vadd.f32 %v6871, %v6931
        %v6933 = vpop.f32.mrb[0].mxu0
        %v6934 = vadd.f32 %v6873, %v6933
        %v6935 = vpop.f32.mrb[0].mxu0
        %v6936 = vadd.f32 %v6875, %v6935
        %v6937 = vpop.f32.mrb[0].mxu0
        %v6938 = vadd.f32 %v6877, %v6937
        %6939 = vmatprep.mubr.bf16.mxu0 0
        %6940 = vmatmul.mubr.bf16.gmra.mrb[0].mxu0 %v4013
        %v6941 = vpop.f32.mrb[0].mxu0
        %v6942 = vadd.f32 %v6881, %v6941
        %v6943 = vpop.f32.mrb[0].mxu0
        %v6944 = vadd.f32 %v6883, %v6943
        %v6945 = vpop.f32.mrb[0].mxu0
        %v6946 = vpop.f32.mrb[0].mxu0
        %6947 = vdwg.mxu0
        %v7108 = vunpack.c.l.b16 %v4456
        %v7109 = vunpack.c.h.b16 %v4456
        %v7110 = vunpack.c.l.b16 %v4457
        %v7111 = vunpack.c.h.b16 %v4457
        %v7112 = vunpack.c.l.b16 %v4458
        %v7113 = vunpack.c.h.b16 %v4458
        %v7114 = vunpack.c.l.b16 %v4459
        %v7115 = vunpack.c.h.b16 %v4459
        %v7116 = vunpack.c.l.b16 %v4460
        %v7117 = vunpack.c.h.b16 %v4460
        %v7118 = vunpack.c.l.b16 %v4461
        %v7119 = vunpack.c.h.b16 %v4461
        %v7120 = vunpack.c.l.b16 %v4462
        %v7121 = vunpack.c.h.b16 %v4462
        %v7122 = vunpack.c.l.b16 %v4463
        %v7123 = vunpack.c.h.b16 %v4463
        %v7124 = vunpack.c.l.b16 %v4464
        %v7125 = vunpack.c.h.b16 %v4464
        %v7126 = vunpack.c.l.b16 %v4465
        %v7127 = vunpack.c.h.b16 %v4465
        %v7128 = vunpack.c.l.b16 %v4466
        %v7129 = vunpack.c.h.b16 %v4466
        %v7130 = vunpack.c.l.b16 %v4467
        %v7131 = vunpack.c.h.b16 %v4467
        %v7132 = vunpack.c.l.b16 %v4468
        %v7133 = vunpack.c.h.b16 %v4468
        %v7134 = vunpack.c.l.b16 %v4469
        %v7135 = vunpack.c.h.b16 %v4469
        %v7136 = vunpack.c.l.b16 %v4470
        %v7137 = vunpack.c.h.b16 %v4470
        %v7138 = vunpack.c.l.b16 %v4471
        %v7139 = vunpack.c.h.b16 %v4471
        %v7140 = vunpack.c.l.b16 %v4472
        %v7141 = vunpack.c.h.b16 %v4472
        %v7142 = vunpack.c.l.b16 %v4473
        %v7143 = vunpack.c.h.b16 %v4473
        %v7144 = vunpack.c.l.b16 %v4474
        %v7145 = vunpack.c.h.b16 %v4474
        %v7146 = vunpack.c.l.b16 %v4475
        %v7147 = vunpack.c.h.b16 %v4475
        %v7148 = vunpack.c.l.b16 %v4476
        %v7149 = vunpack.c.h.b16 %v4476
        %v7150 = vunpack.c.l.b16 %v4477
        %v7151 = vunpack.c.h.b16 %v4477
        %v7152 = vunpack.c.l.b16 %v4478
        %v7153 = vunpack.c.h.b16 %v4478
        %v7154 = vunpack.c.l.b16 %v4479
        %v7155 = vunpack.c.h.b16 %v4479
        %v7156 = vunpack.c.l.b16 %v4480
        %v7157 = vunpack.c.h.b16 %v4480
        %v7158 = vunpack.c.l.b16 %v4481
        %v7159 = vunpack.c.h.b16 %v4481
        %v7160 = vunpack.c.l.b16 %v4482
        %v7161 = vunpack.c.h.b16 %v4482
        %v7162 = vunpack.c.l.b16 %v4483
        %v7163 = vunpack.c.h.b16 %v4483
        %v7164 = vunpack.c.l.b16 %v4484
        %v7165 = vunpack.c.h.b16 %v4484
        %v7166 = vunpack.c.l.b16 %v4485
        %v7167 = vunpack.c.h.b16 %v4485
        %v7168 = vunpack.c.l.b16 %v4486
        %v7169 = vunpack.c.h.b16 %v4486
        %v7170 = vunpack.c.l.b16 %v4487
        %v7171 = vunpack.c.h.b16 %v4487
        %v7172 = vunpack.c.l.b16 %v4488
        %v7173 = vunpack.c.h.b16 %v4488
        %v7174 = vunpack.c.l.b16 %v4489
        %v7175 = vunpack.c.h.b16 %v4489
        %v7176 = vunpack.c.l.b16 %v4490
        %v7177 = vunpack.c.h.b16 %v4490
        %v7178 = vunpack.c.l.b16 %v4491
        %v7179 = vunpack.c.h.b16 %v4491
        %v7180 = vunpack.c.l.b16 %v4492
        %v7181 = vunpack.c.h.b16 %v4492
        %v7182 = vunpack.c.l.b16 %v4493
        %v7183 = vunpack.c.h.b16 %v4493
        %v7184 = vunpack.c.l.b16 %v4494
        %v7185 = vunpack.c.h.b16 %v4494
        %v7186 = vunpack.c.l.b16 %v4495
        %v7187 = vunpack.c.h.b16 %v4495
        %v7188 = vunpack.c.l.b16 %v4496
        %v7189 = vunpack.c.h.b16 %v4496
        %v7190 = vunpack.c.l.b16 %v4497
        %v7191 = vunpack.c.h.b16 %v4497
        %v7192 = vunpack.c.l.b16 %v4498
        %v7193 = vunpack.c.h.b16 %v4498
        %v7194 = vunpack.c.l.b16 %v4499
        %v7195 = vunpack.c.h.b16 %v4499
        %v7196 = vunpack.c.l.b16 %v4500
        %v7197 = vunpack.c.h.b16 %v4500
        %v7198 = vunpack.c.l.b16 %v4501
        %v7199 = vunpack.c.h.b16 %v4501
        %v7200 = vunpack.c.l.b16 %v4502
        %v7201 = vunpack.c.h.b16 %v4502
        %v7202 = vunpack.c.l.b16 %v4503
        %v7203 = vunpack.c.h.b16 %v4503
        %v7204 = vunpack.c.l.b16 %v4504
        %v7205 = vunpack.c.h.b16 %v4504
        %v7206 = vunpack.c.l.b16 %v4505
        %v7207 = vunpack.c.h.b16 %v4505
        %v7208 = vunpack.c.l.b16 %v4506
        %v7209 = vunpack.c.h.b16 %v4506
        %v7210 = vunpack.c.l.b16 %v4507
        %v7211 = vunpack.c.h.b16 %v4507
        %v7212 = vunpack.c.l.b16 %v4508
        %v7213 = vunpack.c.h.b16 %v4508
        %v7214 = vunpack.c.l.b16 %v4509
        %v7215 = vunpack.c.h.b16 %v4509
        %v7216 = vunpack.c.l.b16 %v4510
        %v7217 = vunpack.c.h.b16 %v4510
        %v7218 = vunpack.c.l.b16 %v4511
        %v7219 = vunpack.c.h.b16 %v4511
        %v7220 = vunpack.c.l.b16 %v4512
        %v7221 = vunpack.c.h.b16 %v4512
        %v7222 = vunpack.c.l.b16 %v4513
        %v7223 = vunpack.c.h.b16 %v4513
        %v7224 = vunpack.c.l.b16 %v4514
        %v7225 = vunpack.c.h.b16 %v4514
        %v7226 = vunpack.c.l.b16 %v4515
        %v7227 = vunpack.c.h.b16 %v4515
        %v7228 = vunpack.c.l.b16 %v4516
        %v7229 = vunpack.c.h.b16 %v4516
        %v7230 = vunpack.c.l.b16 %v4517
        %v7231 = vunpack.c.h.b16 %v4517
        %v7232 = vunpack.c.l.b16 %v4518
        %v7233 = vunpack.c.h.b16 %v4518
        %v7234 = vunpack.c.l.b16 %v4519
        %v7235 = vunpack.c.h.b16 %v4519
        %v7236 = vunpack.c.l.b16 %v4520
        %v7237 = vunpack.c.h.b16 %v4520
        %v7238 = vunpack.c.l.b16 %v4521
        %v7239 = vunpack.c.h.b16 %v4521
        %v7240 = vunpack.c.l.b16 %v4522
        %v7241 = vunpack.c.h.b16 %v4522
        %v7242 = vunpack.c.l.b16 %v4523
        %v7243 = vunpack.c.h.b16 %v4523
        %v7244 = vunpack.c.l.b16 %v4524
        %v7245 = vunpack.c.h.b16 %v4524
        %v7246 = vunpack.c.l.b16 %v4525
        %v7247 = vunpack.c.h.b16 %v4525
        %v7248 = vunpack.c.l.b16 %v4526
        %v7249 = vunpack.c.h.b16 %v4526
        %v7250 = vunpack.c.l.b16 %v4527
        %v7251 = vunpack.c.h.b16 %v4527
        %v7252 = vunpack.c.l.b16 %v4528
        %v7253 = vunpack.c.h.b16 %v4528
        %v7254 = vunpack.c.l.b16 %v4529
        %v7255 = vunpack.c.h.b16 %v4529
        %v7256 = vunpack.c.l.b16 %v4530
        %v7257 = vunpack.c.h.b16 %v4530
        %v7258 = vunpack.c.l.b16 %v4531
        %v7259 = vunpack.c.h.b16 %v4531
        %v7260 = vunpack.c.l.b16 %v4532
        %v7261 = vunpack.c.h.b16 %v4532
        %v7262 = vunpack.c.l.b16 %v4533
        %v7263 = vunpack.c.h.b16 %v4533
        %v7264 = vunpack.c.l.b16 %v4534
        %v7265 = vunpack.c.h.b16 %v4534
        %v7266 = vunpack.c.l.b16 %v4535
        %v7267 = vunpack.c.h.b16 %v4535
        %v7268 = vunpack.c.l.b16 %v4536
        %v7269 = vunpack.c.h.b16 %v4536
        %v7270 = vunpack.c.l.b16 %v4537
        %v7271 = vunpack.c.h.b16 %v4537
        %v7272 = vunpack.c.l.b16 %v4538
        %v7273 = vunpack.c.h.b16 %v4538
        %v7274 = vunpack.c.l.b16 %v4539
        %v7275 = vunpack.c.h.b16 %v4539
        %v7276 = vunpack.c.l.b16 %v4540
        %v7277 = vunpack.c.h.b16 %v4540
        %v7278 = vunpack.c.l.b16 %v4541
        %v7279 = vunpack.c.h.b16 %v4541
        %v7280 = vunpack.c.l.b16 %v4542
        %v7281 = vunpack.c.h.b16 %v4542
        %v7282 = vunpack.c.l.b16 %v4543
        %v7283 = vunpack.c.h.b16 %v4543
        %v7284 = vunpack.c.l.b16 %v4544
        %v7285 = vunpack.c.h.b16 %v4544
        %v7286 = vunpack.c.l.b16 %v4545
        %v7287 = vunpack.c.h.b16 %v4545
        %v7288 = vunpack.c.l.b16 %v4546
        %v7289 = vunpack.c.h.b16 %v4546
        %v7290 = vunpack.c.l.b16 %v4547
        %v7291 = vunpack.c.h.b16 %v4547
        %v7292 = vunpack.c.l.b16 %v4548
        %v7293 = vunpack.c.h.b16 %v4548
        %v7294 = vunpack.c.l.b16 %v4549
        %v7295 = vunpack.c.h.b16 %v4549
        %v7296 = vunpack.c.l.b16 %v4550
        %v7297 = vunpack.c.h.b16 %v4550
        %v7298 = vunpack.c.l.b16 %v4551
        %v7299 = vunpack.c.h.b16 %v4551
        %v7300 = vunpack.c.l.b16 %v4552
        %v7301 = vunpack.c.h.b16 %v4552
        %v7302 = vunpack.c.l.b16 %v4553
        %v7303 = vunpack.c.h.b16 %v4553
        %v7304 = vunpack.c.l.b16 %v4554
        %v7305 = vunpack.c.h.b16 %v4554
        %v7306 = vunpack.c.l.b16 %v4555
        %v7307 = vunpack.c.h.b16 %v4555
        %v7308 = vunpack.c.l.b16 %v4556
        %v7309 = vunpack.c.h.b16 %v4556
        %v7310 = vunpack.c.l.b16 %v4557
        %v7311 = vunpack.c.h.b16 %v4557
        %v7312 = vunpack.c.l.b16 %v4558
        %v7313 = vunpack.c.h.b16 %v4558
        %v7314 = vunpack.c.l.b16 %v4559
        %v7315 = vunpack.c.h.b16 %v4559
        %v7316 = vunpack.c.l.b16 %v4560
        %v7317 = vunpack.c.h.b16 %v4560
        %v7318 = vunpack.c.l.b16 %v4561
        %v7319 = vunpack.c.h.b16 %v4561
        %v7320 = vunpack.c.l.b16 %v4562
        %v7321 = vunpack.c.h.b16 %v4562
        %v7322 = vunpack.c.l.b16 %v4563
        %v7323 = vunpack.c.h.b16 %v4563
        %v7324 = vunpack.c.l.b16 %v4564
        %v7325 = vunpack.c.h.b16 %v4564
        %v7326 = vunpack.c.l.b16 %v4565
        %v7327 = vunpack.c.h.b16 %v4565
        %v7328 = vunpack.c.l.b16 %v4566
        %v7329 = vunpack.c.h.b16 %v4566
        %v7330 = vunpack.c.l.b16 %v4567
        %v7331 = vunpack.c.h.b16 %v4567
        %v7332 = vunpack.c.l.b16 %v4568
        %v7333 = vunpack.c.h.b16 %v4568
        %v7334 = vunpack.c.l.b16 %v4569
        %v7335 = vunpack.c.h.b16 %v4569
        %v7336 = vunpack.c.l.b16 %v4570
        %v7337 = vunpack.c.h.b16 %v4570
        %v7338 = vunpack.c.l.b16 %v4571
        %v7339 = vunpack.c.h.b16 %v4571
        %v7340 = vunpack.c.l.b16 %v4572
        %v7341 = vunpack.c.h.b16 %v4572
        %v7342 = vunpack.c.l.b16 %v4573
        %v7343 = vunpack.c.h.b16 %v4573
        %v7344 = vunpack.c.l.b16 %v4574
        %v7345 = vunpack.c.h.b16 %v4574
        %v7346 = vunpack.c.l.b16 %v4575
        %v7347 = vunpack.c.h.b16 %v4575
        %v7348 = vunpack.c.l.b16 %v4576
        %v7349 = vunpack.c.h.b16 %v4576
        %v7350 = vunpack.c.l.b16 %v4577
        %v7351 = vunpack.c.h.b16 %v4577
        %v7352 = vunpack.c.l.b16 %v4578
        %v7353 = vunpack.c.h.b16 %v4578
        %v7354 = vunpack.c.l.b16 %v4579
        %v7355 = vunpack.c.h.b16 %v4579
        %v7356 = vunpack.c.l.b16 %v4580
        %v7357 = vunpack.c.h.b16 %v4580
        %v7358 = vunpack.c.l.b16 %v4581
        %v7359 = vunpack.c.h.b16 %v4581
        %v7360 = vunpack.c.l.b16 %v4582
        %v7361 = vunpack.c.h.b16 %v4582
        %v7362 = vunpack.c.l.b16 %v4583
        %v7363 = vunpack.c.h.b16 %v4583
        %v7364 = vunpack.c.l.b16 %v4584
        %v7365 = vunpack.c.h.b16 %v4584
        %v7366 = vunpack.c.l.b16 %v4585
        %v7367 = vunpack.c.h.b16 %v4585
        %v7368 = vunpack.c.l.b16 %v4586
        %v7369 = vunpack.c.h.b16 %v4586
        %v7370 = vunpack.c.l.b16 %v4587
        %v7371 = vunpack.c.h.b16 %v4587
        %v7372 = vunpack.c.l.b16 %v4588
        %v7373 = vunpack.c.h.b16 %v4588
        %v7374 = vunpack.c.l.b16 %v4589
        %v7375 = vunpack.c.h.b16 %v4589
        %v7376 = vunpack.c.l.b16 %v4590
        %v7377 = vunpack.c.h.b16 %v4590
        %v7378 = vunpack.c.l.b16 %v4591
        %v7379 = vunpack.c.h.b16 %v4591
        %v7380 = vunpack.c.l.b16 %v4592
        %v7381 = vunpack.c.h.b16 %v4592
        %v7382 = vunpack.c.l.b16 %v4593
        %v7383 = vunpack.c.h.b16 %v4593
        %v7384 = vunpack.c.l.b16 %v4594
        %v7385 = vunpack.c.h.b16 %v4594
        %v7386 = vunpack.c.l.b16 %v4595
        %v7387 = vunpack.c.h.b16 %v4595
        %v7388 = vunpack.c.l.b16 %v4596
        %v7389 = vunpack.c.h.b16 %v4596
        %v7390 = vunpack.c.l.b16 %v4597
        %v7391 = vunpack.c.h.b16 %v4597
        %v7392 = vunpack.c.l.b16 %v4598
        %v7393 = vunpack.c.h.b16 %v4598
        %v7394 = vunpack.c.l.b16 %v4599
        %v7395 = vunpack.c.h.b16 %v4599
        %v7396 = vunpack.c.l.b16 %v4600
        %v7397 = vunpack.c.h.b16 %v4600
        %v7398 = vunpack.c.l.b16 %v4601
        %v7399 = vunpack.c.h.b16 %v4601
        %v7400 = vunpack.c.l.b16 %v4602
        %v7401 = vunpack.c.h.b16 %v4602
        %v7402 = vunpack.c.l.b16 %v4603
        %v7403 = vunpack.c.h.b16 %v4603
        %v7404 = vunpack.c.l.b16 %v4604
        %v7405 = vunpack.c.h.b16 %v4604
        %v7406 = vunpack.c.l.b16 %v4605
        %v7407 = vunpack.c.h.b16 %v4605
        %v7408 = vunpack.c.l.b16 %v4606
        %v7409 = vunpack.c.h.b16 %v4606
        %v7410 = vunpack.c.l.b16 %v4607
        %v7411 = vunpack.c.h.b16 %v4607
        %v7412 = vunpack.c.l.b16 %v4608
        %v7413 = vunpack.c.h.b16 %v4608
        %v7414 = vunpack.c.l.b16 %v4609
        %v7415 = vunpack.c.h.b16 %v4609
        %v7416 = vunpack.c.l.b16 %v4610
        %v7417 = vunpack.c.h.b16 %v4610
        %v7418 = vunpack.c.l.b16 %v4611
        %v7419 = vunpack.c.h.b16 %v4611
        %v7420 = vunpack.c.l.b16 %v4612
        %v7421 = vunpack.c.h.b16 %v4612
        %v7422 = vunpack.c.l.b16 %v4613
        %v7423 = vunpack.c.h.b16 %v4613
        %v7424 = vunpack.c.l.b16 %v4614
        %v7425 = vunpack.c.h.b16 %v4614
        %v7426 = vunpack.c.l.b16 %v4615
        %v7427 = vunpack.c.h.b16 %v4615
        %v7428 = vpack.c.b16 %v7112, %v7108
        %v7429 = vpack.c.b16 %v7113, %v7109
        %v7430 = vpack.c.b16 %v7114, %v7110
        %v7431 = vpack.c.b16 %v7115, %v7111
        %v7432 = vpack.c.b16 %v7120, %v7116
        %v7433 = vpack.c.b16 %v7121, %v7117
        %v7434 = vpack.c.b16 %v7122, %v7118
        %v7435 = vpack.c.b16 %v7123, %v7119
        %v7436 = vpack.c.b16 %v7128, %v7124
        %v7437 = vpack.c.b16 %v7129, %v7125
        %v7438 = vpack.c.b16 %v7130, %v7126
        %v7439 = vpack.c.b16 %v7131, %v7127
        %v7440 = vpack.c.b16 %v7136, %v7132
        %v7441 = vpack.c.b16 %v7137, %v7133
        %v7442 = vpack.c.b16 %v7138, %v7134
        %v7443 = vpack.c.b16 %v7139, %v7135
        %v7444 = vpack.c.b16 %v7144, %v7140
        %v7445 = vpack.c.b16 %v7145, %v7141
        %v7446 = vpack.c.b16 %v7146, %v7142
        %v7447 = vpack.c.b16 %v7147, %v7143
        %v7448 = vpack.c.b16 %v7152, %v7148
        %v7449 = vpack.c.b16 %v7153, %v7149
        %v7450 = vpack.c.b16 %v7154, %v7150
        %v7451 = vpack.c.b16 %v7155, %v7151
        %v7452 = vpack.c.b16 %v7160, %v7156
        %v7453 = vpack.c.b16 %v7161, %v7157
        %v7454 = vpack.c.b16 %v7162, %v7158
        %v7455 = vpack.c.b16 %v7163, %v7159
        %v7456 = vpack.c.b16 %v7168, %v7164
        %v7457 = vpack.c.b16 %v7169, %v7165
        %v7458 = vpack.c.b16 %v7170, %v7166
        %v7459 = vpack.c.b16 %v7171, %v7167
        %v7460 = vpack.c.b16 %v7176, %v7172
        %v7461 = vpack.c.b16 %v7177, %v7173
        %v7462 = vpack.c.b16 %v7178, %v7174
        %v7463 = vpack.c.b16 %v7179, %v7175
        %v7464 = vpack.c.b16 %v7184, %v7180
        %v7465 = vpack.c.b16 %v7185, %v7181
        %v7466 = vpack.c.b16 %v7186, %v7182
        %v7467 = vpack.c.b16 %v7187, %v7183
        %v7468 = vpack.c.b16 %v7192, %v7188
        %v7469 = vpack.c.b16 %v7193, %v7189
        %v7470 = vpack.c.b16 %v7194, %v7190
        %v7471 = vpack.c.b16 %v7195, %v7191
        %v7472 = vpack.c.b16 %v7200, %v7196
        %v7473 = vpack.c.b16 %v7201, %v7197
        %v7474 = vpack.c.b16 %v7202, %v7198
        %v7475 = vpack.c.b16 %v7203, %v7199
        %v7476 = vpack.c.b16 %v7208, %v7204
        %v7477 = vpack.c.b16 %v7209, %v7205
        %v7478 = vpack.c.b16 %v7210, %v7206
        %v7479 = vpack.c.b16 %v7211, %v7207
        %v7480 = vpack.c.b16 %v7216, %v7212
        %v7481 = vpack.c.b16 %v7217, %v7213
        %v7482 = vpack.c.b16 %v7218, %v7214
        %v7483 = vpack.c.b16 %v7219, %v7215
        %v7484 = vpack.c.b16 %v7224, %v7220
        %v7485 = vpack.c.b16 %v7225, %v7221
        %v7486 = vpack.c.b16 %v7226, %v7222
        %v7487 = vpack.c.b16 %v7227, %v7223
        %v7488 = vpack.c.b16 %v7232, %v7228
        %v7489 = vpack.c.b16 %v7233, %v7229
        %v7490 = vpack.c.b16 %v7234, %v7230
        %v7491 = vpack.c.b16 %v7235, %v7231
        %v7492 = vpack.c.b16 %v7240, %v7236
        %v7493 = vpack.c.b16 %v7241, %v7237
        %v7494 = vpack.c.b16 %v7242, %v7238
        %v7495 = vpack.c.b16 %v7243, %v7239
        %v7496 = vpack.c.b16 %v7248, %v7244
        %v7497 = vpack.c.b16 %v7249, %v7245
        %v7498 = vpack.c.b16 %v7250, %v7246
        %v7499 = vpack.c.b16 %v7251, %v7247
        %v7500 = vpack.c.b16 %v7256, %v7252
        %v7501 = vpack.c.b16 %v7257, %v7253
        %v7502 = vpack.c.b16 %v7258, %v7254
        %v7503 = vpack.c.b16 %v7259, %v7255
        %v7504 = vpack.c.b16 %v7264, %v7260
        %v7505 = vpack.c.b16 %v7265, %v7261
        %v7506 = vpack.c.b16 %v7266, %v7262
        %v7507 = vpack.c.b16 %v7267, %v7263
        %v7508 = vpack.c.b16 %v7272, %v7268
        %v7509 = vpack.c.b16 %v7273, %v7269
        %v7510 = vpack.c.b16 %v7274, %v7270
        %v7511 = vpack.c.b16 %v7275, %v7271
        %v7512 = vpack.c.b16 %v7280, %v7276
        %v7513 = vpack.c.b16 %v7281, %v7277
        %v7514 = vpack.c.b16 %v7282, %v7278
        %v7515 = vpack.c.b16 %v7283, %v7279
        %v7516 = vpack.c.b16 %v7288, %v7284
        %v7517 = vpack.c.b16 %v7289, %v7285
        %v7518 = vpack.c.b16 %v7290, %v7286
        %v7519 = vpack.c.b16 %v7291, %v7287
        %v7520 = vpack.c.b16 %v7296, %v7292
        %v7521 = vpack.c.b16 %v7297, %v7293
        %v7522 = vpack.c.b16 %v7298, %v7294
        %v7523 = vpack.c.b16 %v7299, %v7295
        %v7524 = vpack.c.b16 %v7304, %v7300
        %v7525 = vpack.c.b16 %v7305, %v7301
        %v7526 = vpack.c.b16 %v7306, %v7302
        %v7527 = vpack.c.b16 %v7307, %v7303
        %v7528 = vpack.c.b16 %v7312, %v7308
        %v7529 = vpack.c.b16 %v7313, %v7309
        %v7530 = vpack.c.b16 %v7314, %v7310
        %v7531 = vpack.c.b16 %v7315, %v7311
        %v7532 = vpack.c.b16 %v7320, %v7316
        %v7533 = vpack.c.b16 %v7321, %v7317
        %v7534 = vpack.c.b16 %v7322, %v7318
        %v7535 = vpack.c.b16 %v7323, %v7319
        %v7536 = vpack.c.b16 %v7328, %v7324
        %v7537 = vpack.c.b16 %v7329, %v7325
        %v7538 = vpack.c.b16 %v7330, %v7326
        %v7539 = vpack.c.b16 %v7331, %v7327
        %v7540 = vpack.c.b16 %v7336, %v7332
        %v7541 = vpack.c.b16 %v7337, %v7333
        %v7542 = vpack.c.b16 %v7338, %v7334
        %v7543 = vpack.c.b16 %v7339, %v7335
        %v7544 = vpack.c.b16 %v7344, %v7340
        %v7545 = vpack.c.b16 %v7345, %v7341
        %v7546 = vpack.c.b16 %v7346, %v7342
        %v7547 = vpack.c.b16 %v7347, %v7343
        %v7548 = vpack.c.b16 %v7352, %v7348
        %v7549 = vpack.c.b16 %v7353, %v7349
        %v7550 = vpack.c.b16 %v7354, %v7350
        %v7551 = vpack.c.b16 %v7355, %v7351
        %v7552 = vpack.c.b16 %v7360, %v7356
        %v7553 = vpack.c.b16 %v7361, %v7357
        %v7554 = vpack.c.b16 %v7362, %v7358
        %v7555 = vpack.c.b16 %v7363, %v7359
        %v7556 = vpack.c.b16 %v7368, %v7364
        %v7557 = vpack.c.b16 %v7369, %v7365
        %v7558 = vpack.c.b16 %v7370, %v7366
        %v7559 = vpack.c.b16 %v7371, %v7367
        %v7560 = vpack.c.b16 %v7376, %v7372
        %v7561 = vpack.c.b16 %v7377, %v7373
        %v7562 = vpack.c.b16 %v7378, %v7374
        %v7563 = vpack.c.b16 %v7379, %v7375
        %v7564 = vpack.c.b16 %v7384, %v7380
        %v7565 = vpack.c.b16 %v7385, %v7381
        %v7566 = vpack.c.b16 %v7386, %v7382
        %v7567 = vpack.c.b16 %v7387, %v7383
        %v7568 = vpack.c.b16 %v7392, %v7388
        %v7569 = vpack.c.b16 %v7393, %v7389
        %v7570 = vpack.c.b16 %v7394, %v7390
        %v7571 = vpack.c.b16 %v7395, %v7391
        %v7572 = vpack.c.b16 %v7400, %v7396
        %v7573 = vpack.c.b16 %v7401, %v7397
        %v7574 = vpack.c.b16 %v7402, %v7398
        %v7575 = vpack.c.b16 %v7403, %v7399
        %v7576 = vpack.c.b16 %v7408, %v7404
        %v7577 = vpack.c.b16 %v7409, %v7405
        %v7578 = vpack.c.b16 %v7410, %v7406
        %v7579 = vpack.c.b16 %v7411, %v7407
        %v7580 = vpack.c.b16 %v7416, %v7412
        %v7581 = vpack.c.b16 %v7417, %v7413
        %v7582 = vpack.c.b16 %v7418, %v7414
        %v7583 = vpack.c.b16 %v7419, %v7415
        %v7584 = vpack.c.b16 %v7424, %v7420
        %v7585 = vpack.c.b16 %v7425, %v7421
        %v7586 = vpack.c.b16 %v7426, %v7422
        %v7587 = vpack.c.b16 %v7427, %v7423
        %7748 = vmatprep.subr.bf16.mxu0 %v7429
        %7749 = vmatpush1.bf16.msra.mxu0 %v7428
        %7750 = vmatprep.subr.bf16.mxu0 %v7433
        %7751 = vmatpush1.bf16.msra.mxu0 %v7432
        %7752 = vmatprep.subr.bf16.mxu0 %v7437
        %7753 = vmatpush1.bf16.msra.mxu0 %v7436
        %7754 = vmatprep.subr.bf16.mxu0 %v7441
        %7755 = vmatpush1.bf16.msra.mxu0 %v7440
        %7756 = vmatprep.subr.bf16.mxu0 %v7445
        %7757 = vmatpush1.bf16.msra.mxu0 %v7444
        %7758 = vmatprep.subr.bf16.mxu0 %v7449
        %7759 = vmatpush1.bf16.msra.mxu0 %v7448
        %7760 = vmatprep.subr.bf16.mxu0 %v7453
        %7761 = vmatpush1.bf16.msra.mxu0 %v7452
        %7762 = vmatprep.subr.bf16.mxu0 %v7457
        %7763 = vmatpush1.bf16.msra.mxu0 %v7456
        %7764 = vmatprep.subr.bf16.mxu0 %v7461
        %7765 = vmatpush1.bf16.msra.mxu0 %v7460
        %7766 = vmatprep.subr.bf16.mxu0 %v7465
        %7767 = vmatpush1.bf16.msra.mxu0 %v7464
        %7768 = vmatprep.subr.bf16.mxu0 %v7469
        %7769 = vmatpush1.bf16.msra.mxu0 %v7468
        %7770 = vmatprep.subr.bf16.mxu0 %v7473
        %7771 = vmatpush1.bf16.msra.mxu0 %v7472
        %7772 = vmatprep.subr.bf16.mxu0 %v7477
        %7773 = vmatpush1.bf16.msra.mxu0 %v7476
        %7774 = vmatprep.subr.bf16.mxu0 %v7481
        %7775 = vmatpush1.bf16.msra.mxu0 %v7480
        %7776 = vmatprep.subr.bf16.mxu0 %v7485
        %7777 = vmatpush1.bf16.msra.mxu0 %v7484
        %7778 = vmatprep.subr.bf16.mxu0 %v7489
        %7779 = vmatpush1.bf16.msra.mxu0 %v7488
        %7780 = vmatprep.mubr.bf16.mxu0 %v4040
        %7781 = vmatmul.mubr.bf16.gmra.mrb[0].mxu0 %v4039
        %v7782 = vpop.f32.mrb[0].mxu0
        %v7783 = vadd.f32 0.0, %v7782
        %v7784 = vpop.f32.mrb[0].mxu0
        %v7785 = vadd.f32 0.0, %v7784
        %v7786 = vpop.f32.mrb[0].mxu0
        %v7787 = vadd.f32 0.0, %v7786
        %v7788 = vpop.f32.mrb[0].mxu0
        %v7789 = vadd.f32 0.0, %v7788
        %7790 = vmatprep.mubr.bf16.mxu0 %v4045
        %7791 = vmatmul.mubr.bf16.gmra.mrb[0].mxu0 %v4044
        %v7792 = vpop.f32.mrb[0].mxu0
        %v7793 = vadd.f32 0.0, %v7792
        %v7794 = vpop.f32.mrb[0].mxu0
        %v7795 = vadd.f32 0.0, %v7794
        %v7796 = vpop.f32.mrb[0].mxu0
        %v7797 = vadd.f32 0.0, %v7796
        %v7798 = vpop.f32.mrb[0].mxu0
        %v7799 = vadd.f32 0.0, %v7798
        %7800 = vmatprep.mubr.bf16.mxu0 %v4050
        %7801 = vmatmul.mubr.bf16.gmra.mrb[0].mxu0 %v4049
        %v7802 = vpop.f32.mrb[0].mxu0
        %v7803 = vadd.f32 0.0, %v7802
        %v7804 = vpop.f32.mrb[0].mxu0
        %v7805 = vadd.f32 0.0, %v7804
        %v7806 = vpop.f32.mrb[0].mxu0
        %v7807 = vpop.f32.mrb[0].mxu0
        %7808 = vdwg.mxu0
        %7809 = vmatprep.subr.bf16.mxu0 %v7493
        %7810 = vmatpush1.bf16.msra.mxu0 %v7492
        %7811 = vmatprep.subr.bf16.mxu0 %v7497
        %7812 = vmatpush1.bf16.msra.mxu0 %v7496
        %7813 = vmatprep.subr.bf16.mxu0 %v7501
        %7814 = vmatpush1.bf16.msra.mxu0 %v7500
        %7815 = vmatprep.subr.bf16.mxu0 %v7505
        %7816 = vmatpush1.bf16.msra.mxu0 %v7504
        %7817 = vmatprep.subr.bf16.mxu0 %v7509
        %7818 = vmatpush1.bf16.msra.mxu0 %v7508
        %7819 = vmatprep.subr.bf16.mxu0 %v7513
        %7820 = vmatpush1.bf16.msra.mxu0 %v7512
        %7821 = vmatprep.subr.bf16.mxu0 %v7517
        %7822 = vmatpush1.bf16.msra.mxu0 %v7516
        %7823 = vmatprep.subr.bf16.mxu0 %v7521
        %7824 = vmatpush1.bf16.msra.mxu0 %v7520
        %7825 = vmatprep.subr.bf16.mxu0 %v7525
        %7826 = vmatpush1.bf16.msra.mxu0 %v7524
        %7827 = vmatprep.subr.bf16.mxu0 %v7529
        %7828 = vmatpush1.bf16.msra.mxu0 %v7528
        %7829 = vmatprep.subr.bf16.mxu0 %v7533
        %7830 = vmatpush1.bf16.msra.mxu0 %v7532
        %7831 = vmatprep.subr.bf16.mxu0 %v7537
        %7832 = vmatpush1.bf16.msra.mxu0 %v7536
        %7833 = vmatprep.subr.bf16.mxu0 %v7541
        %7834 = vmatpush1.bf16.msra.mxu0 %v7540
        %7835 = vmatprep.subr.bf16.mxu0 %v7545
        %7836 = vmatpush1.bf16.msra.mxu0 %v7544
        %7837 = vmatprep.subr.bf16.mxu0 %v7549
        %7838 = vmatpush1.bf16.msra.mxu0 %v7548
        %7839 = vmatprep.subr.bf16.mxu0 %v7553
        %7840 = vmatpush1.bf16.msra.mxu0 %v7552
        %7841 = vmatprep.mubr.bf16.mxu0 %v4042
        %7842 = vmatmul.mubr.bf16.gmra.mrb[0].mxu0 %v4041
        %v7843 = vpop.f32.mrb[0].mxu0
        %v7844 = vadd.f32 %v7783, %v7843
        %v7845 = vpop.f32.mrb[0].mxu0
        %v7846 = vadd.f32 %v7785, %v7845
        %v7847 = vpop.f32.mrb[0].mxu0
        %v7848 = vadd.f32 %v7787, %v7847
        %v7849 = vpop.f32.mrb[0].mxu0
        %v7850 = vadd.f32 %v7789, %v7849
        %7851 = vmatprep.mubr.bf16.mxu0 %v4047
        %7852 = vmatmul.mubr.bf16.gmra.mrb[0].mxu0 %v4046
        %v7853 = vpop.f32.mrb[0].mxu0
        %v7854 = vadd.f32 %v7793, %v7853
        %v7855 = vpop.f32.mrb[0].mxu0
        %v7856 = vadd.f32 %v7795, %v7855
        %v7857 = vpop.f32.mrb[0].mxu0
        %v7858 = vadd.f32 %v7797, %v7857
        %v7859 = vpop.f32.mrb[0].mxu0
        %v7860 = vadd.f32 %v7799, %v7859
        %7861 = vmatprep.mubr.bf16.mxu0 %v4052
        %7862 = vmatmul.mubr.bf16.gmra.mrb[0].mxu0 %v4051
        %v7863 = vpop.f32.mrb[0].mxu0
        %v7864 = vadd.f32 %v7803, %v7863
        %v7865 = vpop.f32.mrb[0].mxu0
        %v7866 = vadd.f32 %v7805, %v7865
        %v7867 = vpop.f32.mrb[0].mxu0
        %v7868 = vpop.f32.mrb[0].mxu0
        %7869 = vdwg.mxu0
        %7870 = vmatprep.subr.bf16.mxu0 %v7557
        %7871 = vmatpush1.bf16.msra.mxu0 %v7556
        %7872 = vmatprep.subr.bf16.mxu0 %v7561
        %7873 = vmatpush1.bf16.msra.mxu0 %v7560
        %7874 = vmatprep.subr.bf16.mxu0 %v7565
        %7875 = vmatpush1.bf16.msra.mxu0 %v7564
        %7876 = vmatprep.subr.bf16.mxu0 %v7569
        %7877 = vmatpush1.bf16.msra.mxu0 %v7568
        %7878 = vmatprep.subr.bf16.mxu0 %v7573
        %7879 = vmatpush1.bf16.msra.mxu0 %v7572
        %7880 = vmatprep.subr.bf16.mxu0 %v7577
        %7881 = vmatpush1.bf16.msra.mxu0 %v7576
        %7882 = vmatprep.subr.bf16.mxu0 %v7581
        %7883 = vmatpush1.bf16.msra.mxu0 %v7580
        %7884 = vmatprep.subr.bf16.mxu0 %v7585
        %7885 = vmatpush1.bf16.msra.mxu0 %v7584
        %7886 = vmatprep.subr.bf16.mxu0 0
        %7887 = vmatpush1.bf16.msra.mxu0 0
        %7888 = vmatprep.subr.bf16.mxu0 0
        %7889 = vmatpush1.bf16.msra.mxu0 0
        %7890 = vmatprep.subr.bf16.mxu0 0
        %7891 = vmatpush1.bf16.msra.mxu0 0
        %7892 = vmatprep.subr.bf16.mxu0 0
        %7893 = vmatpush1.bf16.msra.mxu0 0
        %7894 = vmatprep.subr.bf16.mxu0 0
        %7895 = vmatpush1.bf16.msra.mxu0 0
        %7896 = vmatprep.subr.bf16.mxu0 0
        %7897 = vmatpush1.bf16.msra.mxu0 0
        %7898 = vmatprep.subr.bf16.mxu0 0
        %7899 = vmatpush1.bf16.msra.mxu0 0
        %7900 = vmatprep.subr.bf16.mxu0 0
        %7901 = vmatpush1.bf16.msra.mxu0 0
        %7902 = vmatprep.mubr.bf16.mxu0 0
        %7903 = vmatmul.mubr.bf16.gmra.mrb[0].mxu0 %v4043
        %v7904 = vpop.f32.mrb[0].mxu0
        %v7905 = vadd.f32 %v7844, %v7904
        %v7906 = vpop.f32.mrb[0].mxu0
        %v7907 = vadd.f32 %v7846, %v7906
        %v7908 = vpop.f32.mrb[0].mxu0
        %v7909 = vadd.f32 %v7848, %v7908
        %v7910 = vpop.f32.mrb[0].mxu0
        %v7911 = vadd.f32 %v7850, %v7910
        %7912 = vmatprep.mubr.bf16.mxu0 0
        %7913 = vmatmul.mubr.bf16.gmra.mrb[0].mxu0 %v4048
        %v7914 = vpop.f32.mrb[0].mxu0
        %v7915 = vadd.f32 %v7854, %v7914
        %v7916 = vpop.f32.mrb[0].mxu0
        %v7917 = vadd.f32 %v7856, %v7916
        %v7918 = vpop.f32.mrb[0].mxu0
        %v7919 = vadd.f32 %v7858, %v7918
        %v7920 = vpop.f32.mrb[0].mxu0
        %v7921 = vadd.f32 %v7860, %v7920
        %7922 = vmatprep.mubr.bf16.mxu0 0
        %7923 = vmatmul.mubr.bf16.gmra.mrb[0].mxu0 %v4053
        %v7924 = vpop.f32.mrb[0].mxu0
        %v7925 = vadd.f32 %v7864, %v7924
        %v7926 = vpop.f32.mrb[0].mxu0
        %v7927 = vadd.f32 %v7866, %v7926
        %v7928 = vpop.f32.mrb[0].mxu0
        %v7929 = vpop.f32.mrb[0].mxu0
        %7930 = vdwg.mxu0
        %7931 = vmatprep.subr.bf16.mxu0 %v7431
        %7932 = vmatpush1.bf16.msra.mxu0 %v7430
        %7933 = vmatprep.subr.bf16.mxu0 %v7435
        %7934 = vmatpush1.bf16.msra.mxu0 %v7434
        %7935 = vmatprep.subr.bf16.mxu0 %v7439
        %7936 = vmatpush1.bf16.msra.mxu0 %v7438
        %7937 = vmatprep.subr.bf16.mxu0 %v7443
        %7938 = vmatpush1.bf16.msra.mxu0 %v7442
        %7939 = vmatprep.subr.bf16.mxu0 %v7447
        %7940 = vmatpush1.bf16.msra.mxu0 %v7446
        %7941 = vmatprep.subr.bf16.mxu0 %v7451
        %7942 = vmatpush1.bf16.msra.mxu0 %v7450
        %7943 = vmatprep.subr.bf16.mxu0 %v7455
        %7944 = vmatpush1.bf16.msra.mxu0 %v7454
        %7945 = vmatprep.subr.bf16.mxu0 %v7459
        %7946 = vmatpush1.bf16.msra.mxu0 %v7458
        %7947 = vmatprep.subr.bf16.mxu0 %v7463
        %7948 = vmatpush1.bf16.msra.mxu0 %v7462
        %7949 = vmatprep.subr.bf16.mxu0 %v7467
        %7950 = vmatpush1.bf16.msra.mxu0 %v7466
        %7951 = vmatprep.subr.bf16.mxu0 %v7471
        %7952 = vmatpush1.bf16.msra.mxu0 %v7470
        %7953 = vmatprep.subr.bf16.mxu0 %v7475
        %7954 = vmatpush1.bf16.msra.mxu0 %v7474
        %7955 = vmatprep.subr.bf16.mxu0 %v7479
        %7956 = vmatpush1.bf16.msra.mxu0 %v7478
        %7957 = vmatprep.subr.bf16.mxu0 %v7483
        %7958 = vmatpush1.bf16.msra.mxu0 %v7482
        %7959 = vmatprep.subr.bf16.mxu0 %v7487
        %7960 = vmatpush1.bf16.msra.mxu0 %v7486
        %7961 = vmatprep.subr.bf16.mxu0 %v7491
        %7962 = vmatpush1.bf16.msra.mxu0 %v7490
        %7963 = vmatprep.mubr.bf16.mxu0 %v4040
        %7964 = vmatmul.mubr.bf16.gmra.mrb[0].mxu0 %v4039
        %v7965 = vpop.f32.mrb[0].mxu0
        %v7966 = vadd.f32 0.0, %v7965
        %v7967 = vpop.f32.mrb[0].mxu0
        %v7968 = vadd.f32 0.0, %v7967
        %v7969 = vpop.f32.mrb[0].mxu0
        %v7970 = vadd.f32 0.0, %v7969
        %v7971 = vpop.f32.mrb[0].mxu0
        %v7972 = vadd.f32 0.0, %v7971
        %7973 = vmatprep.mubr.bf16.mxu0 %v4045
        %7974 = vmatmul.mubr.bf16.gmra.mrb[0].mxu0 %v4044
        %v7975 = vpop.f32.mrb[0].mxu0
        %v7976 = vadd.f32 0.0, %v7975
        %v7977 = vpop.f32.mrb[0].mxu0
        %v7978 = vadd.f32 0.0, %v7977
        %v7979 = vpop.f32.mrb[0].mxu0
        %v7980 = vadd.f32 0.0, %v7979
        %v7981 = vpop.f32.mrb[0].mxu0
        %v7982 = vadd.f32 0.0, %v7981
        %7983 = vmatprep.mubr.bf16.mxu0 %v4050
        %7984 = vmatmul.mubr.bf16.gmra.mrb[0].mxu0 %v4049
        %v7985 = vpop.f32.mrb[0].mxu0
        %v7986 = vadd.f32 0.0, %v7985
        %v7987 = vpop.f32.mrb[0].mxu0
        %v7988 = vadd.f32 0.0, %v7987
        %v7989 = vpop.f32.mrb[0].mxu0
        %v7990 = vpop.f32.mrb[0].mxu0
        %7991 = vdwg.mxu0
        %7992 = vmatprep.subr.bf16.mxu0 %v7495
        %7993 = vmatpush1.bf16.msra.mxu0 %v7494
        %7994 = vmatprep.subr.bf16.mxu0 %v7499
        %7995 = vmatpush1.bf16.msra.mxu0 %v7498
        %7996 = vmatprep.subr.bf16.mxu0 %v7503
        %7997 = vmatpush1.bf16.msra.mxu0 %v7502
        %7998 = vmatprep.subr.bf16.mxu0 %v7507
        %7999 = vmatpush1.bf16.msra.mxu0 %v7506
        %8000 = vmatprep.subr.bf16.mxu0 %v7511
        %8001 = vmatpush1.bf16.msra.mxu0 %v7510
        %8002 = vmatprep.subr.bf16.mxu0 %v7515
        %8003 = vmatpush1.bf16.msra.mxu0 %v7514
        %8004 = vmatprep.subr.bf16.mxu0 %v7519
        %8005 = vmatpush1.bf16.msra.mxu0 %v7518
        %8006 = vmatprep.subr.bf16.mxu0 %v7523
        %8007 = vmatpush1.bf16.msra.mxu0 %v7522
        %8008 = vmatprep.subr.bf16.mxu0 %v7527
        %8009 = vmatpush1.bf16.msra.mxu0 %v7526
        %8010 = vmatprep.subr.bf16.mxu0 %v7531
        %8011 = vmatpush1.bf16.msra.mxu0 %v7530
        %8012 = vmatprep.subr.bf16.mxu0 %v7535
        %8013 = vmatpush1.bf16.msra.mxu0 %v7534
        %8014 = vmatprep.subr.bf16.mxu0 %v7539
        %8015 = vmatpush1.bf16.msra.mxu0 %v7538
        %8016 = vmatprep.subr.bf16.mxu0 %v7543
        %8017 = vmatpush1.bf16.msra.mxu0 %v7542
        %8018 = vmatprep.subr.bf16.mxu0 %v7547
        %8019 = vmatpush1.bf16.msra.mxu0 %v7546
        %8020 = vmatprep.subr.bf16.mxu0 %v7551
        %8021 = vmatpush1.bf16.msra.mxu0 %v7550
        %8022 = vmatprep.subr.bf16.mxu0 %v7555
        %8023 = vmatpush1.bf16.msra.mxu0 %v7554
        %8024 = vmatprep.mubr.bf16.mxu0 %v4042
        %8025 = vmatmul.mubr.bf16.gmra.mrb[0].mxu0 %v4041
        %v8026 = vpop.f32.mrb[0].mxu0
        %v8027 = vadd.f32 %v7966, %v8026
        %v8028 = vpop.f32.mrb[0].mxu0
        %v8029 = vadd.f32 %v7968, %v8028
        %v8030 = vpop.f32.mrb[0].mxu0
        %v8031 = vadd.f32 %v7970, %v8030
        %v8032 = vpop.f32.mrb[0].mxu0
        %v8033 = vadd.f32 %v7972, %v8032
        %8034 = vmatprep.mubr.bf16.mxu0 %v4047
        %8035 = vmatmul.mubr.bf16.gmra.mrb[0].mxu0 %v4046
        %v8036 = vpop.f32.mrb[0].mxu0
        %v8037 = vadd.f32 %v7976, %v8036
        %v8038 = vpop.f32.mrb[0].mxu0
        %v8039 = vadd.f32 %v7978, %v8038
        %v8040 = vpop.f32.mrb[0].mxu0
        %v8041 = vadd.f32 %v7980, %v8040
        %v8042 = vpop.f32.mrb[0].mxu0
        %v8043 = vadd.f32 %v7982, %v8042
        %8044 = vmatprep.mubr.bf16.mxu0 %v4052
        %8045 = vmatmul.mubr.bf16.gmra.mrb[0].mxu0 %v4051
        %v8046 = vpop.f32.mrb[0].mxu0
        %v8047 = vadd.f32 %v7986, %v8046
        %v8048 = vpop.f32.mrb[0].mxu0
        %v8049 = vadd.f32 %v7988, %v8048
        %v8050 = vpop.f32.mrb[0].mxu0
        %v8051 = vpop.f32.mrb[0].mxu0
        %8052 = vdwg.mxu0
        %8053 = vmatprep.subr.bf16.mxu0 %v7559
        %8054 = vmatpush1.bf16.msra.mxu0 %v7558
        %8055 = vmatprep.subr.bf16.mxu0 %v7563
        %8056 = vmatpush1.bf16.msra.mxu0 %v7562
        %8057 = vmatprep.subr.bf16.mxu0 %v7567
        %8058 = vmatpush1.bf16.msra.mxu0 %v7566
        %8059 = vmatprep.subr.bf16.mxu0 %v7571
        %8060 = vmatpush1.bf16.msra.mxu0 %v7570
        %8061 = vmatprep.subr.bf16.mxu0 %v7575
        %8062 = vmatpush1.bf16.msra.mxu0 %v7574
        %8063 = vmatprep.subr.bf16.mxu0 %v7579
        %8064 = vmatpush1.bf16.msra.mxu0 %v7578
        %8065 = vmatprep.subr.bf16.mxu0 %v7583
        %8066 = vmatpush1.bf16.msra.mxu0 %v7582
        %8067 = vmatprep.subr.bf16.mxu0 %v7587
        %8068 = vmatpush1.bf16.msra.mxu0 %v7586
        %8069 = vmatprep.subr.bf16.mxu0 0
        %8070 = vmatpush1.bf16.msra.mxu0 0
        %8071 = vmatprep.subr.bf16.mxu0 0
        %8072 = vmatpush1.bf16.msra.mxu0 0
        %8073 = vmatprep.subr.bf16.mxu0 0
        %8074 = vmatpush1.bf16.msra.mxu0 0
        %8075 = vmatprep.subr.bf16.mxu0 0
        %8076 = vmatpush1.bf16.msra.mxu0 0
        %8077 = vmatprep.subr.bf16.mxu0 0
        %8078 = vmatpush1.bf16.msra.mxu0 0
        %8079 = vmatprep.subr.bf16.mxu0 0
        %8080 = vmatpush1.bf16.msra.mxu0 0
        %8081 = vmatprep.subr.bf16.mxu0 0
        %8082 = vmatpush1.bf16.msra.mxu0 0
        %8083 = vmatprep.subr.bf16.mxu0 0
        %8084 = vmatpush1.bf16.msra.mxu0 0
        %8085 = vmatprep.mubr.bf16.mxu0 0
        %8086 = vmatmul.mubr.bf16.gmra.mrb[0].mxu0 %v4043
        %v8087 = vpop.f32.mrb[0].mxu0
        %v8088 = vadd.f32 %v8027, %v8087
        %v8089 = vpop.f32.mrb[0].mxu0
        %v8090 = vadd.f32 %v8029, %v8089
        %v8091 = vpop.f32.mrb[0].mxu0
        %v8092 = vadd.f32 %v8031, %v8091
        %v8093 = vpop.f32.mrb[0].mxu0
        %v8094 = vadd.f32 %v8033, %v8093
        %8095 = vmatprep.mubr.bf16.mxu0 0
        %8096 = vmatmul.mubr.bf16.gmra.mrb[0].mxu0 %v4048
        %v8097 = vpop.f32.mrb[0].mxu0
        %v8098 = vadd.f32 %v8037, %v8097
        %v8099 = vpop.f32.mrb[0].mxu0
        %v8100 = vadd.f32 %v8039, %v8099
        %v8101 = vpop.f32.mrb[0].mxu0
        %v8102 = vadd.f32 %v8041, %v8101
        %v8103 = vpop.f32.mrb[0].mxu0
        %v8104 = vadd.f32 %v8043, %v8103
        %8105 = vmatprep.mubr.bf16.mxu0 0
        %8106 = vmatmul.mubr.bf16.gmra.mrb[0].mxu0 %v4053
        %v8107 = vpop.f32.mrb[0].mxu0
        %v8108 = vadd.f32 %v8047, %v8107
        %v8109 = vpop.f32.mrb[0].mxu0
        %v8110 = vadd.f32 %v8049, %v8109
        %v8111 = vpop.f32.mrb[0].mxu0
        %v8112 = vpop.f32.mrb[0].mxu0
        %8113 = vdwg.mxu0
        %v8114 = vadd.f32 %v6739, %v7905
        %v8115 = vadd.f32 %v6741, %v7907
        %v8116 = vadd.f32 %v6922, %v8088
        %v8117 = vadd.f32 %v6924, %v8090
        %v8118 = vadd.f32 %v6743, %v7909
        %v8119 = vadd.f32 %v6745, %v7911
        %v8120 = vadd.f32 %v6926, %v8092
        %v8121 = vadd.f32 %v6928, %v8094
        %v8122 = vadd.f32 %v6749, %v7915
        %v8123 = vadd.f32 %v6751, %v7917
        %v8124 = vadd.f32 %v6932, %v8098
        %v8125 = vadd.f32 %v6934, %v8100
        %v8126 = vadd.f32 %v6753, %v7919
        %v8127 = vadd.f32 %v6755, %v7921
        %v8128 = vadd.f32 %v6936, %v8102
        %v8129 = vadd.f32 %v6938, %v8104
        %v8130 = vadd.f32 %v6759, %v7925
        %v8131 = vadd.f32 %v6761, %v7927
        %v8132 = vadd.f32 %v6942, %v8108
        %v8133 = vadd.f32 %v6944, %v8110
        %8134 = vmatprep.subr.bf16.mxu0 %v5097
        %8135 = vmatpush1.bf16.msra.mxu0 %v5096
        %8136 = vmatprep.subr.bf16.mxu0 %v5101
        %8137 = vmatpush1.bf16.msra.mxu0 %v5100
        %8138 = vmatprep.subr.bf16.mxu0 %v5105
        %8139 = vmatpush1.bf16.msra.mxu0 %v5104
        %8140 = vmatprep.subr.bf16.mxu0 %v5109
        %8141 = vmatpush1.bf16.msra.mxu0 %v5108
        %8142 = vmatprep.subr.bf16.mxu0 %v5113
        %8143 = vmatpush1.bf16.msra.mxu0 %v5112
        %8144 = vmatprep.subr.bf16.mxu0 %v5117
        %8145 = vmatpush1.bf16.msra.mxu0 %v5116
        %8146 = vmatprep.subr.bf16.mxu0 %v5121
        %8147 = vmatpush1.bf16.msra.mxu0 %v5120
        %8148 = vmatprep.subr.bf16.mxu0 %v5125
        %8149 = vmatpush1.bf16.msra.mxu0 %v5124
        %8150 = vmatprep.subr.bf16.mxu0 %v5129
        %8151 = vmatpush1.bf16.msra.mxu0 %v5128
        %8152 = vmatprep.subr.bf16.mxu0 %v5133
        %8153 = vmatpush1.bf16.msra.mxu0 %v5132
        %8154 = vmatprep.subr.bf16.mxu0 %v5137
        %8155 = vmatpush1.bf16.msra.mxu0 %v5136
        %8156 = vmatprep.subr.bf16.mxu0 %v5141
        %8157 = vmatpush1.bf16.msra.mxu0 %v5140
        %8158 = vmatprep.subr.bf16.mxu0 %v5145
        %8159 = vmatpush1.bf16.msra.mxu0 %v5144
        %8160 = vmatprep.subr.bf16.mxu0 %v5149
        %8161 = vmatpush1.bf16.msra.mxu0 %v5148
        %8162 = vmatprep.subr.bf16.mxu0 %v5153
        %8163 = vmatpush1.bf16.msra.mxu0 %v5152
        %8164 = vmatprep.subr.bf16.mxu0 %v5157
        %8165 = vmatpush1.bf16.msra.mxu0 %v5156
        %8166 = vmatprep.mubr.bf16.mxu0 %v4040
        %8167 = vmatmul.mubr.bf16.gmra.mrb[0].mxu0 %v4039
        %v8168 = vpop.f32.mrb[0].mxu0
        %v8169 = vadd.f32 0.0, %v8168
        %v8170 = vpop.f32.mrb[0].mxu0
        %v8171 = vadd.f32 0.0, %v8170
        %v8172 = vpop.f32.mrb[0].mxu0
        %v8173 = vadd.f32 0.0, %v8172
        %v8174 = vpop.f32.mrb[0].mxu0
        %v8175 = vadd.f32 0.0, %v8174
        %8176 = vmatprep.mubr.bf16.mxu0 %v4045
        %8177 = vmatmul.mubr.bf16.gmra.mrb[0].mxu0 %v4044
        %v8178 = vpop.f32.mrb[0].mxu0
        %v8179 = vadd.f32 0.0, %v8178
        %v8180 = vpop.f32.mrb[0].mxu0
        %v8181 = vadd.f32 0.0, %v8180
        %v8182 = vpop.f32.mrb[0].mxu0
        %v8183 = vadd.f32 0.0, %v8182
        %v8184 = vpop.f32.mrb[0].mxu0
        %v8185 = vadd.f32 0.0, %v8184
        %8186 = vmatprep.mubr.bf16.mxu0 %v4050
        %8187 = vmatmul.mubr.bf16.gmra.mrb[0].mxu0 %v4049
        %v8188 = vpop.f32.mrb[0].mxu0
        %v8189 = vadd.f32 0.0, %v8188
        %v8190 = vpop.f32.mrb[0].mxu0
        %v8191 = vadd.f32 0.0, %v8190
        %v8192 = vpop.f32.mrb[0].mxu0
        %v8193 = vpop.f32.mrb[0].mxu0
        %8194 = vdwg.mxu0
        %8195 = vmatprep.subr.bf16.mxu0 %v5161
        %8196 = vmatpush1.bf16.msra.mxu0 %v5160
        %8197 = vmatprep.subr.bf16.mxu0 %v5165
        %8198 = vmatpush1.bf16.msra.mxu0 %v5164
        %8199 = vmatprep.subr.bf16.mxu0 %v5169
        %8200 = vmatpush1.bf16.msra.mxu0 %v5168
        %8201 = vmatprep.subr.bf16.mxu0 %v5173
        %8202 = vmatpush1.bf16.msra.mxu0 %v5172
        %8203 = vmatprep.subr.bf16.mxu0 %v5177
        %8204 = vmatpush1.bf16.msra.mxu0 %v5176
        %8205 = vmatprep.subr.bf16.mxu0 %v5181
        %8206 = vmatpush1.bf16.msra.mxu0 %v5180
        %8207 = vmatprep.subr.bf16.mxu0 %v5185
        %8208 = vmatpush1.bf16.msra.mxu0 %v5184
        %8209 = vmatprep.subr.bf16.mxu0 %v5189
        %8210 = vmatpush1.bf16.msra.mxu0 %v5188
        %8211 = vmatprep.subr.bf16.mxu0 %v5193
        %8212 = vmatpush1.bf16.msra.mxu0 %v5192
        %8213 = vmatprep.subr.bf16.mxu0 %v5197
        %8214 = vmatpush1.bf16.msra.mxu0 %v5196
        %8215 = vmatprep.subr.bf16.mxu0 %v5201
        %8216 = vmatpush1.bf16.msra.mxu0 %v5200
        %8217 = vmatprep.subr.bf16.mxu0 %v5205
        %8218 = vmatpush1.bf16.msra.mxu0 %v5204
        %8219 = vmatprep.subr.bf16.mxu0 %v5209
        %8220 = vmatpush1.bf16.msra.mxu0 %v5208
        %8221 = vmatprep.subr.bf16.mxu0 %v5213
        %8222 = vmatpush1.bf16.msra.mxu0 %v5212
        %8223 = vmatprep.subr.bf16.mxu0 %v5217
        %8224 = vmatpush1.bf16.msra.mxu0 %v5216
        %8225 = vmatprep.subr.bf16.mxu0 %v5221
        %8226 = vmatpush1.bf16.msra.mxu0 %v5220
        %8227 = vmatprep.mubr.bf16.mxu0 %v4042
        %8228 = vmatmul.mubr.bf16.gmra.mrb[0].mxu0 %v4041
        %v8229 = vpop.f32.mrb[0].mxu0
        %v8230 = vadd.f32 %v8169, %v8229
        %v8231 = vpop.f32.mrb[0].mxu0
        %v8232 = vadd.f32 %v8171, %v8231
        %v8233 = vpop.f32.mrb[0].mxu0
        %v8234 = vadd.f32 %v8173, %v8233
        %v8235 = vpop.f32.mrb[0].mxu0
        %v8236 = vadd.f32 %v8175, %v8235
        %8237 = vmatprep.mubr.bf16.mxu0 %v4047
        %8238 = vmatmul.mubr.bf16.gmra.mrb[0].mxu0 %v4046
        %v8239 = vpop.f32.mrb[0].mxu0
        %v8240 = vadd.f32 %v8179, %v8239
        %v8241 = vpop.f32.mrb[0].mxu0
        %v8242 = vadd.f32 %v8181, %v8241
        %v8243 = vpop.f32.mrb[0].mxu0
        %v8244 = vadd.f32 %v8183, %v8243
        %v8245 = vpop.f32.mrb[0].mxu0
        %v8246 = vadd.f32 %v8185, %v8245
        %8247 = vmatprep.mubr.bf16.mxu0 %v4052
        %8248 = vmatmul.mubr.bf16.gmra.mrb[0].mxu0 %v4051
        %v8249 = vpop.f32.mrb[0].mxu0
        %v8250 = vadd.f32 %v8189, %v8249
        %v8251 = vpop.f32.mrb[0].mxu0
        %v8252 = vadd.f32 %v8191, %v8251
        %v8253 = vpop.f32.mrb[0].mxu0
        %v8254 = vpop.f32.mrb[0].mxu0
        %8255 = vdwg.mxu0
        %8256 = vmatprep.subr.bf16.mxu0 %v5225
        %8257 = vmatpush1.bf16.msra.mxu0 %v5224
        %8258 = vmatprep.subr.bf16.mxu0 %v5229
        %8259 = vmatpush1.bf16.msra.mxu0 %v5228
        %8260 = vmatprep.subr.bf16.mxu0 %v5233
        %8261 = vmatpush1.bf16.msra.mxu0 %v5232
        %8262 = vmatprep.subr.bf16.mxu0 %v5237
        %8263 = vmatpush1.bf16.msra.mxu0 %v5236
        %8264 = vmatprep.subr.bf16.mxu0 %v5241
        %8265 = vmatpush1.bf16.msra.mxu0 %v5240
        %8266 = vmatprep.subr.bf16.mxu0 %v5245
        %8267 = vmatpush1.bf16.msra.mxu0 %v5244
        %8268 = vmatprep.subr.bf16.mxu0 %v5249
        %8269 = vmatpush1.bf16.msra.mxu0 %v5248
        %8270 = vmatprep.subr.bf16.mxu0 %v5253
        %8271 = vmatpush1.bf16.msra.mxu0 %v5252
        %8272 = vmatprep.subr.bf16.mxu0 0
        %8273 = vmatpush1.bf16.msra.mxu0 0
        %8274 = vmatprep.subr.bf16.mxu0 0
        %8275 = vmatpush1.bf16.msra.mxu0 0
        %8276 = vmatprep.subr.bf16.mxu0 0
        %8277 = vmatpush1.bf16.msra.mxu0 0
        %8278 = vmatprep.subr.bf16.mxu0 0
        %8279 = vmatpush1.bf16.msra.mxu0 0
        %8280 = vmatprep.subr.bf16.mxu0 0
        %8281 = vmatpush1.bf16.msra.mxu0 0
        %8282 = vmatprep.subr.bf16.mxu0 0
        %8283 = vmatpush1.bf16.msra.mxu0 0
        %8284 = vmatprep.subr.bf16.mxu0 0
        %8285 = vmatpush1.bf16.msra.mxu0 0
        %8286 = vmatprep.subr.bf16.mxu0 0
        %8287 = vmatpush1.bf16.msra.mxu0 0
        %8288 = vmatprep.mubr.bf16.mxu0 0
        %8289 = vmatmul.mubr.bf16.gmra.mrb[0].mxu0 %v4043
        %v8290 = vpop.f32.mrb[0].mxu0
        %v8291 = vadd.f32 %v8230, %v8290
        %v8292 = vpop.f32.mrb[0].mxu0
        %v8293 = vadd.f32 %v8232, %v8292
        %v8294 = vpop.f32.mrb[0].mxu0
        %v8295 = vadd.f32 %v8234, %v8294
        %v8296 = vpop.f32.mrb[0].mxu0
        %v8297 = vadd.f32 %v8236, %v8296
        %8298 = vmatprep.mubr.bf16.mxu0 0
        %8299 = vmatmul.mubr.bf16.gmra.mrb[0].mxu0 %v4048
        %v8300 = vpop.f32.mrb[0].mxu0
        %v8301 = vadd.f32 %v8240, %v8300
        %v8302 = vpop.f32.mrb[0].mxu0
        %v8303 = vadd.f32 %v8242, %v8302
        %v8304 = vpop.f32.mrb[0].mxu0
        %v8305 = vadd.f32 %v8244, %v8304
        %v8306 = vpop.f32.mrb[0].mxu0
        %v8307 = vadd.f32 %v8246, %v8306
        %8308 = vmatprep.mubr.bf16.mxu0 0
        %8309 = vmatmul.mubr.bf16.gmra.mrb[0].mxu0 %v4053
        %v8310 = vpop.f32.mrb[0].mxu0
        %v8311 = vadd.f32 %v8250, %v8310
        %v8312 = vpop.f32.mrb[0].mxu0
        %v8313 = vadd.f32 %v8252, %v8312
        %v8314 = vpop.f32.mrb[0].mxu0
        %v8315 = vpop.f32.mrb[0].mxu0
        %8316 = vdwg.mxu0
        %8317 = vmatprep.subr.bf16.mxu0 %v5099
        %8318 = vmatpush1.bf16.msra.mxu0 %v5098
        %8319 = vmatprep.subr.bf16.mxu0 %v5103
        %8320 = vmatpush1.bf16.msra.mxu0 %v5102
        %8321 = vmatprep.subr.bf16.mxu0 %v5107
        %8322 = vmatpush1.bf16.msra.mxu0 %v5106
        %8323 = vmatprep.subr.bf16.mxu0 %v5111
        %8324 = vmatpush1.bf16.msra.mxu0 %v5110
        %8325 = vmatprep.subr.bf16.mxu0 %v5115
        %8326 = vmatpush1.bf16.msra.mxu0 %v5114
        %8327 = vmatprep.subr.bf16.mxu0 %v5119
        %8328 = vmatpush1.bf16.msra.mxu0 %v5118
        %8329 = vmatprep.subr.bf16.mxu0 %v5123
        %8330 = vmatpush1.bf16.msra.mxu0 %v5122
        %8331 = vmatprep.subr.bf16.mxu0 %v5127
        %8332 = vmatpush1.bf16.msra.mxu0 %v5126
        %8333 = vmatprep.subr.bf16.mxu0 %v5131
        %8334 = vmatpush1.bf16.msra.mxu0 %v5130
        %8335 = vmatprep.subr.bf16.mxu0 %v5135
        %8336 = vmatpush1.bf16.msra.mxu0 %v5134
        %8337 = vmatprep.subr.bf16.mxu0 %v5139
        %8338 = vmatpush1.bf16.msra.mxu0 %v5138
        %8339 = vmatprep.subr.bf16.mxu0 %v5143
        %8340 = vmatpush1.bf16.msra.mxu0 %v5142
        %8341 = vmatprep.subr.bf16.mxu0 %v5147
        %8342 = vmatpush1.bf16.msra.mxu0 %v5146
        %8343 = vmatprep.subr.bf16.mxu0 %v5151
        %8344 = vmatpush1.bf16.msra.mxu0 %v5150
        %8345 = vmatprep.subr.bf16.mxu0 %v5155
        %8346 = vmatpush1.bf16.msra.mxu0 %v5154
        %8347 = vmatprep.subr.bf16.mxu0 %v5159
        %8348 = vmatpush1.bf16.msra.mxu0 %v5158
        %8349 = vmatprep.mubr.bf16.mxu0 %v4040
        %8350 = vmatmul.mubr.bf16.gmra.mrb[0].mxu0 %v4039
        %v8351 = vpop.f32.mrb[0].mxu0
        %v8352 = vadd.f32 0.0, %v8351
        %v8353 = vpop.f32.mrb[0].mxu0
        %v8354 = vadd.f32 0.0, %v8353
        %v8355 = vpop.f32.mrb[0].mxu0
        %v8356 = vadd.f32 0.0, %v8355
        %v8357 = vpop.f32.mrb[0].mxu0
        %v8358 = vadd.f32 0.0, %v8357
        %8359 = vmatprep.mubr.bf16.mxu0 %v4045
        %8360 = vmatmul.mubr.bf16.gmra.mrb[0].mxu0 %v4044
        %v8361 = vpop.f32.mrb[0].mxu0
        %v8362 = vadd.f32 0.0, %v8361
        %v8363 = vpop.f32.mrb[0].mxu0
        %v8364 = vadd.f32 0.0, %v8363
        %v8365 = vpop.f32.mrb[0].mxu0
        %v8366 = vadd.f32 0.0, %v8365
        %v8367 = vpop.f32.mrb[0].mxu0
        %v8368 = vadd.f32 0.0, %v8367
        %8369 = vmatprep.mubr.bf16.mxu0 %v4050
        %8370 = vmatmul.mubr.bf16.gmra.mrb[0].mxu0 %v4049
        %v8371 = vpop.f32.mrb[0].mxu0
        %v8372 = vadd.f32 0.0, %v8371
        %v8373 = vpop.f32.mrb[0].mxu0
        %v8374 = vadd.f32 0.0, %v8373
        %v8375 = vpop.f32.mrb[0].mxu0
        %v8376 = vpop.f32.mrb[0].mxu0
        %8377 = vdwg.mxu0
        %8378 = vmatprep.subr.bf16.mxu0 %v5163
        %8379 = vmatpush1.bf16.msra.mxu0 %v5162
        %8380 = vmatprep.subr.bf16.mxu0 %v5167
        %8381 = vmatpush1.bf16.msra.mxu0 %v5166
        %8382 = vmatprep.subr.bf16.mxu0 %v5171
        %8383 = vmatpush1.bf16.msra.mxu0 %v5170
        %8384 = vmatprep.subr.bf16.mxu0 %v5175
        %8385 = vmatpush1.bf16.msra.mxu0 %v5174
        %8386 = vmatprep.subr.bf16.mxu0 %v5179
        %8387 = vmatpush1.bf16.msra.mxu0 %v5178
        %8388 = vmatprep.subr.bf16.mxu0 %v5183
        %8389 = vmatpush1.bf16.msra.mxu0 %v5182
        %8390 = vmatprep.subr.bf16.mxu0 %v5187
        %8391 = vmatpush1.bf16.msra.mxu0 %v5186
        %8392 = vmatprep.subr.bf16.mxu0 %v5191
        %8393 = vmatpush1.bf16.msra.mxu0 %v5190
        %8394 = vmatprep.subr.bf16.mxu0 %v5195
        %8395 = vmatpush1.bf16.msra.mxu0 %v5194
        %8396 = vmatprep.subr.bf16.mxu0 %v5199
        %8397 = vmatpush1.bf16.msra.mxu0 %v5198
        %8398 = vmatprep.subr.bf16.mxu0 %v5203
        %8399 = vmatpush1.bf16.msra.mxu0 %v5202
        %8400 = vmatprep.subr.bf16.mxu0 %v5207
        %8401 = vmatpush1.bf16.msra.mxu0 %v5206
        %8402 = vmatprep.subr.bf16.mxu0 %v5211
        %8403 = vmatpush1.bf16.msra.mxu0 %v5210
        %8404 = vmatprep.subr.bf16.mxu0 %v5215
        %8405 = vmatpush1.bf16.msra.mxu0 %v5214
        %8406 = vmatprep.subr.bf16.mxu0 %v5219
        %8407 = vmatpush1.bf16.msra.mxu0 %v5218
        %8408 = vmatprep.subr.bf16.mxu0 %v5223
        %8409 = vmatpush1.bf16.msra.mxu0 %v5222
        %8410 = vmatprep.mubr.bf16.mxu0 %v4042
        %8411 = vmatmul.mubr.bf16.gmra.mrb[0].mxu0 %v4041
        %v8412 = vpop.f32.mrb[0].mxu0
        %v8413 = vadd.f32 %v8352, %v8412
        %v8414 = vpop.f32.mrb[0].mxu0
        %v8415 = vadd.f32 %v8354, %v8414
        %v8416 = vpop.f32.mrb[0].mxu0
        %v8417 = vadd.f32 %v8356, %v8416
        %v8418 = vpop.f32.mrb[0].mxu0
        %v8419 = vadd.f32 %v8358, %v8418
        %8420 = vmatprep.mubr.bf16.mxu0 %v4047
        %8421 = vmatmul.mubr.bf16.gmra.mrb[0].mxu0 %v4046
        %v8422 = vpop.f32.mrb[0].mxu0
        %v8423 = vadd.f32 %v8362, %v8422
        %v8424 = vpop.f32.mrb[0].mxu0
        %v8425 = vadd.f32 %v8364, %v8424
        %v8426 = vpop.f32.mrb[0].mxu0
        %v8427 = vadd.f32 %v8366, %v8426
        %v8428 = vpop.f32.mrb[0].mxu0
        %v8429 = vadd.f32 %v8368, %v8428
        %8430 = vmatprep.mubr.bf16.mxu0 %v4052
        %8431 = vmatmul.mubr.bf16.gmra.mrb[0].mxu0 %v4051
        %v8432 = vpop.f32.mrb[0].mxu0
        %v8433 = vadd.f32 %v8372, %v8432
        %v8434 = vpop.f32.mrb[0].mxu0
        %v8435 = vadd.f32 %v8374, %v8434
        %v8436 = vpop.f32.mrb[0].mxu0
        %v8437 = vpop.f32.mrb[0].mxu0
        %8438 = vdwg.mxu0
        %8439 = vmatprep.subr.bf16.mxu0 %v5227
        %8440 = vmatpush1.bf16.msra.mxu0 %v5226
        %8441 = vmatprep.subr.bf16.mxu0 %v5231
        %8442 = vmatpush1.bf16.msra.mxu0 %v5230
        %8443 = vmatprep.subr.bf16.mxu0 %v5235
        %8444 = vmatpush1.bf16.msra.mxu0 %v5234
        %8445 = vmatprep.subr.bf16.mxu0 %v5239
        %8446 = vmatpush1.bf16.msra.mxu0 %v5238
        %8447 = vmatprep.subr.bf16.mxu0 %v5243
        %8448 = vmatpush1.bf16.msra.mxu0 %v5242
        %8449 = vmatprep.subr.bf16.mxu0 %v5247
        %8450 = vmatpush1.bf16.msra.mxu0 %v5246
        %8451 = vmatprep.subr.bf16.mxu0 %v5251
        %8452 = vmatpush1.bf16.msra.mxu0 %v5250
        %8453 = vmatprep.subr.bf16.mxu0 %v5255
        %8454 = vmatpush1.bf16.msra.mxu0 %v5254
        %8455 = vmatprep.subr.bf16.mxu0 0
        %8456 = vmatpush1.bf16.msra.mxu0 0
        %8457 = vmatprep.subr.bf16.mxu0 0
        %8458 = vmatpush1.bf16.msra.mxu0 0
        %8459 = vmatprep.subr.bf16.mxu0 0
        %8460 = vmatpush1.bf16.msra.mxu0 0
        %8461 = vmatprep.subr.bf16.mxu0 0
        %8462 = vmatpush1.bf16.msra.mxu0 0
        %8463 = vmatprep.subr.bf16.mxu0 0
        %8464 = vmatpush1.bf16.msra.mxu0 0
        %8465 = vmatprep.subr.bf16.mxu0 0
        %8466 = vmatpush1.bf16.msra.mxu0 0
        %8467 = vmatprep.subr.bf16.mxu0 0
        %8468 = vmatpush1.bf16.msra.mxu0 0
        %8469 = vmatprep.subr.bf16.mxu0 0
        %8470 = vmatpush1.bf16.msra.mxu0 0
        %8471 = vmatprep.mubr.bf16.mxu0 0
        %8472 = vmatmul.mubr.bf16.gmra.mrb[0].mxu0 %v4043
        %v8473 = vpop.f32.mrb[0].mxu0
        %v8474 = vadd.f32 %v8413, %v8473
        %v8475 = vpop.f32.mrb[0].mxu0
        %v8476 = vadd.f32 %v8415, %v8475
        %v8477 = vpop.f32.mrb[0].mxu0
        %v8478 = vadd.f32 %v8417, %v8477
        %v8479 = vpop.f32.mrb[0].mxu0
        %v8480 = vadd.f32 %v8419, %v8479
        %8481 = vmatprep.mubr.bf16.mxu0 0
        %8482 = vmatmul.mubr.bf16.gmra.mrb[0].mxu0 %v4048
        %v8483 = vpop.f32.mrb[0].mxu0
        %v8484 = vadd.f32 %v8423, %v8483
        %v8485 = vpop.f32.mrb[0].mxu0
        %v8486 = vadd.f32 %v8425, %v8485
        %v8487 = vpop.f32.mrb[0].mxu0
        %v8488 = vadd.f32 %v8427, %v8487
        %v8489 = vpop.f32.mrb[0].mxu0
        %v8490 = vadd.f32 %v8429, %v8489
        %8491 = vmatprep.mubr.bf16.mxu0 0
        %8492 = vmatmul.mubr.bf16.gmra.mrb[0].mxu0 %v4053
        %v8493 = vpop.f32.mrb[0].mxu0
        %v8494 = vadd.f32 %v8433, %v8493
        %v8495 = vpop.f32.mrb[0].mxu0
        %v8496 = vadd.f32 %v8435, %v8495
        %v8497 = vpop.f32.mrb[0].mxu0
        %v8498 = vpop.f32.mrb[0].mxu0
        %8499 = vdwg.mxu0
        %8500 = vmatprep.subr.bf16.mxu0 %v6263
        %8501 = vmatpush1.bf16.msra.mxu0 %v6262
        %8502 = vmatprep.subr.bf16.mxu0 %v6267
        %8503 = vmatpush1.bf16.msra.mxu0 %v6266
        %8504 = vmatprep.subr.bf16.mxu0 %v6271
        %8505 = vmatpush1.bf16.msra.mxu0 %v6270
        %8506 = vmatprep.subr.bf16.mxu0 %v6275
        %8507 = vmatpush1.bf16.msra.mxu0 %v6274
        %8508 = vmatprep.subr.bf16.mxu0 %v6279
        %8509 = vmatpush1.bf16.msra.mxu0 %v6278
        %8510 = vmatprep.subr.bf16.mxu0 %v6283
        %8511 = vmatpush1.bf16.msra.mxu0 %v6282
        %8512 = vmatprep.subr.bf16.mxu0 %v6287
        %8513 = vmatpush1.bf16.msra.mxu0 %v6286
        %8514 = vmatprep.subr.bf16.mxu0 %v6291
        %8515 = vmatpush1.bf16.msra.mxu0 %v6290
        %8516 = vmatprep.subr.bf16.mxu0 %v6295
        %8517 = vmatpush1.bf16.msra.mxu0 %v6294
        %8518 = vmatprep.subr.bf16.mxu0 %v6299
        %8519 = vmatpush1.bf16.msra.mxu0 %v6298
        %8520 = vmatprep.subr.bf16.mxu0 %v6303
        %8521 = vmatpush1.bf16.msra.mxu0 %v6302
        %8522 = vmatprep.subr.bf16.mxu0 %v6307
        %8523 = vmatpush1.bf16.msra.mxu0 %v6306
        %8524 = vmatprep.subr.bf16.mxu0 %v6311
        %8525 = vmatpush1.bf16.msra.mxu0 %v6310
        %8526 = vmatprep.subr.bf16.mxu0 %v6315
        %8527 = vmatpush1.bf16.msra.mxu0 %v6314
        %8528 = vmatprep.subr.bf16.mxu0 %v6319
        %8529 = vmatpush1.bf16.msra.mxu0 %v6318
        %8530 = vmatprep.subr.bf16.mxu0 %v6323
        %8531 = vmatpush1.bf16.msra.mxu0 %v6322
        %8532 = vmatprep.mubr.bf16.mxu0 %v4080
        %8533 = vmatmul.mubr.bf16.gmra.mrb[0].mxu0 %v4079
        %v8534 = vpop.f32.mrb[0].mxu0
        %v8535 = vadd.f32 %v8291, %v8534
        %v8536 = vpop.f32.mrb[0].mxu0
        %v8537 = vadd.f32 %v8293, %v8536
        %v8538 = vpop.f32.mrb[0].mxu0
        %v8539 = vadd.f32 %v8295, %v8538
        %v8540 = vpop.f32.mrb[0].mxu0
        %v8541 = vadd.f32 %v8297, %v8540
        %8542 = vmatprep.mubr.bf16.mxu0 %v4085
        %8543 = vmatmul.mubr.bf16.gmra.mrb[0].mxu0 %v4084
        %v8544 = vpop.f32.mrb[0].mxu0
        %v8545 = vadd.f32 %v8301, %v8544
        %v8546 = vpop.f32.mrb[0].mxu0
        %v8547 = vadd.f32 %v8303, %v8546
        %v8548 = vpop.f32.mrb[0].mxu0
        %v8549 = vadd.f32 %v8305, %v8548
        %v8550 = vpop.f32.mrb[0].mxu0
        %v8551 = vadd.f32 %v8307, %v8550
        %8552 = vmatprep.mubr.bf16.mxu0 %v4090
        %8553 = vmatmul.mubr.bf16.gmra.mrb[0].mxu0 %v4089
        %v8554 = vpop.f32.mrb[0].mxu0
        %v8555 = vadd.f32 %v8311, %v8554
        %v8556 = vpop.f32.mrb[0].mxu0
        %v8557 = vadd.f32 %v8313, %v8556
        %v8558 = vpop.f32.mrb[0].mxu0
        %v8559 = vpop.f32.mrb[0].mxu0
        %8560 = vdwg.mxu0
        %8561 = vmatprep.subr.bf16.mxu0 %v6327
        %8562 = vmatpush1.bf16.msra.mxu0 %v6326
        %8563 = vmatprep.subr.bf16.mxu0 %v6331
        %8564 = vmatpush1.bf16.msra.mxu0 %v6330
        %8565 = vmatprep.subr.bf16.mxu0 %v6335
        %8566 = vmatpush1.bf16.msra.mxu0 %v6334
        %8567 = vmatprep.subr.bf16.mxu0 %v6339
        %8568 = vmatpush1.bf16.msra.mxu0 %v6338
        %8569 = vmatprep.subr.bf16.mxu0 %v6343
        %8570 = vmatpush1.bf16.msra.mxu0 %v6342
        %8571 = vmatprep.subr.bf16.mxu0 %v6347
        %8572 = vmatpush1.bf16.msra.mxu0 %v6346
        %8573 = vmatprep.subr.bf16.mxu0 %v6351
        %8574 = vmatpush1.bf16.msra.mxu0 %v6350
        %8575 = vmatprep.subr.bf16.mxu0 %v6355
        %8576 = vmatpush1.bf16.msra.mxu0 %v6354
        %8577 = vmatprep.subr.bf16.mxu0 %v6359
        %8578 = vmatpush1.bf16.msra.mxu0 %v6358
        %8579 = vmatprep.subr.bf16.mxu0 %v6363
        %8580 = vmatpush1.bf16.msra.mxu0 %v6362
        %8581 = vmatprep.subr.bf16.mxu0 %v6367
        %8582 = vmatpush1.bf16.msra.mxu0 %v6366
        %8583 = vmatprep.subr.bf16.mxu0 %v6371
        %8584 = vmatpush1.bf16.msra.mxu0 %v6370
        %8585 = vmatprep.subr.bf16.mxu0 %v6375
        %8586 = vmatpush1.bf16.msra.mxu0 %v6374
        %8587 = vmatprep.subr.bf16.mxu0 %v6379
        %8588 = vmatpush1.bf16.msra.mxu0 %v6378
        %8589 = vmatprep.subr.bf16.mxu0 %v6383
        %8590 = vmatpush1.bf16.msra.mxu0 %v6382
        %8591 = vmatprep.subr.bf16.mxu0 %v6387
        %8592 = vmatpush1.bf16.msra.mxu0 %v6386
        %8593 = vmatprep.mubr.bf16.mxu0 %v4082
        %8594 = vmatmul.mubr.bf16.gmra.mrb[0].mxu0 %v4081
        %v8595 = vpop.f32.mrb[0].mxu0
        %v8596 = vadd.f32 %v8535, %v8595
        %v8597 = vpop.f32.mrb[0].mxu0
        %v8598 = vadd.f32 %v8537, %v8597
        %v8599 = vpop.f32.mrb[0].mxu0
        %v8600 = vadd.f32 %v8539, %v8599
        %v8601 = vpop.f32.mrb[0].mxu0
        %v8602 = vadd.f32 %v8541, %v8601
        %8603 = vmatprep.mubr.bf16.mxu0 %v4087
        %8604 = vmatmul.mubr.bf16.gmra.mrb[0].mxu0 %v4086
        %v8605 = vpop.f32.mrb[0].mxu0
        %v8606 = vadd.f32 %v8545, %v8605
        %v8607 = vpop.f32.mrb[0].mxu0
        %v8608 = vadd.f32 %v8547, %v8607
        %v8609 = vpop.f32.mrb[0].mxu0
        %v8610 = vadd.f32 %v8549, %v8609
        %v8611 = vpop.f32.mrb[0].mxu0
        %v8612 = vadd.f32 %v8551, %v8611
        %8613 = vmatprep.mubr.bf16.mxu0 %v4092
        %8614 = vmatmul.mubr.bf16.gmra.mrb[0].mxu0 %v4091
        %v8615 = vpop.f32.mrb[0].mxu0
        %v8616 = vadd.f32 %v8555, %v8615
        %v8617 = vpop.f32.mrb[0].mxu0
        %v8618 = vadd.f32 %v8557, %v8617
        %v8619 = vpop.f32.mrb[0].mxu0
        %v8620 = vpop.f32.mrb[0].mxu0
        %8621 = vdwg.mxu0
        %8622 = vmatprep.subr.bf16.mxu0 %v6391
        %8623 = vmatpush1.bf16.msra.mxu0 %v6390
        %8624 = vmatprep.subr.bf16.mxu0 %v6395
        %8625 = vmatpush1.bf16.msra.mxu0 %v6394
        %8626 = vmatprep.subr.bf16.mxu0 %v6399
        %8627 = vmatpush1.bf16.msra.mxu0 %v6398
        %8628 = vmatprep.subr.bf16.mxu0 %v6403
        %8629 = vmatpush1.bf16.msra.mxu0 %v6402
        %8630 = vmatprep.subr.bf16.mxu0 %v6407
        %8631 = vmatpush1.bf16.msra.mxu0 %v6406
        %8632 = vmatprep.subr.bf16.mxu0 %v6411
        %8633 = vmatpush1.bf16.msra.mxu0 %v6410
        %8634 = vmatprep.subr.bf16.mxu0 %v6415
        %8635 = vmatpush1.bf16.msra.mxu0 %v6414
        %8636 = vmatprep.subr.bf16.mxu0 %v6419
        %8637 = vmatpush1.bf16.msra.mxu0 %v6418
        %8638 = vmatprep.subr.bf16.mxu0 0
        %8639 = vmatpush1.bf16.msra.mxu0 0
        %8640 = vmatprep.subr.bf16.mxu0 0
        %8641 = vmatpush1.bf16.msra.mxu0 0
        %8642 = vmatprep.subr.bf16.mxu0 0
        %8643 = vmatpush1.bf16.msra.mxu0 0
        %8644 = vmatprep.subr.bf16.mxu0 0
        %8645 = vmatpush1.bf16.msra.mxu0 0
        %8646 = vmatprep.subr.bf16.mxu0 0
        %8647 = vmatpush1.bf16.msra.mxu0 0
        %8648 = vmatprep.subr.bf16.mxu0 0
        %8649 = vmatpush1.bf16.msra.mxu0 0
        %8650 = vmatprep.subr.bf16.mxu0 0
        %8651 = vmatpush1.bf16.msra.mxu0 0
        %8652 = vmatprep.subr.bf16.mxu0 0
        %8653 = vmatpush1.bf16.msra.mxu0 0
        %8654 = vmatprep.mubr.bf16.mxu0 0
        %8655 = vmatmul.mubr.bf16.gmra.mrb[0].mxu0 %v4083
        %v8656 = vpop.f32.mrb[0].mxu0
        %v8657 = vadd.f32 %v8596, %v8656
        %v8658 = vpop.f32.mrb[0].mxu0
        %v8659 = vadd.f32 %v8598, %v8658
        %v8660 = vpop.f32.mrb[0].mxu0
        %v8661 = vadd.f32 %v8600, %v8660
        %v8662 = vpop.f32.mrb[0].mxu0
        %v8663 = vadd.f32 %v8602, %v8662
        %8664 = vmatprep.mubr.bf16.mxu0 0
        %8665 = vmatmul.mubr.bf16.gmra.mrb[0].mxu0 %v4088
        %v8666 = vpop.f32.mrb[0].mxu0
        %v8667 = vadd.f32 %v8606, %v8666
        %v8668 = vpop.f32.mrb[0].mxu0
        %v8669 = vadd.f32 %v8608, %v8668
        %v8670 = vpop.f32.mrb[0].mxu0
        %v8671 = vadd.f32 %v8610, %v8670
        %v8672 = vpop.f32.mrb[0].mxu0
        %v8673 = vadd.f32 %v8612, %v8672
        %8674 = vmatprep.mubr.bf16.mxu0 0
        %8675 = vmatmul.mubr.bf16.gmra.mrb[0].mxu0 %v4093
        %v8676 = vpop.f32.mrb[0].mxu0
        %v8677 = vadd.f32 %v8616, %v8676
        %v8678 = vpop.f32.mrb[0].mxu0
        %v8679 = vadd.f32 %v8618, %v8678
        %v8680 = vpop.f32.mrb[0].mxu0
        %v8681 = vpop.f32.mrb[0].mxu0
        %8682 = vdwg.mxu0
        %8683 = vmatprep.subr.bf16.mxu0 %v6265
        %8684 = vmatpush1.bf16.msra.mxu0 %v6264
        %8685 = vmatprep.subr.bf16.mxu0 %v6269
        %8686 = vmatpush1.bf16.msra.mxu0 %v6268
        %8687 = vmatprep.subr.bf16.mxu0 %v6273
        %8688 = vmatpush1.bf16.msra.mxu0 %v6272
        %8689 = vmatprep.subr.bf16.mxu0 %v6277
        %8690 = vmatpush1.bf16.msra.mxu0 %v6276
        %8691 = vmatprep.subr.bf16.mxu0 %v6281
        %8692 = vmatpush1.bf16.msra.mxu0 %v6280
        %8693 = vmatprep.subr.bf16.mxu0 %v6285
        %8694 = vmatpush1.bf16.msra.mxu0 %v6284
        %8695 = vmatprep.subr.bf16.mxu0 %v6289
        %8696 = vmatpush1.bf16.msra.mxu0 %v6288
        %8697 = vmatprep.subr.bf16.mxu0 %v6293
        %8698 = vmatpush1.bf16.msra.mxu0 %v6292
        %8699 = vmatprep.subr.bf16.mxu0 %v6297
        %8700 = vmatpush1.bf16.msra.mxu0 %v6296
        %8701 = vmatprep.subr.bf16.mxu0 %v6301
        %8702 = vmatpush1.bf16.msra.mxu0 %v6300
        %8703 = vmatprep.subr.bf16.mxu0 %v6305
        %8704 = vmatpush1.bf16.msra.mxu0 %v6304
        %8705 = vmatprep.subr.bf16.mxu0 %v6309
        %8706 = vmatpush1.bf16.msra.mxu0 %v6308
        %8707 = vmatprep.subr.bf16.mxu0 %v6313
        %8708 = vmatpush1.bf16.msra.mxu0 %v6312
        %8709 = vmatprep.subr.bf16.mxu0 %v6317
        %8710 = vmatpush1.bf16.msra.mxu0 %v6316
        %8711 = vmatprep.subr.bf16.mxu0 %v6321
        %8712 = vmatpush1.bf16.msra.mxu0 %v6320
        %8713 = vmatprep.subr.bf16.mxu0 %v6325
        %8714 = vmatpush1.bf16.msra.mxu0 %v6324
        %8715 = vmatprep.mubr.bf16.mxu0 %v4080
        %8716 = vmatmul.mubr.bf16.gmra.mrb[0].mxu0 %v4079
        %v8717 = vpop.f32.mrb[0].mxu0
        %v8718 = vadd.f32 %v8474, %v8717
        %v8719 = vpop.f32.mrb[0].mxu0
        %v8720 = vadd.f32 %v8476, %v8719
        %v8721 = vpop.f32.mrb[0].mxu0
        %v8722 = vadd.f32 %v8478, %v8721
        %v8723 = vpop.f32.mrb[0].mxu0
        %v8724 = vadd.f32 %v8480, %v8723
        %8725 = vmatprep.mubr.bf16.mxu0 %v4085
        %8726 = vmatmul.mubr.bf16.gmra.mrb[0].mxu0 %v4084
        %v8727 = vpop.f32.mrb[0].mxu0
        %v8728 = vadd.f32 %v8484, %v8727
        %v8729 = vpop.f32.mrb[0].mxu0
        %v8730 = vadd.f32 %v8486, %v8729
        %v8731 = vpop.f32.mrb[0].mxu0
        %v8732 = vadd.f32 %v8488, %v8731
        %v8733 = vpop.f32.mrb[0].mxu0
        %v8734 = vadd.f32 %v8490, %v8733
        %8735 = vmatprep.mubr.bf16.mxu0 %v4090
        %8736 = vmatmul.mubr.bf16.gmra.mrb[0].mxu0 %v4089
        %v8737 = vpop.f32.mrb[0].mxu0
        %v8738 = vadd.f32 %v8494, %v8737
        %v8739 = vpop.f32.mrb[0].mxu0
        %v8740 = vadd.f32 %v8496, %v8739
        %v8741 = vpop.f32.mrb[0].mxu0
        %v8742 = vpop.f32.mrb[0].mxu0
        %8743 = vdwg.mxu0
        %8744 = vmatprep.subr.bf16.mxu0 %v6329
        %8745 = vmatpush1.bf16.msra.mxu0 %v6328
        %8746 = vmatprep.subr.bf16.mxu0 %v6333
        %8747 = vmatpush1.bf16.msra.mxu0 %v6332
        %8748 = vmatprep.subr.bf16.mxu0 %v6337
        %8749 = vmatpush1.bf16.msra.mxu0 %v6336
        %8750 = vmatprep.subr.bf16.mxu0 %v6341
        %8751 = vmatpush1.bf16.msra.mxu0 %v6340
        %8752 = vmatprep.subr.bf16.mxu0 %v6345
        %8753 = vmatpush1.bf16.msra.mxu0 %v6344
        %8754 = vmatprep.subr.bf16.mxu0 %v6349
        %8755 = vmatpush1.bf16.msra.mxu0 %v6348
        %8756 = vmatprep.subr.bf16.mxu0 %v6353
        %8757 = vmatpush1.bf16.msra.mxu0 %v6352
        %8758 = vmatprep.subr.bf16.mxu0 %v6357
        %8759 = vmatpush1.bf16.msra.mxu0 %v6356
        %8760 = vmatprep.subr.bf16.mxu0 %v6361
        %8761 = vmatpush1.bf16.msra.mxu0 %v6360
        %8762 = vmatprep.subr.bf16.mxu0 %v6365
        %8763 = vmatpush1.bf16.msra.mxu0 %v6364
        %8764 = vmatprep.subr.bf16.mxu0 %v6369
        %8765 = vmatpush1.bf16.msra.mxu0 %v6368
        %8766 = vmatprep.subr.bf16.mxu0 %v6373
        %8767 = vmatpush1.bf16.msra.mxu0 %v6372
        %8768 = vmatprep.subr.bf16.mxu0 %v6377
        %8769 = vmatpush1.bf16.msra.mxu0 %v6376
        %8770 = vmatprep.subr.bf16.mxu0 %v6381
        %8771 = vmatpush1.bf16.msra.mxu0 %v6380
        %8772 = vmatprep.subr.bf16.mxu0 %v6385
        %8773 = vmatpush1.bf16.msra.mxu0 %v6384
        %8774 = vmatprep.subr.bf16.mxu0 %v6389
        %8775 = vmatpush1.bf16.msra.mxu0 %v6388
        %8776 = vmatprep.mubr.bf16.mxu0 %v4082
        %8777 = vmatmul.mubr.bf16.gmra.mrb[0].mxu0 %v4081
        %v8778 = vpop.f32.mrb[0].mxu0
        %v8779 = vadd.f32 %v8718, %v8778
        %v8780 = vpop.f32.mrb[0].mxu0
        %v8781 = vadd.f32 %v8720, %v8780
        %v8782 = vpop.f32.mrb[0].mxu0
        %v8783 = vadd.f32 %v8722, %v8782
        %v8784 = vpop.f32.mrb[0].mxu0
        %v8785 = vadd.f32 %v8724, %v8784
        %8786 = vmatprep.mubr.bf16.mxu0 %v4087
        %8787 = vmatmul.mubr.bf16.gmra.mrb[0].mxu0 %v4086
        %v8788 = vpop.f32.mrb[0].mxu0
        %v8789 = vadd.f32 %v8728, %v8788
        %v8790 = vpop.f32.mrb[0].mxu0
        %v8791 = vadd.f32 %v8730, %v8790
        %v8792 = vpop.f32.mrb[0].mxu0
        %v8793 = vadd.f32 %v8732, %v8792
        %v8794 = vpop.f32.mrb[0].mxu0
        %v8795 = vadd.f32 %v8734, %v8794
        %8796 = vmatprep.mubr.bf16.mxu0 %v4092
        %8797 = vmatmul.mubr.bf16.gmra.mrb[0].mxu0 %v4091
        %v8798 = vpop.f32.mrb[0].mxu0
        %v8799 = vadd.f32 %v8738, %v8798
        %v8800 = vpop.f32.mrb[0].mxu0
        %v8801 = vadd.f32 %v8740, %v8800
        %v8802 = vpop.f32.mrb[0].mxu0
        %v8803 = vpop.f32.mrb[0].mxu0
        %8804 = vdwg.mxu0
        %8805 = vmatprep.subr.bf16.mxu0 %v6393
        %8806 = vmatpush1.bf16.msra.mxu0 %v6392
        %8807 = vmatprep.subr.bf16.mxu0 %v6397
        %8808 = vmatpush1.bf16.msra.mxu0 %v6396
        %8809 = vmatprep.subr.bf16.mxu0 %v6401
        %8810 = vmatpush1.bf16.msra.mxu0 %v6400
        %8811 = vmatprep.subr.bf16.mxu0 %v6405
        %8812 = vmatpush1.bf16.msra.mxu0 %v6404
        %8813 = vmatprep.subr.bf16.mxu0 %v6409
        %8814 = vmatpush1.bf16.msra.mxu0 %v6408
        %8815 = vmatprep.subr.bf16.mxu0 %v6413
        %8816 = vmatpush1.bf16.msra.mxu0 %v6412
        %8817 = vmatprep.subr.bf16.mxu0 %v6417
        %8818 = vmatpush1.bf16.msra.mxu0 %v6416
        %8819 = vmatprep.subr.bf16.mxu0 %v6421
        %8820 = vmatpush1.bf16.msra.mxu0 %v6420
        %8821 = vmatprep.subr.bf16.mxu0 0
        %8822 = vmatpush1.bf16.msra.mxu0 0
        %8823 = vmatprep.subr.bf16.mxu0 0
        %8824 = vmatpush1.bf16.msra.mxu0 0
        %8825 = vmatprep.subr.bf16.mxu0 0
        %8826 = vmatpush1.bf16.msra.mxu0 0
        %8827 = vmatprep.subr.bf16.mxu0 0
        %8828 = vmatpush1.bf16.msra.mxu0 0
        %8829 = vmatprep.subr.bf16.mxu0 0
        %8830 = vmatpush1.bf16.msra.mxu0 0
        %8831 = vmatprep.subr.bf16.mxu0 0
        %8832 = vmatpush1.bf16.msra.mxu0 0
        %8833 = vmatprep.subr.bf16.mxu0 0
        %8834 = vmatpush1.bf16.msra.mxu0 0
        %8835 = vmatprep.subr.bf16.mxu0 0
        %8836 = vmatpush1.bf16.msra.mxu0 0
        %8837 = vmatprep.mubr.bf16.mxu0 0
        %8838 = vmatmul.mubr.bf16.gmra.mrb[0].mxu0 %v4083
        %v8839 = vpop.f32.mrb[0].mxu0
        %v8840 = vadd.f32 %v8779, %v8839
        %v8841 = vpop.f32.mrb[0].mxu0
        %v8842 = vadd.f32 %v8781, %v8841
        %v8843 = vpop.f32.mrb[0].mxu0
        %v8844 = vadd.f32 %v8783, %v8843
        %v8845 = vpop.f32.mrb[0].mxu0
        %v8846 = vadd.f32 %v8785, %v8845
        %8847 = vmatprep.mubr.bf16.mxu0 0
        %8848 = vmatmul.mubr.bf16.gmra.mrb[0].mxu0 %v4088
        %v8849 = vpop.f32.mrb[0].mxu0
        %v8850 = vadd.f32 %v8789, %v8849
        %v8851 = vpop.f32.mrb[0].mxu0
        %v8852 = vadd.f32 %v8791, %v8851
        %v8853 = vpop.f32.mrb[0].mxu0
        %v8854 = vadd.f32 %v8793, %v8853
        %v8855 = vpop.f32.mrb[0].mxu0
        %v8856 = vadd.f32 %v8795, %v8855
        %8857 = vmatprep.mubr.bf16.mxu0 0
        %8858 = vmatmul.mubr.bf16.gmra.mrb[0].mxu0 %v4093
        %v8859 = vpop.f32.mrb[0].mxu0
        %v8860 = vadd.f32 %v8799, %v8859
        %v8861 = vpop.f32.mrb[0].mxu0
        %v8862 = vadd.f32 %v8801, %v8861
        %v8863 = vpop.f32.mrb[0].mxu0
        %v8864 = vpop.f32.mrb[0].mxu0
        %8865 = vdwg.mxu0
        %8866 = vmatprep.subr.bf16.mxu0 %v7429
        %8867 = vmatpush1.bf16.msra.mxu0 %v7428
        %8868 = vmatprep.subr.bf16.mxu0 %v7433
        %8869 = vmatpush1.bf16.msra.mxu0 %v7432
        %8870 = vmatprep.subr.bf16.mxu0 %v7437
        %8871 = vmatpush1.bf16.msra.mxu0 %v7436
        %8872 = vmatprep.subr.bf16.mxu0 %v7441
        %8873 = vmatpush1.bf16.msra.mxu0 %v7440
        %8874 = vmatprep.subr.bf16.mxu0 %v7445
        %8875 = vmatpush1.bf16.msra.mxu0 %v7444
        %8876 = vmatprep.subr.bf16.mxu0 %v7449
        %8877 = vmatpush1.bf16.msra.mxu0 %v7448
        %8878 = vmatprep.subr.bf16.mxu0 %v7453
        %8879 = vmatpush1.bf16.msra.mxu0 %v7452
        %8880 = vmatprep.subr.bf16.mxu0 %v7457
        %8881 = vmatpush1.bf16.msra.mxu0 %v7456
        %8882 = vmatprep.subr.bf16.mxu0 %v7461
        %8883 = vmatpush1.bf16.msra.mxu0 %v7460
        %8884 = vmatprep.subr.bf16.mxu0 %v7465
        %8885 = vmatpush1.bf16.msra.mxu0 %v7464
        %8886 = vmatprep.subr.bf16.mxu0 %v7469
        %8887 = vmatpush1.bf16.msra.mxu0 %v7468
        %8888 = vmatprep.subr.bf16.mxu0 %v7473
        %8889 = vmatpush1.bf16.msra.mxu0 %v7472
        %8890 = vmatprep.subr.bf16.mxu0 %v7477
        %8891 = vmatpush1.bf16.msra.mxu0 %v7476
        %8892 = vmatprep.subr.bf16.mxu0 %v7481
        %8893 = vmatpush1.bf16.msra.mxu0 %v7480
        %8894 = vmatprep.subr.bf16.mxu0 %v7485
        %8895 = vmatpush1.bf16.msra.mxu0 %v7484
        %8896 = vmatprep.subr.bf16.mxu0 %v7489
        %8897 = vmatpush1.bf16.msra.mxu0 %v7488
        %8898 = vmatprep.mubr.bf16.mxu0 %v4120
        %8899 = vmatmul.mubr.bf16.gmra.mrb[0].mxu0 %v4119
        %v8900 = vpop.f32.mrb[0].mxu0
        %v8901 = vadd.f32 0.0, %v8900
        %v8902 = vpop.f32.mrb[0].mxu0
        %v8903 = vadd.f32 0.0, %v8902
        %v8904 = vpop.f32.mrb[0].mxu0
        %v8905 = vadd.f32 0.0, %v8904
        %v8906 = vpop.f32.mrb[0].mxu0
        %v8907 = vadd.f32 0.0, %v8906
        %8908 = vmatprep.mubr.bf16.mxu0 %v4125
        %8909 = vmatmul.mubr.bf16.gmra.mrb[0].mxu0 %v4124
        %v8910 = vpop.f32.mrb[0].mxu0
        %v8911 = vadd.f32 0.0, %v8910
        %v8912 = vpop.f32.mrb[0].mxu0
        %v8913 = vadd.f32 0.0, %v8912
        %v8914 = vpop.f32.mrb[0].mxu0
        %v8915 = vadd.f32 0.0, %v8914
        %v8916 = vpop.f32.mrb[0].mxu0
        %v8917 = vadd.f32 0.0, %v8916
        %8918 = vmatprep.mubr.bf16.mxu0 %v4130
        %8919 = vmatmul.mubr.bf16.gmra.mrb[0].mxu0 %v4129
        %v8920 = vpop.f32.mrb[0].mxu0
        %v8921 = vadd.f32 0.0, %v8920
        %v8922 = vpop.f32.mrb[0].mxu0
        %v8923 = vadd.f32 0.0, %v8922
        %v8924 = vpop.f32.mrb[0].mxu0
        %v8925 = vpop.f32.mrb[0].mxu0
        %8926 = vdwg.mxu0
        %8927 = vmatprep.subr.bf16.mxu0 %v7493
        %8928 = vmatpush1.bf16.msra.mxu0 %v7492
        %8929 = vmatprep.subr.bf16.mxu0 %v7497
        %8930 = vmatpush1.bf16.msra.mxu0 %v7496
        %8931 = vmatprep.subr.bf16.mxu0 %v7501
        %8932 = vmatpush1.bf16.msra.mxu0 %v7500
        %8933 = vmatprep.subr.bf16.mxu0 %v7505
        %8934 = vmatpush1.bf16.msra.mxu0 %v7504
        %8935 = vmatprep.subr.bf16.mxu0 %v7509
        %8936 = vmatpush1.bf16.msra.mxu0 %v7508
        %8937 = vmatprep.subr.bf16.mxu0 %v7513
        %8938 = vmatpush1.bf16.msra.mxu0 %v7512
        %8939 = vmatprep.subr.bf16.mxu0 %v7517
        %8940 = vmatpush1.bf16.msra.mxu0 %v7516
        %8941 = vmatprep.subr.bf16.mxu0 %v7521
        %8942 = vmatpush1.bf16.msra.mxu0 %v7520
        %8943 = vmatprep.subr.bf16.mxu0 %v7525
        %8944 = vmatpush1.bf16.msra.mxu0 %v7524
        %8945 = vmatprep.subr.bf16.mxu0 %v7529
        %8946 = vmatpush1.bf16.msra.mxu0 %v7528
        %8947 = vmatprep.subr.bf16.mxu0 %v7533
        %8948 = vmatpush1.bf16.msra.mxu0 %v7532
        %8949 = vmatprep.subr.bf16.mxu0 %v7537
        %8950 = vmatpush1.bf16.msra.mxu0 %v7536
        %8951 = vmatprep.subr.bf16.mxu0 %v7541
        %8952 = vmatpush1.bf16.msra.mxu0 %v7540
        %8953 = vmatprep.subr.bf16.mxu0 %v7545
        %8954 = vmatpush1.bf16.msra.mxu0 %v7544
        %8955 = vmatprep.subr.bf16.mxu0 %v7549
        %8956 = vmatpush1.bf16.msra.mxu0 %v7548
        %8957 = vmatprep.subr.bf16.mxu0 %v7553
        %8958 = vmatpush1.bf16.msra.mxu0 %v7552
        %8959 = vmatprep.mubr.bf16.mxu0 %v4122
        %8960 = vmatmul.mubr.bf16.gmra.mrb[0].mxu0 %v4121
        %v8961 = vpop.f32.mrb[0].mxu0
        %v8962 = vadd.f32 %v8901, %v8961
        %v8963 = vpop.f32.mrb[0].mxu0
        %v8964 = vadd.f32 %v8903, %v8963
        %v8965 = vpop.f32.mrb[0].mxu0
        %v8966 = vadd.f32 %v8905, %v8965
        %v8967 = vpop.f32.mrb[0].mxu0
        %v8968 = vadd.f32 %v8907, %v8967
        %8969 = vmatprep.mubr.bf16.mxu0 %v4127
        %8970 = vmatmul.mubr.bf16.gmra.mrb[0].mxu0 %v4126
        %v8971 = vpop.f32.mrb[0].mxu0
        %v8972 = vadd.f32 %v8911, %v8971
        %v8973 = vpop.f32.mrb[0].mxu0
        %v8974 = vadd.f32 %v8913, %v8973
        %v8975 = vpop.f32.mrb[0].mxu0
        %v8976 = vadd.f32 %v8915, %v8975
        %v8977 = vpop.f32.mrb[0].mxu0
        %v8978 = vadd.f32 %v8917, %v8977
        %8979 = vmatprep.mubr.bf16.mxu0 %v4132
        %8980 = vmatmul.mubr.bf16.gmra.mrb[0].mxu0 %v4131
        %v8981 = vpop.f32.mrb[0].mxu0
        %v8982 = vadd.f32 %v8921, %v8981
        %v8983 = vpop.f32.mrb[0].mxu0
        %v8984 = vadd.f32 %v8923, %v8983
        %v8985 = vpop.f32.mrb[0].mxu0
        %v8986 = vpop.f32.mrb[0].mxu0
        %8987 = vdwg.mxu0
        %8988 = vmatprep.subr.bf16.mxu0 %v7557
        %8989 = vmatpush1.bf16.msra.mxu0 %v7556
        %8990 = vmatprep.subr.bf16.mxu0 %v7561
        %8991 = vmatpush1.bf16.msra.mxu0 %v7560
        %8992 = vmatprep.subr.bf16.mxu0 %v7565
        %8993 = vmatpush1.bf16.msra.mxu0 %v7564
        %8994 = vmatprep.subr.bf16.mxu0 %v7569
        %8995 = vmatpush1.bf16.msra.mxu0 %v7568
        %8996 = vmatprep.subr.bf16.mxu0 %v7573
        %8997 = vmatpush1.bf16.msra.mxu0 %v7572
        %8998 = vmatprep.subr.bf16.mxu0 %v7577
        %8999 = vmatpush1.bf16.msra.mxu0 %v7576
        %9000 = vmatprep.subr.bf16.mxu0 %v7581
        %9001 = vmatpush1.bf16.msra.mxu0 %v7580
        %9002 = vmatprep.subr.bf16.mxu0 %v7585
        %9003 = vmatpush1.bf16.msra.mxu0 %v7584
        %9004 = vmatprep.subr.bf16.mxu0 0
        %9005 = vmatpush1.bf16.msra.mxu0 0
        %9006 = vmatprep.subr.bf16.mxu0 0
        %9007 = vmatpush1.bf16.msra.mxu0 0
        %9008 = vmatprep.subr.bf16.mxu0 0
        %9009 = vmatpush1.bf16.msra.mxu0 0
        %9010 = vmatprep.subr.bf16.mxu0 0
        %9011 = vmatpush1.bf16.msra.mxu0 0
        %9012 = vmatprep.subr.bf16.mxu0 0
        %9013 = vmatpush1.bf16.msra.mxu0 0
        %9014 = vmatprep.subr.bf16.mxu0 0
        %9015 = vmatpush1.bf16.msra.mxu0 0
        %9016 = vmatprep.subr.bf16.mxu0 0
        %9017 = vmatpush1.bf16.msra.mxu0 0
        %9018 = vmatprep.subr.bf16.mxu0 0
        %9019 = vmatpush1.bf16.msra.mxu0 0
        %9020 = vmatprep.mubr.bf16.mxu0 0
        %9021 = vmatmul.mubr.bf16.gmra.mrb[0].mxu0 %v4123
        %v9022 = vpop.f32.mrb[0].mxu0
        %v9023 = vadd.f32 %v8962, %v9022
        %v9024 = vpop.f32.mrb[0].mxu0
        %v9025 = vadd.f32 %v8964, %v9024
        %v9026 = vpop.f32.mrb[0].mxu0
        %v9027 = vadd.f32 %v8966, %v9026
        %v9028 = vpop.f32.mrb[0].mxu0
        %v9029 = vadd.f32 %v8968, %v9028
        %9030 = vmatprep.mubr.bf16.mxu0 0
        %9031 = vmatmul.mubr.bf16.gmra.mrb[0].mxu0 %v4128
        %v9032 = vpop.f32.mrb[0].mxu0
        %v9033 = vadd.f32 %v8972, %v9032
        %v9034 = vpop.f32.mrb[0].mxu0
        %v9035 = vadd.f32 %v8974, %v9034
        %v9036 = vpop.f32.mrb[0].mxu0
        %v9037 = vadd.f32 %v8976, %v9036
        %v9038 = vpop.f32.mrb[0].mxu0
        %v9039 = vadd.f32 %v8978, %v9038
        %9040 = vmatprep.mubr.bf16.mxu0 0
        %9041 = vmatmul.mubr.bf16.gmra.mrb[0].mxu0 %v4133
        %v9042 = vpop.f32.mrb[0].mxu0
        %v9043 = vadd.f32 %v8982, %v9042
        %v9044 = vpop.f32.mrb[0].mxu0
        %v9045 = vadd.f32 %v8984, %v9044
        %v9046 = vpop.f32.mrb[0].mxu0
        %v9047 = vpop.f32.mrb[0].mxu0
        %9048 = vdwg.mxu0
        %9049 = vmatprep.subr.bf16.mxu0 %v7431
        %9050 = vmatpush1.bf16.msra.mxu0 %v7430
        %9051 = vmatprep.subr.bf16.mxu0 %v7435
        %9052 = vmatpush1.bf16.msra.mxu0 %v7434
        %9053 = vmatprep.subr.bf16.mxu0 %v7439
        %9054 = vmatpush1.bf16.msra.mxu0 %v7438
        %9055 = vmatprep.subr.bf16.mxu0 %v7443
        %9056 = vmatpush1.bf16.msra.mxu0 %v7442
        %9057 = vmatprep.subr.bf16.mxu0 %v7447
        %9058 = vmatpush1.bf16.msra.mxu0 %v7446
        %9059 = vmatprep.subr.bf16.mxu0 %v7451
        %9060 = vmatpush1.bf16.msra.mxu0 %v7450
        %9061 = vmatprep.subr.bf16.mxu0 %v7455
        %9062 = vmatpush1.bf16.msra.mxu0 %v7454
        %9063 = vmatprep.subr.bf16.mxu0 %v7459
        %9064 = vmatpush1.bf16.msra.mxu0 %v7458
        %9065 = vmatprep.subr.bf16.mxu0 %v7463
        %9066 = vmatpush1.bf16.msra.mxu0 %v7462
        %9067 = vmatprep.subr.bf16.mxu0 %v7467
        %9068 = vmatpush1.bf16.msra.mxu0 %v7466
        %9069 = vmatprep.subr.bf16.mxu0 %v7471
        %9070 = vmatpush1.bf16.msra.mxu0 %v7470
        %9071 = vmatprep.subr.bf16.mxu0 %v7475
        %9072 = vmatpush1.bf16.msra.mxu0 %v7474
        %9073 = vmatprep.subr.bf16.mxu0 %v7479
        %9074 = vmatpush1.bf16.msra.mxu0 %v7478
        %9075 = vmatprep.subr.bf16.mxu0 %v7483
        %9076 = vmatpush1.bf16.msra.mxu0 %v7482
        %9077 = vmatprep.subr.bf16.mxu0 %v7487
        %9078 = vmatpush1.bf16.msra.mxu0 %v7486
        %9079 = vmatprep.subr.bf16.mxu0 %v7491
        %9080 = vmatpush1.bf16.msra.mxu0 %v7490
        %9081 = vmatprep.mubr.bf16.mxu0 %v4120
        %9082 = vmatmul.mubr.bf16.gmra.mrb[0].mxu0 %v4119
        %v9083 = vpop.f32.mrb[0].mxu0
        %v9084 = vadd.f32 0.0, %v9083
        %v9085 = vpop.f32.mrb[0].mxu0
        %v9086 = vadd.f32 0.0, %v9085
        %v9087 = vpop.f32.mrb[0].mxu0
        %v9088 = vadd.f32 0.0, %v9087
        %v9089 = vpop.f32.mrb[0].mxu0
        %v9090 = vadd.f32 0.0, %v9089
        %9091 = vmatprep.mubr.bf16.mxu0 %v4125
        %9092 = vmatmul.mubr.bf16.gmra.mrb[0].mxu0 %v4124
        %v9093 = vpop.f32.mrb[0].mxu0
        %v9094 = vadd.f32 0.0, %v9093
        %v9095 = vpop.f32.mrb[0].mxu0
        %v9096 = vadd.f32 0.0, %v9095
        %v9097 = vpop.f32.mrb[0].mxu0
        %v9098 = vadd.f32 0.0, %v9097
        %v9099 = vpop.f32.mrb[0].mxu0
        %v9100 = vadd.f32 0.0, %v9099
        %9101 = vmatprep.mubr.bf16.mxu0 %v4130
        %9102 = vmatmul.mubr.bf16.gmra.mrb[0].mxu0 %v4129
        %v9103 = vpop.f32.mrb[0].mxu0
        %v9104 = vadd.f32 0.0, %v9103
        %v9105 = vpop.f32.mrb[0].mxu0
        %v9106 = vadd.f32 0.0, %v9105
        %v9107 = vpop.f32.mrb[0].mxu0
        %v9108 = vpop.f32.mrb[0].mxu0
        %9109 = vdwg.mxu0
        %9110 = vmatprep.subr.bf16.mxu0 %v7495
        %9111 = vmatpush1.bf16.msra.mxu0 %v7494
        %9112 = vmatprep.subr.bf16.mxu0 %v7499
        %9113 = vmatpush1.bf16.msra.mxu0 %v7498
        %9114 = vmatprep.subr.bf16.mxu0 %v7503
        %9115 = vmatpush1.bf16.msra.mxu0 %v7502
        %9116 = vmatprep.subr.bf16.mxu0 %v7507
        %9117 = vmatpush1.bf16.msra.mxu0 %v7506
        %9118 = vmatprep.subr.bf16.mxu0 %v7511
        %9119 = vmatpush1.bf16.msra.mxu0 %v7510
        %9120 = vmatprep.subr.bf16.mxu0 %v7515
        %9121 = vmatpush1.bf16.msra.mxu0 %v7514
        %9122 = vmatprep.subr.bf16.mxu0 %v7519
        %9123 = vmatpush1.bf16.msra.mxu0 %v7518
        %9124 = vmatprep.subr.bf16.mxu0 %v7523
        %9125 = vmatpush1.bf16.msra.mxu0 %v7522
        %9126 = vmatprep.subr.bf16.mxu0 %v7527
        %9127 = vmatpush1.bf16.msra.mxu0 %v7526
        %9128 = vmatprep.subr.bf16.mxu0 %v7531
        %9129 = vmatpush1.bf16.msra.mxu0 %v7530
        %9130 = vmatprep.subr.bf16.mxu0 %v7535
        %9131 = vmatpush1.bf16.msra.mxu0 %v7534
        %9132 = vmatprep.subr.bf16.mxu0 %v7539
        %9133 = vmatpush1.bf16.msra.mxu0 %v7538
        %9134 = vmatprep.subr.bf16.mxu0 %v7543
        %9135 = vmatpush1.bf16.msra.mxu0 %v7542
        %9136 = vmatprep.subr.bf16.mxu0 %v7547
        %9137 = vmatpush1.bf16.msra.mxu0 %v7546
        %9138 = vmatprep.subr.bf16.mxu0 %v7551
        %9139 = vmatpush1.bf16.msra.mxu0 %v7550
        %9140 = vmatprep.subr.bf16.mxu0 %v7555
        %9141 = vmatpush1.bf16.msra.mxu0 %v7554
        %9142 = vmatprep.mubr.bf16.mxu0 %v4122
        %9143 = vmatmul.mubr.bf16.gmra.mrb[0].mxu0 %v4121
        %v9144 = vpop.f32.mrb[0].mxu0
        %v9145 = vadd.f32 %v9084, %v9144
        %v9146 = vpop.f32.mrb[0].mxu0
        %v9147 = vadd.f32 %v9086, %v9146
        %v9148 = vpop.f32.mrb[0].mxu0
        %v9149 = vadd.f32 %v9088, %v9148
        %v9150 = vpop.f32.mrb[0].mxu0
        %v9151 = vadd.f32 %v9090, %v9150
        %9152 = vmatprep.mubr.bf16.mxu0 %v4127
        %9153 = vmatmul.mubr.bf16.gmra.mrb[0].mxu0 %v4126
        %v9154 = vpop.f32.mrb[0].mxu0
        %v9155 = vadd.f32 %v9094, %v9154
        %v9156 = vpop.f32.mrb[0].mxu0
        %v9157 = vadd.f32 %v9096, %v9156
        %v9158 = vpop.f32.mrb[0].mxu0
        %v9159 = vadd.f32 %v9098, %v9158
        %v9160 = vpop.f32.mrb[0].mxu0
        %v9161 = vadd.f32 %v9100, %v9160
        %9162 = vmatprep.mubr.bf16.mxu0 %v4132
        %9163 = vmatmul.mubr.bf16.gmra.mrb[0].mxu0 %v4131
        %v9164 = vpop.f32.mrb[0].mxu0
        %v9165 = vadd.f32 %v9104, %v9164
        %v9166 = vpop.f32.mrb[0].mxu0
        %v9167 = vadd.f32 %v9106, %v9166
        %v9168 = vpop.f32.mrb[0].mxu0
        %v9169 = vpop.f32.mrb[0].mxu0
        %9170 = vdwg.mxu0
        %9171 = vmatprep.subr.bf16.mxu0 %v7559
        %9172 = vmatpush1.bf16.msra.mxu0 %v7558
        %9173 = vmatprep.subr.bf16.mxu0 %v7563
        %9174 = vmatpush1.bf16.msra.mxu0 %v7562
        %9175 = vmatprep.subr.bf16.mxu0 %v7567
        %9176 = vmatpush1.bf16.msra.mxu0 %v7566
        %9177 = vmatprep.subr.bf16.mxu0 %v7571
        %9178 = vmatpush1.bf16.msra.mxu0 %v7570
        %9179 = vmatprep.subr.bf16.mxu0 %v7575
        %9180 = vmatpush1.bf16.msra.mxu0 %v7574
        %9181 = vmatprep.subr.bf16.mxu0 %v7579
        %9182 = vmatpush1.bf16.msra.mxu0 %v7578
        %9183 = vmatprep.subr.bf16.mxu0 %v7583
        %9184 = vmatpush1.bf16.msra.mxu0 %v7582
        %9185 = vmatprep.subr.bf16.mxu0 %v7587
        %9186 = vmatpush1.bf16.msra.mxu0 %v7586
        %9187 = vmatprep.subr.bf16.mxu0 0
        %9188 = vmatpush1.bf16.msra.mxu0 0
        %9189 = vmatprep.subr.bf16.mxu0 0
        %9190 = vmatpush1.bf16.msra.mxu0 0
        %9191 = vmatprep.subr.bf16.mxu0 0
        %9192 = vmatpush1.bf16.msra.mxu0 0
        %9193 = vmatprep.subr.bf16.mxu0 0
        %9194 = vmatpush1.bf16.msra.mxu0 0
        %9195 = vmatprep.subr.bf16.mxu0 0
        %9196 = vmatpush1.bf16.msra.mxu0 0
        %9197 = vmatprep.subr.bf16.mxu0 0
        %9198 = vmatpush1.bf16.msra.mxu0 0
        %9199 = vmatprep.subr.bf16.mxu0 0
        %9200 = vmatpush1.bf16.msra.mxu0 0
        %9201 = vmatprep.subr.bf16.mxu0 0
        %9202 = vmatpush1.bf16.msra.mxu0 0
        %9203 = vmatprep.mubr.bf16.mxu0 0
        %9204 = vmatmul.mubr.bf16.gmra.mrb[0].mxu0 %v4123
        %v9205 = vpop.f32.mrb[0].mxu0
        %v9206 = vadd.f32 %v9145, %v9205
        %v9207 = vpop.f32.mrb[0].mxu0
        %v9208 = vadd.f32 %v9147, %v9207
        %v9209 = vpop.f32.mrb[0].mxu0
        %v9210 = vadd.f32 %v9149, %v9209
        %v9211 = vpop.f32.mrb[0].mxu0
        %v9212 = vadd.f32 %v9151, %v9211
        %9213 = vmatprep.mubr.bf16.mxu0 0
        %9214 = vmatmul.mubr.bf16.gmra.mrb[0].mxu0 %v4128
        %v9215 = vpop.f32.mrb[0].mxu0
        %v9216 = vadd.f32 %v9155, %v9215
        %v9217 = vpop.f32.mrb[0].mxu0
        %v9218 = vadd.f32 %v9157, %v9217
        %v9219 = vpop.f32.mrb[0].mxu0
        %v9220 = vadd.f32 %v9159, %v9219
        %v9221 = vpop.f32.mrb[0].mxu0
        %v9222 = vadd.f32 %v9161, %v9221
        %9223 = vmatprep.mubr.bf16.mxu0 0
        %9224 = vmatmul.mubr.bf16.gmra.mrb[0].mxu0 %v4133
        %v9225 = vpop.f32.mrb[0].mxu0
        %v9226 = vadd.f32 %v9165, %v9225
        %v9227 = vpop.f32.mrb[0].mxu0
        %v9228 = vadd.f32 %v9167, %v9227
        %v9229 = vpop.f32.mrb[0].mxu0
        %v9230 = vpop.f32.mrb[0].mxu0
        %9231 = vdwg.mxu0
        %v9232 = vadd.f32 %v8657, %v9023
        %v9233 = vadd.f32 %v8659, %v9025
        %v9234 = vadd.f32 %v8840, %v9206
        %v9235 = vadd.f32 %v8842, %v9208
        %v9236 = vadd.f32 %v8661, %v9027
        %v9237 = vadd.f32 %v8663, %v9029
        %v9238 = vadd.f32 %v8844, %v9210
        %v9239 = vadd.f32 %v8846, %v9212
        %v9240 = vadd.f32 %v8667, %v9033
        %v9241 = vadd.f32 %v8669, %v9035
        %v9242 = vadd.f32 %v8850, %v9216
        %v9243 = vadd.f32 %v8852, %v9218
        %v9244 = vadd.f32 %v8671, %v9037
        %v9245 = vadd.f32 %v8673, %v9039
        %v9246 = vadd.f32 %v8854, %v9220
        %v9247 = vadd.f32 %v8856, %v9222
        %v9248 = vadd.f32 %v8677, %v9043
        %v9249 = vadd.f32 %v8679, %v9045
        %v9250 = vadd.f32 %v8860, %v9226
        %v9251 = vadd.f32 %v8862, %v9228
        %v9252 = vld [vmem:[%s7] sm:$0x3]
        %v9253 = vmax.f32 %v8114, %v8116
        %v9254 = vmax.f32 %v8115, %v8117
        %v9255 = vmax.f32 %v8118, %v8120
        %v9256 = vmax.f32 %v8119, %v8121
        %v9257 = vmax.f32 %v8122, %v8124
        %v9258 = vmax.f32 %v8123, %v8125
        %v9259 = vmax.f32 %v8126, %v8128
        %v9260 = vmax.f32 %v8127, %v8129
        %v9261 = vmax.f32 %v8130, %v8132
        %v9262 = vmax.f32 %v8131, %v8133
        %v9263 = vmax.f32 %v9232, %v9234
        %v9264 = vmax.f32 %v9233, %v9235
        %v9265 = vmax.f32 %v9236, %v9238
        %v9266 = vmax.f32 %v9237, %v9239
        %v9267 = vmax.f32 %v9240, %v9242
        %v9268 = vmax.f32 %v9241, %v9243
        %v9269 = vmax.f32 %v9244, %v9246
        %v9270 = vmax.f32 %v9245, %v9247
        %v9271 = vmax.f32 %v9248, %v9250
        %v9272 = vmax.f32 %v9249, %v9251
        %v9273 = vmax.f32 %v9253, %v9263
        %v9274 = vmax.f32 %v9254, %v9264
        %v9275 = vmax.f32 %v9255, %v9265
        %v9276 = vmax.f32 %v9256, %v9266
        %v9277 = vmax.f32 %v9257, %v9267
        %v9278 = vmax.f32 %v9258, %v9268
        %v9279 = vmax.f32 %v9259, %v9269
        %v9280 = vmax.f32 %v9260, %v9270
        %v9281 = vmax.f32 %v9261, %v9271
        %v9282 = vmax.f32 %v9262, %v9272
        %v9284 = vlaneseq
        %v9285 = vshrl.u32 %v9284, 7
        %v9286 = vsub.s32 0, %v9285
        %v9287 = vrot.slane %v9252, %v9286
        %v9288 = vlaneseq
        %v9289 = vshrl.u32 %v9288, 7
        %v9290 = vsub.s32 1, %v9289
        %v9291 = vrot.slane %v9252, %v9290
        %v9294 = vadd.f32 %v9273, %v9287
        %v9295 = vadd.f32 %v9274, %v9291
        %v9296 = vadd.f32 %v9275, %v9287
        %v9297 = vadd.f32 %v9276, %v9291
        %v9298 = vadd.f32 %v9277, %v9287
        %v9299 = vadd.f32 %v9278, %v9291
        %v9300 = vadd.f32 %v9279, %v9287
        %v9301 = vadd.f32 %v9280, %v9291
        %v9302 = vadd.f32 %v9281, %v9287
        %v9303 = vadd.f32 %v9282, %v9291
        %v9304 = vmax.f32 %v9294, 0.0
        %v9305 = vmax.f32 %v9295, 0.0
        %v9306 = vmax.f32 %v9296, 0.0
        %v9307 = vmax.f32 %v9297, 0.0
        %v9308 = vmax.f32 %v9298, 0.0
        %v9309 = vmax.f32 %v9299, 0.0
        %v9310 = vmax.f32 %v9300, 0.0
        %v9311 = vmax.f32 %v9301, 0.0
        %v9312 = vmax.f32 %v9302, 0.0
        %v9313 = vmax.f32 %v9303, 0.0
        %v9316 = vcombine.low %v9304, %v9305
        %v9318 = vunpack.c.l.s4 1966171168
        %v9319 = vunpack.c.0.s8 %v9318
        %v9320 = vlaneseq
        %v9321 = vshrl.u32 %v9320, 7
        %v9322 = vsub.s32 %v9319, %v9321
        %v9323 = vrot.slane %v9316, %v9322
        %v9325 = vunpack.c.l.s4 1966171168
        %v9326 = vunpack.c.0.s8 %v9325
        %v9327 = vlaneseq
        %v9328 = vshrl.u32 %v9327, 7
        %v9329 = vsub.s32 %v9326, %v9328
        %v9330 = vrot.slane %v9323, %v9329
        %v9332 = vlaneseq
        %vm9333 = vcmp.ge.s32.totalorder %v9332, 0
        %vm9334 = vcmp.lt.s32.totalorder %v9332, 256
        %vm9335 = vmand %vm9333, %vm9334
        %9336 = vst.msk [vmem:[#allocation6] ss:$8 sm:$0x3] %vm9335, %v9330
        %9337 = vst.msk [vmem:[#allocation6] ss:$8 sm:$0x0] %vm9335, %v9330
        %v9338 = vcombine.high %v9323, %v9323
        %v9340 = vunpack.c.l.s4 1966171168
        %v9341 = vunpack.c.0.s8 %v9340
        %v9342 = vlaneseq
        %v9343 = vshrl.u32 %v9342, 7
        %v9344 = vsub.s32 %v9341, %v9343
        %v9345 = vrot.slane %v9338, %v9344
        %s9347 = scalar_lea.vmem [#allocation6], 16
        %9348 = vst.msk [vmem:[%s9347] ss:$8 sm:$0x3] %vm9335, %v9345
        %9349 = vst.msk [vmem:[%s9347] ss:$8 sm:$0x0] %vm9335, %v9345
        %v9350 = vcombine.high %v9330, %v9330
        %s9352 = scalar_lea.vmem [#allocation6], 32
        %9353 = vst.msk [vmem:[%s9352] ss:$8 sm:$0x3] %vm9335, %v9350
        %9354 = vst.msk [vmem:[%s9352] ss:$8 sm:$0x0] %vm9335, %v9350
        %v9355 = vcombine.high %v9345, %v9345
        %s9357 = scalar_lea.vmem [#allocation6], 48
        %9358 = vst.msk [vmem:[%s9357] ss:$8 sm:$0x3] %vm9335, %v9355
        %9359 = vst.msk [vmem:[%s9357] ss:$8 sm:$0x0] %vm9335, %v9355
        %v9360 = vcombine.high %v9304, %v9305
        %v9362 = vunpack.c.l.s4 1966171168
        %v9363 = vunpack.c.0.s8 %v9362
        %v9364 = vlaneseq
        %v9365 = vshrl.u32 %v9364, 7
        %v9366 = vsub.s32 %v9363, %v9365
        %v9367 = vrot.slane %v9360, %v9366
        %v9369 = vunpack.c.l.s4 1966171168
        %v9370 = vunpack.c.0.s8 %v9369
        %v9371 = vlaneseq
        %v9372 = vshrl.u32 %v9371, 7
        %v9373 = vsub.s32 %v9370, %v9372
        %v9374 = vrot.slane %v9367, %v9373
        %s9376 = scalar_lea.vmem [#allocation6], 64
        %9377 = vst.msk [vmem:[%s9376] ss:$8 sm:$0x3] %vm9335, %v9374
        %9378 = vst.msk [vmem:[%s9376] ss:$8 sm:$0x0] %vm9335, %v9374
        %v9379 = vcombine.high %v9367, %v9367
        %v9381 = vunpack.c.l.s4 1966171168
        %v9382 = vunpack.c.0.s8 %v9381
        %v9383 = vlaneseq
        %v9384 = vshrl.u32 %v9383, 7
        %v9385 = vsub.s32 %v9382, %v9384
        %v9386 = vrot.slane %v9379, %v9385
        %s9388 = scalar_lea.vmem [#allocation6], 1
        %9389 = vst.msk [vmem:[%s9388] ss:$8 sm:$0x3] %vm9335, %v9386
        %9390 = vst.msk [vmem:[%s9388] ss:$8 sm:$0x0] %vm9335, %v9386
        %v9391 = vcombine.high %v9374, %v9374
        %s9393 = scalar_lea.vmem %s9347, 1 [#allocation6]
        %9394 = vst.msk [vmem:[%s9393] ss:$8 sm:$0x3] %vm9335, %v9391
        %9395 = vst.msk [vmem:[%s9393] ss:$8 sm:$0x0] %vm9335, %v9391
        %v9396 = vcombine.high %v9386, %v9386
        %s9398 = scalar_lea.vmem %s9352, 1 [#allocation6]
        %9399 = vst.msk [vmem:[%s9398] ss:$8 sm:$0x3] %vm9335, %v9396
        %9400 = vst.msk [vmem:[%s9398] ss:$8 sm:$0x0] %vm9335, %v9396
        %v9403 = vcombine.low %v9306, %v9307
        %v9405 = vunpack.c.l.s4 1966171168
        %v9406 = vunpack.c.0.s8 %v9405
        %v9407 = vlaneseq
        %v9408 = vshrl.u32 %v9407, 7
        %v9409 = vsub.s32 %v9406, %v9408
        %v9410 = vrot.slane %v9403, %v9409
        %v9412 = vunpack.c.l.s4 1966171168
        %v9413 = vunpack.c.0.s8 %v9412
        %v9414 = vlaneseq
        %v9415 = vshrl.u32 %v9414, 7
        %v9416 = vsub.s32 %v9413, %v9415
        %v9417 = vrot.slane %v9410, %v9416
        %s9419 = scalar_lea.vmem %s9357, 1 [#allocation6]
        %9420 = vst.msk [vmem:[%s9419] ss:$8 sm:$0x3] %vm9335, %v9417
        %9421 = vst.msk [vmem:[%s9419] ss:$8 sm:$0x0] %vm9335, %v9417
        %v9422 = vcombine.high %v9410, %v9410
        %v9424 = vunpack.c.l.s4 1966171168
        %v9425 = vunpack.c.0.s8 %v9424
        %v9426 = vlaneseq
        %v9427 = vshrl.u32 %v9426, 7
        %v9428 = vsub.s32 %v9425, %v9427
        %v9429 = vrot.slane %v9422, %v9428
        %s9431 = scalar_lea.vmem %s9376, 1 [#allocation6]
        %9432 = vst.msk [vmem:[%s9431] ss:$8 sm:$0x3] %vm9335, %v9429
        %9433 = vst.msk [vmem:[%s9431] ss:$8 sm:$0x0] %vm9335, %v9429
        %v9434 = vcombine.high %v9417, %v9417
        %s9436 = scalar_lea.vmem [#allocation6], 2
        %9437 = vst.msk [vmem:[%s9436] ss:$8 sm:$0x3] %vm9335, %v9434
        %9438 = vst.msk [vmem:[%s9436] ss:$8 sm:$0x0] %vm9335, %v9434
        %v9439 = vcombine.high %v9429, %v9429
        %s9441 = scalar_lea.vmem %s9347, 2 [#allocation6]
        %9442 = vst.msk [vmem:[%s9441] ss:$8 sm:$0x3] %vm9335, %v9439
        %9443 = vst.msk [vmem:[%s9441] ss:$8 sm:$0x0] %vm9335, %v9439
        %v9444 = vcombine.high %v9306, %v9307
        %v9446 = vunpack.c.l.s4 1966171168
        %v9447 = vunpack.c.0.s8 %v9446
        %v9448 = vlaneseq
        %v9449 = vshrl.u32 %v9448, 7
        %v9450 = vsub.s32 %v9447, %v9449
        %v9451 = vrot.slane %v9444, %v9450
        %v9453 = vunpack.c.l.s4 1966171168
        %v9454 = vunpack.c.0.s8 %v9453
        %v9455 = vlaneseq
        %v9456 = vshrl.u32 %v9455, 7
        %v9457 = vsub.s32 %v9454, %v9456
        %v9458 = vrot.slane %v9451, %v9457
        %s9460 = scalar_lea.vmem %s9352, 2 [#allocation6]
        %9461 = vst.msk [vmem:[%s9460] ss:$8 sm:$0x3] %vm9335, %v9458
        %9462 = vst.msk [vmem:[%s9460] ss:$8 sm:$0x0] %vm9335, %v9458
        %v9463 = vcombine.high %v9451, %v9451
        %v9465 = vunpack.c.l.s4 1966171168
        %v9466 = vunpack.c.0.s8 %v9465
        %v9467 = vlaneseq
        %v9468 = vshrl.u32 %v9467, 7
        %v9469 = vsub.s32 %v9466, %v9468
        %v9470 = vrot.slane %v9463, %v9469
        %s9472 = scalar_lea.vmem %s9357, 2 [#allocation6]
        %9473 = vst.msk [vmem:[%s9472] ss:$8 sm:$0x3] %vm9335, %v9470
        %9474 = vst.msk [vmem:[%s9472] ss:$8 sm:$0x0] %vm9335, %v9470
        %v9475 = vcombine.high %v9458, %v9458
        %s9477 = scalar_lea.vmem %s9376, 2 [#allocation6]
        %9478 = vst.msk [vmem:[%s9477] ss:$8 sm:$0x3] %vm9335, %v9475
        %9479 = vst.msk [vmem:[%s9477] ss:$8 sm:$0x0] %vm9335, %v9475
        %v9480 = vcombine.high %v9470, %v9470
        %s9482 = scalar_lea.vmem [#allocation6], 3
        %9483 = vst.msk [vmem:[%s9482] ss:$8 sm:$0x3] %vm9335, %v9480
        %9484 = vst.msk [vmem:[%s9482] ss:$8 sm:$0x0] %vm9335, %v9480
        %v9487 = vcombine.low %v9308, %v9309
        %v9489 = vunpack.c.l.s4 1966171168
        %v9490 = vunpack.c.0.s8 %v9489
        %v9491 = vlaneseq
        %v9492 = vshrl.u32 %v9491, 7
        %v9493 = vsub.s32 %v9490, %v9492
        %v9494 = vrot.slane %v9487, %v9493
        %v9496 = vunpack.c.l.s4 1966171168
        %v9497 = vunpack.c.0.s8 %v9496
        %v9498 = vlaneseq
        %v9499 = vshrl.u32 %v9498, 7
        %v9500 = vsub.s32 %v9497, %v9499
        %v9501 = vrot.slane %v9494, %v9500
        %s9503 = scalar_lea.vmem %s9347, 3 [#allocation6]
        %9504 = vst.msk [vmem:[%s9503] ss:$8 sm:$0x3] %vm9335, %v9501
        %9505 = vst.msk [vmem:[%s9503] ss:$8 sm:$0x0] %vm9335, %v9501
        %v9506 = vcombine.high %v9494, %v9494
        %v9508 = vunpack.c.l.s4 1966171168
        %v9509 = vunpack.c.0.s8 %v9508
        %v9510 = vlaneseq
        %v9511 = vshrl.u32 %v9510, 7
        %v9512 = vsub.s32 %v9509, %v9511
        %v9513 = vrot.slane %v9506, %v9512
        %s9515 = scalar_lea.vmem %s9352, 3 [#allocation6]
        %9516 = vst.msk [vmem:[%s9515] ss:$8 sm:$0x3] %vm9335, %v9513
        %9517 = vst.msk [vmem:[%s9515] ss:$8 sm:$0x0] %vm9335, %v9513
        %v9518 = vcombine.high %v9501, %v9501
        %s9520 = scalar_lea.vmem %s9357, 3 [#allocation6]
        %9521 = vst.msk [vmem:[%s9520] ss:$8 sm:$0x3] %vm9335, %v9518
        %9522 = vst.msk [vmem:[%s9520] ss:$8 sm:$0x0] %vm9335, %v9518
        %v9523 = vcombine.high %v9513, %v9513
        %s9525 = scalar_lea.vmem %s9376, 3 [#allocation6]
        %9526 = vst.msk [vmem:[%s9525] ss:$8 sm:$0x3] %vm9335, %v9523
        %9527 = vst.msk [vmem:[%s9525] ss:$8 sm:$0x0] %vm9335, %v9523
        %v9528 = vcombine.high %v9308, %v9309
        %v9530 = vunpack.c.l.s4 1966171168
        %v9531 = vunpack.c.0.s8 %v9530
        %v9532 = vlaneseq
        %v9533 = vshrl.u32 %v9532, 7
        %v9534 = vsub.s32 %v9531, %v9533
        %v9535 = vrot.slane %v9528, %v9534
        %v9537 = vunpack.c.l.s4 1966171168
        %v9538 = vunpack.c.0.s8 %v9537
        %v9539 = vlaneseq
        %v9540 = vshrl.u32 %v9539, 7
        %v9541 = vsub.s32 %v9538, %v9540
        %v9542 = vrot.slane %v9535, %v9541
        %s9544 = scalar_lea.vmem [#allocation6], 4
        %9545 = vst.msk [vmem:[%s9544] ss:$8 sm:$0x3] %vm9335, %v9542
        %9546 = vst.msk [vmem:[%s9544] ss:$8 sm:$0x0] %vm9335, %v9542
        %v9547 = vcombine.high %v9535, %v9535
        %v9549 = vunpack.c.l.s4 1966171168
        %v9550 = vunpack.c.0.s8 %v9549
        %v9551 = vlaneseq
        %v9552 = vshrl.u32 %v9551, 7
        %v9553 = vsub.s32 %v9550, %v9552
        %v9554 = vrot.slane %v9547, %v9553
        %s9556 = scalar_lea.vmem %s9347, 4 [#allocation6]
        %9557 = vst.msk [vmem:[%s9556] ss:$8 sm:$0x3] %vm9335, %v9554
        %9558 = vst.msk [vmem:[%s9556] ss:$8 sm:$0x0] %vm9335, %v9554
        %v9559 = vcombine.high %v9542, %v9542
        %s9561 = scalar_lea.vmem %s9352, 4 [#allocation6]
        %9562 = vst.msk [vmem:[%s9561] ss:$8 sm:$0x3] %vm9335, %v9559
        %9563 = vst.msk [vmem:[%s9561] ss:$8 sm:$0x0] %vm9335, %v9559
        %v9564 = vcombine.high %v9554, %v9554
        %s9566 = scalar_lea.vmem %s9357, 4 [#allocation6]
        %9567 = vst.msk [vmem:[%s9566] ss:$8 sm:$0x3] %vm9335, %v9564
        %9568 = vst.msk [vmem:[%s9566] ss:$8 sm:$0x0] %vm9335, %v9564
        %v9571 = vcombine.low %v9310, %v9311
        %v9573 = vunpack.c.l.s4 1966171168
        %v9574 = vunpack.c.0.s8 %v9573
        %v9575 = vlaneseq
        %v9576 = vshrl.u32 %v9575, 7
        %v9577 = vsub.s32 %v9574, %v9576
        %v9578 = vrot.slane %v9571, %v9577
        %v9580 = vunpack.c.l.s4 1966171168
        %v9581 = vunpack.c.0.s8 %v9580
        %v9582 = vlaneseq
        %v9583 = vshrl.u32 %v9582, 7
        %v9584 = vsub.s32 %v9581, %v9583
        %v9585 = vrot.slane %v9578, %v9584
        %s9587 = scalar_lea.vmem %s9376, 4 [#allocation6]
        %9588 = vst.msk [vmem:[%s9587] ss:$8 sm:$0x3] %vm9335, %v9585
        %9589 = vst.msk [vmem:[%s9587] ss:$8 sm:$0x0] %vm9335, %v9585
        %v9590 = vcombine.high %v9578, %v9578
        %v9592 = vunpack.c.l.s4 1966171168
        %v9593 = vunpack.c.0.s8 %v9592
        %v9594 = vlaneseq
        %v9595 = vshrl.u32 %v9594, 7
        %v9596 = vsub.s32 %v9593, %v9595
        %v9597 = vrot.slane %v9590, %v9596
        %s9599 = scalar_lea.vmem [#allocation6], 5
        %9600 = vst.msk [vmem:[%s9599] ss:$8 sm:$0x3] %vm9335, %v9597
        %9601 = vst.msk [vmem:[%s9599] ss:$8 sm:$0x0] %vm9335, %v9597
        %v9602 = vcombine.high %v9585, %v9585
        %s9604 = scalar_lea.vmem %s9347, 5 [#allocation6]
        %9605 = vst.msk [vmem:[%s9604] ss:$8 sm:$0x3] %vm9335, %v9602
        %9606 = vst.msk [vmem:[%s9604] ss:$8 sm:$0x0] %vm9335, %v9602
        %v9607 = vcombine.high %v9597, %v9597
        %s9609 = scalar_lea.vmem %s9352, 5 [#allocation6]
        %9610 = vst.msk [vmem:[%s9609] ss:$8 sm:$0x3] %vm9335, %v9607
        %9611 = vst.msk [vmem:[%s9609] ss:$8 sm:$0x0] %vm9335, %v9607
        %v9612 = vcombine.high %v9310, %v9311
        %v9614 = vunpack.c.l.s4 1966171168
        %v9615 = vunpack.c.0.s8 %v9614
        %v9616 = vlaneseq
        %v9617 = vshrl.u32 %v9616, 7
        %v9618 = vsub.s32 %v9615, %v9617
        %v9619 = vrot.slane %v9612, %v9618
        %v9621 = vunpack.c.l.s4 1966171168
        %v9622 = vunpack.c.0.s8 %v9621
        %v9623 = vlaneseq
        %v9624 = vshrl.u32 %v9623, 7
        %v9625 = vsub.s32 %v9622, %v9624
        %v9626 = vrot.slane %v9619, %v9625
        %s9628 = scalar_lea.vmem %s9357, 5 [#allocation6]
        %9629 = vst.msk [vmem:[%s9628] ss:$8 sm:$0x3] %vm9335, %v9626
        %9630 = vst.msk [vmem:[%s9628] ss:$8 sm:$0x0] %vm9335, %v9626
        %v9631 = vcombine.high %v9619, %v9619
        %v9633 = vunpack.c.l.s4 1966171168
        %v9634 = vunpack.c.0.s8 %v9633
        %v9635 = vlaneseq
        %v9636 = vshrl.u32 %v9635, 7
        %v9637 = vsub.s32 %v9634, %v9636
        %v9638 = vrot.slane %v9631, %v9637
        %s9640 = scalar_lea.vmem %s9376, 5 [#allocation6]
        %9641 = vst.msk [vmem:[%s9640] ss:$8 sm:$0x3] %vm9335, %v9638
        %9642 = vst.msk [vmem:[%s9640] ss:$8 sm:$0x0] %vm9335, %v9638
        %v9643 = vcombine.high %v9626, %v9626
        %s9645 = scalar_lea.vmem [#allocation6], 6
        %9646 = vst.msk [vmem:[%s9645] ss:$8 sm:$0x3] %vm9335, %v9643
        %9647 = vst.msk [vmem:[%s9645] ss:$8 sm:$0x0] %vm9335, %v9643
        %v9648 = vcombine.high %v9638, %v9638
        %s9650 = scalar_lea.vmem %s9347, 6 [#allocation6]
        %9651 = vst.msk [vmem:[%s9650] ss:$8 sm:$0x3] %vm9335, %v9648
        %9652 = vst.msk [vmem:[%s9650] ss:$8 sm:$0x0] %vm9335, %v9648
        %v9655 = vcombine.low %v9312, %v9313
        %v9657 = vunpack.c.l.s4 1966171168
        %v9658 = vunpack.c.0.s8 %v9657
        %v9659 = vlaneseq
        %v9660 = vshrl.u32 %v9659, 7
        %v9661 = vsub.s32 %v9658, %v9660
        %v9662 = vrot.slane %v9655, %v9661
        %v9664 = vunpack.c.l.s4 1966171168
        %v9665 = vunpack.c.0.s8 %v9664
        %v9666 = vlaneseq
        %v9667 = vshrl.u32 %v9666, 7
        %v9668 = vsub.s32 %v9665, %v9667
        %v9669 = vrot.slane %v9662, %v9668
        %s9671 = scalar_lea.vmem %s9352, 6 [#allocation6]
        %9672 = vst.msk [vmem:[%s9671] ss:$8 sm:$0x3] %vm9335, %v9669
        %9673 = vst.msk [vmem:[%s9671] ss:$8 sm:$0x0] %vm9335, %v9669
        %v9674 = vcombine.high %v9662, %v9662
        %v9676 = vunpack.c.l.s4 1966171168
        %v9677 = vunpack.c.0.s8 %v9676
        %v9678 = vlaneseq
        %v9679 = vshrl.u32 %v9678, 7
        %v9680 = vsub.s32 %v9677, %v9679
        %v9681 = vrot.slane %v9674, %v9680
        %s9683 = scalar_lea.vmem %s9357, 6 [#allocation6]
        %9684 = vst.msk [vmem:[%s9683] ss:$8 sm:$0x3] %vm9335, %v9681
        %9685 = vst.msk [vmem:[%s9683] ss:$8 sm:$0x0] %vm9335, %v9681
        %v9686 = vcombine.high %v9669, %v9669
        %s9688 = scalar_lea.vmem %s9376, 6 [#allocation6]
        %9689 = vst.msk [vmem:[%s9688] ss:$8 sm:$0x3] %vm9335, %v9686
        %9690 = vst.msk [vmem:[%s9688] ss:$8 sm:$0x0] %vm9335, %v9686
        %v9691 = vcombine.high %v9681, %v9681
        %s9693 = scalar_lea.vmem [#allocation6], 7
        %9694 = vst.msk [vmem:[%s9693] ss:$8 sm:$0x3] %vm9335, %v9691
        %9695 = vst.msk [vmem:[%s9693] ss:$8 sm:$0x0] %vm9335, %v9691
        %v9696 = vcombine.high %v9312, %v9313
        %v9698 = vunpack.c.l.s4 1966171168
        %v9699 = vunpack.c.0.s8 %v9698
        %v9700 = vlaneseq
        %v9701 = vshrl.u32 %v9700, 7
        %v9702 = vsub.s32 %v9699, %v9701
        %v9703 = vrot.slane %v9696, %v9702
        %v9705 = vunpack.c.l.s4 1966171168
        %v9706 = vunpack.c.0.s8 %v9705
        %v9707 = vlaneseq
        %v9708 = vshrl.u32 %v9707, 7
        %v9709 = vsub.s32 %v9706, %v9708
        %v9710 = vrot.slane %v9703, %v9709
        %s9712 = scalar_lea.vmem %s9347, 7 [#allocation6]
        %9713 = vst.msk [vmem:[%s9712] ss:$8 sm:$0x3] %vm9335, %v9710
        %9714 = vst.msk [vmem:[%s9712] ss:$8 sm:$0x0] %vm9335, %v9710
        %v9715 = vcombine.high %v9703, %v9703
        %v9717 = vunpack.c.l.s4 1966171168
        %v9718 = vunpack.c.0.s8 %v9717
        %v9719 = vlaneseq
        %v9720 = vshrl.u32 %v9719, 7
        %v9721 = vsub.s32 %v9718, %v9720
        %v9722 = vrot.slane %v9715, %v9721
        %s9724 = scalar_lea.vmem %s9352, 7 [#allocation6]
        %9725 = vst.msk [vmem:[%s9724] ss:$8 sm:$0x3] %vm9335, %v9722
        %9726 = vst.msk [vmem:[%s9724] ss:$8 sm:$0x0] %vm9335, %v9722
        %v9727 = vcombine.high %v9710, %v9710
        %s9729 = scalar_lea.vmem %s9357, 7 [#allocation6]
        %9730 = vst.msk [vmem:[%s9729] ss:$8 sm:$0x3] %vm9335, %v9727
        %9731 = vst.msk [vmem:[%s9729] ss:$8 sm:$0x0] %vm9335, %v9727
        %v9732 = vcombine.high %v9722, %v9722
        %s9734 = scalar_lea.vmem %s9376, 7 [#allocation6]
        %9735 = vst.msk [vmem:[%s9734] ss:$8 sm:$0x3] %vm9335, %v9732
        %9736 = vst.msk [vmem:[%s9734] ss:$8 sm:$0x0] %vm9335, %v9732
        %v9737 = vld [vmem:[#allocation6] sm:$0xff]
        %v9738 = vld [vmem:[#allocation6 + $0x8] sm:$0xff]
        %v9739 = vld [vmem:[%s8] sm:$0xff]
        %v9740 = vld [vmem:[%s8 + $0x8] sm:$0xff]
        %v9741 = vld [vmem:[%s8 + $0x50] sm:$0x3]
        %v9742 = vld [vmem:[%s8 + $0x58] sm:$0x3]
        %v9743 = vld [vmem:[%s9347] sm:$0xff]
        %v9744 = vld [vmem:[%s9347 + $0x8] sm:$0xff]
        %v9745 = vld [vmem:[%s8 + $0x10] sm:$0xff]
        %v9746 = vld [vmem:[%s8 + $0x18] sm:$0xff]
        %v9747 = vld [vmem:[%s8 + $0x60] sm:$0x3]
        %v9748 = vld [vmem:[%s8 + $0x68] sm:$0x3]
        %9749 = vmatprep.subr.mxu0 %v9746
        %9750 = vmatpush1.xpose.msra.mxu0 %v9745
        %9751 = vmatprep.subr.mxu0 %v9748
        %9752 = vmatpush1.xpose.msra.mxu0 %v9747
        %9753 = vmatprep.subr.mxu0 0.0
        %9754 = vmatpush1.xpose.msra.mxu0 0.0
        %9755 = vmatprep.subr.mxu0 0.0
        %9756 = vmatpush1.xpose.msra.mxu0 0.0
        %9757 = vmatprep.subr.mxu0 0.0
        %9758 = vmatpush1.xpose.msra.mxu0 0.0
        %9759 = vmatprep.subr.mxu0 0.0
        %9760 = vmatpush1.xpose.msra.mxu0 0.0
        %9761 = vmatprep.subr.mxu0 0.0
        %9762 = vmatpush1.xpose.msra.mxu0 0.0
        %9763 = vmatprep.subr.mxu0 0.0
        %9764 = vmatpush1.xpose.msra.mxu0 0.0
        %9765 = vmatprep.subr.mxu0 0.0
        %9766 = vmatpush1.xpose.msra.mxu0 0.0
        %9767 = vmatprep.subr.mxu0 0.0
        %9768 = vmatpush1.xpose.msra.mxu0 0.0
        %9769 = vmatprep.subr.mxu0 0.0
        %9770 = vmatpush1.xpose.msra.mxu0 0.0
        %9771 = vmatprep.subr.mxu0 0.0
        %9772 = vmatpush1.xpose.msra.mxu0 0.0
        %9773 = vmatprep.subr.mxu0 0.0
        %9774 = vmatpush1.xpose.msra.mxu0 0.0
        %9775 = vmatprep.subr.mxu0 0.0
        %9776 = vmatpush1.xpose.msra.mxu0 0.0
        %9777 = vmatprep.subr.mxu0 0.0
        %9778 = vmatpush1.xpose.msra.mxu0 0.0
        %9779 = vmatprep.subr.mxu0 0.0
        %9780 = vmatpush1.xpose.msra.mxu0 0.0
        %9781 = vmatprep.subr.mxu0 0.0
        %9782 = vmatpush1.xpose.msra.mxu0 0.0
        %9783 = vmatprep.subr.mxu0 0.0
        %9784 = vmatpush1.xpose.msra.mxu0 0.0
        %9785 = vmatprep.subr.mxu0 0.0
        %9786 = vmatpush1.xpose.msra.mxu0 0.0
        %9787 = vmatprep.subr.mxu0 0.0
        %9788 = vmatpush1.xpose.msra.mxu0 0.0
        %9789 = vmatprep.subr.mxu0 0.0
        %9790 = vmatpush1.xpose.msra.mxu0 0.0
        %9791 = vmatprep.subr.mxu0 0.0
        %9792 = vmatpush1.xpose.msra.mxu0 0.0
        %9793 = vmatprep.subr.mxu0 0.0
        %9794 = vmatpush1.xpose.msra.mxu0 0.0
        %9795 = vmatprep.subr.mxu0 0.0
        %9796 = vmatpush1.xpose.msra.mxu0 0.0
        %9797 = vmatprep.subr.mxu0 0.0
        %9798 = vmatpush1.xpose.msra.mxu0 0.0
        %9799 = vmatprep.subr.mxu0 0.0
        %9800 = vmatpush1.xpose.msra.mxu0 0.0
        %9801 = vmatprep.subr.mxu0 0.0
        %9802 = vmatpush1.xpose.msra.mxu0 0.0
        %9803 = vmatprep.subr.mxu0 0.0
        %9804 = vmatpush1.xpose.msra.mxu0 0.0
        %9805 = vmatprep.subr.mxu0 0.0
        %9806 = vmatpush1.xpose.msra.mxu0 0.0
        %9807 = vmatprep.subr.mxu0 0.0
        %9808 = vmatpush1.xpose.msra.mxu0 0.0
        %9809 = vmatprep.subr.mxu0 0.0
        %9810 = vmatpush1.xpose.msra.mxu0 0.0
        %9811 = vmatprep.subr.mxu0 0.0
        %9812 = vmatpush1.xpose.msra.mxu0 0.0
        %9813 = vmatprep.mubr.f32.mxu0 %v9744
        %9814 = vmatmul.mubr.f32.gmra.mrb[0].mxu0 %v9743
        %v9815 = vpop.f32.mrb[0].mxu0
        %v9816 = vadd.f32 0.0, %v9815
        %v9817 = vpop.f32.mrb[0].mxu0
        %9818 = vdwg.mxu0
        %9819 = vmatprep.subr.mxu0 %v9740
        %9820 = vmatpush1.xpose.msra.mxu0 %v9739
        %9821 = vmatprep.subr.mxu0 %v9742
        %9822 = vmatpush1.xpose.msra.mxu0 %v9741
        %9823 = vmatprep.subr.mxu0 0.0
        %9824 = vmatpush1.xpose.msra.mxu0 0.0
        %9825 = vmatprep.subr.mxu0 0.0
        %9826 = vmatpush1.xpose.msra.mxu0 0.0
        %9827 = vmatprep.subr.mxu0 0.0
        %9828 = vmatpush1.xpose.msra.mxu0 0.0
        %9829 = vmatprep.subr.mxu0 0.0
        %9830 = vmatpush1.xpose.msra.mxu0 0.0
        %9831 = vmatprep.subr.mxu0 0.0
        %9832 = vmatpush1.xpose.msra.mxu0 0.0
        %9833 = vmatprep.subr.mxu0 0.0
        %9834 = vmatpush1.xpose.msra.mxu0 0.0
        %9835 = vmatprep.subr.mxu0 0.0
        %9836 = vmatpush1.xpose.msra.mxu0 0.0
        %9837 = vmatprep.subr.mxu0 0.0
        %9838 = vmatpush1.xpose.msra.mxu0 0.0
        %9839 = vmatprep.subr.mxu0 0.0
        %9840 = vmatpush1.xpose.msra.mxu0 0.0
        %9841 = vmatprep.subr.mxu0 0.0
        %9842 = vmatpush1.xpose.msra.mxu0 0.0
        %9843 = vmatprep.subr.mxu0 0.0
        %9844 = vmatpush1.xpose.msra.mxu0 0.0
        %9845 = vmatprep.subr.mxu0 0.0
        %9846 = vmatpush1.xpose.msra.mxu0 0.0
        %9847 = vmatprep.subr.mxu0 0.0
        %9848 = vmatpush1.xpose.msra.mxu0 0.0
        %9849 = vmatprep.subr.mxu0 0.0
        %9850 = vmatpush1.xpose.msra.mxu0 0.0
        %9851 = vmatprep.subr.mxu0 0.0
        %9852 = vmatpush1.xpose.msra.mxu0 0.0
        %9853 = vmatprep.subr.mxu0 0.0
        %9854 = vmatpush1.xpose.msra.mxu0 0.0
        %9855 = vmatprep.subr.mxu0 0.0
        %9856 = vmatpush1.xpose.msra.mxu0 0.0
        %9857 = vmatprep.subr.mxu0 0.0
        %9858 = vmatpush1.xpose.msra.mxu0 0.0
        %9859 = vmatprep.subr.mxu0 0.0
        %9860 = vmatpush1.xpose.msra.mxu0 0.0
        %9861 = vmatprep.subr.mxu0 0.0
        %9862 = vmatpush1.xpose.msra.mxu0 0.0
        %9863 = vmatprep.subr.mxu0 0.0
        %9864 = vmatpush1.xpose.msra.mxu0 0.0
        %9865 = vmatprep.subr.mxu0 0.0
        %9866 = vmatpush1.xpose.msra.mxu0 0.0
        %9867 = vmatprep.subr.mxu0 0.0
        %9868 = vmatpush1.xpose.msra.mxu0 0.0
        %9869 = vmatprep.subr.mxu0 0.0
        %9870 = vmatpush1.xpose.msra.mxu0 0.0
        %9871 = vmatprep.subr.mxu0 0.0
        %9872 = vmatpush1.xpose.msra.mxu0 0.0
        %9873 = vmatprep.subr.mxu0 0.0
        %9874 = vmatpush1.xpose.msra.mxu0 0.0
        %9875 = vmatprep.subr.mxu0 0.0
        %9876 = vmatpush1.xpose.msra.mxu0 0.0
        %9877 = vmatprep.subr.mxu0 0.0
        %9878 = vmatpush1.xpose.msra.mxu0 0.0
        %9879 = vmatprep.subr.mxu0 0.0
        %9880 = vmatpush1.xpose.msra.mxu0 0.0
        %9881 = vmatprep.subr.mxu0 0.0
        %9882 = vmatpush1.xpose.msra.mxu0 0.0
        %9883 = vmatprep.mubr.f32.mxu0 %v9738
        %9884 = vmatmul.mubr.f32.gmra.mrb[0].mxu0 %v9737
        %v9885 = vpop.f32.mrb[0].mxu0
        %v9886 = vadd.f32 %v9816, %v9885
        %v9887 = vpop.f32.mrb[0].mxu0
        %9888 = vdwg.mxu0
        %v9889 = vld [vmem:[%s9352] sm:$0xff]
        %v9890 = vld [vmem:[%s9352 + $0x8] sm:$0xff]
        %v9891 = vld [vmem:[%s8 + $0x20] sm:$0xff]
        %v9892 = vld [vmem:[%s8 + $0x28] sm:$0xff]
        %v9893 = vld [vmem:[%s8 + $0x70] sm:$0x3]
        %v9894 = vld [vmem:[%s8 + $0x78] sm:$0x3]
        %9895 = vmatprep.subr.mxu0 %v9892
        %9896 = vmatpush1.xpose.msra.mxu0 %v9891
        %9897 = vmatprep.subr.mxu0 %v9894
        %9898 = vmatpush1.xpose.msra.mxu0 %v9893
        %9899 = vmatprep.subr.mxu0 0.0
        %9900 = vmatpush1.xpose.msra.mxu0 0.0
        %9901 = vmatprep.subr.mxu0 0.0
        %9902 = vmatpush1.xpose.msra.mxu0 0.0
        %9903 = vmatprep.subr.mxu0 0.0
        %9904 = vmatpush1.xpose.msra.mxu0 0.0
        %9905 = vmatprep.subr.mxu0 0.0
        %9906 = vmatpush1.xpose.msra.mxu0 0.0
        %9907 = vmatprep.subr.mxu0 0.0
        %9908 = vmatpush1.xpose.msra.mxu0 0.0
        %9909 = vmatprep.subr.mxu0 0.0
        %9910 = vmatpush1.xpose.msra.mxu0 0.0
        %9911 = vmatprep.subr.mxu0 0.0
        %9912 = vmatpush1.xpose.msra.mxu0 0.0
        %9913 = vmatprep.subr.mxu0 0.0
        %9914 = vmatpush1.xpose.msra.mxu0 0.0
        %9915 = vmatprep.subr.mxu0 0.0
        %9916 = vmatpush1.xpose.msra.mxu0 0.0
        %9917 = vmatprep.subr.mxu0 0.0
        %9918 = vmatpush1.xpose.msra.mxu0 0.0
        %9919 = vmatprep.subr.mxu0 0.0
        %9920 = vmatpush1.xpose.msra.mxu0 0.0
        %9921 = vmatprep.subr.mxu0 0.0
        %9922 = vmatpush1.xpose.msra.mxu0 0.0
        %9923 = vmatprep.subr.mxu0 0.0
        %9924 = vmatpush1.xpose.msra.mxu0 0.0
        %9925 = vmatprep.subr.mxu0 0.0
        %9926 = vmatpush1.xpose.msra.mxu0 0.0
        %9927 = vmatprep.subr.mxu0 0.0
        %9928 = vmatpush1.xpose.msra.mxu0 0.0
        %9929 = vmatprep.subr.mxu0 0.0
        %9930 = vmatpush1.xpose.msra.mxu0 0.0
        %9931 = vmatprep.subr.mxu0 0.0
        %9932 = vmatpush1.xpose.msra.mxu0 0.0
        %9933 = vmatprep.subr.mxu0 0.0
        %9934 = vmatpush1.xpose.msra.mxu0 0.0
        %9935 = vmatprep.subr.mxu0 0.0
        %9936 = vmatpush1.xpose.msra.mxu0 0.0
        %9937 = vmatprep.subr.mxu0 0.0
        %9938 = vmatpush1.xpose.msra.mxu0 0.0
        %9939 = vmatprep.subr.mxu0 0.0
        %9940 = vmatpush1.xpose.msra.mxu0 0.0
        %9941 = vmatprep.subr.mxu0 0.0
        %9942 = vmatpush1.xpose.msra.mxu0 0.0
        %9943 = vmatprep.subr.mxu0 0.0
        %9944 = vmatpush1.xpose.msra.mxu0 0.0
        %9945 = vmatprep.subr.mxu0 0.0
        %9946 = vmatpush1.xpose.msra.mxu0 0.0
        %9947 = vmatprep.subr.mxu0 0.0
        %9948 = vmatpush1.xpose.msra.mxu0 0.0
        %9949 = vmatprep.subr.mxu0 0.0
        %9950 = vmatpush1.xpose.msra.mxu0 0.0
        %9951 = vmatprep.subr.mxu0 0.0
        %9952 = vmatpush1.xpose.msra.mxu0 0.0
        %9953 = vmatprep.subr.mxu0 0.0
        %9954 = vmatpush1.xpose.msra.mxu0 0.0
        %9955 = vmatprep.subr.mxu0 0.0
        %9956 = vmatpush1.xpose.msra.mxu0 0.0
        %9957 = vmatprep.subr.mxu0 0.0
        %9958 = vmatpush1.xpose.msra.mxu0 0.0
        %9959 = vmatprep.mubr.f32.mxu0 %v9890
        %9960 = vmatmul.mubr.f32.gmra.mrb[0].mxu0 %v9889
        %v9961 = vpop.f32.mrb[0].mxu0
        %v9962 = vadd.f32 0.0, %v9961
        %v9963 = vpop.f32.mrb[0].mxu0
        %9964 = vdwg.mxu0
        %v9965 = vadd.f32 %v9886, %v9962
        %v9966 = vld [vmem:[%s9357] sm:$0xff]
        %v9967 = vld [vmem:[%s9357 + $0x8] sm:$0xff]
        %v9968 = vld [vmem:[%s8 + $0x30] sm:$0xff]
        %v9969 = vld [vmem:[%s8 + $0x38] sm:$0xff]
        %v9970 = vld [vmem:[%s8 + $0x80] sm:$0x3]
        %v9971 = vld [vmem:[%s8 + $0x88] sm:$0x3]
        %9972 = vmatprep.subr.mxu0 %v9969
        %9973 = vmatpush1.xpose.msra.mxu0 %v9968
        %9974 = vmatprep.subr.mxu0 %v9971
        %9975 = vmatpush1.xpose.msra.mxu0 %v9970
        %9976 = vmatprep.subr.mxu0 0.0
        %9977 = vmatpush1.xpose.msra.mxu0 0.0
        %9978 = vmatprep.subr.mxu0 0.0
        %9979 = vmatpush1.xpose.msra.mxu0 0.0
        %9980 = vmatprep.subr.mxu0 0.0
        %9981 = vmatpush1.xpose.msra.mxu0 0.0
        %9982 = vmatprep.subr.mxu0 0.0
        %9983 = vmatpush1.xpose.msra.mxu0 0.0
        %9984 = vmatprep.subr.mxu0 0.0
        %9985 = vmatpush1.xpose.msra.mxu0 0.0
        %9986 = vmatprep.subr.mxu0 0.0
        %9987 = vmatpush1.xpose.msra.mxu0 0.0
        %9988 = vmatprep.subr.mxu0 0.0
        %9989 = vmatpush1.xpose.msra.mxu0 0.0
        %9990 = vmatprep.subr.mxu0 0.0
        %9991 = vmatpush1.xpose.msra.mxu0 0.0
        %9992 = vmatprep.subr.mxu0 0.0
        %9993 = vmatpush1.xpose.msra.mxu0 0.0
        %9994 = vmatprep.subr.mxu0 0.0
        %9995 = vmatpush1.xpose.msra.mxu0 0.0
        %9996 = vmatprep.subr.mxu0 0.0
        %9997 = vmatpush1.xpose.msra.mxu0 0.0
        %9998 = vmatprep.subr.mxu0 0.0
        %9999 = vmatpush1.xpose.msra.mxu0 0.0
        %10000 = vmatprep.subr.mxu0 0.0
        %10001 = vmatpush1.xpose.msra.mxu0 0.0
        %10002 = vmatprep.subr.mxu0 0.0
        %10003 = vmatpush1.xpose.msra.mxu0 0.0
        %10004 = vmatprep.subr.mxu0 0.0
        %10005 = vmatpush1.xpose.msra.mxu0 0.0
        %10006 = vmatprep.subr.mxu0 0.0
        %10007 = vmatpush1.xpose.msra.mxu0 0.0
        %10008 = vmatprep.subr.mxu0 0.0
        %10009 = vmatpush1.xpose.msra.mxu0 0.0
        %10010 = vmatprep.subr.mxu0 0.0
        %10011 = vmatpush1.xpose.msra.mxu0 0.0
        %10012 = vmatprep.subr.mxu0 0.0
        %10013 = vmatpush1.xpose.msra.mxu0 0.0
        %10014 = vmatprep.subr.mxu0 0.0
        %10015 = vmatpush1.xpose.msra.mxu0 0.0
        %10016 = vmatprep.subr.mxu0 0.0
        %10017 = vmatpush1.xpose.msra.mxu0 0.0
        %10018 = vmatprep.subr.mxu0 0.0
        %10019 = vmatpush1.xpose.msra.mxu0 0.0
        %10020 = vmatprep.subr.mxu0 0.0
        %10021 = vmatpush1.xpose.msra.mxu0 0.0
        %10022 = vmatprep.subr.mxu0 0.0
        %10023 = vmatpush1.xpose.msra.mxu0 0.0
        %10024 = vmatprep.subr.mxu0 0.0
        %10025 = vmatpush1.xpose.msra.mxu0 0.0
        %10026 = vmatprep.subr.mxu0 0.0
        %10027 = vmatpush1.xpose.msra.mxu0 0.0
        %10028 = vmatprep.subr.mxu0 0.0
        %10029 = vmatpush1.xpose.msra.mxu0 0.0
        %10030 = vmatprep.subr.mxu0 0.0
        %10031 = vmatpush1.xpose.msra.mxu0 0.0
        %10032 = vmatprep.subr.mxu0 0.0
        %10033 = vmatpush1.xpose.msra.mxu0 0.0
        %10034 = vmatprep.subr.mxu0 0.0
        %10035 = vmatpush1.xpose.msra.mxu0 0.0
        %10036 = vmatprep.mubr.f32.mxu0 %v9967
        %10037 = vmatmul.mubr.f32.gmra.mrb[0].mxu0 %v9966
        %v10038 = vpop.f32.mrb[0].mxu0
        %v10039 = vadd.f32 0.0, %v10038
        %v10040 = vpop.f32.mrb[0].mxu0
        %10041 = vdwg.mxu0
        %v10042 = vadd.f32 %v9965, %v10039
        %v10043 = vld [vmem:[%s9376] sm:$0xff]
        %v10044 = vld [vmem:[%s9376 + $0x8] sm:$0xff]
        %v10045 = vld [vmem:[%s8 + $0x40] sm:$0xff]
        %v10046 = vld [vmem:[%s8 + $0x48] sm:$0xff]
        %v10047 = vld [vmem:[%s8 + $0x90] sm:$0x3]
        %v10048 = vld [vmem:[%s8 + $0x98] sm:$0x3]
        %10049 = vmatprep.subr.mxu0 %v10046
        %10050 = vmatpush1.xpose.msra.mxu0 %v10045
        %10051 = vmatprep.subr.mxu0 %v10048
        %10052 = vmatpush1.xpose.msra.mxu0 %v10047
        %10053 = vmatprep.subr.mxu0 0.0
        %10054 = vmatpush1.xpose.msra.mxu0 0.0
        %10055 = vmatprep.subr.mxu0 0.0
        %10056 = vmatpush1.xpose.msra.mxu0 0.0
        %10057 = vmatprep.subr.mxu0 0.0
        %10058 = vmatpush1.xpose.msra.mxu0 0.0
        %10059 = vmatprep.subr.mxu0 0.0
        %10060 = vmatpush1.xpose.msra.mxu0 0.0
        %10061 = vmatprep.subr.mxu0 0.0
        %10062 = vmatpush1.xpose.msra.mxu0 0.0
        %10063 = vmatprep.subr.mxu0 0.0
        %10064 = vmatpush1.xpose.msra.mxu0 0.0
        %10065 = vmatprep.subr.mxu0 0.0
        %10066 = vmatpush1.xpose.msra.mxu0 0.0
        %10067 = vmatprep.subr.mxu0 0.0
        %10068 = vmatpush1.xpose.msra.mxu0 0.0
        %10069 = vmatprep.subr.mxu0 0.0
        %10070 = vmatpush1.xpose.msra.mxu0 0.0
        %10071 = vmatprep.subr.mxu0 0.0
        %10072 = vmatpush1.xpose.msra.mxu0 0.0
        %10073 = vmatprep.subr.mxu0 0.0
        %10074 = vmatpush1.xpose.msra.mxu0 0.0
        %10075 = vmatprep.subr.mxu0 0.0
        %10076 = vmatpush1.xpose.msra.mxu0 0.0
        %10077 = vmatprep.subr.mxu0 0.0
        %10078 = vmatpush1.xpose.msra.mxu0 0.0
        %10079 = vmatprep.subr.mxu0 0.0
        %10080 = vmatpush1.xpose.msra.mxu0 0.0
        %10081 = vmatprep.subr.mxu0 0.0
        %10082 = vmatpush1.xpose.msra.mxu0 0.0
        %10083 = vmatprep.subr.mxu0 0.0
        %10084 = vmatpush1.xpose.msra.mxu0 0.0
        %10085 = vmatprep.subr.mxu0 0.0
        %10086 = vmatpush1.xpose.msra.mxu0 0.0
        %10087 = vmatprep.subr.mxu0 0.0
        %10088 = vmatpush1.xpose.msra.mxu0 0.0
        %10089 = vmatprep.subr.mxu0 0.0
        %10090 = vmatpush1.xpose.msra.mxu0 0.0
        %10091 = vmatprep.subr.mxu0 0.0
        %10092 = vmatpush1.xpose.msra.mxu0 0.0
        %10093 = vmatprep.subr.mxu0 0.0
        %10094 = vmatpush1.xpose.msra.mxu0 0.0
        %10095 = vmatprep.subr.mxu0 0.0
        %10096 = vmatpush1.xpose.msra.mxu0 0.0
        %10097 = vmatprep.subr.mxu0 0.0
        %10098 = vmatpush1.xpose.msra.mxu0 0.0
        %10099 = vmatprep.subr.mxu0 0.0
        %10100 = vmatpush1.xpose.msra.mxu0 0.0
        %10101 = vmatprep.subr.mxu0 0.0
        %10102 = vmatpush1.xpose.msra.mxu0 0.0
        %10103 = vmatprep.subr.mxu0 0.0
        %10104 = vmatpush1.xpose.msra.mxu0 0.0
        %10105 = vmatprep.subr.mxu0 0.0
        %10106 = vmatpush1.xpose.msra.mxu0 0.0
        %10107 = vmatprep.subr.mxu0 0.0
        %10108 = vmatpush1.xpose.msra.mxu0 0.0
        %10109 = vmatprep.subr.mxu0 0.0
        %10110 = vmatpush1.xpose.msra.mxu0 0.0
        %10111 = vmatprep.subr.mxu0 0.0
        %10112 = vmatpush1.xpose.msra.mxu0 0.0
        %10113 = vmatprep.mubr.f32.mxu0 %v10044
        %10114 = vmatmul.mubr.f32.gmra.mrb[0].mxu0 %v10043
        %v10115 = vpop.f32.mrb[0].mxu0
        %v10116 = vadd.f32 0.0, %v10115
        %v10117 = vpop.f32.mrb[0].mxu0
        %10118 = vdwg.mxu0
        %v10119 = vadd.f32 %v10042, %v10116
        %v10120 = vld [vmem:[%s9] sm:$0x1]
        %v10122 = vlaneseq
        %v10123 = vshrl.u32 %v10122, 7
        %v10124 = vsub.s32 0, %v10123
        %v10125 = vrot.slane %v10120, %v10124
        %v10127 = vadd.f32 %v10119, %v10125
        %vm10128 = vcmask 80896
        %10129 = vst.msk [vmem:[%s401] sm:$0xff] %vm10128, %v10127
        %s10130 = sand.u32 %s262, 1
        %s10131 = scalar_lea.sflag [#allocation8], %s10130
        %s10132 = sand.u32 %s262, 1
        %s10133 = smul.addr %s10132, 8
        %s10134 = scalar_lea.vmem [#allocation7], %s10133
        // Predicated region
        $region61: #{netbn_forward.1} parent=59 // pred_check
          %p10135 = pneg %p272
        $region62: #{netbn_forward.1} parent=59 // pred_check_branch
          %10137 = sbr.rel (%p10135) target = $region64
        $region63: #{netbn_forward.1} parent=59 // pred_region
          %s10139 = ssub.s32 128, 128
          %10140 = vsyncadd %s10131, %s10139
          %s10141 = smul.addr %s24, 128
          %s10142 = scalar_lea.hbm %s10, %s10141
          %s10144 = sshll.u32 %s10134, 4
          %s10145 = int_to_ptr.vmem [resolvable:$true] %s10144
          %10147 = dma.vmem_to_hbm [thread:$0]  %s10145, 128, %s10142, %s10131
        $region64: #{netbn_forward.1} parent=59 // pred_fallthru
          _
      $region60: #{netbn_forward.1} parent=5 // pred_fallthru
        _
      %p10148 = scmp.le.s32.totalorder 2, %s19
      // Predicated region
      $region65: #{netbn_forward.1} parent=5 // pred_check
        %p10149 = pneg %p10148
      $region66: #{netbn_forward.1} parent=5 // pred_check_branch
        %10151 = sbr.rel (%p10149) target = $region68
      $region67: #{netbn_forward.1} parent=5 // pred_region
        %s10152 = ssub.s32 %s19, 2
        // Predicated region
        $region69: #{netbn_forward.1} parent=67 // pred_check
          %p10153 = pneg %p278
        $region70: #{netbn_forward.1} parent=67 // pred_check_branch
          %10155 = sbr.rel (%p10153) target = $region72
        $region71: #{netbn_forward.1} parent=67 // pred_region
          %s10156 = sand.u32 %s263, 1
          %s10157 = scalar_lea.sflag [#allocation8], %s10156
          %s10158 = sand.u32 %s263, 1
          %s10159 = smul.addr %s10158, 8
          %s10160 = scalar_lea.vmem [#allocation7], %s10159
          %10161 = dma.done %s10157, 128
        $region72: #{netbn_forward.1} parent=67 // pred_fallthru
          _
      $region68: #{netbn_forward.1} parent=5 // pred_fallthru
        _
    $region6: #{netbn_forward.1} parent=1 // loop_footer
      %s23 = sadd.s32 1, %s19
    $region7: #{netbn_forward.1} parent=1 // loop_footer_branch
      %18 = sbr.rel target = $region3
    $region8: #{netbn_forward.1} parent=1 // loop_exit
      _
    %10162 = vsyncpa [#allocation8], 1
    %s10163 = scalar_lea.sflag [#allocation8], 1
    %10164 = vsyncpa %s10163, 1

</llo_original>
